<compile_context>
chip_gen: v7x
topology: tpu7x:2x2x1
jax: 0.10.0
libtpu: 0.0.40
codegen_flags: <defaults>
</compile_context>

<pallas_src>
import jax
import jax.numpy as jnp
from jax.experimental import pallas as pl
from jax.experimental.pallas import tpu as pltpu

_EPS = 1e-5
_SLOPE = 0.2
# Scoped-VMEM default is 16 MiB (v5e) / 32 MiB (v6e, v7x).  Per-step footprint
# here (resident phase planes + weight taps + one per-image output tile) is a
# few MiB, so 32 MiB is safe on every generation (v7x physical VMEM is 64 MiB;
# re-derive before growing the row block / per-image tiles).
_VMEM_LIMIT = 32 * 1024 * 1024


def dcnn_forward(x, weight, gamma, beta, stride):
    """Conv2d(k=4, stride, pad=1 reflect, no bias) + BatchNorm2d(train) + LeakyReLU(0.2).

    x: [N, Cin, H, W] f32, weight: [Cout, Cin, 4, 4] f32, gamma/beta: [Cout] f32.
    Returns [N, Cout, Ho, Wo] f32.
    """
    N, Cin, H, W = x.shape
    Cout = weight.shape[0]
    KH = KW = 4
    pad = 1
    s = int(stride)

    Hp, Wp = H + 2 * pad, W + 2 * pad
    Ho = (Hp - KH) // s + 1
    Wo = (Wp - KW) // s + 1
    qmax = (KH - 1) // s            # max whole-stride shift of any tap

    # Row-block size for pass 1.  RB == Ho keeps every in-kernel index static
    # for typical discriminator feature maps; larger maps use 16-row blocks.
    RB = Ho if Ho <= 16 else 16
    Ho_pad = ((Ho + RB - 1) // RB) * RB
    nRB = Ho_pad // RB
    L = Ho_pad * Wo                 # lane-dense flattened spatial extent

    # ---- reflect pad + bf16 cast + space-to-depth ("phase split") ----------
    # x_ph[n, i, (ph*s+pw)*Cin + ci, j] == x_pad[n, ci, i*s + ph, j*s + pw]
    # so every strided conv tap becomes a contiguous in-kernel slice.
    x_pad = jnp.pad(x, ((0, 0), (0, 0), (pad, pad), (pad, pad)), mode="reflect")
    x_pad = x_pad.astype(jnp.bfloat16)
    Hq = Ho_pad + qmax
    Wq = Wo + qmax
    TH, TW = s * Hq, s * Wq
    xp = x_pad[:, :, : min(Hp, TH), : min(Wp, TW)]
    xp = jnp.pad(xp, ((0, 0), (0, 0), (0, TH - xp.shape[2]), (0, TW - xp.shape[3])))
    Css = s * s * Cin
    x_ph = (
        xp.reshape(N, Cin, Hq, s, Wq, s)
        .transpose(0, 2, 3, 5, 1, 4)
        .reshape(N, Hq, Css, Wq)
    )

    # Weight as 16 per-tap [Cout, Cin] matrices (tap index t = kh*4 + kw).
    w_taps = weight.transpose(2, 3, 0, 1).reshape(KH * KW, Cout, Cin).astype(jnp.bfloat16)

    # ------------------------- pass 1: conv + per-image stats ----------------
    def conv_stats_kernel(w_ref, x_ref, y_ref, sum_ref, sq_ref):
        # w_ref:   [16, Cout, Cin] bf16 (resident)
        # x_ref:   [1, Hq, Css, Wq] bf16 phase planes (resident per image)
        # y_ref:   [1, Cout, L]     bf16 pre-BN conv output (lane-dense spatial)
        # sum_ref: [1, Cout, 1]     f32 per-image partial sum
        # sq_ref:  [1, Cout, 1]     f32 per-image partial sum of squares
        rb = pl.program_id(1)

        @pl.when(rb == 0)
        def _():
            sum_ref[...] = jnp.zeros_like(sum_ref)
            sq_ref[...] = jnp.zeros_like(sq_ref)

        row0 = rb * RB
        s_acc = jnp.zeros((Cout, 1), jnp.float32)
        q_acc = jnp.zeros((Cout, 1), jnp.float32)
        rows = []
        for r in range(RB):                       # static unrolled row loop
            ho = row0 + r
            acc = jnp.zeros((Cout, Wo), jnp.float32)
            for kh in range(KH):
                qh, ph = kh // s, kh % s
                for kw in range(KW):
                    qw, pw = kw // s, kw % s
                    c0 = (ph * s + pw) * Cin
                    # contiguous [Cin, Wo] tap slice from the phase planes
                    x_t = x_ref[0, ho + qh, c0:c0 + Cin, qw:qw + Wo]
                    w_t = w_ref[kh * KW + kw]     # [Cout, Cin]
                    acc = acc + jnp.dot(w_t, x_t, preferred_element_type=jnp.float32)
            rows.append(acc)
            # exclude padded rows (ho >= Ho) from the batch statistics
            valid = (ho < Ho).astype(jnp.float32)
            s_acc = s_acc + valid * jnp.sum(acc, axis=-1, keepdims=True)
            q_acc = q_acc + valid * jnp.sum(acc * acc, axis=-1, keepdims=True)

        y_blk = jnp.concatenate(rows, axis=-1).astype(y_ref.dtype)   # [Cout, RB*Wo]
        if nRB == 1:
            y_ref[0, :, :] = y_blk
        else:
            off = pl.multiple_of(row0 * Wo, RB * Wo)
            y_ref[0, :, pl.ds(off, RB * Wo)] = y_blk
        sum_ref[...] += s_acc[None]
        sq_ref[...] += q_acc[None]

    y_raw, ch_sum, ch_sq = pl.pallas_call(
        conv_stats_kernel,
        out_shape=(
            jax.ShapeDtypeStruct((N, Cout, L), jnp.bfloat16),   # bf16 intermediate
            jax.ShapeDtypeStruct((N, Cout, 1), jnp.float32),    # per-image partial sum
            jax.ShapeDtypeStruct((N, Cout, 1), jnp.float32),    # per-image partial sumsq
        ),
        grid=(N, nRB),
        in_specs=[
            pl.BlockSpec((KH * KW, Cout, Cin), lambda n, rb: (0, 0, 0)),  # resident W
            pl.BlockSpec((1, Hq, Css, Wq), lambda n, rb: (n, 0, 0, 0)),   # per-image input
            # NOTE(v5e): pipeline_mode=pl.Buffered(3) on the input spec can hide
            # DMA issue latency if the per-image transfer stops overlapping.
        ],
        out_specs=(
            pl.BlockSpec((1, Cout, L), lambda n, rb: (n, 0, 0)),
            pl.BlockSpec((1, Cout, 1), lambda n, rb: (n, 0, 0)),
            pl.BlockSpec((1, Cout, 1), lambda n, rb: (n, 0, 0)),
        ),
        compiler_params=pltpu.CompilerParams(
            # batch axis "parallel" -> v7x's two TensorCores split pass 1; each
            # image owns its own stats block so there is no cross-core clash.
            dimension_semantics=("parallel", "arbitrary"),
            vmem_limit_bytes=_VMEM_LIMIT,
        ),
    )(w_taps, x_ph)

    # --- fold BatchNorm (training-mode biased batch stats) into scale/shift --
    cnt = float(N * Ho * Wo)
    tot = jnp.sum(ch_sum, axis=0)                  # [Cout, 1]
    tot_sq = jnp.sum(ch_sq, axis=0)                # [Cout, 1]
    mean = tot / cnt
    var = jnp.maximum(tot_sq / cnt - mean * mean, 0.0)
    scale = gamma.reshape(Cout, 1).astype(jnp.float32) * jax.lax.rsqrt(var + _EPS)
    shift = beta.reshape(Cout, 1).astype(jnp.float32) - mean * scale
    scale3 = scale.reshape(1, Cout, 1)
    shift3 = shift.reshape(1, Cout, 1)

    # ------------------- pass 2: normalize + LeakyReLU ----------------------
    def bn_lrelu_kernel(y_ref, scale_ref, shift_ref, o_ref):
        z = y_ref[...].astype(jnp.float32) * scale_ref[...] + shift_ref[...]
        o_ref[...] = jnp.maximum(z, _SLOPE * z).astype(o_ref.dtype)

    out_flat = pl.pallas_call(
        bn_lrelu_kernel,
        out_shape=jax.ShapeDtypeStruct((N, Cout, L), jnp.float32),
        grid=(N,),
        in_specs=[
            pl.BlockSpec((1, Cout, L), lambda n: (n, 0, 0)),
            pl.BlockSpec((1, Cout, 1), lambda n: (0, 0, 0)),
            pl.BlockSpec((1, Cout, 1), lambda n: (0, 0, 0)),
        ],
        out_specs=pl.BlockSpec((1, Cout, L), lambda n: (n, 0, 0)),
        compiler_params=pltpu.CompilerParams(
            dimension_semantics=("parallel",),
            vmem_limit_bytes=_VMEM_LIMIT,
        ),
    )(y_raw, scale3, shift3)

    # Output is already channel-major with lane-dense spatial: NCHW is a free
    # reshape (plus a slice only if Ho was padded).
    out = out_flat.reshape(N, Cout, Ho_pad, Wo)[:, :, :Ho, :]
    return out


def _reference(x, weight, gamma, beta, stride):
    """Pure-JAX f32 reference: Conv2d(reflect) + BatchNorm2d(train) + LeakyReLU."""
    x_pad = jnp.pad(x, ((0, 0), (0, 0), (1, 1), (1, 1)), mode="reflect")
    y = jax.lax.conv_general_dilated(
        x_pad, weight, window_strides=(stride, stride), padding="VALID",
        dimension_numbers=("NCHW", "OIHW", "NCHW"))
    mean = jnp.mean(y, axis=(0, 2, 3), keepdims=True)
    var = jnp.var(y, axis=(0, 2, 3), keepdims=True)
    y_hat = (y - mean) * jax.lax.rsqrt(var + _EPS)
    y_aff = y_hat * gamma.reshape(1, -1, 1, 1) + beta.reshape(1, -1, 1, 1)
    return jnp.where(y_aff >= 0, y_aff, _SLOPE * y_aff)


if __name__ == "__main__":
    # Small shapes consistent with the module
    N, Cin, H, W = 2, 4, 16, 16
    Cout = 8
    stride = 2

    key = jax.random.PRNGKey(0)
    kx, kw = jax.random.split(key)
    x = jax.random.normal(kx, (N, Cin, H, W), dtype=jnp.float32)
    weight = 0.05 * jax.random.normal(kw, (Cout, Cin, 4, 4), dtype=jnp.float32)
    gamma = jnp.ones((Cout,), jnp.float32)   # BatchNorm2d init: weight = 1
    beta = jnp.zeros((Cout,), jnp.float32)   # BatchNorm2d init: bias   = 0

    out = dcnn_forward(x, weight, gamma, beta, stride)
    jax.block_until_ready(out)
    assert out.shape == (N, Cout, H // stride, W // stride)

    ref = _reference(x, weight, gamma, beta, stride)
    max_err = float(jnp.max(jnp.abs(out - ref)))
    assert max_err < 5e-2, f"mismatch vs reference: max abs err = {max_err}"

    print("KERNEL_OK")
</pallas_src>

<mosaic_0001>
module attributes {stable_mosaic.version = 11 : i64} {
  func.func @conv_stats_kernel(%arg0: i32, %arg1: i32, %arg2: memref<16x8x4xbf16, #tpu.memory_space<vmem>>, %arg3: memref<1x9x16x9xbf16, #tpu.memory_space<vmem>>, %arg4: memref<1x8x64xbf16, #tpu.memory_space<vmem>>, %arg5: memref<1x8x1xf32, #tpu.memory_space<vmem>>, %arg6: memref<1x8x1xf32, #tpu.memory_space<vmem>>) attributes {dimension_semantics = [#tpu.dimension_semantics<parallel>, #tpu.dimension_semantics<arbitrary>], iteration_bounds = array<i64: 2, 1>, scalar_prefetch = 0 : i64, scratch_operands = 0 : i64, tpu.core_type = #tpu.core_type<tc>, window_params = [{pipeline_mode = #tpu.pipeline_mode<synchronous>, transform_indices = @transform_0, window_bounds = array<i64: 16, 8, 4>}, {transform_indices = @transform_1, window_bounds = array<i64: 1, 9, 16, 9>}, {transform_indices = @transform_2, window_bounds = array<i64: 1, 8, 64>}, {transform_indices = @transform_3, window_bounds = array<i64: 1, 8, 1>}, {transform_indices = @transform_4, window_bounds = array<i64: 1, 8, 1>}]} {
    %c0_i32 = arith.constant 0 : i32
    %0 = arith.cmpi eq, %arg1, %c0_i32 : i32
    %1 = arith.extui %0 : i1 to i32
    %c0_i32_0 = arith.constant 0 : i32
    %2 = arith.cmpi ne, %1, %c0_i32_0 : i32
    scf.if %2 {
      %cst_1058 = arith.constant 0.000000e+00 : f32
      %1171 = vector.broadcast %cst_1058 : f32 to vector<1x8x1xf32>
      %c0_1059 = arith.constant 0 : index
      %c0_1060 = arith.constant 0 : index
      %c0_1061 = arith.constant 0 : index
      %1172 = vector.load %arg5[%c0_1059, %c0_1060, %c0_1061] : memref<1x8x1xf32, #tpu.memory_space<vmem>>, vector<1x8x1xf32>
      tpu.vector_store %arg5[%c0_1059, %c0_1060, %c0_1061], %1171 {strides = array<i32>} : memref<1x8x1xf32, #tpu.memory_space<vmem>>, vector<1x8x1xf32>,
      %cst_1062 = arith.constant 0.000000e+00 : f32
      %1173 = vector.broadcast %cst_1062 : f32 to vector<1x8x1xf32>
      %c0_1063 = arith.constant 0 : index
      %c0_1064 = arith.constant 0 : index
      %c0_1065 = arith.constant 0 : index
      %1174 = vector.load %arg6[%c0_1063, %c0_1064, %c0_1065] : memref<1x8x1xf32, #tpu.memory_space<vmem>>, vector<1x8x1xf32>
      tpu.vector_store %arg6[%c0_1063, %c0_1064, %c0_1065], %1173 {strides = array<i32>} : memref<1x8x1xf32, #tpu.memory_space<vmem>>, vector<1x8x1xf32>,
    } else {
    }
    %c8_i32 = arith.constant 8 : i32
    %3 = arith.muli %arg1, %c8_i32 : i32
    %cst = arith.constant 0.000000e+00 : f32
    %4 = vector.broadcast %cst : f32 to vector<8x1xf32>
    %cst_1 = arith.constant 0.000000e+00 : f32
    %5 = vector.broadcast %cst_1 : f32 to vector<8x1xf32>
    %c0_i32_2 = arith.constant 0 : i32
    %6 = arith.addi %3, %c0_i32_2 : i32
    %cst_3 = arith.constant 0.000000e+00 : f32
    %7 = vector.broadcast %cst_3 : f32 to vector<8x8xf32>
    %c0_i32_4 = arith.constant 0 : i32
    %8 = arith.addi %6, %c0_i32_4 : i32
    %c0 = arith.constant 0 : index
    %9 = arith.index_cast %8 : i32 to index
    %c0_5 = arith.constant 0 : index
    %c0_6 = arith.constant 0 : index
    %10 = vector.load %arg3[%c0, %9, %c0_5, %c0_6] : memref<1x9x16x9xbf16, #tpu.memory_space<vmem>>, vector<1x1x4x8xbf16>
    %11 = vector.shape_cast %10 : vector<1x1x4x8xbf16> to vector<4x8xbf16>
    %c0_7 = arith.constant 0 : index
    %c0_8 = arith.constant 0 : index
    %c0_9 = arith.constant 0 : index
    %12 = vector.load %arg2[%c0_7, %c0_8, %c0_9] : memref<16x8x4xbf16, #tpu.memory_space<vmem>>, vector<1x8x4xbf16>
    %13 = vector.shape_cast %12 : vector<1x8x4xbf16> to vector<8x4xbf16>
    %cst_10 = arith.constant dense<0.000000e+00> : vector<8x8xf32>
    %14 = tpu.matmul %13, %11, %cst_10 {dimension_numbers = #tpu.dot_dimension_numbers<[1], [0], [0], [1], [0, 0, 1, 1], [], []>} : vector<8x4xbf16>, vector<4x8xbf16>, vector<8x8xf32> -> vector<8x8xf32>
    %15 = arith.addf %7, %14 : vector<8x8xf32>
    %c0_i32_11 = arith.constant 0 : i32
    %16 = arith.addi %6, %c0_i32_11 : i32
    %c0_12 = arith.constant 0 : index
    %17 = arith.index_cast %16 : i32 to index
    %c4 = arith.constant 4 : index
    %c0_13 = arith.constant 0 : index
    %18 = vector.load %arg3[%c0_12, %17, %c4, %c0_13] : memref<1x9x16x9xbf16, #tpu.memory_space<vmem>>, vector<1x1x4x8xbf16>
    %19 = vector.shape_cast %18 : vector<1x1x4x8xbf16> to vector<4x8xbf16>
    %c1 = arith.constant 1 : index
    %c0_14 = arith.constant 0 : index
    %c0_15 = arith.constant 0 : index
    %20 = vector.load %arg2[%c1, %c0_14, %c0_15] : memref<16x8x4xbf16, #tpu.memory_space<vmem>>, vector<1x8x4xbf16>
    %21 = vector.shape_cast %20 : vector<1x8x4xbf16> to vector<8x4xbf16>
    %cst_16 = arith.constant dense<0.000000e+00> : vector<8x8xf32>
    %22 = tpu.matmul %21, %19, %cst_16 {dimension_numbers = #tpu.dot_dimension_numbers<[1], [0], [0], [1], [0, 0, 1, 1], [], []>} : vector<8x4xbf16>, vector<4x8xbf16>, vector<8x8xf32> -> vector<8x8xf32>
    %23 = arith.addf %15, %22 : vector<8x8xf32>
    %c0_i32_17 = arith.constant 0 : i32
    %24 = arith.addi %6, %c0_i32_17 : i32
    %c0_18 = arith.constant 0 : index
    %25 = arith.index_cast %24 : i32 to index
    %c0_19 = arith.constant 0 : index
    %c1_20 = arith.constant 1 : index
    %26 = vector.load %arg3[%c0_18, %25, %c0_19, %c1_20] : memref<1x9x16x9xbf16, #tpu.memory_space<vmem>>, vector<1x1x4x8xbf16>
    %27 = vector.shape_cast %26 : vector<1x1x4x8xbf16> to vector<4x8xbf16>
    %c2 = arith.constant 2 : index
    %c0_21 = arith.constant 0 : index
    %c0_22 = arith.constant 0 : index
    %28 = vector.load %arg2[%c2, %c0_21, %c0_22] : memref<16x8x4xbf16, #tpu.memory_space<vmem>>, vector<1x8x4xbf16>
    %29 = vector.shape_cast %28 : vector<1x8x4xbf16> to vector<8x4xbf16>
    %cst_23 = arith.constant dense<0.000000e+00> : vector<8x8xf32>
    %30 = tpu.matmul %29, %27, %cst_23 {dimension_numbers = #tpu.dot_dimension_numbers<[1], [0], [0], [1], [0, 0, 1, 1], [], []>} : vector<8x4xbf16>, vector<4x8xbf16>, vector<8x8xf32> -> vector<8x8xf32>
    %31 = arith.addf %23, %30 : vector<8x8xf32>
    %c0_i32_24 = arith.constant 0 : i32
    %32 = arith.addi %6, %c0_i32_24 : i32
    %c0_25 = arith.constant 0 : index
    %33 = arith.index_cast %32 : i32 to index
    %c4_26 = arith.constant 4 : index
    %c1_27 = arith.constant 1 : index
    %34 = vector.load %arg3[%c0_25, %33, %c4_26, %c1_27] : memref<1x9x16x9xbf16, #tpu.memory_space<vmem>>, vector<1x1x4x8xbf16>
    %35 = vector.shape_cast %34 : vector<1x1x4x8xbf16> to vector<4x8xbf16>
    %c3 = arith.constant 3 : index
    %c0_28 = arith.constant 0 : index
    %c0_29 = arith.constant 0 : index
    %36 = vector.load %arg2[%c3, %c0_28, %c0_29] : memref<16x8x4xbf16, #tpu.memory_space<vmem>>, vector<1x8x4xbf16>
    %37 = vector.shape_cast %36 : vector<1x8x4xbf16> to vector<8x4xbf16>
    %cst_30 = arith.constant dense<0.000000e+00> : vector<8x8xf32>
    %38 = tpu.matmul %37, %35, %cst_30 {dimension_numbers = #tpu.dot_dimension_numbers<[1], [0], [0], [1], [0, 0, 1, 1], [], []>} : vector<8x4xbf16>, vector<4x8xbf16>, vector<8x8xf32> -> vector<8x8xf32>
    %39 = arith.addf %31, %38 : vector<8x8xf32>
    %c0_i32_31 = arith.constant 0 : i32
    %40 = arith.addi %6, %c0_i32_31 : i32
    %c0_32 = arith.constant 0 : index
    %41 = arith.index_cast %40 : i32 to index
    %c8 = arith.constant 8 : index
    %c0_33 = arith.constant 0 : index
    %42 = vector.load %arg3[%c0_32, %41, %c8, %c0_33] : memref<1x9x16x9xbf16, #tpu.memory_space<vmem>>, vector<1x1x4x8xbf16>
    %43 = vector.shape_cast %42 : vector<1x1x4x8xbf16> to vector<4x8xbf16>
    %c4_34 = arith.constant 4 : index
    %c0_35 = arith.constant 0 : index
    %c0_36 = arith.constant 0 : index
    %44 = vector.load %arg2[%c4_34, %c0_35, %c0_36] : memref<16x8x4xbf16, #tpu.memory_space<vmem>>, vector<1x8x4xbf16>
    %45 = vector.shape_cast %44 : vector<1x8x4xbf16> to vector<8x4xbf16>
    %cst_37 = arith.constant dense<0.000000e+00> : vector<8x8xf32>
    %46 = tpu.matmul %45, %43, %cst_37 {dimension_numbers = #tpu.dot_dimension_numbers<[1], [0], [0], [1], [0, 0, 1, 1], [], []>} : vector<8x4xbf16>, vector<4x8xbf16>, vector<8x8xf32> -> vector<8x8xf32>
    %47 = arith.addf %39, %46 : vector<8x8xf32>
    %c0_i32_38 = arith.constant 0 : i32
    %48 = arith.addi %6, %c0_i32_38 : i32
    %c0_39 = arith.constant 0 : index
    %49 = arith.index_cast %48 : i32 to index
    %c12 = arith.constant 12 : index
    %c0_40 = arith.constant 0 : index
    %50 = vector.load %arg3[%c0_39, %49, %c12, %c0_40] : memref<1x9x16x9xbf16, #tpu.memory_space<vmem>>, vector<1x1x4x8xbf16>
    %51 = vector.shape_cast %50 : vector<1x1x4x8xbf16> to vector<4x8xbf16>
    %c5 = arith.constant 5 : index
    %c0_41 = arith.constant 0 : index
    %c0_42 = arith.constant 0 : index
    %52 = vector.load %arg2[%c5, %c0_41, %c0_42] : memref<16x8x4xbf16, #tpu.memory_space<vmem>>, vector<1x8x4xbf16>
    %53 = vector.shape_cast %52 : vector<1x8x4xbf16> to vector<8x4xbf16>
    %cst_43 = arith.constant dense<0.000000e+00> : vector<8x8xf32>
    %54 = tpu.matmul %53, %51, %cst_43 {dimension_numbers = #tpu.dot_dimension_numbers<[1], [0], [0], [1], [0, 0, 1, 1], [], []>} : vector<8x4xbf16>, vector<4x8xbf16>, vector<8x8xf32> -> vector<8x8xf32>
    %55 = arith.addf %47, %54 : vector<8x8xf32>
    %c0_i32_44 = arith.constant 0 : i32
    %56 = arith.addi %6, %c0_i32_44 : i32
    %c0_45 = arith.constant 0 : index
    %57 = arith.index_cast %56 : i32 to index
    %c8_46 = arith.constant 8 : index
    %c1_47 = arith.constant 1 : index
    %58 = vector.load %arg3[%c0_45, %57, %c8_46, %c1_47] : memref<1x9x16x9xbf16, #tpu.memory_space<vmem>>, vector<1x1x4x8xbf16>
    %59 = vector.shape_cast %58 : vector<1x1x4x8xbf16> to vector<4x8xbf16>
    %c6 = arith.constant 6 : index
    %c0_48 = arith.constant 0 : index
    %c0_49 = arith.constant 0 : index
    %60 = vector.load %arg2[%c6, %c0_48, %c0_49] : memref<16x8x4xbf16, #tpu.memory_space<vmem>>, vector<1x8x4xbf16>
    %61 = vector.shape_cast %60 : vector<1x8x4xbf16> to vector<8x4xbf16>
    %cst_50 = arith.constant dense<0.000000e+00> : vector<8x8xf32>
    %62 = tpu.matmul %61, %59, %cst_50 {dimension_numbers = #tpu.dot_dimension_numbers<[1], [0], [0], [1], [0, 0, 1, 1], [], []>} : vector<8x4xbf16>, vector<4x8xbf16>, vector<8x8xf32> -> vector<8x8xf32>
    %63 = arith.addf %55, %62 : vector<8x8xf32>
    %c0_i32_51 = arith.constant 0 : i32
    %64 = arith.addi %6, %c0_i32_51 : i32
    %c0_52 = arith.constant 0 : index
    %65 = arith.index_cast %64 : i32 to index
    %c12_53 = arith.constant 12 : index
    %c1_54 = arith.constant 1 : index
    %66 = vector.load %arg3[%c0_52, %65, %c12_53, %c1_54] : memref<1x9x16x9xbf16, #tpu.memory_space<vmem>>, vector<1x1x4x8xbf16>
    %67 = vector.shape_cast %66 : vector<1x1x4x8xbf16> to vector<4x8xbf16>
    %c7 = arith.constant 7 : index
    %c0_55 = arith.constant 0 : index
    %c0_56 = arith.constant 0 : index
    %68 = vector.load %arg2[%c7, %c0_55, %c0_56] : memref<16x8x4xbf16, #tpu.memory_space<vmem>>, vector<1x8x4xbf16>
    %69 = vector.shape_cast %68 : vector<1x8x4xbf16> to vector<8x4xbf16>
    %cst_57 = arith.constant dense<0.000000e+00> : vector<8x8xf32>
    %70 = tpu.matmul %69, %67, %cst_57 {dimension_numbers = #tpu.dot_dimension_numbers<[1], [0], [0], [1], [0, 0, 1, 1], [], []>} : vector<8x4xbf16>, vector<4x8xbf16>, vector<8x8xf32> -> vector<8x8xf32>
    %71 = arith.addf %63, %70 : vector<8x8xf32>
    %c1_i32 = arith.constant 1 : i32
    %72 = arith.addi %6, %c1_i32 : i32
    %c0_58 = arith.constant 0 : index
    %73 = arith.index_cast %72 : i32 to index
    %c0_59 = arith.constant 0 : index
    %c0_60 = arith.constant 0 : index
    %74 = vector.load %arg3[%c0_58, %73, %c0_59, %c0_60] : memref<1x9x16x9xbf16, #tpu.memory_space<vmem>>, vector<1x1x4x8xbf16>
    %75 = vector.shape_cast %74 : vector<1x1x4x8xbf16> to vector<4x8xbf16>
    %c8_61 = arith.constant 8 : index
    %c0_62 = arith.constant 0 : index
    %c0_63 = arith.constant 0 : index
    %76 = vector.load %arg2[%c8_61, %c0_62, %c0_63] : memref<16x8x4xbf16, #tpu.memory_space<vmem>>, vector<1x8x4xbf16>
    %77 = vector.shape_cast %76 : vector<1x8x4xbf16> to vector<8x4xbf16>
    %cst_64 = arith.constant dense<0.000000e+00> : vector<8x8xf32>
    %78 = tpu.matmul %77, %75, %cst_64 {dimension_numbers = #tpu.dot_dimension_numbers<[1], [0], [0], [1], [0, 0, 1, 1], [], []>} : vector<8x4xbf16>, vector<4x8xbf16>, vector<8x8xf32> -> vector<8x8xf32>
    %79 = arith.addf %71, %78 : vector<8x8xf32>
    %c1_i32_65 = arith.constant 1 : i32
    %80 = arith.addi %6, %c1_i32_65 : i32
    %c0_66 = arith.constant 0 : index
    %81 = arith.index_cast %80 : i32 to index
    %c4_67 = arith.constant 4 : index
    %c0_68 = arith.constant 0 : index
    %82 = vector.load %arg3[%c0_66, %81, %c4_67, %c0_68] : memref<1x9x16x9xbf16, #tpu.memory_space<vmem>>, vector<1x1x4x8xbf16>
    %83 = vector.shape_cast %82 : vector<1x1x4x8xbf16> to vector<4x8xbf16>
    %c9 = arith.constant 9 : index
    %c0_69 = arith.constant 0 : index
    %c0_70 = arith.constant 0 : index
    %84 = vector.load %arg2[%c9, %c0_69, %c0_70] : memref<16x8x4xbf16, #tpu.memory_space<vmem>>, vector<1x8x4xbf16>
    %85 = vector.shape_cast %84 : vector<1x8x4xbf16> to vector<8x4xbf16>
    %cst_71 = arith.constant dense<0.000000e+00> : vector<8x8xf32>
    %86 = tpu.matmul %85, %83, %cst_71 {dimension_numbers = #tpu.dot_dimension_numbers<[1], [0], [0], [1], [0, 0, 1, 1], [], []>} : vector<8x4xbf16>, vector<4x8xbf16>, vector<8x8xf32> -> vector<8x8xf32>
    %87 = arith.addf %79, %86 : vector<8x8xf32>
    %c1_i32_72 = arith.constant 1 : i32
    %88 = arith.addi %6, %c1_i32_72 : i32
    %c0_73 = arith.constant 0 : index
    %89 = arith.index_cast %88 : i32 to index
    %c0_74 = arith.constant 0 : index
    %c1_75 = arith.constant 1 : index
    %90 = vector.load %arg3[%c0_73, %89, %c0_74, %c1_75] : memref<1x9x16x9xbf16, #tpu.memory_space<vmem>>, vector<1x1x4x8xbf16>
    %91 = vector.shape_cast %90 : vector<1x1x4x8xbf16> to vector<4x8xbf16>
    %c10 = arith.constant 10 : index
    %c0_76 = arith.constant 0 : index
    %c0_77 = arith.constant 0 : index
    %92 = vector.load %arg2[%c10, %c0_76, %c0_77] : memref<16x8x4xbf16, #tpu.memory_space<vmem>>, vector<1x8x4xbf16>
    %93 = vector.shape_cast %92 : vector<1x8x4xbf16> to vector<8x4xbf16>
    %cst_78 = arith.constant dense<0.000000e+00> : vector<8x8xf32>
    %94 = tpu.matmul %93, %91, %cst_78 {dimension_numbers = #tpu.dot_dimension_numbers<[1], [0], [0], [1], [0, 0, 1, 1], [], []>} : vector<8x4xbf16>, vector<4x8xbf16>, vector<8x8xf32> -> vector<8x8xf32>
    %95 = arith.addf %87, %94 : vector<8x8xf32>
    %c1_i32_79 = arith.constant 1 : i32
    %96 = arith.addi %6, %c1_i32_79 : i32
    %c0_80 = arith.constant 0 : index
    %97 = arith.index_cast %96 : i32 to index
    %c4_81 = arith.constant 4 : index
    %c1_82 = arith.constant 1 : index
    %98 = vector.load %arg3[%c0_80, %97, %c4_81, %c1_82] : memref<1x9x16x9xbf16, #tpu.memory_space<vmem>>, vector<1x1x4x8xbf16>
    %99 = vector.shape_cast %98 : vector<1x1x4x8xbf16> to vector<4x8xbf16>
    %c11 = arith.constant 11 : index
    %c0_83 = arith.constant 0 : index
    %c0_84 = arith.constant 0 : index
    %100 = vector.load %arg2[%c11, %c0_83, %c0_84] : memref<16x8x4xbf16, #tpu.memory_space<vmem>>, vector<1x8x4xbf16>
    %101 = vector.shape_cast %100 : vector<1x8x4xbf16> to vector<8x4xbf16>
    %cst_85 = arith.constant dense<0.000000e+00> : vector<8x8xf32>
    %102 = tpu.matmul %101, %99, %cst_85 {dimension_numbers = #tpu.dot_dimension_numbers<[1], [0], [0], [1], [0, 0, 1, 1], [], []>} : vector<8x4xbf16>, vector<4x8xbf16>, vector<8x8xf32> -> vector<8x8xf32>
    %103 = arith.addf %95, %102 : vector<8x8xf32>
    %c1_i32_86 = arith.constant 1 : i32
    %104 = arith.addi %6, %c1_i32_86 : i32
    %c0_87 = arith.constant 0 : index
    %105 = arith.index_cast %104 : i32 to index
    %c8_88 = arith.constant 8 : index
    %c0_89 = arith.constant 0 : index
    %106 = vector.load %arg3[%c0_87, %105, %c8_88, %c0_89] : memref<1x9x16x9xbf16, #tpu.memory_space<vmem>>, vector<1x1x4x8xbf16>
    %107 = vector.shape_cast %106 : vector<1x1x4x8xbf16> to vector<4x8xbf16>
    %c12_90 = arith.constant 12 : index
    %c0_91 = arith.constant 0 : index
    %c0_92 = arith.constant 0 : index
    %108 = vector.load %arg2[%c12_90, %c0_91, %c0_92] : memref<16x8x4xbf16, #tpu.memory_space<vmem>>, vector<1x8x4xbf16>
    %109 = vector.shape_cast %108 : vector<1x8x4xbf16> to vector<8x4xbf16>
    %cst_93 = arith.constant dense<0.000000e+00> : vector<8x8xf32>
    %110 = tpu.matmul %109, %107, %cst_93 {dimension_numbers = #tpu.dot_dimension_numbers<[1], [0], [0], [1], [0, 0, 1, 1], [], []>} : vector<8x4xbf16>, vector<4x8xbf16>, vector<8x8xf32> -> vector<8x8xf32>
    %111 = arith.addf %103, %110 : vector<8x8xf32>
    %c1_i32_94 = arith.constant 1 : i32
    %112 = arith.addi %6, %c1_i32_94 : i32
    %c0_95 = arith.constant 0 : index
    %113 = arith.index_cast %112 : i32 to index
    %c12_96 = arith.constant 12 : index
    %c0_97 = arith.constant 0 : index
    %114 = vector.load %arg3[%c0_95, %113, %c12_96, %c0_97] : memref<1x9x16x9xbf16, #tpu.memory_space<vmem>>, vector<1x1x4x8xbf16>
    %115 = vector.shape_cast %114 : vector<1x1x4x8xbf16> to vector<4x8xbf16>
    %c13 = arith.constant 13 : index
    %c0_98 = arith.constant 0 : index
    %c0_99 = arith.constant 0 : index
    %116 = vector.load %arg2[%c13, %c0_98, %c0_99] : memref<16x8x4xbf16, #tpu.memory_space<vmem>>, vector<1x8x4xbf16>
    %117 = vector.shape_cast %116 : vector<1x8x4xbf16> to vector<8x4xbf16>
    %cst_100 = arith.constant dense<0.000000e+00> : vector<8x8xf32>
    %118 = tpu.matmul %117, %115, %cst_100 {dimension_numbers = #tpu.dot_dimension_numbers<[1], [0], [0], [1], [0, 0, 1, 1], [], []>} : vector<8x4xbf16>, vector<4x8xbf16>, vector<8x8xf32> -> vector<8x8xf32>
    %119 = arith.addf %111, %118 : vector<8x8xf32>
    %c1_i32_101 = arith.constant 1 : i32
    %120 = arith.addi %6, %c1_i32_101 : i32
    %c0_102 = arith.constant 0 : index
    %121 = arith.index_cast %120 : i32 to index
    %c8_103 = arith.constant 8 : index
    %c1_104 = arith.constant 1 : index
    %122 = vector.load %arg3[%c0_102, %121, %c8_103, %c1_104] : memref<1x9x16x9xbf16, #tpu.memory_space<vmem>>, vector<1x1x4x8xbf16>
    %123 = vector.shape_cast %122 : vector<1x1x4x8xbf16> to vector<4x8xbf16>
    %c14 = arith.constant 14 : index
    %c0_105 = arith.constant 0 : index
    %c0_106 = arith.constant 0 : index
    %124 = vector.load %arg2[%c14, %c0_105, %c0_106] : memref<16x8x4xbf16, #tpu.memory_space<vmem>>, vector<1x8x4xbf16>
    %125 = vector.shape_cast %124 : vector<1x8x4xbf16> to vector<8x4xbf16>
    %cst_107 = arith.constant dense<0.000000e+00> : vector<8x8xf32>
    %126 = tpu.matmul %125, %123, %cst_107 {dimension_numbers = #tpu.dot_dimension_numbers<[1], [0], [0], [1], [0, 0, 1, 1], [], []>} : vector<8x4xbf16>, vector<4x8xbf16>, vector<8x8xf32> -> vector<8x8xf32>
    %127 = arith.addf %119, %126 : vector<8x8xf32>
    %c1_i32_108 = arith.constant 1 : i32
    %128 = arith.addi %6, %c1_i32_108 : i32
    %c0_109 = arith.constant 0 : index
    %129 = arith.index_cast %128 : i32 to index
    %c12_110 = arith.constant 12 : index
    %c1_111 = arith.constant 1 : index
    %130 = vector.load %arg3[%c0_109, %129, %c12_110, %c1_111] : memref<1x9x16x9xbf16, #tpu.memory_space<vmem>>, vector<1x1x4x8xbf16>
    %131 = vector.shape_cast %130 : vector<1x1x4x8xbf16> to vector<4x8xbf16>
    %c15 = arith.constant 15 : index
    %c0_112 = arith.constant 0 : index
    %c0_113 = arith.constant 0 : index
    %132 = vector.load %arg2[%c15, %c0_112, %c0_113] : memref<16x8x4xbf16, #tpu.memory_space<vmem>>, vector<1x8x4xbf16>
    %133 = vector.shape_cast %132 : vector<1x8x4xbf16> to vector<8x4xbf16>
    %cst_114 = arith.constant dense<0.000000e+00> : vector<8x8xf32>
    %134 = tpu.matmul %133, %131, %cst_114 {dimension_numbers = #tpu.dot_dimension_numbers<[1], [0], [0], [1], [0, 0, 1, 1], [], []>} : vector<8x4xbf16>, vector<4x8xbf16>, vector<8x8xf32> -> vector<8x8xf32>
    %135 = arith.addf %127, %134 : vector<8x8xf32>
    %c8_i32_115 = arith.constant 8 : i32
    %136 = arith.cmpi slt, %6, %c8_i32_115 : i32
    %137 = arith.extui %136 : i1 to i32
    %138 = arith.sitofp %137 : i32 to f32
    %cst_116 = arith.constant dense<0.000000e+00> : vector<8xf32>
    %139 = vector.multi_reduction <add>, %135, %cst_116 [1] : vector<8x8xf32> to vector<8xf32>
    %140 = vector.shape_cast %139 : vector<8xf32> to vector<8x1xf32>
    %141 = vector.broadcast %138 : f32 to vector<8x1xf32>
    %142 = arith.mulf %141, %140 : vector<8x1xf32>
    %143 = arith.addf %4, %142 : vector<8x1xf32>
    %144 = arith.mulf %135, %135 : vector<8x8xf32>
    %cst_117 = arith.constant dense<0.000000e+00> : vector<8xf32>
    %145 = vector.multi_reduction <add>, %144, %cst_117 [1] : vector<8x8xf32> to vector<8xf32>
    %146 = vector.shape_cast %145 : vector<8xf32> to vector<8x1xf32>
    %147 = vector.broadcast %138 : f32 to vector<8x1xf32>
    %148 = arith.mulf %147, %146 : vector<8x1xf32>
    %149 = arith.addf %5, %148 : vector<8x1xf32>
    %c1_i32_118 = arith.constant 1 : i32
    %150 = arith.addi %3, %c1_i32_118 : i32
    %cst_119 = arith.constant 0.000000e+00 : f32
    %151 = vector.broadcast %cst_119 : f32 to vector<8x8xf32>
    %c0_i32_120 = arith.constant 0 : i32
    %152 = arith.addi %150, %c0_i32_120 : i32
    %c0_121 = arith.constant 0 : index
    %153 = arith.index_cast %152 : i32 to index
    %c0_122 = arith.constant 0 : index
    %c0_123 = arith.constant 0 : index
    %154 = vector.load %arg3[%c0_121, %153, %c0_122, %c0_123] : memref<1x9x16x9xbf16, #tpu.memory_space<vmem>>, vector<1x1x4x8xbf16>
    %155 = vector.shape_cast %154 : vector<1x1x4x8xbf16> to vector<4x8xbf16>
    %c0_124 = arith.constant 0 : index
    %c0_125 = arith.constant 0 : index
    %c0_126 = arith.constant 0 : index
    %156 = vector.load %arg2[%c0_124, %c0_125, %c0_126] : memref<16x8x4xbf16, #tpu.memory_space<vmem>>, vector<1x8x4xbf16>
    %157 = vector.shape_cast %156 : vector<1x8x4xbf16> to vector<8x4xbf16>
    %cst_127 = arith.constant dense<0.000000e+00> : vector<8x8xf32>
    %158 = tpu.matmul %157, %155, %cst_127 {dimension_numbers = #tpu.dot_dimension_numbers<[1], [0], [0], [1], [0, 0, 1, 1], [], []>} : vector<8x4xbf16>, vector<4x8xbf16>, vector<8x8xf32> -> vector<8x8xf32>
    %159 = arith.addf %151, %158 : vector<8x8xf32>
    %c0_i32_128 = arith.constant 0 : i32
    %160 = arith.addi %150, %c0_i32_128 : i32
    %c0_129 = arith.constant 0 : index
    %161 = arith.index_cast %160 : i32 to index
    %c4_130 = arith.constant 4 : index
    %c0_131 = arith.constant 0 : index
    %162 = vector.load %arg3[%c0_129, %161, %c4_130, %c0_131] : memref<1x9x16x9xbf16, #tpu.memory_space<vmem>>, vector<1x1x4x8xbf16>
    %163 = vector.shape_cast %162 : vector<1x1x4x8xbf16> to vector<4x8xbf16>
    %c1_132 = arith.constant 1 : index
    %c0_133 = arith.constant 0 : index
    %c0_134 = arith.constant 0 : index
    %164 = vector.load %arg2[%c1_132, %c0_133, %c0_134] : memref<16x8x4xbf16, #tpu.memory_space<vmem>>, vector<1x8x4xbf16>
    %165 = vector.shape_cast %164 : vector<1x8x4xbf16> to vector<8x4xbf16>
    %cst_135 = arith.constant dense<0.000000e+00> : vector<8x8xf32>
    %166 = tpu.matmul %165, %163, %cst_135 {dimension_numbers = #tpu.dot_dimension_numbers<[1], [0], [0], [1], [0, 0, 1, 1], [], []>} : vector<8x4xbf16>, vector<4x8xbf16>, vector<8x8xf32> -> vector<8x8xf32>
    %167 = arith.addf %159, %166 : vector<8x8xf32>
    %c0_i32_136 = arith.constant 0 : i32
    %168 = arith.addi %150, %c0_i32_136 : i32
    %c0_137 = arith.constant 0 : index
    %169 = arith.index_cast %168 : i32 to index
    %c0_138 = arith.constant 0 : index
    %c1_139 = arith.constant 1 : index
    %170 = vector.load %arg3[%c0_137, %169, %c0_138, %c1_139] : memref<1x9x16x9xbf16, #tpu.memory_space<vmem>>, vector<1x1x4x8xbf16>
    %171 = vector.shape_cast %170 : vector<1x1x4x8xbf16> to vector<4x8xbf16>
    %c2_140 = arith.constant 2 : index
    %c0_141 = arith.constant 0 : index
    %c0_142 = arith.constant 0 : index
    %172 = vector.load %arg2[%c2_140, %c0_141, %c0_142] : memref<16x8x4xbf16, #tpu.memory_space<vmem>>, vector<1x8x4xbf16>
    %173 = vector.shape_cast %172 : vector<1x8x4xbf16> to vector<8x4xbf16>
    %cst_143 = arith.constant dense<0.000000e+00> : vector<8x8xf32>
    %174 = tpu.matmul %173, %171, %cst_143 {dimension_numbers = #tpu.dot_dimension_numbers<[1], [0], [0], [1], [0, 0, 1, 1], [], []>} : vector<8x4xbf16>, vector<4x8xbf16>, vector<8x8xf32> -> vector<8x8xf32>
    %175 = arith.addf %167, %174 : vector<8x8xf32>
    %c0_i32_144 = arith.constant 0 : i32
    %176 = arith.addi %150, %c0_i32_144 : i32
    %c0_145 = arith.constant 0 : index
    %177 = arith.index_cast %176 : i32 to index
    %c4_146 = arith.constant 4 : index
    %c1_147 = arith.constant 1 : index
    %178 = vector.load %arg3[%c0_145, %177, %c4_146, %c1_147] : memref<1x9x16x9xbf16, #tpu.memory_space<vmem>>, vector<1x1x4x8xbf16>
    %179 = vector.shape_cast %178 : vector<1x1x4x8xbf16> to vector<4x8xbf16>
    %c3_148 = arith.constant 3 : index
    %c0_149 = arith.constant 0 : index
    %c0_150 = arith.constant 0 : index
    %180 = vector.load %arg2[%c3_148, %c0_149, %c0_150] : memref<16x8x4xbf16, #tpu.memory_space<vmem>>, vector<1x8x4xbf16>
    %181 = vector.shape_cast %180 : vector<1x8x4xbf16> to vector<8x4xbf16>
    %cst_151 = arith.constant dense<0.000000e+00> : vector<8x8xf32>
    %182 = tpu.matmul %181, %179, %cst_151 {dimension_numbers = #tpu.dot_dimension_numbers<[1], [0], [0], [1], [0, 0, 1, 1], [], []>} : vector<8x4xbf16>, vector<4x8xbf16>, vector<8x8xf32> -> vector<8x8xf32>
    %183 = arith.addf %175, %182 : vector<8x8xf32>
    %c0_i32_152 = arith.constant 0 : i32
    %184 = arith.addi %150, %c0_i32_152 : i32
    %c0_153 = arith.constant 0 : index
    %185 = arith.index_cast %184 : i32 to index
    %c8_154 = arith.constant 8 : index
    %c0_155 = arith.constant 0 : index
    %186 = vector.load %arg3[%c0_153, %185, %c8_154, %c0_155] : memref<1x9x16x9xbf16, #tpu.memory_space<vmem>>, vector<1x1x4x8xbf16>
    %187 = vector.shape_cast %186 : vector<1x1x4x8xbf16> to vector<4x8xbf16>
    %c4_156 = arith.constant 4 : index
    %c0_157 = arith.constant 0 : index
    %c0_158 = arith.constant 0 : index
    %188 = vector.load %arg2[%c4_156, %c0_157, %c0_158] : memref<16x8x4xbf16, #tpu.memory_space<vmem>>, vector<1x8x4xbf16>
    %189 = vector.shape_cast %188 : vector<1x8x4xbf16> to vector<8x4xbf16>
    %cst_159 = arith.constant dense<0.000000e+00> : vector<8x8xf32>
    %190 = tpu.matmul %189, %187, %cst_159 {dimension_numbers = #tpu.dot_dimension_numbers<[1], [0], [0], [1], [0, 0, 1, 1], [], []>} : vector<8x4xbf16>, vector<4x8xbf16>, vector<8x8xf32> -> vector<8x8xf32>
    %191 = arith.addf %183, %190 : vector<8x8xf32>
    %c0_i32_160 = arith.constant 0 : i32
    %192 = arith.addi %150, %c0_i32_160 : i32
    %c0_161 = arith.constant 0 : index
    %193 = arith.index_cast %192 : i32 to index
    %c12_162 = arith.constant 12 : index
    %c0_163 = arith.constant 0 : index
    %194 = vector.load %arg3[%c0_161, %193, %c12_162, %c0_163] : memref<1x9x16x9xbf16, #tpu.memory_space<vmem>>, vector<1x1x4x8xbf16>
    %195 = vector.shape_cast %194 : vector<1x1x4x8xbf16> to vector<4x8xbf16>
    %c5_164 = arith.constant 5 : index
    %c0_165 = arith.constant 0 : index
    %c0_166 = arith.constant 0 : index
    %196 = vector.load %arg2[%c5_164, %c0_165, %c0_166] : memref<16x8x4xbf16, #tpu.memory_space<vmem>>, vector<1x8x4xbf16>
    %197 = vector.shape_cast %196 : vector<1x8x4xbf16> to vector<8x4xbf16>
    %cst_167 = arith.constant dense<0.000000e+00> : vector<8x8xf32>
    %198 = tpu.matmul %197, %195, %cst_167 {dimension_numbers = #tpu.dot_dimension_numbers<[1], [0], [0], [1], [0, 0, 1, 1], [], []>} : vector<8x4xbf16>, vector<4x8xbf16>, vector<8x8xf32> -> vector<8x8xf32>
    %199 = arith.addf %191, %198 : vector<8x8xf32>
    %c0_i32_168 = arith.constant 0 : i32
    %200 = arith.addi %150, %c0_i32_168 : i32
    %c0_169 = arith.constant 0 : index
    %201 = arith.index_cast %200 : i32 to index
    %c8_170 = arith.constant 8 : index
    %c1_171 = arith.constant 1 : index
    %202 = vector.load %arg3[%c0_169, %201, %c8_170, %c1_171] : memref<1x9x16x9xbf16, #tpu.memory_space<vmem>>, vector<1x1x4x8xbf16>
    %203 = vector.shape_cast %202 : vector<1x1x4x8xbf16> to vector<4x8xbf16>
    %c6_172 = arith.constant 6 : index
    %c0_173 = arith.constant 0 : index
    %c0_174 = arith.constant 0 : index
    %204 = vector.load %arg2[%c6_172, %c0_173, %c0_174] : memref<16x8x4xbf16, #tpu.memory_space<vmem>>, vector<1x8x4xbf16>
    %205 = vector.shape_cast %204 : vector<1x8x4xbf16> to vector<8x4xbf16>
    %cst_175 = arith.constant dense<0.000000e+00> : vector<8x8xf32>
    %206 = tpu.matmul %205, %203, %cst_175 {dimension_numbers = #tpu.dot_dimension_numbers<[1], [0], [0], [1], [0, 0, 1, 1], [], []>} : vector<8x4xbf16>, vector<4x8xbf16>, vector<8x8xf32> -> vector<8x8xf32>
    %207 = arith.addf %199, %206 : vector<8x8xf32>
    %c0_i32_176 = arith.constant 0 : i32
    %208 = arith.addi %150, %c0_i32_176 : i32
    %c0_177 = arith.constant 0 : index
    %209 = arith.index_cast %208 : i32 to index
    %c12_178 = arith.constant 12 : index
    %c1_179 = arith.constant 1 : index
    %210 = vector.load %arg3[%c0_177, %209, %c12_178, %c1_179] : memref<1x9x16x9xbf16, #tpu.memory_space<vmem>>, vector<1x1x4x8xbf16>
    %211 = vector.shape_cast %210 : vector<1x1x4x8xbf16> to vector<4x8xbf16>
    %c7_180 = arith.constant 7 : index
    %c0_181 = arith.constant 0 : index
    %c0_182 = arith.constant 0 : index
    %212 = vector.load %arg2[%c7_180, %c0_181, %c0_182] : memref<16x8x4xbf16, #tpu.memory_space<vmem>>, vector<1x8x4xbf16>
    %213 = vector.shape_cast %212 : vector<1x8x4xbf16> to vector<8x4xbf16>
    %cst_183 = arith.constant dense<0.000000e+00> : vector<8x8xf32>
    %214 = tpu.matmul %213, %211, %cst_183 {dimension_numbers = #tpu.dot_dimension_numbers<[1], [0], [0], [1], [0, 0, 1, 1], [], []>} : vector<8x4xbf16>, vector<4x8xbf16>, vector<8x8xf32> -> vector<8x8xf32>
    %215 = arith.addf %207, %214 : vector<8x8xf32>
    %c1_i32_184 = arith.constant 1 : i32
    %216 = arith.addi %150, %c1_i32_184 : i32
    %c0_185 = arith.constant 0 : index
    %217 = arith.index_cast %216 : i32 to index
    %c0_186 = arith.constant 0 : index
    %c0_187 = arith.constant 0 : index
    %218 = vector.load %arg3[%c0_185, %217, %c0_186, %c0_187] : memref<1x9x16x9xbf16, #tpu.memory_space<vmem>>, vector<1x1x4x8xbf16>
    %219 = vector.shape_cast %218 : vector<1x1x4x8xbf16> to vector<4x8xbf16>
    %c8_188 = arith.constant 8 : index
    %c0_189 = arith.constant 0 : index
    %c0_190 = arith.constant 0 : index
    %220 = vector.load %arg2[%c8_188, %c0_189, %c0_190] : memref<16x8x4xbf16, #tpu.memory_space<vmem>>, vector<1x8x4xbf16>
    %221 = vector.shape_cast %220 : vector<1x8x4xbf16> to vector<8x4xbf16>
    %cst_191 = arith.constant dense<0.000000e+00> : vector<8x8xf32>
    %222 = tpu.matmul %221, %219, %cst_191 {dimension_numbers = #tpu.dot_dimension_numbers<[1], [0], [0], [1], [0, 0, 1, 1], [], []>} : vector<8x4xbf16>, vector<4x8xbf16>, vector<8x8xf32> -> vector<8x8xf32>
    %223 = arith.addf %215, %222 : vector<8x8xf32>
    %c1_i32_192 = arith.constant 1 : i32
    %224 = arith.addi %150, %c1_i32_192 : i32
    %c0_193 = arith.constant 0 : index
    %225 = arith.index_cast %224 : i32 to index
    %c4_194 = arith.constant 4 : index
    %c0_195 = arith.constant 0 : index
    %226 = vector.load %arg3[%c0_193, %225, %c4_194, %c0_195] : memref<1x9x16x9xbf16, #tpu.memory_space<vmem>>, vector<1x1x4x8xbf16>
    %227 = vector.shape_cast %226 : vector<1x1x4x8xbf16> to vector<4x8xbf16>
    %c9_196 = arith.constant 9 : index
    %c0_197 = arith.constant 0 : index
    %c0_198 = arith.constant 0 : index
    %228 = vector.load %arg2[%c9_196, %c0_197, %c0_198] : memref<16x8x4xbf16, #tpu.memory_space<vmem>>, vector<1x8x4xbf16>
    %229 = vector.shape_cast %228 : vector<1x8x4xbf16> to vector<8x4xbf16>
    %cst_199 = arith.constant dense<0.000000e+00> : vector<8x8xf32>
    %230 = tpu.matmul %229, %227, %cst_199 {dimension_numbers = #tpu.dot_dimension_numbers<[1], [0], [0], [1], [0, 0, 1, 1], [], []>} : vector<8x4xbf16>, vector<4x8xbf16>, vector<8x8xf32> -> vector<8x8xf32>
    %231 = arith.addf %223, %230 : vector<8x8xf32>
    %c1_i32_200 = arith.constant 1 : i32
    %232 = arith.addi %150, %c1_i32_200 : i32
    %c0_201 = arith.constant 0 : index
    %233 = arith.index_cast %232 : i32 to index
    %c0_202 = arith.constant 0 : index
    %c1_203 = arith.constant 1 : index
    %234 = vector.load %arg3[%c0_201, %233, %c0_202, %c1_203] : memref<1x9x16x9xbf16, #tpu.memory_space<vmem>>, vector<1x1x4x8xbf16>
    %235 = vector.shape_cast %234 : vector<1x1x4x8xbf16> to vector<4x8xbf16>
    %c10_204 = arith.constant 10 : index
    %c0_205 = arith.constant 0 : index
    %c0_206 = arith.constant 0 : index
    %236 = vector.load %arg2[%c10_204, %c0_205, %c0_206] : memref<16x8x4xbf16, #tpu.memory_space<vmem>>, vector<1x8x4xbf16>
    %237 = vector.shape_cast %236 : vector<1x8x4xbf16> to vector<8x4xbf16>
    %cst_207 = arith.constant dense<0.000000e+00> : vector<8x8xf32>
    %238 = tpu.matmul %237, %235, %cst_207 {dimension_numbers = #tpu.dot_dimension_numbers<[1], [0], [0], [1], [0, 0, 1, 1], [], []>} : vector<8x4xbf16>, vector<4x8xbf16>, vector<8x8xf32> -> vector<8x8xf32>
    %239 = arith.addf %231, %238 : vector<8x8xf32>
    %c1_i32_208 = arith.constant 1 : i32
    %240 = arith.addi %150, %c1_i32_208 : i32
    %c0_209 = arith.constant 0 : index
    %241 = arith.index_cast %240 : i32 to index
    %c4_210 = arith.constant 4 : index
    %c1_211 = arith.constant 1 : index
    %242 = vector.load %arg3[%c0_209, %241, %c4_210, %c1_211] : memref<1x9x16x9xbf16, #tpu.memory_space<vmem>>, vector<1x1x4x8xbf16>
    %243 = vector.shape_cast %242 : vector<1x1x4x8xbf16> to vector<4x8xbf16>
    %c11_212 = arith.constant 11 : index
    %c0_213 = arith.constant 0 : index
    %c0_214 = arith.constant 0 : index
    %244 = vector.load %arg2[%c11_212, %c0_213, %c0_214] : memref<16x8x4xbf16, #tpu.memory_space<vmem>>, vector<1x8x4xbf16>
    %245 = vector.shape_cast %244 : vector<1x8x4xbf16> to vector<8x4xbf16>
    %cst_215 = arith.constant dense<0.000000e+00> : vector<8x8xf32>
    %246 = tpu.matmul %245, %243, %cst_215 {dimension_numbers = #tpu.dot_dimension_numbers<[1], [0], [0], [1], [0, 0, 1, 1], [], []>} : vector<8x4xbf16>, vector<4x8xbf16>, vector<8x8xf32> -> vector<8x8xf32>
    %247 = arith.addf %239, %246 : vector<8x8xf32>
    %c1_i32_216 = arith.constant 1 : i32
    %248 = arith.addi %150, %c1_i32_216 : i32
    %c0_217 = arith.constant 0 : index
    %249 = arith.index_cast %248 : i32 to index
    %c8_218 = arith.constant 8 : index
    %c0_219 = arith.constant 0 : index
    %250 = vector.load %arg3[%c0_217, %249, %c8_218, %c0_219] : memref<1x9x16x9xbf16, #tpu.memory_space<vmem>>, vector<1x1x4x8xbf16>
    %251 = vector.shape_cast %250 : vector<1x1x4x8xbf16> to vector<4x8xbf16>
    %c12_220 = arith.constant 12 : index
    %c0_221 = arith.constant 0 : index
    %c0_222 = arith.constant 0 : index
    %252 = vector.load %arg2[%c12_220, %c0_221, %c0_222] : memref<16x8x4xbf16, #tpu.memory_space<vmem>>, vector<1x8x4xbf16>
    %253 = vector.shape_cast %252 : vector<1x8x4xbf16> to vector<8x4xbf16>
    %cst_223 = arith.constant dense<0.000000e+00> : vector<8x8xf32>
    %254 = tpu.matmul %253, %251, %cst_223 {dimension_numbers = #tpu.dot_dimension_numbers<[1], [0], [0], [1], [0, 0, 1, 1], [], []>} : vector<8x4xbf16>, vector<4x8xbf16>, vector<8x8xf32> -> vector<8x8xf32>
    %255 = arith.addf %247, %254 : vector<8x8xf32>
    %c1_i32_224 = arith.constant 1 : i32
    %256 = arith.addi %150, %c1_i32_224 : i32
    %c0_225 = arith.constant 0 : index
    %257 = arith.index_cast %256 : i32 to index
    %c12_226 = arith.constant 12 : index
    %c0_227 = arith.constant 0 : index
    %258 = vector.load %arg3[%c0_225, %257, %c12_226, %c0_227] : memref<1x9x16x9xbf16, #tpu.memory_space<vmem>>, vector<1x1x4x8xbf16>
    %259 = vector.shape_cast %258 : vector<1x1x4x8xbf16> to vector<4x8xbf16>
    %c13_228 = arith.constant 13 : index
    %c0_229 = arith.constant 0 : index
    %c0_230 = arith.constant 0 : index
    %260 = vector.load %arg2[%c13_228, %c0_229, %c0_230] : memref<16x8x4xbf16, #tpu.memory_space<vmem>>, vector<1x8x4xbf16>
    %261 = vector.shape_cast %260 : vector<1x8x4xbf16> to vector<8x4xbf16>
    %cst_231 = arith.constant dense<0.000000e+00> : vector<8x8xf32>
    %262 = tpu.matmul %261, %259, %cst_231 {dimension_numbers = #tpu.dot_dimension_numbers<[1], [0], [0], [1], [0, 0, 1, 1], [], []>} : vector<8x4xbf16>, vector<4x8xbf16>, vector<8x8xf32> -> vector<8x8xf32>
    %263 = arith.addf %255, %262 : vector<8x8xf32>
    %c1_i32_232 = arith.constant 1 : i32
    %264 = arith.addi %150, %c1_i32_232 : i32
    %c0_233 = arith.constant 0 : index
    %265 = arith.index_cast %264 : i32 to index
    %c8_234 = arith.constant 8 : index
    %c1_235 = arith.constant 1 : index
    %266 = vector.load %arg3[%c0_233, %265, %c8_234, %c1_235] : memref<1x9x16x9xbf16, #tpu.memory_space<vmem>>, vector<1x1x4x8xbf16>
    %267 = vector.shape_cast %266 : vector<1x1x4x8xbf16> to vector<4x8xbf16>
    %c14_236 = arith.constant 14 : index
    %c0_237 = arith.constant 0 : index
    %c0_238 = arith.constant 0 : index
    %268 = vector.load %arg2[%c14_236, %c0_237, %c0_238] : memref<16x8x4xbf16, #tpu.memory_space<vmem>>, vector<1x8x4xbf16>
    %269 = vector.shape_cast %268 : vector<1x8x4xbf16> to vector<8x4xbf16>
    %cst_239 = arith.constant dense<0.000000e+00> : vector<8x8xf32>
    %270 = tpu.matmul %269, %267, %cst_239 {dimension_numbers = #tpu.dot_dimension_numbers<[1], [0], [0], [1], [0, 0, 1, 1], [], []>} : vector<8x4xbf16>, vector<4x8xbf16>, vector<8x8xf32> -> vector<8x8xf32>
    %271 = arith.addf %263, %270 : vector<8x8xf32>
    %c1_i32_240 = arith.constant 1 : i32
    %272 = arith.addi %150, %c1_i32_240 : i32
    %c0_241 = arith.constant 0 : index
    %273 = arith.index_cast %272 : i32 to index
    %c12_242 = arith.constant 12 : index
    %c1_243 = arith.constant 1 : index
    %274 = vector.load %arg3[%c0_241, %273, %c12_242, %c1_243] : memref<1x9x16x9xbf16, #tpu.memory_space<vmem>>, vector<1x1x4x8xbf16>
    %275 = vector.shape_cast %274 : vector<1x1x4x8xbf16> to vector<4x8xbf16>
    %c15_244 = arith.constant 15 : index
    %c0_245 = arith.constant 0 : index
    %c0_246 = arith.constant 0 : index
    %276 = vector.load %arg2[%c15_244, %c0_245, %c0_246] : memref<16x8x4xbf16, #tpu.memory_space<vmem>>, vector<1x8x4xbf16>
    %277 = vector.shape_cast %276 : vector<1x8x4xbf16> to vector<8x4xbf16>
    %cst_247 = arith.constant dense<0.000000e+00> : vector<8x8xf32>
    %278 = tpu.matmul %277, %275, %cst_247 {dimension_numbers = #tpu.dot_dimension_numbers<[1], [0], [0], [1], [0, 0, 1, 1], [], []>} : vector<8x4xbf16>, vector<4x8xbf16>, vector<8x8xf32> -> vector<8x8xf32>
    %279 = arith.addf %271, %278 : vector<8x8xf32>
    %c8_i32_248 = arith.constant 8 : i32
    %280 = arith.cmpi slt, %150, %c8_i32_248 : i32
    %281 = arith.extui %280 : i1 to i32
    %282 = arith.sitofp %281 : i32 to f32
    %cst_249 = arith.constant dense<0.000000e+00> : vector<8xf32>
    %283 = vector.multi_reduction <add>, %279, %cst_249 [1] : vector<8x8xf32> to vector<8xf32>
    %284 = vector.shape_cast %283 : vector<8xf32> to vector<8x1xf32>
    %285 = vector.broadcast %282 : f32 to vector<8x1xf32>
    %286 = arith.mulf %285, %284 : vector<8x1xf32>
    %287 = arith.addf %143, %286 : vector<8x1xf32>
    %288 = arith.mulf %279, %279 : vector<8x8xf32>
    %cst_250 = arith.constant dense<0.000000e+00> : vector<8xf32>
    %289 = vector.multi_reduction <add>, %288, %cst_250 [1] : vector<8x8xf32> to vector<8xf32>
    %290 = vector.shape_cast %289 : vector<8xf32> to vector<8x1xf32>
    %291 = vector.broadcast %282 : f32 to vector<8x1xf32>
    %292 = arith.mulf %291, %290 : vector<8x1xf32>
    %293 = arith.addf %149, %292 : vector<8x1xf32>
    %c2_i32 = arith.constant 2 : i32
    %294 = arith.addi %3, %c2_i32 : i32
    %cst_251 = arith.constant 0.000000e+00 : f32
    %295 = vector.broadcast %cst_251 : f32 to vector<8x8xf32>
    %c0_i32_252 = arith.constant 0 : i32
    %296 = arith.addi %294, %c0_i32_252 : i32
    %c0_253 = arith.constant 0 : index
    %297 = arith.index_cast %296 : i32 to index
    %c0_254 = arith.constant 0 : index
    %c0_255 = arith.constant 0 : index
    %298 = vector.load %arg3[%c0_253, %297, %c0_254, %c0_255] : memref<1x9x16x9xbf16, #tpu.memory_space<vmem>>, vector<1x1x4x8xbf16>
    %299 = vector.shape_cast %298 : vector<1x1x4x8xbf16> to vector<4x8xbf16>
    %c0_256 = arith.constant 0 : index
    %c0_257 = arith.constant 0 : index
    %c0_258 = arith.constant 0 : index
    %300 = vector.load %arg2[%c0_256, %c0_257, %c0_258] : memref<16x8x4xbf16, #tpu.memory_space<vmem>>, vector<1x8x4xbf16>
    %301 = vector.shape_cast %300 : vector<1x8x4xbf16> to vector<8x4xbf16>
    %cst_259 = arith.constant dense<0.000000e+00> : vector<8x8xf32>
    %302 = tpu.matmul %301, %299, %cst_259 {dimension_numbers = #tpu.dot_dimension_numbers<[1], [0], [0], [1], [0, 0, 1, 1], [], []>} : vector<8x4xbf16>, vector<4x8xbf16>, vector<8x8xf32> -> vector<8x8xf32>
    %303 = arith.addf %295, %302 : vector<8x8xf32>
    %c0_i32_260 = arith.constant 0 : i32
    %304 = arith.addi %294, %c0_i32_260 : i32
    %c0_261 = arith.constant 0 : index
    %305 = arith.index_cast %304 : i32 to index
    %c4_262 = arith.constant 4 : index
    %c0_263 = arith.constant 0 : index
    %306 = vector.load %arg3[%c0_261, %305, %c4_262, %c0_263] : memref<1x9x16x9xbf16, #tpu.memory_space<vmem>>, vector<1x1x4x8xbf16>
    %307 = vector.shape_cast %306 : vector<1x1x4x8xbf16> to vector<4x8xbf16>
    %c1_264 = arith.constant 1 : index
    %c0_265 = arith.constant 0 : index
    %c0_266 = arith.constant 0 : index
    %308 = vector.load %arg2[%c1_264, %c0_265, %c0_266] : memref<16x8x4xbf16, #tpu.memory_space<vmem>>, vector<1x8x4xbf16>
    %309 = vector.shape_cast %308 : vector<1x8x4xbf16> to vector<8x4xbf16>
    %cst_267 = arith.constant dense<0.000000e+00> : vector<8x8xf32>
    %310 = tpu.matmul %309, %307, %cst_267 {dimension_numbers = #tpu.dot_dimension_numbers<[1], [0], [0], [1], [0, 0, 1, 1], [], []>} : vector<8x4xbf16>, vector<4x8xbf16>, vector<8x8xf32> -> vector<8x8xf32>
    %311 = arith.addf %303, %310 : vector<8x8xf32>
    %c0_i32_268 = arith.constant 0 : i32
    %312 = arith.addi %294, %c0_i32_268 : i32
    %c0_269 = arith.constant 0 : index
    %313 = arith.index_cast %312 : i32 to index
    %c0_270 = arith.constant 0 : index
    %c1_271 = arith.constant 1 : index
    %314 = vector.load %arg3[%c0_269, %313, %c0_270, %c1_271] : memref<1x9x16x9xbf16, #tpu.memory_space<vmem>>, vector<1x1x4x8xbf16>
    %315 = vector.shape_cast %314 : vector<1x1x4x8xbf16> to vector<4x8xbf16>
    %c2_272 = arith.constant 2 : index
    %c0_273 = arith.constant 0 : index
    %c0_274 = arith.constant 0 : index
    %316 = vector.load %arg2[%c2_272, %c0_273, %c0_274] : memref<16x8x4xbf16, #tpu.memory_space<vmem>>, vector<1x8x4xbf16>
    %317 = vector.shape_cast %316 : vector<1x8x4xbf16> to vector<8x4xbf16>
    %cst_275 = arith.constant dense<0.000000e+00> : vector<8x8xf32>
    %318 = tpu.matmul %317, %315, %cst_275 {dimension_numbers = #tpu.dot_dimension_numbers<[1], [0], [0], [1], [0, 0, 1, 1], [], []>} : vector<8x4xbf16>, vector<4x8xbf16>, vector<8x8xf32> -> vector<8x8xf32>
    %319 = arith.addf %311, %318 : vector<8x8xf32>
    %c0_i32_276 = arith.constant 0 : i32
    %320 = arith.addi %294, %c0_i32_276 : i32
    %c0_277 = arith.constant 0 : index
    %321 = arith.index_cast %320 : i32 to index
    %c4_278 = arith.constant 4 : index
    %c1_279 = arith.constant 1 : index
    %322 = vector.load %arg3[%c0_277, %321, %c4_278, %c1_279] : memref<1x9x16x9xbf16, #tpu.memory_space<vmem>>, vector<1x1x4x8xbf16>
    %323 = vector.shape_cast %322 : vector<1x1x4x8xbf16> to vector<4x8xbf16>
    %c3_280 = arith.constant 3 : index
    %c0_281 = arith.constant 0 : index
    %c0_282 = arith.constant 0 : index
    %324 = vector.load %arg2[%c3_280, %c0_281, %c0_282] : memref<16x8x4xbf16, #tpu.memory_space<vmem>>, vector<1x8x4xbf16>
    %325 = vector.shape_cast %324 : vector<1x8x4xbf16> to vector<8x4xbf16>
    %cst_283 = arith.constant dense<0.000000e+00> : vector<8x8xf32>
    %326 = tpu.matmul %325, %323, %cst_283 {dimension_numbers = #tpu.dot_dimension_numbers<[1], [0], [0], [1], [0, 0, 1, 1], [], []>} : vector<8x4xbf16>, vector<4x8xbf16>, vector<8x8xf32> -> vector<8x8xf32>
    %327 = arith.addf %319, %326 : vector<8x8xf32>
    %c0_i32_284 = arith.constant 0 : i32
    %328 = arith.addi %294, %c0_i32_284 : i32
    %c0_285 = arith.constant 0 : index
    %329 = arith.index_cast %328 : i32 to index
    %c8_286 = arith.constant 8 : index
    %c0_287 = arith.constant 0 : index
    %330 = vector.load %arg3[%c0_285, %329, %c8_286, %c0_287] : memref<1x9x16x9xbf16, #tpu.memory_space<vmem>>, vector<1x1x4x8xbf16>
    %331 = vector.shape_cast %330 : vector<1x1x4x8xbf16> to vector<4x8xbf16>
    %c4_288 = arith.constant 4 : index
    %c0_289 = arith.constant 0 : index
    %c0_290 = arith.constant 0 : index
    %332 = vector.load %arg2[%c4_288, %c0_289, %c0_290] : memref<16x8x4xbf16, #tpu.memory_space<vmem>>, vector<1x8x4xbf16>
    %333 = vector.shape_cast %332 : vector<1x8x4xbf16> to vector<8x4xbf16>
    %cst_291 = arith.constant dense<0.000000e+00> : vector<8x8xf32>
    %334 = tpu.matmul %333, %331, %cst_291 {dimension_numbers = #tpu.dot_dimension_numbers<[1], [0], [0], [1], [0, 0, 1, 1], [], []>} : vector<8x4xbf16>, vector<4x8xbf16>, vector<8x8xf32> -> vector<8x8xf32>
    %335 = arith.addf %327, %334 : vector<8x8xf32>
    %c0_i32_292 = arith.constant 0 : i32
    %336 = arith.addi %294, %c0_i32_292 : i32
    %c0_293 = arith.constant 0 : index
    %337 = arith.index_cast %336 : i32 to index
    %c12_294 = arith.constant 12 : index
    %c0_295 = arith.constant 0 : index
    %338 = vector.load %arg3[%c0_293, %337, %c12_294, %c0_295] : memref<1x9x16x9xbf16, #tpu.memory_space<vmem>>, vector<1x1x4x8xbf16>
    %339 = vector.shape_cast %338 : vector<1x1x4x8xbf16> to vector<4x8xbf16>
    %c5_296 = arith.constant 5 : index
    %c0_297 = arith.constant 0 : index
    %c0_298 = arith.constant 0 : index
    %340 = vector.load %arg2[%c5_296, %c0_297, %c0_298] : memref<16x8x4xbf16, #tpu.memory_space<vmem>>, vector<1x8x4xbf16>
    %341 = vector.shape_cast %340 : vector<1x8x4xbf16> to vector<8x4xbf16>
    %cst_299 = arith.constant dense<0.000000e+00> : vector<8x8xf32>
    %342 = tpu.matmul %341, %339, %cst_299 {dimension_numbers = #tpu.dot_dimension_numbers<[1], [0], [0], [1], [0, 0, 1, 1], [], []>} : vector<8x4xbf16>, vector<4x8xbf16>, vector<8x8xf32> -> vector<8x8xf32>
    %343 = arith.addf %335, %342 : vector<8x8xf32>
    %c0_i32_300 = arith.constant 0 : i32
    %344 = arith.addi %294, %c0_i32_300 : i32
    %c0_301 = arith.constant 0 : index
    %345 = arith.index_cast %344 : i32 to index
    %c8_302 = arith.constant 8 : index
    %c1_303 = arith.constant 1 : index
    %346 = vector.load %arg3[%c0_301, %345, %c8_302, %c1_303] : memref<1x9x16x9xbf16, #tpu.memory_space<vmem>>, vector<1x1x4x8xbf16>
    %347 = vector.shape_cast %346 : vector<1x1x4x8xbf16> to vector<4x8xbf16>
    %c6_304 = arith.constant 6 : index
    %c0_305 = arith.constant 0 : index
    %c0_306 = arith.constant 0 : index
    %348 = vector.load %arg2[%c6_304, %c0_305, %c0_306] : memref<16x8x4xbf16, #tpu.memory_space<vmem>>, vector<1x8x4xbf16>
    %349 = vector.shape_cast %348 : vector<1x8x4xbf16> to vector<8x4xbf16>
    %cst_307 = arith.constant dense<0.000000e+00> : vector<8x8xf32>
    %350 = tpu.matmul %349, %347, %cst_307 {dimension_numbers = #tpu.dot_dimension_numbers<[1], [0], [0], [1], [0, 0, 1, 1], [], []>} : vector<8x4xbf16>, vector<4x8xbf16>, vector<8x8xf32> -> vector<8x8xf32>
    %351 = arith.addf %343, %350 : vector<8x8xf32>
    %c0_i32_308 = arith.constant 0 : i32
    %352 = arith.addi %294, %c0_i32_308 : i32
    %c0_309 = arith.constant 0 : index
    %353 = arith.index_cast %352 : i32 to index
    %c12_310 = arith.constant 12 : index
    %c1_311 = arith.constant 1 : index
    %354 = vector.load %arg3[%c0_309, %353, %c12_310, %c1_311] : memref<1x9x16x9xbf16, #tpu.memory_space<vmem>>, vector<1x1x4x8xbf16>
    %355 = vector.shape_cast %354 : vector<1x1x4x8xbf16> to vector<4x8xbf16>
    %c7_312 = arith.constant 7 : index
    %c0_313 = arith.constant 0 : index
    %c0_314 = arith.constant 0 : index
    %356 = vector.load %arg2[%c7_312, %c0_313, %c0_314] : memref<16x8x4xbf16, #tpu.memory_space<vmem>>, vector<1x8x4xbf16>
    %357 = vector.shape_cast %356 : vector<1x8x4xbf16> to vector<8x4xbf16>
    %cst_315 = arith.constant dense<0.000000e+00> : vector<8x8xf32>
    %358 = tpu.matmul %357, %355, %cst_315 {dimension_numbers = #tpu.dot_dimension_numbers<[1], [0], [0], [1], [0, 0, 1, 1], [], []>} : vector<8x4xbf16>, vector<4x8xbf16>, vector<8x8xf32> -> vector<8x8xf32>
    %359 = arith.addf %351, %358 : vector<8x8xf32>
    %c1_i32_316 = arith.constant 1 : i32
    %360 = arith.addi %294, %c1_i32_316 : i32
    %c0_317 = arith.constant 0 : index
    %361 = arith.index_cast %360 : i32 to index
    %c0_318 = arith.constant 0 : index
    %c0_319 = arith.constant 0 : index
    %362 = vector.load %arg3[%c0_317, %361, %c0_318, %c0_319] : memref<1x9x16x9xbf16, #tpu.memory_space<vmem>>, vector<1x1x4x8xbf16>
    %363 = vector.shape_cast %362 : vector<1x1x4x8xbf16> to vector<4x8xbf16>
    %c8_320 = arith.constant 8 : index
    %c0_321 = arith.constant 0 : index
    %c0_322 = arith.constant 0 : index
    %364 = vector.load %arg2[%c8_320, %c0_321, %c0_322] : memref<16x8x4xbf16, #tpu.memory_space<vmem>>, vector<1x8x4xbf16>
    %365 = vector.shape_cast %364 : vector<1x8x4xbf16> to vector<8x4xbf16>
    %cst_323 = arith.constant dense<0.000000e+00> : vector<8x8xf32>
    %366 = tpu.matmul %365, %363, %cst_323 {dimension_numbers = #tpu.dot_dimension_numbers<[1], [0], [0], [1], [0, 0, 1, 1], [], []>} : vector<8x4xbf16>, vector<4x8xbf16>, vector<8x8xf32> -> vector<8x8xf32>
    %367 = arith.addf %359, %366 : vector<8x8xf32>
    %c1_i32_324 = arith.constant 1 : i32
    %368 = arith.addi %294, %c1_i32_324 : i32
    %c0_325 = arith.constant 0 : index
    %369 = arith.index_cast %368 : i32 to index
    %c4_326 = arith.constant 4 : index
    %c0_327 = arith.constant 0 : index
    %370 = vector.load %arg3[%c0_325, %369, %c4_326, %c0_327] : memref<1x9x16x9xbf16, #tpu.memory_space<vmem>>, vector<1x1x4x8xbf16>
    %371 = vector.shape_cast %370 : vector<1x1x4x8xbf16> to vector<4x8xbf16>
    %c9_328 = arith.constant 9 : index
    %c0_329 = arith.constant 0 : index
    %c0_330 = arith.constant 0 : index
    %372 = vector.load %arg2[%c9_328, %c0_329, %c0_330] : memref<16x8x4xbf16, #tpu.memory_space<vmem>>, vector<1x8x4xbf16>
    %373 = vector.shape_cast %372 : vector<1x8x4xbf16> to vector<8x4xbf16>
    %cst_331 = arith.constant dense<0.000000e+00> : vector<8x8xf32>
    %374 = tpu.matmul %373, %371, %cst_331 {dimension_numbers = #tpu.dot_dimension_numbers<[1], [0], [0], [1], [0, 0, 1, 1], [], []>} : vector<8x4xbf16>, vector<4x8xbf16>, vector<8x8xf32> -> vector<8x8xf32>
    %375 = arith.addf %367, %374 : vector<8x8xf32>
    %c1_i32_332 = arith.constant 1 : i32
    %376 = arith.addi %294, %c1_i32_332 : i32
    %c0_333 = arith.constant 0 : index
    %377 = arith.index_cast %376 : i32 to index
    %c0_334 = arith.constant 0 : index
    %c1_335 = arith.constant 1 : index
    %378 = vector.load %arg3[%c0_333, %377, %c0_334, %c1_335] : memref<1x9x16x9xbf16, #tpu.memory_space<vmem>>, vector<1x1x4x8xbf16>
    %379 = vector.shape_cast %378 : vector<1x1x4x8xbf16> to vector<4x8xbf16>
    %c10_336 = arith.constant 10 : index
    %c0_337 = arith.constant 0 : index
    %c0_338 = arith.constant 0 : index
    %380 = vector.load %arg2[%c10_336, %c0_337, %c0_338] : memref<16x8x4xbf16, #tpu.memory_space<vmem>>, vector<1x8x4xbf16>
    %381 = vector.shape_cast %380 : vector<1x8x4xbf16> to vector<8x4xbf16>
    %cst_339 = arith.constant dense<0.000000e+00> : vector<8x8xf32>
    %382 = tpu.matmul %381, %379, %cst_339 {dimension_numbers = #tpu.dot_dimension_numbers<[1], [0], [0], [1], [0, 0, 1, 1], [], []>} : vector<8x4xbf16>, vector<4x8xbf16>, vector<8x8xf32> -> vector<8x8xf32>
    %383 = arith.addf %375, %382 : vector<8x8xf32>
    %c1_i32_340 = arith.constant 1 : i32
    %384 = arith.addi %294, %c1_i32_340 : i32
    %c0_341 = arith.constant 0 : index
    %385 = arith.index_cast %384 : i32 to index
    %c4_342 = arith.constant 4 : index
    %c1_343 = arith.constant 1 : index
    %386 = vector.load %arg3[%c0_341, %385, %c4_342, %c1_343] : memref<1x9x16x9xbf16, #tpu.memory_space<vmem>>, vector<1x1x4x8xbf16>
    %387 = vector.shape_cast %386 : vector<1x1x4x8xbf16> to vector<4x8xbf16>
    %c11_344 = arith.constant 11 : index
    %c0_345 = arith.constant 0 : index
    %c0_346 = arith.constant 0 : index
    %388 = vector.load %arg2[%c11_344, %c0_345, %c0_346] : memref<16x8x4xbf16, #tpu.memory_space<vmem>>, vector<1x8x4xbf16>
    %389 = vector.shape_cast %388 : vector<1x8x4xbf16> to vector<8x4xbf16>
    %cst_347 = arith.constant dense<0.000000e+00> : vector<8x8xf32>
    %390 = tpu.matmul %389, %387, %cst_347 {dimension_numbers = #tpu.dot_dimension_numbers<[1], [0], [0], [1], [0, 0, 1, 1], [], []>} : vector<8x4xbf16>, vector<4x8xbf16>, vector<8x8xf32> -> vector<8x8xf32>
    %391 = arith.addf %383, %390 : vector<8x8xf32>
    %c1_i32_348 = arith.constant 1 : i32
    %392 = arith.addi %294, %c1_i32_348 : i32
    %c0_349 = arith.constant 0 : index
    %393 = arith.index_cast %392 : i32 to index
    %c8_350 = arith.constant 8 : index
    %c0_351 = arith.constant 0 : index
    %394 = vector.load %arg3[%c0_349, %393, %c8_350, %c0_351] : memref<1x9x16x9xbf16, #tpu.memory_space<vmem>>, vector<1x1x4x8xbf16>
    %395 = vector.shape_cast %394 : vector<1x1x4x8xbf16> to vector<4x8xbf16>
    %c12_352 = arith.constant 12 : index
    %c0_353 = arith.constant 0 : index
    %c0_354 = arith.constant 0 : index
    %396 = vector.load %arg2[%c12_352, %c0_353, %c0_354] : memref<16x8x4xbf16, #tpu.memory_space<vmem>>, vector<1x8x4xbf16>
    %397 = vector.shape_cast %396 : vector<1x8x4xbf16> to vector<8x4xbf16>
    %cst_355 = arith.constant dense<0.000000e+00> : vector<8x8xf32>
    %398 = tpu.matmul %397, %395, %cst_355 {dimension_numbers = #tpu.dot_dimension_numbers<[1], [0], [0], [1], [0, 0, 1, 1], [], []>} : vector<8x4xbf16>, vector<4x8xbf16>, vector<8x8xf32> -> vector<8x8xf32>
    %399 = arith.addf %391, %398 : vector<8x8xf32>
    %c1_i32_356 = arith.constant 1 : i32
    %400 = arith.addi %294, %c1_i32_356 : i32
    %c0_357 = arith.constant 0 : index
    %401 = arith.index_cast %400 : i32 to index
    %c12_358 = arith.constant 12 : index
    %c0_359 = arith.constant 0 : index
    %402 = vector.load %arg3[%c0_357, %401, %c12_358, %c0_359] : memref<1x9x16x9xbf16, #tpu.memory_space<vmem>>, vector<1x1x4x8xbf16>
    %403 = vector.shape_cast %402 : vector<1x1x4x8xbf16> to vector<4x8xbf16>
    %c13_360 = arith.constant 13 : index
    %c0_361 = arith.constant 0 : index
    %c0_362 = arith.constant 0 : index
    %404 = vector.load %arg2[%c13_360, %c0_361, %c0_362] : memref<16x8x4xbf16, #tpu.memory_space<vmem>>, vector<1x8x4xbf16>
    %405 = vector.shape_cast %404 : vector<1x8x4xbf16> to vector<8x4xbf16>
    %cst_363 = arith.constant dense<0.000000e+00> : vector<8x8xf32>
    %406 = tpu.matmul %405, %403, %cst_363 {dimension_numbers = #tpu.dot_dimension_numbers<[1], [0], [0], [1], [0, 0, 1, 1], [], []>} : vector<8x4xbf16>, vector<4x8xbf16>, vector<8x8xf32> -> vector<8x8xf32>
    %407 = arith.addf %399, %406 : vector<8x8xf32>
    %c1_i32_364 = arith.constant 1 : i32
    %408 = arith.addi %294, %c1_i32_364 : i32
    %c0_365 = arith.constant 0 : index
    %409 = arith.index_cast %408 : i32 to index
    %c8_366 = arith.constant 8 : index
    %c1_367 = arith.constant 1 : index
    %410 = vector.load %arg3[%c0_365, %409, %c8_366, %c1_367] : memref<1x9x16x9xbf16, #tpu.memory_space<vmem>>, vector<1x1x4x8xbf16>
    %411 = vector.shape_cast %410 : vector<1x1x4x8xbf16> to vector<4x8xbf16>
    %c14_368 = arith.constant 14 : index
    %c0_369 = arith.constant 0 : index
    %c0_370 = arith.constant 0 : index
    %412 = vector.load %arg2[%c14_368, %c0_369, %c0_370] : memref<16x8x4xbf16, #tpu.memory_space<vmem>>, vector<1x8x4xbf16>
    %413 = vector.shape_cast %412 : vector<1x8x4xbf16> to vector<8x4xbf16>
    %cst_371 = arith.constant dense<0.000000e+00> : vector<8x8xf32>
    %414 = tpu.matmul %413, %411, %cst_371 {dimension_numbers = #tpu.dot_dimension_numbers<[1], [0], [0], [1], [0, 0, 1, 1], [], []>} : vector<8x4xbf16>, vector<4x8xbf16>, vector<8x8xf32> -> vector<8x8xf32>
    %415 = arith.addf %407, %414 : vector<8x8xf32>
    %c1_i32_372 = arith.constant 1 : i32
    %416 = arith.addi %294, %c1_i32_372 : i32
    %c0_373 = arith.constant 0 : index
    %417 = arith.index_cast %416 : i32 to index
    %c12_374 = arith.constant 12 : index
    %c1_375 = arith.constant 1 : index
    %418 = vector.load %arg3[%c0_373, %417, %c12_374, %c1_375] : memref<1x9x16x9xbf16, #tpu.memory_space<vmem>>, vector<1x1x4x8xbf16>
    %419 = vector.shape_cast %418 : vector<1x1x4x8xbf16> to vector<4x8xbf16>
    %c15_376 = arith.constant 15 : index
    %c0_377 = arith.constant 0 : index
    %c0_378 = arith.constant 0 : index
    %420 = vector.load %arg2[%c15_376, %c0_377, %c0_378] : memref<16x8x4xbf16, #tpu.memory_space<vmem>>, vector<1x8x4xbf16>
    %421 = vector.shape_cast %420 : vector<1x8x4xbf16> to vector<8x4xbf16>
    %cst_379 = arith.constant dense<0.000000e+00> : vector<8x8xf32>
    %422 = tpu.matmul %421, %419, %cst_379 {dimension_numbers = #tpu.dot_dimension_numbers<[1], [0], [0], [1], [0, 0, 1, 1], [], []>} : vector<8x4xbf16>, vector<4x8xbf16>, vector<8x8xf32> -> vector<8x8xf32>
    %423 = arith.addf %415, %422 : vector<8x8xf32>
    %c8_i32_380 = arith.constant 8 : i32
    %424 = arith.cmpi slt, %294, %c8_i32_380 : i32
    %425 = arith.extui %424 : i1 to i32
    %426 = arith.sitofp %425 : i32 to f32
    %cst_381 = arith.constant dense<0.000000e+00> : vector<8xf32>
    %427 = vector.multi_reduction <add>, %423, %cst_381 [1] : vector<8x8xf32> to vector<8xf32>
    %428 = vector.shape_cast %427 : vector<8xf32> to vector<8x1xf32>
    %429 = vector.broadcast %426 : f32 to vector<8x1xf32>
    %430 = arith.mulf %429, %428 : vector<8x1xf32>
    %431 = arith.addf %287, %430 : vector<8x1xf32>
    %432 = arith.mulf %423, %423 : vector<8x8xf32>
    %cst_382 = arith.constant dense<0.000000e+00> : vector<8xf32>
    %433 = vector.multi_reduction <add>, %432, %cst_382 [1] : vector<8x8xf32> to vector<8xf32>
    %434 = vector.shape_cast %433 : vector<8xf32> to vector<8x1xf32>
    %435 = vector.broadcast %426 : f32 to vector<8x1xf32>
    %436 = arith.mulf %435, %434 : vector<8x1xf32>
    %437 = arith.addf %293, %436 : vector<8x1xf32>
    %c3_i32 = arith.constant 3 : i32
    %438 = arith.addi %3, %c3_i32 : i32
    %cst_383 = arith.constant 0.000000e+00 : f32
    %439 = vector.broadcast %cst_383 : f32 to vector<8x8xf32>
    %c0_i32_384 = arith.constant 0 : i32
    %440 = arith.addi %438, %c0_i32_384 : i32
    %c0_385 = arith.constant 0 : index
    %441 = arith.index_cast %440 : i32 to index
    %c0_386 = arith.constant 0 : index
    %c0_387 = arith.constant 0 : index
    %442 = vector.load %arg3[%c0_385, %441, %c0_386, %c0_387] : memref<1x9x16x9xbf16, #tpu.memory_space<vmem>>, vector<1x1x4x8xbf16>
    %443 = vector.shape_cast %442 : vector<1x1x4x8xbf16> to vector<4x8xbf16>
    %c0_388 = arith.constant 0 : index
    %c0_389 = arith.constant 0 : index
    %c0_390 = arith.constant 0 : index
    %444 = vector.load %arg2[%c0_388, %c0_389, %c0_390] : memref<16x8x4xbf16, #tpu.memory_space<vmem>>, vector<1x8x4xbf16>
    %445 = vector.shape_cast %444 : vector<1x8x4xbf16> to vector<8x4xbf16>
    %cst_391 = arith.constant dense<0.000000e+00> : vector<8x8xf32>
    %446 = tpu.matmul %445, %443, %cst_391 {dimension_numbers = #tpu.dot_dimension_numbers<[1], [0], [0], [1], [0, 0, 1, 1], [], []>} : vector<8x4xbf16>, vector<4x8xbf16>, vector<8x8xf32> -> vector<8x8xf32>
    %447 = arith.addf %439, %446 : vector<8x8xf32>
    %c0_i32_392 = arith.constant 0 : i32
    %448 = arith.addi %438, %c0_i32_392 : i32
    %c0_393 = arith.constant 0 : index
    %449 = arith.index_cast %448 : i32 to index
    %c4_394 = arith.constant 4 : index
    %c0_395 = arith.constant 0 : index
    %450 = vector.load %arg3[%c0_393, %449, %c4_394, %c0_395] : memref<1x9x16x9xbf16, #tpu.memory_space<vmem>>, vector<1x1x4x8xbf16>
    %451 = vector.shape_cast %450 : vector<1x1x4x8xbf16> to vector<4x8xbf16>
    %c1_396 = arith.constant 1 : index
    %c0_397 = arith.constant 0 : index
    %c0_398 = arith.constant 0 : index
    %452 = vector.load %arg2[%c1_396, %c0_397, %c0_398] : memref<16x8x4xbf16, #tpu.memory_space<vmem>>, vector<1x8x4xbf16>
    %453 = vector.shape_cast %452 : vector<1x8x4xbf16> to vector<8x4xbf16>
    %cst_399 = arith.constant dense<0.000000e+00> : vector<8x8xf32>
    %454 = tpu.matmul %453, %451, %cst_399 {dimension_numbers = #tpu.dot_dimension_numbers<[1], [0], [0], [1], [0, 0, 1, 1], [], []>} : vector<8x4xbf16>, vector<4x8xbf16>, vector<8x8xf32> -> vector<8x8xf32>
    %455 = arith.addf %447, %454 : vector<8x8xf32>
    %c0_i32_400 = arith.constant 0 : i32
    %456 = arith.addi %438, %c0_i32_400 : i32
    %c0_401 = arith.constant 0 : index
    %457 = arith.index_cast %456 : i32 to index
    %c0_402 = arith.constant 0 : index
    %c1_403 = arith.constant 1 : index
    %458 = vector.load %arg3[%c0_401, %457, %c0_402, %c1_403] : memref<1x9x16x9xbf16, #tpu.memory_space<vmem>>, vector<1x1x4x8xbf16>
    %459 = vector.shape_cast %458 : vector<1x1x4x8xbf16> to vector<4x8xbf16>
    %c2_404 = arith.constant 2 : index
    %c0_405 = arith.constant 0 : index
    %c0_406 = arith.constant 0 : index
    %460 = vector.load %arg2[%c2_404, %c0_405, %c0_406] : memref<16x8x4xbf16, #tpu.memory_space<vmem>>, vector<1x8x4xbf16>
    %461 = vector.shape_cast %460 : vector<1x8x4xbf16> to vector<8x4xbf16>
    %cst_407 = arith.constant dense<0.000000e+00> : vector<8x8xf32>
    %462 = tpu.matmul %461, %459, %cst_407 {dimension_numbers = #tpu.dot_dimension_numbers<[1], [0], [0], [1], [0, 0, 1, 1], [], []>} : vector<8x4xbf16>, vector<4x8xbf16>, vector<8x8xf32> -> vector<8x8xf32>
    %463 = arith.addf %455, %462 : vector<8x8xf32>
    %c0_i32_408 = arith.constant 0 : i32
    %464 = arith.addi %438, %c0_i32_408 : i32
    %c0_409 = arith.constant 0 : index
    %465 = arith.index_cast %464 : i32 to index
    %c4_410 = arith.constant 4 : index
    %c1_411 = arith.constant 1 : index
    %466 = vector.load %arg3[%c0_409, %465, %c4_410, %c1_411] : memref<1x9x16x9xbf16, #tpu.memory_space<vmem>>, vector<1x1x4x8xbf16>
    %467 = vector.shape_cast %466 : vector<1x1x4x8xbf16> to vector<4x8xbf16>
    %c3_412 = arith.constant 3 : index
    %c0_413 = arith.constant 0 : index
    %c0_414 = arith.constant 0 : index
    %468 = vector.load %arg2[%c3_412, %c0_413, %c0_414] : memref<16x8x4xbf16, #tpu.memory_space<vmem>>, vector<1x8x4xbf16>
    %469 = vector.shape_cast %468 : vector<1x8x4xbf16> to vector<8x4xbf16>
    %cst_415 = arith.constant dense<0.000000e+00> : vector<8x8xf32>
    %470 = tpu.matmul %469, %467, %cst_415 {dimension_numbers = #tpu.dot_dimension_numbers<[1], [0], [0], [1], [0, 0, 1, 1], [], []>} : vector<8x4xbf16>, vector<4x8xbf16>, vector<8x8xf32> -> vector<8x8xf32>
    %471 = arith.addf %463, %470 : vector<8x8xf32>
    %c0_i32_416 = arith.constant 0 : i32
    %472 = arith.addi %438, %c0_i32_416 : i32
    %c0_417 = arith.constant 0 : index
    %473 = arith.index_cast %472 : i32 to index
    %c8_418 = arith.constant 8 : index
    %c0_419 = arith.constant 0 : index
    %474 = vector.load %arg3[%c0_417, %473, %c8_418, %c0_419] : memref<1x9x16x9xbf16, #tpu.memory_space<vmem>>, vector<1x1x4x8xbf16>
    %475 = vector.shape_cast %474 : vector<1x1x4x8xbf16> to vector<4x8xbf16>
    %c4_420 = arith.constant 4 : index
    %c0_421 = arith.constant 0 : index
    %c0_422 = arith.constant 0 : index
    %476 = vector.load %arg2[%c4_420, %c0_421, %c0_422] : memref<16x8x4xbf16, #tpu.memory_space<vmem>>, vector<1x8x4xbf16>
    %477 = vector.shape_cast %476 : vector<1x8x4xbf16> to vector<8x4xbf16>
    %cst_423 = arith.constant dense<0.000000e+00> : vector<8x8xf32>
    %478 = tpu.matmul %477, %475, %cst_423 {dimension_numbers = #tpu.dot_dimension_numbers<[1], [0], [0], [1], [0, 0, 1, 1], [], []>} : vector<8x4xbf16>, vector<4x8xbf16>, vector<8x8xf32> -> vector<8x8xf32>
    %479 = arith.addf %471, %478 : vector<8x8xf32>
    %c0_i32_424 = arith.constant 0 : i32
    %480 = arith.addi %438, %c0_i32_424 : i32
    %c0_425 = arith.constant 0 : index
    %481 = arith.index_cast %480 : i32 to index
    %c12_426 = arith.constant 12 : index
    %c0_427 = arith.constant 0 : index
    %482 = vector.load %arg3[%c0_425, %481, %c12_426, %c0_427] : memref<1x9x16x9xbf16, #tpu.memory_space<vmem>>, vector<1x1x4x8xbf16>
    %483 = vector.shape_cast %482 : vector<1x1x4x8xbf16> to vector<4x8xbf16>
    %c5_428 = arith.constant 5 : index
    %c0_429 = arith.constant 0 : index
    %c0_430 = arith.constant 0 : index
    %484 = vector.load %arg2[%c5_428, %c0_429, %c0_430] : memref<16x8x4xbf16, #tpu.memory_space<vmem>>, vector<1x8x4xbf16>
    %485 = vector.shape_cast %484 : vector<1x8x4xbf16> to vector<8x4xbf16>
    %cst_431 = arith.constant dense<0.000000e+00> : vector<8x8xf32>
    %486 = tpu.matmul %485, %483, %cst_431 {dimension_numbers = #tpu.dot_dimension_numbers<[1], [0], [0], [1], [0, 0, 1, 1], [], []>} : vector<8x4xbf16>, vector<4x8xbf16>, vector<8x8xf32> -> vector<8x8xf32>
    %487 = arith.addf %479, %486 : vector<8x8xf32>
    %c0_i32_432 = arith.constant 0 : i32
    %488 = arith.addi %438, %c0_i32_432 : i32
    %c0_433 = arith.constant 0 : index
    %489 = arith.index_cast %488 : i32 to index
    %c8_434 = arith.constant 8 : index
    %c1_435 = arith.constant 1 : index
    %490 = vector.load %arg3[%c0_433, %489, %c8_434, %c1_435] : memref<1x9x16x9xbf16, #tpu.memory_space<vmem>>, vector<1x1x4x8xbf16>
    %491 = vector.shape_cast %490 : vector<1x1x4x8xbf16> to vector<4x8xbf16>
    %c6_436 = arith.constant 6 : index
    %c0_437 = arith.constant 0 : index
    %c0_438 = arith.constant 0 : index
    %492 = vector.load %arg2[%c6_436, %c0_437, %c0_438] : memref<16x8x4xbf16, #tpu.memory_space<vmem>>, vector<1x8x4xbf16>
    %493 = vector.shape_cast %492 : vector<1x8x4xbf16> to vector<8x4xbf16>
    %cst_439 = arith.constant dense<0.000000e+00> : vector<8x8xf32>
    %494 = tpu.matmul %493, %491, %cst_439 {dimension_numbers = #tpu.dot_dimension_numbers<[1], [0], [0], [1], [0, 0, 1, 1], [], []>} : vector<8x4xbf16>, vector<4x8xbf16>, vector<8x8xf32> -> vector<8x8xf32>
    %495 = arith.addf %487, %494 : vector<8x8xf32>
    %c0_i32_440 = arith.constant 0 : i32
    %496 = arith.addi %438, %c0_i32_440 : i32
    %c0_441 = arith.constant 0 : index
    %497 = arith.index_cast %496 : i32 to index
    %c12_442 = arith.constant 12 : index
    %c1_443 = arith.constant 1 : index
    %498 = vector.load %arg3[%c0_441, %497, %c12_442, %c1_443] : memref<1x9x16x9xbf16, #tpu.memory_space<vmem>>, vector<1x1x4x8xbf16>
    %499 = vector.shape_cast %498 : vector<1x1x4x8xbf16> to vector<4x8xbf16>
    %c7_444 = arith.constant 7 : index
    %c0_445 = arith.constant 0 : index
    %c0_446 = arith.constant 0 : index
    %500 = vector.load %arg2[%c7_444, %c0_445, %c0_446] : memref<16x8x4xbf16, #tpu.memory_space<vmem>>, vector<1x8x4xbf16>
    %501 = vector.shape_cast %500 : vector<1x8x4xbf16> to vector<8x4xbf16>
    %cst_447 = arith.constant dense<0.000000e+00> : vector<8x8xf32>
    %502 = tpu.matmul %501, %499, %cst_447 {dimension_numbers = #tpu.dot_dimension_numbers<[1], [0], [0], [1], [0, 0, 1, 1], [], []>} : vector<8x4xbf16>, vector<4x8xbf16>, vector<8x8xf32> -> vector<8x8xf32>
    %503 = arith.addf %495, %502 : vector<8x8xf32>
    %c1_i32_448 = arith.constant 1 : i32
    %504 = arith.addi %438, %c1_i32_448 : i32
    %c0_449 = arith.constant 0 : index
    %505 = arith.index_cast %504 : i32 to index
    %c0_450 = arith.constant 0 : index
    %c0_451 = arith.constant 0 : index
    %506 = vector.load %arg3[%c0_449, %505, %c0_450, %c0_451] : memref<1x9x16x9xbf16, #tpu.memory_space<vmem>>, vector<1x1x4x8xbf16>
    %507 = vector.shape_cast %506 : vector<1x1x4x8xbf16> to vector<4x8xbf16>
    %c8_452 = arith.constant 8 : index
    %c0_453 = arith.constant 0 : index
    %c0_454 = arith.constant 0 : index
    %508 = vector.load %arg2[%c8_452, %c0_453, %c0_454] : memref<16x8x4xbf16, #tpu.memory_space<vmem>>, vector<1x8x4xbf16>
    %509 = vector.shape_cast %508 : vector<1x8x4xbf16> to vector<8x4xbf16>
    %cst_455 = arith.constant dense<0.000000e+00> : vector<8x8xf32>
    %510 = tpu.matmul %509, %507, %cst_455 {dimension_numbers = #tpu.dot_dimension_numbers<[1], [0], [0], [1], [0, 0, 1, 1], [], []>} : vector<8x4xbf16>, vector<4x8xbf16>, vector<8x8xf32> -> vector<8x8xf32>
    %511 = arith.addf %503, %510 : vector<8x8xf32>
    %c1_i32_456 = arith.constant 1 : i32
    %512 = arith.addi %438, %c1_i32_456 : i32
    %c0_457 = arith.constant 0 : index
    %513 = arith.index_cast %512 : i32 to index
    %c4_458 = arith.constant 4 : index
    %c0_459 = arith.constant 0 : index
    %514 = vector.load %arg3[%c0_457, %513, %c4_458, %c0_459] : memref<1x9x16x9xbf16, #tpu.memory_space<vmem>>, vector<1x1x4x8xbf16>
    %515 = vector.shape_cast %514 : vector<1x1x4x8xbf16> to vector<4x8xbf16>
    %c9_460 = arith.constant 9 : index
    %c0_461 = arith.constant 0 : index
    %c0_462 = arith.constant 0 : index
    %516 = vector.load %arg2[%c9_460, %c0_461, %c0_462] : memref<16x8x4xbf16, #tpu.memory_space<vmem>>, vector<1x8x4xbf16>
    %517 = vector.shape_cast %516 : vector<1x8x4xbf16> to vector<8x4xbf16>
    %cst_463 = arith.constant dense<0.000000e+00> : vector<8x8xf32>
    %518 = tpu.matmul %517, %515, %cst_463 {dimension_numbers = #tpu.dot_dimension_numbers<[1], [0], [0], [1], [0, 0, 1, 1], [], []>} : vector<8x4xbf16>, vector<4x8xbf16>, vector<8x8xf32> -> vector<8x8xf32>
    %519 = arith.addf %511, %518 : vector<8x8xf32>
    %c1_i32_464 = arith.constant 1 : i32
    %520 = arith.addi %438, %c1_i32_464 : i32
    %c0_465 = arith.constant 0 : index
    %521 = arith.index_cast %520 : i32 to index
    %c0_466 = arith.constant 0 : index
    %c1_467 = arith.constant 1 : index
    %522 = vector.load %arg3[%c0_465, %521, %c0_466, %c1_467] : memref<1x9x16x9xbf16, #tpu.memory_space<vmem>>, vector<1x1x4x8xbf16>
    %523 = vector.shape_cast %522 : vector<1x1x4x8xbf16> to vector<4x8xbf16>
    %c10_468 = arith.constant 10 : index
    %c0_469 = arith.constant 0 : index
    %c0_470 = arith.constant 0 : index
    %524 = vector.load %arg2[%c10_468, %c0_469, %c0_470] : memref<16x8x4xbf16, #tpu.memory_space<vmem>>, vector<1x8x4xbf16>
    %525 = vector.shape_cast %524 : vector<1x8x4xbf16> to vector<8x4xbf16>
    %cst_471 = arith.constant dense<0.000000e+00> : vector<8x8xf32>
    %526 = tpu.matmul %525, %523, %cst_471 {dimension_numbers = #tpu.dot_dimension_numbers<[1], [0], [0], [1], [0, 0, 1, 1], [], []>} : vector<8x4xbf16>, vector<4x8xbf16>, vector<8x8xf32> -> vector<8x8xf32>
    %527 = arith.addf %519, %526 : vector<8x8xf32>
    %c1_i32_472 = arith.constant 1 : i32
    %528 = arith.addi %438, %c1_i32_472 : i32
    %c0_473 = arith.constant 0 : index
    %529 = arith.index_cast %528 : i32 to index
    %c4_474 = arith.constant 4 : index
    %c1_475 = arith.constant 1 : index
    %530 = vector.load %arg3[%c0_473, %529, %c4_474, %c1_475] : memref<1x9x16x9xbf16, #tpu.memory_space<vmem>>, vector<1x1x4x8xbf16>
    %531 = vector.shape_cast %530 : vector<1x1x4x8xbf16> to vector<4x8xbf16>
    %c11_476 = arith.constant 11 : index
    %c0_477 = arith.constant 0 : index
    %c0_478 = arith.constant 0 : index
    %532 = vector.load %arg2[%c11_476, %c0_477, %c0_478] : memref<16x8x4xbf16, #tpu.memory_space<vmem>>, vector<1x8x4xbf16>
    %533 = vector.shape_cast %532 : vector<1x8x4xbf16> to vector<8x4xbf16>
    %cst_479 = arith.constant dense<0.000000e+00> : vector<8x8xf32>
    %534 = tpu.matmul %533, %531, %cst_479 {dimension_numbers = #tpu.dot_dimension_numbers<[1], [0], [0], [1], [0, 0, 1, 1], [], []>} : vector<8x4xbf16>, vector<4x8xbf16>, vector<8x8xf32> -> vector<8x8xf32>
    %535 = arith.addf %527, %534 : vector<8x8xf32>
    %c1_i32_480 = arith.constant 1 : i32
    %536 = arith.addi %438, %c1_i32_480 : i32
    %c0_481 = arith.constant 0 : index
    %537 = arith.index_cast %536 : i32 to index
    %c8_482 = arith.constant 8 : index
    %c0_483 = arith.constant 0 : index
    %538 = vector.load %arg3[%c0_481, %537, %c8_482, %c0_483] : memref<1x9x16x9xbf16, #tpu.memory_space<vmem>>, vector<1x1x4x8xbf16>
    %539 = vector.shape_cast %538 : vector<1x1x4x8xbf16> to vector<4x8xbf16>
    %c12_484 = arith.constant 12 : index
    %c0_485 = arith.constant 0 : index
    %c0_486 = arith.constant 0 : index
    %540 = vector.load %arg2[%c12_484, %c0_485, %c0_486] : memref<16x8x4xbf16, #tpu.memory_space<vmem>>, vector<1x8x4xbf16>
    %541 = vector.shape_cast %540 : vector<1x8x4xbf16> to vector<8x4xbf16>
    %cst_487 = arith.constant dense<0.000000e+00> : vector<8x8xf32>
    %542 = tpu.matmul %541, %539, %cst_487 {dimension_numbers = #tpu.dot_dimension_numbers<[1], [0], [0], [1], [0, 0, 1, 1], [], []>} : vector<8x4xbf16>, vector<4x8xbf16>, vector<8x8xf32> -> vector<8x8xf32>
    %543 = arith.addf %535, %542 : vector<8x8xf32>
    %c1_i32_488 = arith.constant 1 : i32
    %544 = arith.addi %438, %c1_i32_488 : i32
    %c0_489 = arith.constant 0 : index
    %545 = arith.index_cast %544 : i32 to index
    %c12_490 = arith.constant 12 : index
    %c0_491 = arith.constant 0 : index
    %546 = vector.load %arg3[%c0_489, %545, %c12_490, %c0_491] : memref<1x9x16x9xbf16, #tpu.memory_space<vmem>>, vector<1x1x4x8xbf16>
    %547 = vector.shape_cast %546 : vector<1x1x4x8xbf16> to vector<4x8xbf16>
    %c13_492 = arith.constant 13 : index
    %c0_493 = arith.constant 0 : index
    %c0_494 = arith.constant 0 : index
    %548 = vector.load %arg2[%c13_492, %c0_493, %c0_494] : memref<16x8x4xbf16, #tpu.memory_space<vmem>>, vector<1x8x4xbf16>
    %549 = vector.shape_cast %548 : vector<1x8x4xbf16> to vector<8x4xbf16>
    %cst_495 = arith.constant dense<0.000000e+00> : vector<8x8xf32>
    %550 = tpu.matmul %549, %547, %cst_495 {dimension_numbers = #tpu.dot_dimension_numbers<[1], [0], [0], [1], [0, 0, 1, 1], [], []>} : vector<8x4xbf16>, vector<4x8xbf16>, vector<8x8xf32> -> vector<8x8xf32>
    %551 = arith.addf %543, %550 : vector<8x8xf32>
    %c1_i32_496 = arith.constant 1 : i32
    %552 = arith.addi %438, %c1_i32_496 : i32
    %c0_497 = arith.constant 0 : index
    %553 = arith.index_cast %552 : i32 to index
    %c8_498 = arith.constant 8 : index
    %c1_499 = arith.constant 1 : index
    %554 = vector.load %arg3[%c0_497, %553, %c8_498, %c1_499] : memref<1x9x16x9xbf16, #tpu.memory_space<vmem>>, vector<1x1x4x8xbf16>
    %555 = vector.shape_cast %554 : vector<1x1x4x8xbf16> to vector<4x8xbf16>
    %c14_500 = arith.constant 14 : index
    %c0_501 = arith.constant 0 : index
    %c0_502 = arith.constant 0 : index
    %556 = vector.load %arg2[%c14_500, %c0_501, %c0_502] : memref<16x8x4xbf16, #tpu.memory_space<vmem>>, vector<1x8x4xbf16>
    %557 = vector.shape_cast %556 : vector<1x8x4xbf16> to vector<8x4xbf16>
    %cst_503 = arith.constant dense<0.000000e+00> : vector<8x8xf32>
    %558 = tpu.matmul %557, %555, %cst_503 {dimension_numbers = #tpu.dot_dimension_numbers<[1], [0], [0], [1], [0, 0, 1, 1], [], []>} : vector<8x4xbf16>, vector<4x8xbf16>, vector<8x8xf32> -> vector<8x8xf32>
    %559 = arith.addf %551, %558 : vector<8x8xf32>
    %c1_i32_504 = arith.constant 1 : i32
    %560 = arith.addi %438, %c1_i32_504 : i32
    %c0_505 = arith.constant 0 : index
    %561 = arith.index_cast %560 : i32 to index
    %c12_506 = arith.constant 12 : index
    %c1_507 = arith.constant 1 : index
    %562 = vector.load %arg3[%c0_505, %561, %c12_506, %c1_507] : memref<1x9x16x9xbf16, #tpu.memory_space<vmem>>, vector<1x1x4x8xbf16>
    %563 = vector.shape_cast %562 : vector<1x1x4x8xbf16> to vector<4x8xbf16>
    %c15_508 = arith.constant 15 : index
    %c0_509 = arith.constant 0 : index
    %c0_510 = arith.constant 0 : index
    %564 = vector.load %arg2[%c15_508, %c0_509, %c0_510] : memref<16x8x4xbf16, #tpu.memory_space<vmem>>, vector<1x8x4xbf16>
    %565 = vector.shape_cast %564 : vector<1x8x4xbf16> to vector<8x4xbf16>
    %cst_511 = arith.constant dense<0.000000e+00> : vector<8x8xf32>
    %566 = tpu.matmul %565, %563, %cst_511 {dimension_numbers = #tpu.dot_dimension_numbers<[1], [0], [0], [1], [0, 0, 1, 1], [], []>} : vector<8x4xbf16>, vector<4x8xbf16>, vector<8x8xf32> -> vector<8x8xf32>
    %567 = arith.addf %559, %566 : vector<8x8xf32>
    %c8_i32_512 = arith.constant 8 : i32
    %568 = arith.cmpi slt, %438, %c8_i32_512 : i32
    %569 = arith.extui %568 : i1 to i32
    %570 = arith.sitofp %569 : i32 to f32
    %cst_513 = arith.constant dense<0.000000e+00> : vector<8xf32>
    %571 = vector.multi_reduction <add>, %567, %cst_513 [1] : vector<8x8xf32> to vector<8xf32>
    %572 = vector.shape_cast %571 : vector<8xf32> to vector<8x1xf32>
    %573 = vector.broadcast %570 : f32 to vector<8x1xf32>
    %574 = arith.mulf %573, %572 : vector<8x1xf32>
    %575 = arith.addf %431, %574 : vector<8x1xf32>
    %576 = arith.mulf %567, %567 : vector<8x8xf32>
    %cst_514 = arith.constant dense<0.000000e+00> : vector<8xf32>
    %577 = vector.multi_reduction <add>, %576, %cst_514 [1] : vector<8x8xf32> to vector<8xf32>
    %578 = vector.shape_cast %577 : vector<8xf32> to vector<8x1xf32>
    %579 = vector.broadcast %570 : f32 to vector<8x1xf32>
    %580 = arith.mulf %579, %578 : vector<8x1xf32>
    %581 = arith.addf %437, %580 : vector<8x1xf32>
    %c4_i32 = arith.constant 4 : i32
    %582 = arith.addi %3, %c4_i32 : i32
    %cst_515 = arith.constant 0.000000e+00 : f32
    %583 = vector.broadcast %cst_515 : f32 to vector<8x8xf32>
    %c0_i32_516 = arith.constant 0 : i32
    %584 = arith.addi %582, %c0_i32_516 : i32
    %c0_517 = arith.constant 0 : index
    %585 = arith.index_cast %584 : i32 to index
    %c0_518 = arith.constant 0 : index
    %c0_519 = arith.constant 0 : index
    %586 = vector.load %arg3[%c0_517, %585, %c0_518, %c0_519] : memref<1x9x16x9xbf16, #tpu.memory_space<vmem>>, vector<1x1x4x8xbf16>
    %587 = vector.shape_cast %586 : vector<1x1x4x8xbf16> to vector<4x8xbf16>
    %c0_520 = arith.constant 0 : index
    %c0_521 = arith.constant 0 : index
    %c0_522 = arith.constant 0 : index
    %588 = vector.load %arg2[%c0_520, %c0_521, %c0_522] : memref<16x8x4xbf16, #tpu.memory_space<vmem>>, vector<1x8x4xbf16>
    %589 = vector.shape_cast %588 : vector<1x8x4xbf16> to vector<8x4xbf16>
    %cst_523 = arith.constant dense<0.000000e+00> : vector<8x8xf32>
    %590 = tpu.matmul %589, %587, %cst_523 {dimension_numbers = #tpu.dot_dimension_numbers<[1], [0], [0], [1], [0, 0, 1, 1], [], []>} : vector<8x4xbf16>, vector<4x8xbf16>, vector<8x8xf32> -> vector<8x8xf32>
    %591 = arith.addf %583, %590 : vector<8x8xf32>
    %c0_i32_524 = arith.constant 0 : i32
    %592 = arith.addi %582, %c0_i32_524 : i32
    %c0_525 = arith.constant 0 : index
    %593 = arith.index_cast %592 : i32 to index
    %c4_526 = arith.constant 4 : index
    %c0_527 = arith.constant 0 : index
    %594 = vector.load %arg3[%c0_525, %593, %c4_526, %c0_527] : memref<1x9x16x9xbf16, #tpu.memory_space<vmem>>, vector<1x1x4x8xbf16>
    %595 = vector.shape_cast %594 : vector<1x1x4x8xbf16> to vector<4x8xbf16>
    %c1_528 = arith.constant 1 : index
    %c0_529 = arith.constant 0 : index
    %c0_530 = arith.constant 0 : index
    %596 = vector.load %arg2[%c1_528, %c0_529, %c0_530] : memref<16x8x4xbf16, #tpu.memory_space<vmem>>, vector<1x8x4xbf16>
    %597 = vector.shape_cast %596 : vector<1x8x4xbf16> to vector<8x4xbf16>
    %cst_531 = arith.constant dense<0.000000e+00> : vector<8x8xf32>
    %598 = tpu.matmul %597, %595, %cst_531 {dimension_numbers = #tpu.dot_dimension_numbers<[1], [0], [0], [1], [0, 0, 1, 1], [], []>} : vector<8x4xbf16>, vector<4x8xbf16>, vector<8x8xf32> -> vector<8x8xf32>
    %599 = arith.addf %591, %598 : vector<8x8xf32>
    %c0_i32_532 = arith.constant 0 : i32
    %600 = arith.addi %582, %c0_i32_532 : i32
    %c0_533 = arith.constant 0 : index
    %601 = arith.index_cast %600 : i32 to index
    %c0_534 = arith.constant 0 : index
    %c1_535 = arith.constant 1 : index
    %602 = vector.load %arg3[%c0_533, %601, %c0_534, %c1_535] : memref<1x9x16x9xbf16, #tpu.memory_space<vmem>>, vector<1x1x4x8xbf16>
    %603 = vector.shape_cast %602 : vector<1x1x4x8xbf16> to vector<4x8xbf16>
    %c2_536 = arith.constant 2 : index
    %c0_537 = arith.constant 0 : index
    %c0_538 = arith.constant 0 : index
    %604 = vector.load %arg2[%c2_536, %c0_537, %c0_538] : memref<16x8x4xbf16, #tpu.memory_space<vmem>>, vector<1x8x4xbf16>
    %605 = vector.shape_cast %604 : vector<1x8x4xbf16> to vector<8x4xbf16>
    %cst_539 = arith.constant dense<0.000000e+00> : vector<8x8xf32>
    %606 = tpu.matmul %605, %603, %cst_539 {dimension_numbers = #tpu.dot_dimension_numbers<[1], [0], [0], [1], [0, 0, 1, 1], [], []>} : vector<8x4xbf16>, vector<4x8xbf16>, vector<8x8xf32> -> vector<8x8xf32>
    %607 = arith.addf %599, %606 : vector<8x8xf32>
    %c0_i32_540 = arith.constant 0 : i32
    %608 = arith.addi %582, %c0_i32_540 : i32
    %c0_541 = arith.constant 0 : index
    %609 = arith.index_cast %608 : i32 to index
    %c4_542 = arith.constant 4 : index
    %c1_543 = arith.constant 1 : index
    %610 = vector.load %arg3[%c0_541, %609, %c4_542, %c1_543] : memref<1x9x16x9xbf16, #tpu.memory_space<vmem>>, vector<1x1x4x8xbf16>
    %611 = vector.shape_cast %610 : vector<1x1x4x8xbf16> to vector<4x8xbf16>
    %c3_544 = arith.constant 3 : index
    %c0_545 = arith.constant 0 : index
    %c0_546 = arith.constant 0 : index
    %612 = vector.load %arg2[%c3_544, %c0_545, %c0_546] : memref<16x8x4xbf16, #tpu.memory_space<vmem>>, vector<1x8x4xbf16>
    %613 = vector.shape_cast %612 : vector<1x8x4xbf16> to vector<8x4xbf16>
    %cst_547 = arith.constant dense<0.000000e+00> : vector<8x8xf32>
    %614 = tpu.matmul %613, %611, %cst_547 {dimension_numbers = #tpu.dot_dimension_numbers<[1], [0], [0], [1], [0, 0, 1, 1], [], []>} : vector<8x4xbf16>, vector<4x8xbf16>, vector<8x8xf32> -> vector<8x8xf32>
    %615 = arith.addf %607, %614 : vector<8x8xf32>
    %c0_i32_548 = arith.constant 0 : i32
    %616 = arith.addi %582, %c0_i32_548 : i32
    %c0_549 = arith.constant 0 : index
    %617 = arith.index_cast %616 : i32 to index
    %c8_550 = arith.constant 8 : index
    %c0_551 = arith.constant 0 : index
    %618 = vector.load %arg3[%c0_549, %617, %c8_550, %c0_551] : memref<1x9x16x9xbf16, #tpu.memory_space<vmem>>, vector<1x1x4x8xbf16>
    %619 = vector.shape_cast %618 : vector<1x1x4x8xbf16> to vector<4x8xbf16>
    %c4_552 = arith.constant 4 : index
    %c0_553 = arith.constant 0 : index
    %c0_554 = arith.constant 0 : index
    %620 = vector.load %arg2[%c4_552, %c0_553, %c0_554] : memref<16x8x4xbf16, #tpu.memory_space<vmem>>, vector<1x8x4xbf16>
    %621 = vector.shape_cast %620 : vector<1x8x4xbf16> to vector<8x4xbf16>
    %cst_555 = arith.constant dense<0.000000e+00> : vector<8x8xf32>
    %622 = tpu.matmul %621, %619, %cst_555 {dimension_numbers = #tpu.dot_dimension_numbers<[1], [0], [0], [1], [0, 0, 1, 1], [], []>} : vector<8x4xbf16>, vector<4x8xbf16>, vector<8x8xf32> -> vector<8x8xf32>
    %623 = arith.addf %615, %622 : vector<8x8xf32>
    %c0_i32_556 = arith.constant 0 : i32
    %624 = arith.addi %582, %c0_i32_556 : i32
    %c0_557 = arith.constant 0 : index
    %625 = arith.index_cast %624 : i32 to index
    %c12_558 = arith.constant 12 : index
    %c0_559 = arith.constant 0 : index
    %626 = vector.load %arg3[%c0_557, %625, %c12_558, %c0_559] : memref<1x9x16x9xbf16, #tpu.memory_space<vmem>>, vector<1x1x4x8xbf16>
    %627 = vector.shape_cast %626 : vector<1x1x4x8xbf16> to vector<4x8xbf16>
    %c5_560 = arith.constant 5 : index
    %c0_561 = arith.constant 0 : index
    %c0_562 = arith.constant 0 : index
    %628 = vector.load %arg2[%c5_560, %c0_561, %c0_562] : memref<16x8x4xbf16, #tpu.memory_space<vmem>>, vector<1x8x4xbf16>
    %629 = vector.shape_cast %628 : vector<1x8x4xbf16> to vector<8x4xbf16>
    %cst_563 = arith.constant dense<0.000000e+00> : vector<8x8xf32>
    %630 = tpu.matmul %629, %627, %cst_563 {dimension_numbers = #tpu.dot_dimension_numbers<[1], [0], [0], [1], [0, 0, 1, 1], [], []>} : vector<8x4xbf16>, vector<4x8xbf16>, vector<8x8xf32> -> vector<8x8xf32>
    %631 = arith.addf %623, %630 : vector<8x8xf32>
    %c0_i32_564 = arith.constant 0 : i32
    %632 = arith.addi %582, %c0_i32_564 : i32
    %c0_565 = arith.constant 0 : index
    %633 = arith.index_cast %632 : i32 to index
    %c8_566 = arith.constant 8 : index
    %c1_567 = arith.constant 1 : index
    %634 = vector.load %arg3[%c0_565, %633, %c8_566, %c1_567] : memref<1x9x16x9xbf16, #tpu.memory_space<vmem>>, vector<1x1x4x8xbf16>
    %635 = vector.shape_cast %634 : vector<1x1x4x8xbf16> to vector<4x8xbf16>
    %c6_568 = arith.constant 6 : index
    %c0_569 = arith.constant 0 : index
    %c0_570 = arith.constant 0 : index
    %636 = vector.load %arg2[%c6_568, %c0_569, %c0_570] : memref<16x8x4xbf16, #tpu.memory_space<vmem>>, vector<1x8x4xbf16>
    %637 = vector.shape_cast %636 : vector<1x8x4xbf16> to vector<8x4xbf16>
    %cst_571 = arith.constant dense<0.000000e+00> : vector<8x8xf32>
    %638 = tpu.matmul %637, %635, %cst_571 {dimension_numbers = #tpu.dot_dimension_numbers<[1], [0], [0], [1], [0, 0, 1, 1], [], []>} : vector<8x4xbf16>, vector<4x8xbf16>, vector<8x8xf32> -> vector<8x8xf32>
    %639 = arith.addf %631, %638 : vector<8x8xf32>
    %c0_i32_572 = arith.constant 0 : i32
    %640 = arith.addi %582, %c0_i32_572 : i32
    %c0_573 = arith.constant 0 : index
    %641 = arith.index_cast %640 : i32 to index
    %c12_574 = arith.constant 12 : index
    %c1_575 = arith.constant 1 : index
    %642 = vector.load %arg3[%c0_573, %641, %c12_574, %c1_575] : memref<1x9x16x9xbf16, #tpu.memory_space<vmem>>, vector<1x1x4x8xbf16>
    %643 = vector.shape_cast %642 : vector<1x1x4x8xbf16> to vector<4x8xbf16>
    %c7_576 = arith.constant 7 : index
    %c0_577 = arith.constant 0 : index
    %c0_578 = arith.constant 0 : index
    %644 = vector.load %arg2[%c7_576, %c0_577, %c0_578] : memref<16x8x4xbf16, #tpu.memory_space<vmem>>, vector<1x8x4xbf16>
    %645 = vector.shape_cast %644 : vector<1x8x4xbf16> to vector<8x4xbf16>
    %cst_579 = arith.constant dense<0.000000e+00> : vector<8x8xf32>
    %646 = tpu.matmul %645, %643, %cst_579 {dimension_numbers = #tpu.dot_dimension_numbers<[1], [0], [0], [1], [0, 0, 1, 1], [], []>} : vector<8x4xbf16>, vector<4x8xbf16>, vector<8x8xf32> -> vector<8x8xf32>
    %647 = arith.addf %639, %646 : vector<8x8xf32>
    %c1_i32_580 = arith.constant 1 : i32
    %648 = arith.addi %582, %c1_i32_580 : i32
    %c0_581 = arith.constant 0 : index
    %649 = arith.index_cast %648 : i32 to index
    %c0_582 = arith.constant 0 : index
    %c0_583 = arith.constant 0 : index
    %650 = vector.load %arg3[%c0_581, %649, %c0_582, %c0_583] : memref<1x9x16x9xbf16, #tpu.memory_space<vmem>>, vector<1x1x4x8xbf16>
    %651 = vector.shape_cast %650 : vector<1x1x4x8xbf16> to vector<4x8xbf16>
    %c8_584 = arith.constant 8 : index
    %c0_585 = arith.constant 0 : index
    %c0_586 = arith.constant 0 : index
    %652 = vector.load %arg2[%c8_584, %c0_585, %c0_586] : memref<16x8x4xbf16, #tpu.memory_space<vmem>>, vector<1x8x4xbf16>
    %653 = vector.shape_cast %652 : vector<1x8x4xbf16> to vector<8x4xbf16>
    %cst_587 = arith.constant dense<0.000000e+00> : vector<8x8xf32>
    %654 = tpu.matmul %653, %651, %cst_587 {dimension_numbers = #tpu.dot_dimension_numbers<[1], [0], [0], [1], [0, 0, 1, 1], [], []>} : vector<8x4xbf16>, vector<4x8xbf16>, vector<8x8xf32> -> vector<8x8xf32>
    %655 = arith.addf %647, %654 : vector<8x8xf32>
    %c1_i32_588 = arith.constant 1 : i32
    %656 = arith.addi %582, %c1_i32_588 : i32
    %c0_589 = arith.constant 0 : index
    %657 = arith.index_cast %656 : i32 to index
    %c4_590 = arith.constant 4 : index
    %c0_591 = arith.constant 0 : index
    %658 = vector.load %arg3[%c0_589, %657, %c4_590, %c0_591] : memref<1x9x16x9xbf16, #tpu.memory_space<vmem>>, vector<1x1x4x8xbf16>
    %659 = vector.shape_cast %658 : vector<1x1x4x8xbf16> to vector<4x8xbf16>
    %c9_592 = arith.constant 9 : index
    %c0_593 = arith.constant 0 : index
    %c0_594 = arith.constant 0 : index
    %660 = vector.load %arg2[%c9_592, %c0_593, %c0_594] : memref<16x8x4xbf16, #tpu.memory_space<vmem>>, vector<1x8x4xbf16>
    %661 = vector.shape_cast %660 : vector<1x8x4xbf16> to vector<8x4xbf16>
    %cst_595 = arith.constant dense<0.000000e+00> : vector<8x8xf32>
    %662 = tpu.matmul %661, %659, %cst_595 {dimension_numbers = #tpu.dot_dimension_numbers<[1], [0], [0], [1], [0, 0, 1, 1], [], []>} : vector<8x4xbf16>, vector<4x8xbf16>, vector<8x8xf32> -> vector<8x8xf32>
    %663 = arith.addf %655, %662 : vector<8x8xf32>
    %c1_i32_596 = arith.constant 1 : i32
    %664 = arith.addi %582, %c1_i32_596 : i32
    %c0_597 = arith.constant 0 : index
    %665 = arith.index_cast %664 : i32 to index
    %c0_598 = arith.constant 0 : index
    %c1_599 = arith.constant 1 : index
    %666 = vector.load %arg3[%c0_597, %665, %c0_598, %c1_599] : memref<1x9x16x9xbf16, #tpu.memory_space<vmem>>, vector<1x1x4x8xbf16>
    %667 = vector.shape_cast %666 : vector<1x1x4x8xbf16> to vector<4x8xbf16>
    %c10_600 = arith.constant 10 : index
    %c0_601 = arith.constant 0 : index
    %c0_602 = arith.constant 0 : index
    %668 = vector.load %arg2[%c10_600, %c0_601, %c0_602] : memref<16x8x4xbf16, #tpu.memory_space<vmem>>, vector<1x8x4xbf16>
    %669 = vector.shape_cast %668 : vector<1x8x4xbf16> to vector<8x4xbf16>
    %cst_603 = arith.constant dense<0.000000e+00> : vector<8x8xf32>
    %670 = tpu.matmul %669, %667, %cst_603 {dimension_numbers = #tpu.dot_dimension_numbers<[1], [0], [0], [1], [0, 0, 1, 1], [], []>} : vector<8x4xbf16>, vector<4x8xbf16>, vector<8x8xf32> -> vector<8x8xf32>
    %671 = arith.addf %663, %670 : vector<8x8xf32>
    %c1_i32_604 = arith.constant 1 : i32
    %672 = arith.addi %582, %c1_i32_604 : i32
    %c0_605 = arith.constant 0 : index
    %673 = arith.index_cast %672 : i32 to index
    %c4_606 = arith.constant 4 : index
    %c1_607 = arith.constant 1 : index
    %674 = vector.load %arg3[%c0_605, %673, %c4_606, %c1_607] : memref<1x9x16x9xbf16, #tpu.memory_space<vmem>>, vector<1x1x4x8xbf16>
    %675 = vector.shape_cast %674 : vector<1x1x4x8xbf16> to vector<4x8xbf16>
    %c11_608 = arith.constant 11 : index
    %c0_609 = arith.constant 0 : index
    %c0_610 = arith.constant 0 : index
    %676 = vector.load %arg2[%c11_608, %c0_609, %c0_610] : memref<16x8x4xbf16, #tpu.memory_space<vmem>>, vector<1x8x4xbf16>
    %677 = vector.shape_cast %676 : vector<1x8x4xbf16> to vector<8x4xbf16>
    %cst_611 = arith.constant dense<0.000000e+00> : vector<8x8xf32>
    %678 = tpu.matmul %677, %675, %cst_611 {dimension_numbers = #tpu.dot_dimension_numbers<[1], [0], [0], [1], [0, 0, 1, 1], [], []>} : vector<8x4xbf16>, vector<4x8xbf16>, vector<8x8xf32> -> vector<8x8xf32>
    %679 = arith.addf %671, %678 : vector<8x8xf32>
    %c1_i32_612 = arith.constant 1 : i32
    %680 = arith.addi %582, %c1_i32_612 : i32
    %c0_613 = arith.constant 0 : index
    %681 = arith.index_cast %680 : i32 to index
    %c8_614 = arith.constant 8 : index
    %c0_615 = arith.constant 0 : index
    %682 = vector.load %arg3[%c0_613, %681, %c8_614, %c0_615] : memref<1x9x16x9xbf16, #tpu.memory_space<vmem>>, vector<1x1x4x8xbf16>
    %683 = vector.shape_cast %682 : vector<1x1x4x8xbf16> to vector<4x8xbf16>
    %c12_616 = arith.constant 12 : index
    %c0_617 = arith.constant 0 : index
    %c0_618 = arith.constant 0 : index
    %684 = vector.load %arg2[%c12_616, %c0_617, %c0_618] : memref<16x8x4xbf16, #tpu.memory_space<vmem>>, vector<1x8x4xbf16>
    %685 = vector.shape_cast %684 : vector<1x8x4xbf16> to vector<8x4xbf16>
    %cst_619 = arith.constant dense<0.000000e+00> : vector<8x8xf32>
    %686 = tpu.matmul %685, %683, %cst_619 {dimension_numbers = #tpu.dot_dimension_numbers<[1], [0], [0], [1], [0, 0, 1, 1], [], []>} : vector<8x4xbf16>, vector<4x8xbf16>, vector<8x8xf32> -> vector<8x8xf32>
    %687 = arith.addf %679, %686 : vector<8x8xf32>
    %c1_i32_620 = arith.constant 1 : i32
    %688 = arith.addi %582, %c1_i32_620 : i32
    %c0_621 = arith.constant 0 : index
    %689 = arith.index_cast %688 : i32 to index
    %c12_622 = arith.constant 12 : index
    %c0_623 = arith.constant 0 : index
    %690 = vector.load %arg3[%c0_621, %689, %c12_622, %c0_623] : memref<1x9x16x9xbf16, #tpu.memory_space<vmem>>, vector<1x1x4x8xbf16>
    %691 = vector.shape_cast %690 : vector<1x1x4x8xbf16> to vector<4x8xbf16>
    %c13_624 = arith.constant 13 : index
    %c0_625 = arith.constant 0 : index
    %c0_626 = arith.constant 0 : index
    %692 = vector.load %arg2[%c13_624, %c0_625, %c0_626] : memref<16x8x4xbf16, #tpu.memory_space<vmem>>, vector<1x8x4xbf16>
    %693 = vector.shape_cast %692 : vector<1x8x4xbf16> to vector<8x4xbf16>
    %cst_627 = arith.constant dense<0.000000e+00> : vector<8x8xf32>
    %694 = tpu.matmul %693, %691, %cst_627 {dimension_numbers = #tpu.dot_dimension_numbers<[1], [0], [0], [1], [0, 0, 1, 1], [], []>} : vector<8x4xbf16>, vector<4x8xbf16>, vector<8x8xf32> -> vector<8x8xf32>
    %695 = arith.addf %687, %694 : vector<8x8xf32>
    %c1_i32_628 = arith.constant 1 : i32
    %696 = arith.addi %582, %c1_i32_628 : i32
    %c0_629 = arith.constant 0 : index
    %697 = arith.index_cast %696 : i32 to index
    %c8_630 = arith.constant 8 : index
    %c1_631 = arith.constant 1 : index
    %698 = vector.load %arg3[%c0_629, %697, %c8_630, %c1_631] : memref<1x9x16x9xbf16, #tpu.memory_space<vmem>>, vector<1x1x4x8xbf16>
    %699 = vector.shape_cast %698 : vector<1x1x4x8xbf16> to vector<4x8xbf16>
    %c14_632 = arith.constant 14 : index
    %c0_633 = arith.constant 0 : index
    %c0_634 = arith.constant 0 : index
    %700 = vector.load %arg2[%c14_632, %c0_633, %c0_634] : memref<16x8x4xbf16, #tpu.memory_space<vmem>>, vector<1x8x4xbf16>
    %701 = vector.shape_cast %700 : vector<1x8x4xbf16> to vector<8x4xbf16>
    %cst_635 = arith.constant dense<0.000000e+00> : vector<8x8xf32>
    %702 = tpu.matmul %701, %699, %cst_635 {dimension_numbers = #tpu.dot_dimension_numbers<[1], [0], [0], [1], [0, 0, 1, 1], [], []>} : vector<8x4xbf16>, vector<4x8xbf16>, vector<8x8xf32> -> vector<8x8xf32>
    %703 = arith.addf %695, %702 : vector<8x8xf32>
    %c1_i32_636 = arith.constant 1 : i32
    %704 = arith.addi %582, %c1_i32_636 : i32
    %c0_637 = arith.constant 0 : index
    %705 = arith.index_cast %704 : i32 to index
    %c12_638 = arith.constant 12 : index
    %c1_639 = arith.constant 1 : index
    %706 = vector.load %arg3[%c0_637, %705, %c12_638, %c1_639] : memref<1x9x16x9xbf16, #tpu.memory_space<vmem>>, vector<1x1x4x8xbf16>
    %707 = vector.shape_cast %706 : vector<1x1x4x8xbf16> to vector<4x8xbf16>
    %c15_640 = arith.constant 15 : index
    %c0_641 = arith.constant 0 : index
    %c0_642 = arith.constant 0 : index
    %708 = vector.load %arg2[%c15_640, %c0_641, %c0_642] : memref<16x8x4xbf16, #tpu.memory_space<vmem>>, vector<1x8x4xbf16>
    %709 = vector.shape_cast %708 : vector<1x8x4xbf16> to vector<8x4xbf16>
    %cst_643 = arith.constant dense<0.000000e+00> : vector<8x8xf32>
    %710 = tpu.matmul %709, %707, %cst_643 {dimension_numbers = #tpu.dot_dimension_numbers<[1], [0], [0], [1], [0, 0, 1, 1], [], []>} : vector<8x4xbf16>, vector<4x8xbf16>, vector<8x8xf32> -> vector<8x8xf32>
    %711 = arith.addf %703, %710 : vector<8x8xf32>
    %c8_i32_644 = arith.constant 8 : i32
    %712 = arith.cmpi slt, %582, %c8_i32_644 : i32
    %713 = arith.extui %712 : i1 to i32
    %714 = arith.sitofp %713 : i32 to f32
    %cst_645 = arith.constant dense<0.000000e+00> : vector<8xf32>
    %715 = vector.multi_reduction <add>, %711, %cst_645 [1] : vector<8x8xf32> to vector<8xf32>
    %716 = vector.shape_cast %715 : vector<8xf32> to vector<8x1xf32>
    %717 = vector.broadcast %714 : f32 to vector<8x1xf32>
    %718 = arith.mulf %717, %716 : vector<8x1xf32>
    %719 = arith.addf %575, %718 : vector<8x1xf32>
    %720 = arith.mulf %711, %711 : vector<8x8xf32>
    %cst_646 = arith.constant dense<0.000000e+00> : vector<8xf32>
    %721 = vector.multi_reduction <add>, %720, %cst_646 [1] : vector<8x8xf32> to vector<8xf32>
    %722 = vector.shape_cast %721 : vector<8xf32> to vector<8x1xf32>
    %723 = vector.broadcast %714 : f32 to vector<8x1xf32>
    %724 = arith.mulf %723, %722 : vector<8x1xf32>
    %725 = arith.addf %581, %724 : vector<8x1xf32>
    %c5_i32 = arith.constant 5 : i32
    %726 = arith.addi %3, %c5_i32 : i32
    %cst_647 = arith.constant 0.000000e+00 : f32
    %727 = vector.broadcast %cst_647 : f32 to vector<8x8xf32>
    %c0_i32_648 = arith.constant 0 : i32
    %728 = arith.addi %726, %c0_i32_648 : i32
    %c0_649 = arith.constant 0 : index
    %729 = arith.index_cast %728 : i32 to index
    %c0_650 = arith.constant 0 : index
    %c0_651 = arith.constant 0 : index
    %730 = vector.load %arg3[%c0_649, %729, %c0_650, %c0_651] : memref<1x9x16x9xbf16, #tpu.memory_space<vmem>>, vector<1x1x4x8xbf16>
    %731 = vector.shape_cast %730 : vector<1x1x4x8xbf16> to vector<4x8xbf16>
    %c0_652 = arith.constant 0 : index
    %c0_653 = arith.constant 0 : index
    %c0_654 = arith.constant 0 : index
    %732 = vector.load %arg2[%c0_652, %c0_653, %c0_654] : memref<16x8x4xbf16, #tpu.memory_space<vmem>>, vector<1x8x4xbf16>
    %733 = vector.shape_cast %732 : vector<1x8x4xbf16> to vector<8x4xbf16>
    %cst_655 = arith.constant dense<0.000000e+00> : vector<8x8xf32>
    %734 = tpu.matmul %733, %731, %cst_655 {dimension_numbers = #tpu.dot_dimension_numbers<[1], [0], [0], [1], [0, 0, 1, 1], [], []>} : vector<8x4xbf16>, vector<4x8xbf16>, vector<8x8xf32> -> vector<8x8xf32>
    %735 = arith.addf %727, %734 : vector<8x8xf32>
    %c0_i32_656 = arith.constant 0 : i32
    %736 = arith.addi %726, %c0_i32_656 : i32
    %c0_657 = arith.constant 0 : index
    %737 = arith.index_cast %736 : i32 to index
    %c4_658 = arith.constant 4 : index
    %c0_659 = arith.constant 0 : index
    %738 = vector.load %arg3[%c0_657, %737, %c4_658, %c0_659] : memref<1x9x16x9xbf16, #tpu.memory_space<vmem>>, vector<1x1x4x8xbf16>
    %739 = vector.shape_cast %738 : vector<1x1x4x8xbf16> to vector<4x8xbf16>
    %c1_660 = arith.constant 1 : index
    %c0_661 = arith.constant 0 : index
    %c0_662 = arith.constant 0 : index
    %740 = vector.load %arg2[%c1_660, %c0_661, %c0_662] : memref<16x8x4xbf16, #tpu.memory_space<vmem>>, vector<1x8x4xbf16>
    %741 = vector.shape_cast %740 : vector<1x8x4xbf16> to vector<8x4xbf16>
    %cst_663 = arith.constant dense<0.000000e+00> : vector<8x8xf32>
    %742 = tpu.matmul %741, %739, %cst_663 {dimension_numbers = #tpu.dot_dimension_numbers<[1], [0], [0], [1], [0, 0, 1, 1], [], []>} : vector<8x4xbf16>, vector<4x8xbf16>, vector<8x8xf32> -> vector<8x8xf32>
    %743 = arith.addf %735, %742 : vector<8x8xf32>
    %c0_i32_664 = arith.constant 0 : i32
    %744 = arith.addi %726, %c0_i32_664 : i32
    %c0_665 = arith.constant 0 : index
    %745 = arith.index_cast %744 : i32 to index
    %c0_666 = arith.constant 0 : index
    %c1_667 = arith.constant 1 : index
    %746 = vector.load %arg3[%c0_665, %745, %c0_666, %c1_667] : memref<1x9x16x9xbf16, #tpu.memory_space<vmem>>, vector<1x1x4x8xbf16>
    %747 = vector.shape_cast %746 : vector<1x1x4x8xbf16> to vector<4x8xbf16>
    %c2_668 = arith.constant 2 : index
    %c0_669 = arith.constant 0 : index
    %c0_670 = arith.constant 0 : index
    %748 = vector.load %arg2[%c2_668, %c0_669, %c0_670] : memref<16x8x4xbf16, #tpu.memory_space<vmem>>, vector<1x8x4xbf16>
    %749 = vector.shape_cast %748 : vector<1x8x4xbf16> to vector<8x4xbf16>
    %cst_671 = arith.constant dense<0.000000e+00> : vector<8x8xf32>
    %750 = tpu.matmul %749, %747, %cst_671 {dimension_numbers = #tpu.dot_dimension_numbers<[1], [0], [0], [1], [0, 0, 1, 1], [], []>} : vector<8x4xbf16>, vector<4x8xbf16>, vector<8x8xf32> -> vector<8x8xf32>
    %751 = arith.addf %743, %750 : vector<8x8xf32>
    %c0_i32_672 = arith.constant 0 : i32
    %752 = arith.addi %726, %c0_i32_672 : i32
    %c0_673 = arith.constant 0 : index
    %753 = arith.index_cast %752 : i32 to index
    %c4_674 = arith.constant 4 : index
    %c1_675 = arith.constant 1 : index
    %754 = vector.load %arg3[%c0_673, %753, %c4_674, %c1_675] : memref<1x9x16x9xbf16, #tpu.memory_space<vmem>>, vector<1x1x4x8xbf16>
    %755 = vector.shape_cast %754 : vector<1x1x4x8xbf16> to vector<4x8xbf16>
    %c3_676 = arith.constant 3 : index
    %c0_677 = arith.constant 0 : index
    %c0_678 = arith.constant 0 : index
    %756 = vector.load %arg2[%c3_676, %c0_677, %c0_678] : memref<16x8x4xbf16, #tpu.memory_space<vmem>>, vector<1x8x4xbf16>
    %757 = vector.shape_cast %756 : vector<1x8x4xbf16> to vector<8x4xbf16>
    %cst_679 = arith.constant dense<0.000000e+00> : vector<8x8xf32>
    %758 = tpu.matmul %757, %755, %cst_679 {dimension_numbers = #tpu.dot_dimension_numbers<[1], [0], [0], [1], [0, 0, 1, 1], [], []>} : vector<8x4xbf16>, vector<4x8xbf16>, vector<8x8xf32> -> vector<8x8xf32>
    %759 = arith.addf %751, %758 : vector<8x8xf32>
    %c0_i32_680 = arith.constant 0 : i32
    %760 = arith.addi %726, %c0_i32_680 : i32
    %c0_681 = arith.constant 0 : index
    %761 = arith.index_cast %760 : i32 to index
    %c8_682 = arith.constant 8 : index
    %c0_683 = arith.constant 0 : index
    %762 = vector.load %arg3[%c0_681, %761, %c8_682, %c0_683] : memref<1x9x16x9xbf16, #tpu.memory_space<vmem>>, vector<1x1x4x8xbf16>
    %763 = vector.shape_cast %762 : vector<1x1x4x8xbf16> to vector<4x8xbf16>
    %c4_684 = arith.constant 4 : index
    %c0_685 = arith.constant 0 : index
    %c0_686 = arith.constant 0 : index
    %764 = vector.load %arg2[%c4_684, %c0_685, %c0_686] : memref<16x8x4xbf16, #tpu.memory_space<vmem>>, vector<1x8x4xbf16>
    %765 = vector.shape_cast %764 : vector<1x8x4xbf16> to vector<8x4xbf16>
    %cst_687 = arith.constant dense<0.000000e+00> : vector<8x8xf32>
    %766 = tpu.matmul %765, %763, %cst_687 {dimension_numbers = #tpu.dot_dimension_numbers<[1], [0], [0], [1], [0, 0, 1, 1], [], []>} : vector<8x4xbf16>, vector<4x8xbf16>, vector<8x8xf32> -> vector<8x8xf32>
    %767 = arith.addf %759, %766 : vector<8x8xf32>
    %c0_i32_688 = arith.constant 0 : i32
    %768 = arith.addi %726, %c0_i32_688 : i32
    %c0_689 = arith.constant 0 : index
    %769 = arith.index_cast %768 : i32 to index
    %c12_690 = arith.constant 12 : index
    %c0_691 = arith.constant 0 : index
    %770 = vector.load %arg3[%c0_689, %769, %c12_690, %c0_691] : memref<1x9x16x9xbf16, #tpu.memory_space<vmem>>, vector<1x1x4x8xbf16>
    %771 = vector.shape_cast %770 : vector<1x1x4x8xbf16> to vector<4x8xbf16>
    %c5_692 = arith.constant 5 : index
    %c0_693 = arith.constant 0 : index
    %c0_694 = arith.constant 0 : index
    %772 = vector.load %arg2[%c5_692, %c0_693, %c0_694] : memref<16x8x4xbf16, #tpu.memory_space<vmem>>, vector<1x8x4xbf16>
    %773 = vector.shape_cast %772 : vector<1x8x4xbf16> to vector<8x4xbf16>
    %cst_695 = arith.constant dense<0.000000e+00> : vector<8x8xf32>
    %774 = tpu.matmul %773, %771, %cst_695 {dimension_numbers = #tpu.dot_dimension_numbers<[1], [0], [0], [1], [0, 0, 1, 1], [], []>} : vector<8x4xbf16>, vector<4x8xbf16>, vector<8x8xf32> -> vector<8x8xf32>
    %775 = arith.addf %767, %774 : vector<8x8xf32>
    %c0_i32_696 = arith.constant 0 : i32
    %776 = arith.addi %726, %c0_i32_696 : i32
    %c0_697 = arith.constant 0 : index
    %777 = arith.index_cast %776 : i32 to index
    %c8_698 = arith.constant 8 : index
    %c1_699 = arith.constant 1 : index
    %778 = vector.load %arg3[%c0_697, %777, %c8_698, %c1_699] : memref<1x9x16x9xbf16, #tpu.memory_space<vmem>>, vector<1x1x4x8xbf16>
    %779 = vector.shape_cast %778 : vector<1x1x4x8xbf16> to vector<4x8xbf16>
    %c6_700 = arith.constant 6 : index
    %c0_701 = arith.constant 0 : index
    %c0_702 = arith.constant 0 : index
    %780 = vector.load %arg2[%c6_700, %c0_701, %c0_702] : memref<16x8x4xbf16, #tpu.memory_space<vmem>>, vector<1x8x4xbf16>
    %781 = vector.shape_cast %780 : vector<1x8x4xbf16> to vector<8x4xbf16>
    %cst_703 = arith.constant dense<0.000000e+00> : vector<8x8xf32>
    %782 = tpu.matmul %781, %779, %cst_703 {dimension_numbers = #tpu.dot_dimension_numbers<[1], [0], [0], [1], [0, 0, 1, 1], [], []>} : vector<8x4xbf16>, vector<4x8xbf16>, vector<8x8xf32> -> vector<8x8xf32>
    %783 = arith.addf %775, %782 : vector<8x8xf32>
    %c0_i32_704 = arith.constant 0 : i32
    %784 = arith.addi %726, %c0_i32_704 : i32
    %c0_705 = arith.constant 0 : index
    %785 = arith.index_cast %784 : i32 to index
    %c12_706 = arith.constant 12 : index
    %c1_707 = arith.constant 1 : index
    %786 = vector.load %arg3[%c0_705, %785, %c12_706, %c1_707] : memref<1x9x16x9xbf16, #tpu.memory_space<vmem>>, vector<1x1x4x8xbf16>
    %787 = vector.shape_cast %786 : vector<1x1x4x8xbf16> to vector<4x8xbf16>
    %c7_708 = arith.constant 7 : index
    %c0_709 = arith.constant 0 : index
    %c0_710 = arith.constant 0 : index
    %788 = vector.load %arg2[%c7_708, %c0_709, %c0_710] : memref<16x8x4xbf16, #tpu.memory_space<vmem>>, vector<1x8x4xbf16>
    %789 = vector.shape_cast %788 : vector<1x8x4xbf16> to vector<8x4xbf16>
    %cst_711 = arith.constant dense<0.000000e+00> : vector<8x8xf32>
    %790 = tpu.matmul %789, %787, %cst_711 {dimension_numbers = #tpu.dot_dimension_numbers<[1], [0], [0], [1], [0, 0, 1, 1], [], []>} : vector<8x4xbf16>, vector<4x8xbf16>, vector<8x8xf32> -> vector<8x8xf32>
    %791 = arith.addf %783, %790 : vector<8x8xf32>
    %c1_i32_712 = arith.constant 1 : i32
    %792 = arith.addi %726, %c1_i32_712 : i32
    %c0_713 = arith.constant 0 : index
    %793 = arith.index_cast %792 : i32 to index
    %c0_714 = arith.constant 0 : index
    %c0_715 = arith.constant 0 : index
    %794 = vector.load %arg3[%c0_713, %793, %c0_714, %c0_715] : memref<1x9x16x9xbf16, #tpu.memory_space<vmem>>, vector<1x1x4x8xbf16>
    %795 = vector.shape_cast %794 : vector<1x1x4x8xbf16> to vector<4x8xbf16>
    %c8_716 = arith.constant 8 : index
    %c0_717 = arith.constant 0 : index
    %c0_718 = arith.constant 0 : index
    %796 = vector.load %arg2[%c8_716, %c0_717, %c0_718] : memref<16x8x4xbf16, #tpu.memory_space<vmem>>, vector<1x8x4xbf16>
    %797 = vector.shape_cast %796 : vector<1x8x4xbf16> to vector<8x4xbf16>
    %cst_719 = arith.constant dense<0.000000e+00> : vector<8x8xf32>
    %798 = tpu.matmul %797, %795, %cst_719 {dimension_numbers = #tpu.dot_dimension_numbers<[1], [0], [0], [1], [0, 0, 1, 1], [], []>} : vector<8x4xbf16>, vector<4x8xbf16>, vector<8x8xf32> -> vector<8x8xf32>
    %799 = arith.addf %791, %798 : vector<8x8xf32>
    %c1_i32_720 = arith.constant 1 : i32
    %800 = arith.addi %726, %c1_i32_720 : i32
    %c0_721 = arith.constant 0 : index
    %801 = arith.index_cast %800 : i32 to index
    %c4_722 = arith.constant 4 : index
    %c0_723 = arith.constant 0 : index
    %802 = vector.load %arg3[%c0_721, %801, %c4_722, %c0_723] : memref<1x9x16x9xbf16, #tpu.memory_space<vmem>>, vector<1x1x4x8xbf16>
    %803 = vector.shape_cast %802 : vector<1x1x4x8xbf16> to vector<4x8xbf16>
    %c9_724 = arith.constant 9 : index
    %c0_725 = arith.constant 0 : index
    %c0_726 = arith.constant 0 : index
    %804 = vector.load %arg2[%c9_724, %c0_725, %c0_726] : memref<16x8x4xbf16, #tpu.memory_space<vmem>>, vector<1x8x4xbf16>
    %805 = vector.shape_cast %804 : vector<1x8x4xbf16> to vector<8x4xbf16>
    %cst_727 = arith.constant dense<0.000000e+00> : vector<8x8xf32>
    %806 = tpu.matmul %805, %803, %cst_727 {dimension_numbers = #tpu.dot_dimension_numbers<[1], [0], [0], [1], [0, 0, 1, 1], [], []>} : vector<8x4xbf16>, vector<4x8xbf16>, vector<8x8xf32> -> vector<8x8xf32>
    %807 = arith.addf %799, %806 : vector<8x8xf32>
    %c1_i32_728 = arith.constant 1 : i32
    %808 = arith.addi %726, %c1_i32_728 : i32
    %c0_729 = arith.constant 0 : index
    %809 = arith.index_cast %808 : i32 to index
    %c0_730 = arith.constant 0 : index
    %c1_731 = arith.constant 1 : index
    %810 = vector.load %arg3[%c0_729, %809, %c0_730, %c1_731] : memref<1x9x16x9xbf16, #tpu.memory_space<vmem>>, vector<1x1x4x8xbf16>
    %811 = vector.shape_cast %810 : vector<1x1x4x8xbf16> to vector<4x8xbf16>
    %c10_732 = arith.constant 10 : index
    %c0_733 = arith.constant 0 : index
    %c0_734 = arith.constant 0 : index
    %812 = vector.load %arg2[%c10_732, %c0_733, %c0_734] : memref<16x8x4xbf16, #tpu.memory_space<vmem>>, vector<1x8x4xbf16>
    %813 = vector.shape_cast %812 : vector<1x8x4xbf16> to vector<8x4xbf16>
    %cst_735 = arith.constant dense<0.000000e+00> : vector<8x8xf32>
    %814 = tpu.matmul %813, %811, %cst_735 {dimension_numbers = #tpu.dot_dimension_numbers<[1], [0], [0], [1], [0, 0, 1, 1], [], []>} : vector<8x4xbf16>, vector<4x8xbf16>, vector<8x8xf32> -> vector<8x8xf32>
    %815 = arith.addf %807, %814 : vector<8x8xf32>
    %c1_i32_736 = arith.constant 1 : i32
    %816 = arith.addi %726, %c1_i32_736 : i32
    %c0_737 = arith.constant 0 : index
    %817 = arith.index_cast %816 : i32 to index
    %c4_738 = arith.constant 4 : index
    %c1_739 = arith.constant 1 : index
    %818 = vector.load %arg3[%c0_737, %817, %c4_738, %c1_739] : memref<1x9x16x9xbf16, #tpu.memory_space<vmem>>, vector<1x1x4x8xbf16>
    %819 = vector.shape_cast %818 : vector<1x1x4x8xbf16> to vector<4x8xbf16>
    %c11_740 = arith.constant 11 : index
    %c0_741 = arith.constant 0 : index
    %c0_742 = arith.constant 0 : index
    %820 = vector.load %arg2[%c11_740, %c0_741, %c0_742] : memref<16x8x4xbf16, #tpu.memory_space<vmem>>, vector<1x8x4xbf16>
    %821 = vector.shape_cast %820 : vector<1x8x4xbf16> to vector<8x4xbf16>
    %cst_743 = arith.constant dense<0.000000e+00> : vector<8x8xf32>
    %822 = tpu.matmul %821, %819, %cst_743 {dimension_numbers = #tpu.dot_dimension_numbers<[1], [0], [0], [1], [0, 0, 1, 1], [], []>} : vector<8x4xbf16>, vector<4x8xbf16>, vector<8x8xf32> -> vector<8x8xf32>
    %823 = arith.addf %815, %822 : vector<8x8xf32>
    %c1_i32_744 = arith.constant 1 : i32
    %824 = arith.addi %726, %c1_i32_744 : i32
    %c0_745 = arith.constant 0 : index
    %825 = arith.index_cast %824 : i32 to index
    %c8_746 = arith.constant 8 : index
    %c0_747 = arith.constant 0 : index
    %826 = vector.load %arg3[%c0_745, %825, %c8_746, %c0_747] : memref<1x9x16x9xbf16, #tpu.memory_space<vmem>>, vector<1x1x4x8xbf16>
    %827 = vector.shape_cast %826 : vector<1x1x4x8xbf16> to vector<4x8xbf16>
    %c12_748 = arith.constant 12 : index
    %c0_749 = arith.constant 0 : index
    %c0_750 = arith.constant 0 : index
    %828 = vector.load %arg2[%c12_748, %c0_749, %c0_750] : memref<16x8x4xbf16, #tpu.memory_space<vmem>>, vector<1x8x4xbf16>
    %829 = vector.shape_cast %828 : vector<1x8x4xbf16> to vector<8x4xbf16>
    %cst_751 = arith.constant dense<0.000000e+00> : vector<8x8xf32>
    %830 = tpu.matmul %829, %827, %cst_751 {dimension_numbers = #tpu.dot_dimension_numbers<[1], [0], [0], [1], [0, 0, 1, 1], [], []>} : vector<8x4xbf16>, vector<4x8xbf16>, vector<8x8xf32> -> vector<8x8xf32>
    %831 = arith.addf %823, %830 : vector<8x8xf32>
    %c1_i32_752 = arith.constant 1 : i32
    %832 = arith.addi %726, %c1_i32_752 : i32
    %c0_753 = arith.constant 0 : index
    %833 = arith.index_cast %832 : i32 to index
    %c12_754 = arith.constant 12 : index
    %c0_755 = arith.constant 0 : index
    %834 = vector.load %arg3[%c0_753, %833, %c12_754, %c0_755] : memref<1x9x16x9xbf16, #tpu.memory_space<vmem>>, vector<1x1x4x8xbf16>
    %835 = vector.shape_cast %834 : vector<1x1x4x8xbf16> to vector<4x8xbf16>
    %c13_756 = arith.constant 13 : index
    %c0_757 = arith.constant 0 : index
    %c0_758 = arith.constant 0 : index
    %836 = vector.load %arg2[%c13_756, %c0_757, %c0_758] : memref<16x8x4xbf16, #tpu.memory_space<vmem>>, vector<1x8x4xbf16>
    %837 = vector.shape_cast %836 : vector<1x8x4xbf16> to vector<8x4xbf16>
    %cst_759 = arith.constant dense<0.000000e+00> : vector<8x8xf32>
    %838 = tpu.matmul %837, %835, %cst_759 {dimension_numbers = #tpu.dot_dimension_numbers<[1], [0], [0], [1], [0, 0, 1, 1], [], []>} : vector<8x4xbf16>, vector<4x8xbf16>, vector<8x8xf32> -> vector<8x8xf32>
    %839 = arith.addf %831, %838 : vector<8x8xf32>
    %c1_i32_760 = arith.constant 1 : i32
    %840 = arith.addi %726, %c1_i32_760 : i32
    %c0_761 = arith.constant 0 : index
    %841 = arith.index_cast %840 : i32 to index
    %c8_762 = arith.constant 8 : index
    %c1_763 = arith.constant 1 : index
    %842 = vector.load %arg3[%c0_761, %841, %c8_762, %c1_763] : memref<1x9x16x9xbf16, #tpu.memory_space<vmem>>, vector<1x1x4x8xbf16>
    %843 = vector.shape_cast %842 : vector<1x1x4x8xbf16> to vector<4x8xbf16>
    %c14_764 = arith.constant 14 : index
    %c0_765 = arith.constant 0 : index
    %c0_766 = arith.constant 0 : index
    %844 = vector.load %arg2[%c14_764, %c0_765, %c0_766] : memref<16x8x4xbf16, #tpu.memory_space<vmem>>, vector<1x8x4xbf16>
    %845 = vector.shape_cast %844 : vector<1x8x4xbf16> to vector<8x4xbf16>
    %cst_767 = arith.constant dense<0.000000e+00> : vector<8x8xf32>
    %846 = tpu.matmul %845, %843, %cst_767 {dimension_numbers = #tpu.dot_dimension_numbers<[1], [0], [0], [1], [0, 0, 1, 1], [], []>} : vector<8x4xbf16>, vector<4x8xbf16>, vector<8x8xf32> -> vector<8x8xf32>
    %847 = arith.addf %839, %846 : vector<8x8xf32>
    %c1_i32_768 = arith.constant 1 : i32
    %848 = arith.addi %726, %c1_i32_768 : i32
    %c0_769 = arith.constant 0 : index
    %849 = arith.index_cast %848 : i32 to index
    %c12_770 = arith.constant 12 : index
    %c1_771 = arith.constant 1 : index
    %850 = vector.load %arg3[%c0_769, %849, %c12_770, %c1_771] : memref<1x9x16x9xbf16, #tpu.memory_space<vmem>>, vector<1x1x4x8xbf16>
    %851 = vector.shape_cast %850 : vector<1x1x4x8xbf16> to vector<4x8xbf16>
    %c15_772 = arith.constant 15 : index
    %c0_773 = arith.constant 0 : index
    %c0_774 = arith.constant 0 : index
    %852 = vector.load %arg2[%c15_772, %c0_773, %c0_774] : memref<16x8x4xbf16, #tpu.memory_space<vmem>>, vector<1x8x4xbf16>
    %853 = vector.shape_cast %852 : vector<1x8x4xbf16> to vector<8x4xbf16>
    %cst_775 = arith.constant dense<0.000000e+00> : vector<8x8xf32>
    %854 = tpu.matmul %853, %851, %cst_775 {dimension_numbers = #tpu.dot_dimension_numbers<[1], [0], [0], [1], [0, 0, 1, 1], [], []>} : vector<8x4xbf16>, vector<4x8xbf16>, vector<8x8xf32> -> vector<8x8xf32>
    %855 = arith.addf %847, %854 : vector<8x8xf32>
    %c8_i32_776 = arith.constant 8 : i32
    %856 = arith.cmpi slt, %726, %c8_i32_776 : i32
    %857 = arith.extui %856 : i1 to i32
    %858 = arith.sitofp %857 : i32 to f32
    %cst_777 = arith.constant dense<0.000000e+00> : vector<8xf32>
    %859 = vector.multi_reduction <add>, %855, %cst_777 [1] : vector<8x8xf32> to vector<8xf32>
    %860 = vector.shape_cast %859 : vector<8xf32> to vector<8x1xf32>
    %861 = vector.broadcast %858 : f32 to vector<8x1xf32>
    %862 = arith.mulf %861, %860 : vector<8x1xf32>
    %863 = arith.addf %719, %862 : vector<8x1xf32>
    %864 = arith.mulf %855, %855 : vector<8x8xf32>
    %cst_778 = arith.constant dense<0.000000e+00> : vector<8xf32>
    %865 = vector.multi_reduction <add>, %864, %cst_778 [1] : vector<8x8xf32> to vector<8xf32>
    %866 = vector.shape_cast %865 : vector<8xf32> to vector<8x1xf32>
    %867 = vector.broadcast %858 : f32 to vector<8x1xf32>
    %868 = arith.mulf %867, %866 : vector<8x1xf32>
    %869 = arith.addf %725, %868 : vector<8x1xf32>
    %c6_i32 = arith.constant 6 : i32
    %870 = arith.addi %3, %c6_i32 : i32
    %cst_779 = arith.constant 0.000000e+00 : f32
    %871 = vector.broadcast %cst_779 : f32 to vector<8x8xf32>
    %c0_i32_780 = arith.constant 0 : i32
    %872 = arith.addi %870, %c0_i32_780 : i32
    %c0_781 = arith.constant 0 : index
    %873 = arith.index_cast %872 : i32 to index
    %c0_782 = arith.constant 0 : index
    %c0_783 = arith.constant 0 : index
    %874 = vector.load %arg3[%c0_781, %873, %c0_782, %c0_783] : memref<1x9x16x9xbf16, #tpu.memory_space<vmem>>, vector<1x1x4x8xbf16>
    %875 = vector.shape_cast %874 : vector<1x1x4x8xbf16> to vector<4x8xbf16>
    %c0_784 = arith.constant 0 : index
    %c0_785 = arith.constant 0 : index
    %c0_786 = arith.constant 0 : index
    %876 = vector.load %arg2[%c0_784, %c0_785, %c0_786] : memref<16x8x4xbf16, #tpu.memory_space<vmem>>, vector<1x8x4xbf16>
    %877 = vector.shape_cast %876 : vector<1x8x4xbf16> to vector<8x4xbf16>
    %cst_787 = arith.constant dense<0.000000e+00> : vector<8x8xf32>
    %878 = tpu.matmul %877, %875, %cst_787 {dimension_numbers = #tpu.dot_dimension_numbers<[1], [0], [0], [1], [0, 0, 1, 1], [], []>} : vector<8x4xbf16>, vector<4x8xbf16>, vector<8x8xf32> -> vector<8x8xf32>
    %879 = arith.addf %871, %878 : vector<8x8xf32>
    %c0_i32_788 = arith.constant 0 : i32
    %880 = arith.addi %870, %c0_i32_788 : i32
    %c0_789 = arith.constant 0 : index
    %881 = arith.index_cast %880 : i32 to index
    %c4_790 = arith.constant 4 : index
    %c0_791 = arith.constant 0 : index
    %882 = vector.load %arg3[%c0_789, %881, %c4_790, %c0_791] : memref<1x9x16x9xbf16, #tpu.memory_space<vmem>>, vector<1x1x4x8xbf16>
    %883 = vector.shape_cast %882 : vector<1x1x4x8xbf16> to vector<4x8xbf16>
    %c1_792 = arith.constant 1 : index
    %c0_793 = arith.constant 0 : index
    %c0_794 = arith.constant 0 : index
    %884 = vector.load %arg2[%c1_792, %c0_793, %c0_794] : memref<16x8x4xbf16, #tpu.memory_space<vmem>>, vector<1x8x4xbf16>
    %885 = vector.shape_cast %884 : vector<1x8x4xbf16> to vector<8x4xbf16>
    %cst_795 = arith.constant dense<0.000000e+00> : vector<8x8xf32>
    %886 = tpu.matmul %885, %883, %cst_795 {dimension_numbers = #tpu.dot_dimension_numbers<[1], [0], [0], [1], [0, 0, 1, 1], [], []>} : vector<8x4xbf16>, vector<4x8xbf16>, vector<8x8xf32> -> vector<8x8xf32>
    %887 = arith.addf %879, %886 : vector<8x8xf32>
    %c0_i32_796 = arith.constant 0 : i32
    %888 = arith.addi %870, %c0_i32_796 : i32
    %c0_797 = arith.constant 0 : index
    %889 = arith.index_cast %888 : i32 to index
    %c0_798 = arith.constant 0 : index
    %c1_799 = arith.constant 1 : index
    %890 = vector.load %arg3[%c0_797, %889, %c0_798, %c1_799] : memref<1x9x16x9xbf16, #tpu.memory_space<vmem>>, vector<1x1x4x8xbf16>
    %891 = vector.shape_cast %890 : vector<1x1x4x8xbf16> to vector<4x8xbf16>
    %c2_800 = arith.constant 2 : index
    %c0_801 = arith.constant 0 : index
    %c0_802 = arith.constant 0 : index
    %892 = vector.load %arg2[%c2_800, %c0_801, %c0_802] : memref<16x8x4xbf16, #tpu.memory_space<vmem>>, vector<1x8x4xbf16>
    %893 = vector.shape_cast %892 : vector<1x8x4xbf16> to vector<8x4xbf16>
    %cst_803 = arith.constant dense<0.000000e+00> : vector<8x8xf32>
    %894 = tpu.matmul %893, %891, %cst_803 {dimension_numbers = #tpu.dot_dimension_numbers<[1], [0], [0], [1], [0, 0, 1, 1], [], []>} : vector<8x4xbf16>, vector<4x8xbf16>, vector<8x8xf32> -> vector<8x8xf32>
    %895 = arith.addf %887, %894 : vector<8x8xf32>
    %c0_i32_804 = arith.constant 0 : i32
    %896 = arith.addi %870, %c0_i32_804 : i32
    %c0_805 = arith.constant 0 : index
    %897 = arith.index_cast %896 : i32 to index
    %c4_806 = arith.constant 4 : index
    %c1_807 = arith.constant 1 : index
    %898 = vector.load %arg3[%c0_805, %897, %c4_806, %c1_807] : memref<1x9x16x9xbf16, #tpu.memory_space<vmem>>, vector<1x1x4x8xbf16>
    %899 = vector.shape_cast %898 : vector<1x1x4x8xbf16> to vector<4x8xbf16>
    %c3_808 = arith.constant 3 : index
    %c0_809 = arith.constant 0 : index
    %c0_810 = arith.constant 0 : index
    %900 = vector.load %arg2[%c3_808, %c0_809, %c0_810] : memref<16x8x4xbf16, #tpu.memory_space<vmem>>, vector<1x8x4xbf16>
    %901 = vector.shape_cast %900 : vector<1x8x4xbf16> to vector<8x4xbf16>
    %cst_811 = arith.constant dense<0.000000e+00> : vector<8x8xf32>
    %902 = tpu.matmul %901, %899, %cst_811 {dimension_numbers = #tpu.dot_dimension_numbers<[1], [0], [0], [1], [0, 0, 1, 1], [], []>} : vector<8x4xbf16>, vector<4x8xbf16>, vector<8x8xf32> -> vector<8x8xf32>
    %903 = arith.addf %895, %902 : vector<8x8xf32>
    %c0_i32_812 = arith.constant 0 : i32
    %904 = arith.addi %870, %c0_i32_812 : i32
    %c0_813 = arith.constant 0 : index
    %905 = arith.index_cast %904 : i32 to index
    %c8_814 = arith.constant 8 : index
    %c0_815 = arith.constant 0 : index
    %906 = vector.load %arg3[%c0_813, %905, %c8_814, %c0_815] : memref<1x9x16x9xbf16, #tpu.memory_space<vmem>>, vector<1x1x4x8xbf16>
    %907 = vector.shape_cast %906 : vector<1x1x4x8xbf16> to vector<4x8xbf16>
    %c4_816 = arith.constant 4 : index
    %c0_817 = arith.constant 0 : index
    %c0_818 = arith.constant 0 : index
    %908 = vector.load %arg2[%c4_816, %c0_817, %c0_818] : memref<16x8x4xbf16, #tpu.memory_space<vmem>>, vector<1x8x4xbf16>
    %909 = vector.shape_cast %908 : vector<1x8x4xbf16> to vector<8x4xbf16>
    %cst_819 = arith.constant dense<0.000000e+00> : vector<8x8xf32>
    %910 = tpu.matmul %909, %907, %cst_819 {dimension_numbers = #tpu.dot_dimension_numbers<[1], [0], [0], [1], [0, 0, 1, 1], [], []>} : vector<8x4xbf16>, vector<4x8xbf16>, vector<8x8xf32> -> vector<8x8xf32>
    %911 = arith.addf %903, %910 : vector<8x8xf32>
    %c0_i32_820 = arith.constant 0 : i32
    %912 = arith.addi %870, %c0_i32_820 : i32
    %c0_821 = arith.constant 0 : index
    %913 = arith.index_cast %912 : i32 to index
    %c12_822 = arith.constant 12 : index
    %c0_823 = arith.constant 0 : index
    %914 = vector.load %arg3[%c0_821, %913, %c12_822, %c0_823] : memref<1x9x16x9xbf16, #tpu.memory_space<vmem>>, vector<1x1x4x8xbf16>
    %915 = vector.shape_cast %914 : vector<1x1x4x8xbf16> to vector<4x8xbf16>
    %c5_824 = arith.constant 5 : index
    %c0_825 = arith.constant 0 : index
    %c0_826 = arith.constant 0 : index
    %916 = vector.load %arg2[%c5_824, %c0_825, %c0_826] : memref<16x8x4xbf16, #tpu.memory_space<vmem>>, vector<1x8x4xbf16>
    %917 = vector.shape_cast %916 : vector<1x8x4xbf16> to vector<8x4xbf16>
    %cst_827 = arith.constant dense<0.000000e+00> : vector<8x8xf32>
    %918 = tpu.matmul %917, %915, %cst_827 {dimension_numbers = #tpu.dot_dimension_numbers<[1], [0], [0], [1], [0, 0, 1, 1], [], []>} : vector<8x4xbf16>, vector<4x8xbf16>, vector<8x8xf32> -> vector<8x8xf32>
    %919 = arith.addf %911, %918 : vector<8x8xf32>
    %c0_i32_828 = arith.constant 0 : i32
    %920 = arith.addi %870, %c0_i32_828 : i32
    %c0_829 = arith.constant 0 : index
    %921 = arith.index_cast %920 : i32 to index
    %c8_830 = arith.constant 8 : index
    %c1_831 = arith.constant 1 : index
    %922 = vector.load %arg3[%c0_829, %921, %c8_830, %c1_831] : memref<1x9x16x9xbf16, #tpu.memory_space<vmem>>, vector<1x1x4x8xbf16>
    %923 = vector.shape_cast %922 : vector<1x1x4x8xbf16> to vector<4x8xbf16>
    %c6_832 = arith.constant 6 : index
    %c0_833 = arith.constant 0 : index
    %c0_834 = arith.constant 0 : index
    %924 = vector.load %arg2[%c6_832, %c0_833, %c0_834] : memref<16x8x4xbf16, #tpu.memory_space<vmem>>, vector<1x8x4xbf16>
    %925 = vector.shape_cast %924 : vector<1x8x4xbf16> to vector<8x4xbf16>
    %cst_835 = arith.constant dense<0.000000e+00> : vector<8x8xf32>
    %926 = tpu.matmul %925, %923, %cst_835 {dimension_numbers = #tpu.dot_dimension_numbers<[1], [0], [0], [1], [0, 0, 1, 1], [], []>} : vector<8x4xbf16>, vector<4x8xbf16>, vector<8x8xf32> -> vector<8x8xf32>
    %927 = arith.addf %919, %926 : vector<8x8xf32>
    %c0_i32_836 = arith.constant 0 : i32
    %928 = arith.addi %870, %c0_i32_836 : i32
    %c0_837 = arith.constant 0 : index
    %929 = arith.index_cast %928 : i32 to index
    %c12_838 = arith.constant 12 : index
    %c1_839 = arith.constant 1 : index
    %930 = vector.load %arg3[%c0_837, %929, %c12_838, %c1_839] : memref<1x9x16x9xbf16, #tpu.memory_space<vmem>>, vector<1x1x4x8xbf16>
    %931 = vector.shape_cast %930 : vector<1x1x4x8xbf16> to vector<4x8xbf16>
    %c7_840 = arith.constant 7 : index
    %c0_841 = arith.constant 0 : index
    %c0_842 = arith.constant 0 : index
    %932 = vector.load %arg2[%c7_840, %c0_841, %c0_842] : memref<16x8x4xbf16, #tpu.memory_space<vmem>>, vector<1x8x4xbf16>
    %933 = vector.shape_cast %932 : vector<1x8x4xbf16> to vector<8x4xbf16>
    %cst_843 = arith.constant dense<0.000000e+00> : vector<8x8xf32>
    %934 = tpu.matmul %933, %931, %cst_843 {dimension_numbers = #tpu.dot_dimension_numbers<[1], [0], [0], [1], [0, 0, 1, 1], [], []>} : vector<8x4xbf16>, vector<4x8xbf16>, vector<8x8xf32> -> vector<8x8xf32>
    %935 = arith.addf %927, %934 : vector<8x8xf32>
    %c1_i32_844 = arith.constant 1 : i32
    %936 = arith.addi %870, %c1_i32_844 : i32
    %c0_845 = arith.constant 0 : index
    %937 = arith.index_cast %936 : i32 to index
    %c0_846 = arith.constant 0 : index
    %c0_847 = arith.constant 0 : index
    %938 = vector.load %arg3[%c0_845, %937, %c0_846, %c0_847] : memref<1x9x16x9xbf16, #tpu.memory_space<vmem>>, vector<1x1x4x8xbf16>
    %939 = vector.shape_cast %938 : vector<1x1x4x8xbf16> to vector<4x8xbf16>
    %c8_848 = arith.constant 8 : index
    %c0_849 = arith.constant 0 : index
    %c0_850 = arith.constant 0 : index
    %940 = vector.load %arg2[%c8_848, %c0_849, %c0_850] : memref<16x8x4xbf16, #tpu.memory_space<vmem>>, vector<1x8x4xbf16>
    %941 = vector.shape_cast %940 : vector<1x8x4xbf16> to vector<8x4xbf16>
    %cst_851 = arith.constant dense<0.000000e+00> : vector<8x8xf32>
    %942 = tpu.matmul %941, %939, %cst_851 {dimension_numbers = #tpu.dot_dimension_numbers<[1], [0], [0], [1], [0, 0, 1, 1], [], []>} : vector<8x4xbf16>, vector<4x8xbf16>, vector<8x8xf32> -> vector<8x8xf32>
    %943 = arith.addf %935, %942 : vector<8x8xf32>
    %c1_i32_852 = arith.constant 1 : i32
    %944 = arith.addi %870, %c1_i32_852 : i32
    %c0_853 = arith.constant 0 : index
    %945 = arith.index_cast %944 : i32 to index
    %c4_854 = arith.constant 4 : index
    %c0_855 = arith.constant 0 : index
    %946 = vector.load %arg3[%c0_853, %945, %c4_854, %c0_855] : memref<1x9x16x9xbf16, #tpu.memory_space<vmem>>, vector<1x1x4x8xbf16>
    %947 = vector.shape_cast %946 : vector<1x1x4x8xbf16> to vector<4x8xbf16>
    %c9_856 = arith.constant 9 : index
    %c0_857 = arith.constant 0 : index
    %c0_858 = arith.constant 0 : index
    %948 = vector.load %arg2[%c9_856, %c0_857, %c0_858] : memref<16x8x4xbf16, #tpu.memory_space<vmem>>, vector<1x8x4xbf16>
    %949 = vector.shape_cast %948 : vector<1x8x4xbf16> to vector<8x4xbf16>
    %cst_859 = arith.constant dense<0.000000e+00> : vector<8x8xf32>
    %950 = tpu.matmul %949, %947, %cst_859 {dimension_numbers = #tpu.dot_dimension_numbers<[1], [0], [0], [1], [0, 0, 1, 1], [], []>} : vector<8x4xbf16>, vector<4x8xbf16>, vector<8x8xf32> -> vector<8x8xf32>
    %951 = arith.addf %943, %950 : vector<8x8xf32>
    %c1_i32_860 = arith.constant 1 : i32
    %952 = arith.addi %870, %c1_i32_860 : i32
    %c0_861 = arith.constant 0 : index
    %953 = arith.index_cast %952 : i32 to index
    %c0_862 = arith.constant 0 : index
    %c1_863 = arith.constant 1 : index
    %954 = vector.load %arg3[%c0_861, %953, %c0_862, %c1_863] : memref<1x9x16x9xbf16, #tpu.memory_space<vmem>>, vector<1x1x4x8xbf16>
    %955 = vector.shape_cast %954 : vector<1x1x4x8xbf16> to vector<4x8xbf16>
    %c10_864 = arith.constant 10 : index
    %c0_865 = arith.constant 0 : index
    %c0_866 = arith.constant 0 : index
    %956 = vector.load %arg2[%c10_864, %c0_865, %c0_866] : memref<16x8x4xbf16, #tpu.memory_space<vmem>>, vector<1x8x4xbf16>
    %957 = vector.shape_cast %956 : vector<1x8x4xbf16> to vector<8x4xbf16>
    %cst_867 = arith.constant dense<0.000000e+00> : vector<8x8xf32>
    %958 = tpu.matmul %957, %955, %cst_867 {dimension_numbers = #tpu.dot_dimension_numbers<[1], [0], [0], [1], [0, 0, 1, 1], [], []>} : vector<8x4xbf16>, vector<4x8xbf16>, vector<8x8xf32> -> vector<8x8xf32>
    %959 = arith.addf %951, %958 : vector<8x8xf32>
    %c1_i32_868 = arith.constant 1 : i32
    %960 = arith.addi %870, %c1_i32_868 : i32
    %c0_869 = arith.constant 0 : index
    %961 = arith.index_cast %960 : i32 to index
    %c4_870 = arith.constant 4 : index
    %c1_871 = arith.constant 1 : index
    %962 = vector.load %arg3[%c0_869, %961, %c4_870, %c1_871] : memref<1x9x16x9xbf16, #tpu.memory_space<vmem>>, vector<1x1x4x8xbf16>
    %963 = vector.shape_cast %962 : vector<1x1x4x8xbf16> to vector<4x8xbf16>
    %c11_872 = arith.constant 11 : index
    %c0_873 = arith.constant 0 : index
    %c0_874 = arith.constant 0 : index
    %964 = vector.load %arg2[%c11_872, %c0_873, %c0_874] : memref<16x8x4xbf16, #tpu.memory_space<vmem>>, vector<1x8x4xbf16>
    %965 = vector.shape_cast %964 : vector<1x8x4xbf16> to vector<8x4xbf16>
    %cst_875 = arith.constant dense<0.000000e+00> : vector<8x8xf32>
    %966 = tpu.matmul %965, %963, %cst_875 {dimension_numbers = #tpu.dot_dimension_numbers<[1], [0], [0], [1], [0, 0, 1, 1], [], []>} : vector<8x4xbf16>, vector<4x8xbf16>, vector<8x8xf32> -> vector<8x8xf32>
    %967 = arith.addf %959, %966 : vector<8x8xf32>
    %c1_i32_876 = arith.constant 1 : i32
    %968 = arith.addi %870, %c1_i32_876 : i32
    %c0_877 = arith.constant 0 : index
    %969 = arith.index_cast %968 : i32 to index
    %c8_878 = arith.constant 8 : index
    %c0_879 = arith.constant 0 : index
    %970 = vector.load %arg3[%c0_877, %969, %c8_878, %c0_879] : memref<1x9x16x9xbf16, #tpu.memory_space<vmem>>, vector<1x1x4x8xbf16>
    %971 = vector.shape_cast %970 : vector<1x1x4x8xbf16> to vector<4x8xbf16>
    %c12_880 = arith.constant 12 : index
    %c0_881 = arith.constant 0 : index
    %c0_882 = arith.constant 0 : index
    %972 = vector.load %arg2[%c12_880, %c0_881, %c0_882] : memref<16x8x4xbf16, #tpu.memory_space<vmem>>, vector<1x8x4xbf16>
    %973 = vector.shape_cast %972 : vector<1x8x4xbf16> to vector<8x4xbf16>
    %cst_883 = arith.constant dense<0.000000e+00> : vector<8x8xf32>
    %974 = tpu.matmul %973, %971, %cst_883 {dimension_numbers = #tpu.dot_dimension_numbers<[1], [0], [0], [1], [0, 0, 1, 1], [], []>} : vector<8x4xbf16>, vector<4x8xbf16>, vector<8x8xf32> -> vector<8x8xf32>
    %975 = arith.addf %967, %974 : vector<8x8xf32>
    %c1_i32_884 = arith.constant 1 : i32
    %976 = arith.addi %870, %c1_i32_884 : i32
    %c0_885 = arith.constant 0 : index
    %977 = arith.index_cast %976 : i32 to index
    %c12_886 = arith.constant 12 : index
    %c0_887 = arith.constant 0 : index
    %978 = vector.load %arg3[%c0_885, %977, %c12_886, %c0_887] : memref<1x9x16x9xbf16, #tpu.memory_space<vmem>>, vector<1x1x4x8xbf16>
    %979 = vector.shape_cast %978 : vector<1x1x4x8xbf16> to vector<4x8xbf16>
    %c13_888 = arith.constant 13 : index
    %c0_889 = arith.constant 0 : index
    %c0_890 = arith.constant 0 : index
    %980 = vector.load %arg2[%c13_888, %c0_889, %c0_890] : memref<16x8x4xbf16, #tpu.memory_space<vmem>>, vector<1x8x4xbf16>
    %981 = vector.shape_cast %980 : vector<1x8x4xbf16> to vector<8x4xbf16>
    %cst_891 = arith.constant dense<0.000000e+00> : vector<8x8xf32>
    %982 = tpu.matmul %981, %979, %cst_891 {dimension_numbers = #tpu.dot_dimension_numbers<[1], [0], [0], [1], [0, 0, 1, 1], [], []>} : vector<8x4xbf16>, vector<4x8xbf16>, vector<8x8xf32> -> vector<8x8xf32>
    %983 = arith.addf %975, %982 : vector<8x8xf32>
    %c1_i32_892 = arith.constant 1 : i32
    %984 = arith.addi %870, %c1_i32_892 : i32
    %c0_893 = arith.constant 0 : index
    %985 = arith.index_cast %984 : i32 to index
    %c8_894 = arith.constant 8 : index
    %c1_895 = arith.constant 1 : index
    %986 = vector.load %arg3[%c0_893, %985, %c8_894, %c1_895] : memref<1x9x16x9xbf16, #tpu.memory_space<vmem>>, vector<1x1x4x8xbf16>
    %987 = vector.shape_cast %986 : vector<1x1x4x8xbf16> to vector<4x8xbf16>
    %c14_896 = arith.constant 14 : index
    %c0_897 = arith.constant 0 : index
    %c0_898 = arith.constant 0 : index
    %988 = vector.load %arg2[%c14_896, %c0_897, %c0_898] : memref<16x8x4xbf16, #tpu.memory_space<vmem>>, vector<1x8x4xbf16>
    %989 = vector.shape_cast %988 : vector<1x8x4xbf16> to vector<8x4xbf16>
    %cst_899 = arith.constant dense<0.000000e+00> : vector<8x8xf32>
    %990 = tpu.matmul %989, %987, %cst_899 {dimension_numbers = #tpu.dot_dimension_numbers<[1], [0], [0], [1], [0, 0, 1, 1], [], []>} : vector<8x4xbf16>, vector<4x8xbf16>, vector<8x8xf32> -> vector<8x8xf32>
    %991 = arith.addf %983, %990 : vector<8x8xf32>
    %c1_i32_900 = arith.constant 1 : i32
    %992 = arith.addi %870, %c1_i32_900 : i32
    %c0_901 = arith.constant 0 : index
    %993 = arith.index_cast %992 : i32 to index
    %c12_902 = arith.constant 12 : index
    %c1_903 = arith.constant 1 : index
    %994 = vector.load %arg3[%c0_901, %993, %c12_902, %c1_903] : memref<1x9x16x9xbf16, #tpu.memory_space<vmem>>, vector<1x1x4x8xbf16>
    %995 = vector.shape_cast %994 : vector<1x1x4x8xbf16> to vector<4x8xbf16>
    %c15_904 = arith.constant 15 : index
    %c0_905 = arith.constant 0 : index
    %c0_906 = arith.constant 0 : index
    %996 = vector.load %arg2[%c15_904, %c0_905, %c0_906] : memref<16x8x4xbf16, #tpu.memory_space<vmem>>, vector<1x8x4xbf16>
    %997 = vector.shape_cast %996 : vector<1x8x4xbf16> to vector<8x4xbf16>
    %cst_907 = arith.constant dense<0.000000e+00> : vector<8x8xf32>
    %998 = tpu.matmul %997, %995, %cst_907 {dimension_numbers = #tpu.dot_dimension_numbers<[1], [0], [0], [1], [0, 0, 1, 1], [], []>} : vector<8x4xbf16>, vector<4x8xbf16>, vector<8x8xf32> -> vector<8x8xf32>
    %999 = arith.addf %991, %998 : vector<8x8xf32>
    %c8_i32_908 = arith.constant 8 : i32
    %1000 = arith.cmpi slt, %870, %c8_i32_908 : i32
    %1001 = arith.extui %1000 : i1 to i32
    %1002 = arith.sitofp %1001 : i32 to f32
    %cst_909 = arith.constant dense<0.000000e+00> : vector<8xf32>
    %1003 = vector.multi_reduction <add>, %999, %cst_909 [1] : vector<8x8xf32> to vector<8xf32>
    %1004 = vector.shape_cast %1003 : vector<8xf32> to vector<8x1xf32>
    %1005 = vector.broadcast %1002 : f32 to vector<8x1xf32>
    %1006 = arith.mulf %1005, %1004 : vector<8x1xf32>
    %1007 = arith.addf %863, %1006 : vector<8x1xf32>
    %1008 = arith.mulf %999, %999 : vector<8x8xf32>
    %cst_910 = arith.constant dense<0.000000e+00> : vector<8xf32>
    %1009 = vector.multi_reduction <add>, %1008, %cst_910 [1] : vector<8x8xf32> to vector<8xf32>
    %1010 = vector.shape_cast %1009 : vector<8xf32> to vector<8x1xf32>
    %1011 = vector.broadcast %1002 : f32 to vector<8x1xf32>
    %1012 = arith.mulf %1011, %1010 : vector<8x1xf32>
    %1013 = arith.addf %869, %1012 : vector<8x1xf32>
    %c7_i32 = arith.constant 7 : i32
    %1014 = arith.addi %3, %c7_i32 : i32
    %cst_911 = arith.constant 0.000000e+00 : f32
    %1015 = vector.broadcast %cst_911 : f32 to vector<8x8xf32>
    %c0_i32_912 = arith.constant 0 : i32
    %1016 = arith.addi %1014, %c0_i32_912 : i32
    %c0_913 = arith.constant 0 : index
    %1017 = arith.index_cast %1016 : i32 to index
    %c0_914 = arith.constant 0 : index
    %c0_915 = arith.constant 0 : index
    %1018 = vector.load %arg3[%c0_913, %1017, %c0_914, %c0_915] : memref<1x9x16x9xbf16, #tpu.memory_space<vmem>>, vector<1x1x4x8xbf16>
    %1019 = vector.shape_cast %1018 : vector<1x1x4x8xbf16> to vector<4x8xbf16>
    %c0_916 = arith.constant 0 : index
    %c0_917 = arith.constant 0 : index
    %c0_918 = arith.constant 0 : index
    %1020 = vector.load %arg2[%c0_916, %c0_917, %c0_918] : memref<16x8x4xbf16, #tpu.memory_space<vmem>>, vector<1x8x4xbf16>
    %1021 = vector.shape_cast %1020 : vector<1x8x4xbf16> to vector<8x4xbf16>
    %cst_919 = arith.constant dense<0.000000e+00> : vector<8x8xf32>
    %1022 = tpu.matmul %1021, %1019, %cst_919 {dimension_numbers = #tpu.dot_dimension_numbers<[1], [0], [0], [1], [0, 0, 1, 1], [], []>} : vector<8x4xbf16>, vector<4x8xbf16>, vector<8x8xf32> -> vector<8x8xf32>
    %1023 = arith.addf %1015, %1022 : vector<8x8xf32>
    %c0_i32_920 = arith.constant 0 : i32
    %1024 = arith.addi %1014, %c0_i32_920 : i32
    %c0_921 = arith.constant 0 : index
    %1025 = arith.index_cast %1024 : i32 to index
    %c4_922 = arith.constant 4 : index
    %c0_923 = arith.constant 0 : index
    %1026 = vector.load %arg3[%c0_921, %1025, %c4_922, %c0_923] : memref<1x9x16x9xbf16, #tpu.memory_space<vmem>>, vector<1x1x4x8xbf16>
    %1027 = vector.shape_cast %1026 : vector<1x1x4x8xbf16> to vector<4x8xbf16>
    %c1_924 = arith.constant 1 : index
    %c0_925 = arith.constant 0 : index
    %c0_926 = arith.constant 0 : index
    %1028 = vector.load %arg2[%c1_924, %c0_925, %c0_926] : memref<16x8x4xbf16, #tpu.memory_space<vmem>>, vector<1x8x4xbf16>
    %1029 = vector.shape_cast %1028 : vector<1x8x4xbf16> to vector<8x4xbf16>
    %cst_927 = arith.constant dense<0.000000e+00> : vector<8x8xf32>
    %1030 = tpu.matmul %1029, %1027, %cst_927 {dimension_numbers = #tpu.dot_dimension_numbers<[1], [0], [0], [1], [0, 0, 1, 1], [], []>} : vector<8x4xbf16>, vector<4x8xbf16>, vector<8x8xf32> -> vector<8x8xf32>
    %1031 = arith.addf %1023, %1030 : vector<8x8xf32>
    %c0_i32_928 = arith.constant 0 : i32
    %1032 = arith.addi %1014, %c0_i32_928 : i32
    %c0_929 = arith.constant 0 : index
    %1033 = arith.index_cast %1032 : i32 to index
    %c0_930 = arith.constant 0 : index
    %c1_931 = arith.constant 1 : index
    %1034 = vector.load %arg3[%c0_929, %1033, %c0_930, %c1_931] : memref<1x9x16x9xbf16, #tpu.memory_space<vmem>>, vector<1x1x4x8xbf16>
    %1035 = vector.shape_cast %1034 : vector<1x1x4x8xbf16> to vector<4x8xbf16>
    %c2_932 = arith.constant 2 : index
    %c0_933 = arith.constant 0 : index
    %c0_934 = arith.constant 0 : index
    %1036 = vector.load %arg2[%c2_932, %c0_933, %c0_934] : memref<16x8x4xbf16, #tpu.memory_space<vmem>>, vector<1x8x4xbf16>
    %1037 = vector.shape_cast %1036 : vector<1x8x4xbf16> to vector<8x4xbf16>
    %cst_935 = arith.constant dense<0.000000e+00> : vector<8x8xf32>
    %1038 = tpu.matmul %1037, %1035, %cst_935 {dimension_numbers = #tpu.dot_dimension_numbers<[1], [0], [0], [1], [0, 0, 1, 1], [], []>} : vector<8x4xbf16>, vector<4x8xbf16>, vector<8x8xf32> -> vector<8x8xf32>
    %1039 = arith.addf %1031, %1038 : vector<8x8xf32>
    %c0_i32_936 = arith.constant 0 : i32
    %1040 = arith.addi %1014, %c0_i32_936 : i32
    %c0_937 = arith.constant 0 : index
    %1041 = arith.index_cast %1040 : i32 to index
    %c4_938 = arith.constant 4 : index
    %c1_939 = arith.constant 1 : index
    %1042 = vector.load %arg3[%c0_937, %1041, %c4_938, %c1_939] : memref<1x9x16x9xbf16, #tpu.memory_space<vmem>>, vector<1x1x4x8xbf16>
    %1043 = vector.shape_cast %1042 : vector<1x1x4x8xbf16> to vector<4x8xbf16>
    %c3_940 = arith.constant 3 : index
    %c0_941 = arith.constant 0 : index
    %c0_942 = arith.constant 0 : index
    %1044 = vector.load %arg2[%c3_940, %c0_941, %c0_942] : memref<16x8x4xbf16, #tpu.memory_space<vmem>>, vector<1x8x4xbf16>
    %1045 = vector.shape_cast %1044 : vector<1x8x4xbf16> to vector<8x4xbf16>
    %cst_943 = arith.constant dense<0.000000e+00> : vector<8x8xf32>
    %1046 = tpu.matmul %1045, %1043, %cst_943 {dimension_numbers = #tpu.dot_dimension_numbers<[1], [0], [0], [1], [0, 0, 1, 1], [], []>} : vector<8x4xbf16>, vector<4x8xbf16>, vector<8x8xf32> -> vector<8x8xf32>
    %1047 = arith.addf %1039, %1046 : vector<8x8xf32>
    %c0_i32_944 = arith.constant 0 : i32
    %1048 = arith.addi %1014, %c0_i32_944 : i32
    %c0_945 = arith.constant 0 : index
    %1049 = arith.index_cast %1048 : i32 to index
    %c8_946 = arith.constant 8 : index
    %c0_947 = arith.constant 0 : index
    %1050 = vector.load %arg3[%c0_945, %1049, %c8_946, %c0_947] : memref<1x9x16x9xbf16, #tpu.memory_space<vmem>>, vector<1x1x4x8xbf16>
    %1051 = vector.shape_cast %1050 : vector<1x1x4x8xbf16> to vector<4x8xbf16>
    %c4_948 = arith.constant 4 : index
    %c0_949 = arith.constant 0 : index
    %c0_950 = arith.constant 0 : index
    %1052 = vector.load %arg2[%c4_948, %c0_949, %c0_950] : memref<16x8x4xbf16, #tpu.memory_space<vmem>>, vector<1x8x4xbf16>
    %1053 = vector.shape_cast %1052 : vector<1x8x4xbf16> to vector<8x4xbf16>
    %cst_951 = arith.constant dense<0.000000e+00> : vector<8x8xf32>
    %1054 = tpu.matmul %1053, %1051, %cst_951 {dimension_numbers = #tpu.dot_dimension_numbers<[1], [0], [0], [1], [0, 0, 1, 1], [], []>} : vector<8x4xbf16>, vector<4x8xbf16>, vector<8x8xf32> -> vector<8x8xf32>
    %1055 = arith.addf %1047, %1054 : vector<8x8xf32>
    %c0_i32_952 = arith.constant 0 : i32
    %1056 = arith.addi %1014, %c0_i32_952 : i32
    %c0_953 = arith.constant 0 : index
    %1057 = arith.index_cast %1056 : i32 to index
    %c12_954 = arith.constant 12 : index
    %c0_955 = arith.constant 0 : index
    %1058 = vector.load %arg3[%c0_953, %1057, %c12_954, %c0_955] : memref<1x9x16x9xbf16, #tpu.memory_space<vmem>>, vector<1x1x4x8xbf16>
    %1059 = vector.shape_cast %1058 : vector<1x1x4x8xbf16> to vector<4x8xbf16>
    %c5_956 = arith.constant 5 : index
    %c0_957 = arith.constant 0 : index
    %c0_958 = arith.constant 0 : index
    %1060 = vector.load %arg2[%c5_956, %c0_957, %c0_958] : memref<16x8x4xbf16, #tpu.memory_space<vmem>>, vector<1x8x4xbf16>
    %1061 = vector.shape_cast %1060 : vector<1x8x4xbf16> to vector<8x4xbf16>
    %cst_959 = arith.constant dense<0.000000e+00> : vector<8x8xf32>
    %1062 = tpu.matmul %1061, %1059, %cst_959 {dimension_numbers = #tpu.dot_dimension_numbers<[1], [0], [0], [1], [0, 0, 1, 1], [], []>} : vector<8x4xbf16>, vector<4x8xbf16>, vector<8x8xf32> -> vector<8x8xf32>
    %1063 = arith.addf %1055, %1062 : vector<8x8xf32>
    %c0_i32_960 = arith.constant 0 : i32
    %1064 = arith.addi %1014, %c0_i32_960 : i32
    %c0_961 = arith.constant 0 : index
    %1065 = arith.index_cast %1064 : i32 to index
    %c8_962 = arith.constant 8 : index
    %c1_963 = arith.constant 1 : index
    %1066 = vector.load %arg3[%c0_961, %1065, %c8_962, %c1_963] : memref<1x9x16x9xbf16, #tpu.memory_space<vmem>>, vector<1x1x4x8xbf16>
    %1067 = vector.shape_cast %1066 : vector<1x1x4x8xbf16> to vector<4x8xbf16>
    %c6_964 = arith.constant 6 : index
    %c0_965 = arith.constant 0 : index
    %c0_966 = arith.constant 0 : index
    %1068 = vector.load %arg2[%c6_964, %c0_965, %c0_966] : memref<16x8x4xbf16, #tpu.memory_space<vmem>>, vector<1x8x4xbf16>
    %1069 = vector.shape_cast %1068 : vector<1x8x4xbf16> to vector<8x4xbf16>
    %cst_967 = arith.constant dense<0.000000e+00> : vector<8x8xf32>
    %1070 = tpu.matmul %1069, %1067, %cst_967 {dimension_numbers = #tpu.dot_dimension_numbers<[1], [0], [0], [1], [0, 0, 1, 1], [], []>} : vector<8x4xbf16>, vector<4x8xbf16>, vector<8x8xf32> -> vector<8x8xf32>
    %1071 = arith.addf %1063, %1070 : vector<8x8xf32>
    %c0_i32_968 = arith.constant 0 : i32
    %1072 = arith.addi %1014, %c0_i32_968 : i32
    %c0_969 = arith.constant 0 : index
    %1073 = arith.index_cast %1072 : i32 to index
    %c12_970 = arith.constant 12 : index
    %c1_971 = arith.constant 1 : index
    %1074 = vector.load %arg3[%c0_969, %1073, %c12_970, %c1_971] : memref<1x9x16x9xbf16, #tpu.memory_space<vmem>>, vector<1x1x4x8xbf16>
    %1075 = vector.shape_cast %1074 : vector<1x1x4x8xbf16> to vector<4x8xbf16>
    %c7_972 = arith.constant 7 : index
    %c0_973 = arith.constant 0 : index
    %c0_974 = arith.constant 0 : index
    %1076 = vector.load %arg2[%c7_972, %c0_973, %c0_974] : memref<16x8x4xbf16, #tpu.memory_space<vmem>>, vector<1x8x4xbf16>
    %1077 = vector.shape_cast %1076 : vector<1x8x4xbf16> to vector<8x4xbf16>
    %cst_975 = arith.constant dense<0.000000e+00> : vector<8x8xf32>
    %1078 = tpu.matmul %1077, %1075, %cst_975 {dimension_numbers = #tpu.dot_dimension_numbers<[1], [0], [0], [1], [0, 0, 1, 1], [], []>} : vector<8x4xbf16>, vector<4x8xbf16>, vector<8x8xf32> -> vector<8x8xf32>
    %1079 = arith.addf %1071, %1078 : vector<8x8xf32>
    %c1_i32_976 = arith.constant 1 : i32
    %1080 = arith.addi %1014, %c1_i32_976 : i32
    %c0_977 = arith.constant 0 : index
    %1081 = arith.index_cast %1080 : i32 to index
    %c0_978 = arith.constant 0 : index
    %c0_979 = arith.constant 0 : index
    %1082 = vector.load %arg3[%c0_977, %1081, %c0_978, %c0_979] : memref<1x9x16x9xbf16, #tpu.memory_space<vmem>>, vector<1x1x4x8xbf16>
    %1083 = vector.shape_cast %1082 : vector<1x1x4x8xbf16> to vector<4x8xbf16>
    %c8_980 = arith.constant 8 : index
    %c0_981 = arith.constant 0 : index
    %c0_982 = arith.constant 0 : index
    %1084 = vector.load %arg2[%c8_980, %c0_981, %c0_982] : memref<16x8x4xbf16, #tpu.memory_space<vmem>>, vector<1x8x4xbf16>
    %1085 = vector.shape_cast %1084 : vector<1x8x4xbf16> to vector<8x4xbf16>
    %cst_983 = arith.constant dense<0.000000e+00> : vector<8x8xf32>
    %1086 = tpu.matmul %1085, %1083, %cst_983 {dimension_numbers = #tpu.dot_dimension_numbers<[1], [0], [0], [1], [0, 0, 1, 1], [], []>} : vector<8x4xbf16>, vector<4x8xbf16>, vector<8x8xf32> -> vector<8x8xf32>
    %1087 = arith.addf %1079, %1086 : vector<8x8xf32>
    %c1_i32_984 = arith.constant 1 : i32
    %1088 = arith.addi %1014, %c1_i32_984 : i32
    %c0_985 = arith.constant 0 : index
    %1089 = arith.index_cast %1088 : i32 to index
    %c4_986 = arith.constant 4 : index
    %c0_987 = arith.constant 0 : index
    %1090 = vector.load %arg3[%c0_985, %1089, %c4_986, %c0_987] : memref<1x9x16x9xbf16, #tpu.memory_space<vmem>>, vector<1x1x4x8xbf16>
    %1091 = vector.shape_cast %1090 : vector<1x1x4x8xbf16> to vector<4x8xbf16>
    %c9_988 = arith.constant 9 : index
    %c0_989 = arith.constant 0 : index
    %c0_990 = arith.constant 0 : index
    %1092 = vector.load %arg2[%c9_988, %c0_989, %c0_990] : memref<16x8x4xbf16, #tpu.memory_space<vmem>>, vector<1x8x4xbf16>
    %1093 = vector.shape_cast %1092 : vector<1x8x4xbf16> to vector<8x4xbf16>
    %cst_991 = arith.constant dense<0.000000e+00> : vector<8x8xf32>
    %1094 = tpu.matmul %1093, %1091, %cst_991 {dimension_numbers = #tpu.dot_dimension_numbers<[1], [0], [0], [1], [0, 0, 1, 1], [], []>} : vector<8x4xbf16>, vector<4x8xbf16>, vector<8x8xf32> -> vector<8x8xf32>
    %1095 = arith.addf %1087, %1094 : vector<8x8xf32>
    %c1_i32_992 = arith.constant 1 : i32
    %1096 = arith.addi %1014, %c1_i32_992 : i32
    %c0_993 = arith.constant 0 : index
    %1097 = arith.index_cast %1096 : i32 to index
    %c0_994 = arith.constant 0 : index
    %c1_995 = arith.constant 1 : index
    %1098 = vector.load %arg3[%c0_993, %1097, %c0_994, %c1_995] : memref<1x9x16x9xbf16, #tpu.memory_space<vmem>>, vector<1x1x4x8xbf16>
    %1099 = vector.shape_cast %1098 : vector<1x1x4x8xbf16> to vector<4x8xbf16>
    %c10_996 = arith.constant 10 : index
    %c0_997 = arith.constant 0 : index
    %c0_998 = arith.constant 0 : index
    %1100 = vector.load %arg2[%c10_996, %c0_997, %c0_998] : memref<16x8x4xbf16, #tpu.memory_space<vmem>>, vector<1x8x4xbf16>
    %1101 = vector.shape_cast %1100 : vector<1x8x4xbf16> to vector<8x4xbf16>
    %cst_999 = arith.constant dense<0.000000e+00> : vector<8x8xf32>
    %1102 = tpu.matmul %1101, %1099, %cst_999 {dimension_numbers = #tpu.dot_dimension_numbers<[1], [0], [0], [1], [0, 0, 1, 1], [], []>} : vector<8x4xbf16>, vector<4x8xbf16>, vector<8x8xf32> -> vector<8x8xf32>
    %1103 = arith.addf %1095, %1102 : vector<8x8xf32>
    %c1_i32_1000 = arith.constant 1 : i32
    %1104 = arith.addi %1014, %c1_i32_1000 : i32
    %c0_1001 = arith.constant 0 : index
    %1105 = arith.index_cast %1104 : i32 to index
    %c4_1002 = arith.constant 4 : index
    %c1_1003 = arith.constant 1 : index
    %1106 = vector.load %arg3[%c0_1001, %1105, %c4_1002, %c1_1003] : memref<1x9x16x9xbf16, #tpu.memory_space<vmem>>, vector<1x1x4x8xbf16>
    %1107 = vector.shape_cast %1106 : vector<1x1x4x8xbf16> to vector<4x8xbf16>
    %c11_1004 = arith.constant 11 : index
    %c0_1005 = arith.constant 0 : index
    %c0_1006 = arith.constant 0 : index
    %1108 = vector.load %arg2[%c11_1004, %c0_1005, %c0_1006] : memref<16x8x4xbf16, #tpu.memory_space<vmem>>, vector<1x8x4xbf16>
    %1109 = vector.shape_cast %1108 : vector<1x8x4xbf16> to vector<8x4xbf16>
    %cst_1007 = arith.constant dense<0.000000e+00> : vector<8x8xf32>
    %1110 = tpu.matmul %1109, %1107, %cst_1007 {dimension_numbers = #tpu.dot_dimension_numbers<[1], [0], [0], [1], [0, 0, 1, 1], [], []>} : vector<8x4xbf16>, vector<4x8xbf16>, vector<8x8xf32> -> vector<8x8xf32>
    %1111 = arith.addf %1103, %1110 : vector<8x8xf32>
    %c1_i32_1008 = arith.constant 1 : i32
    %1112 = arith.addi %1014, %c1_i32_1008 : i32
    %c0_1009 = arith.constant 0 : index
    %1113 = arith.index_cast %1112 : i32 to index
    %c8_1010 = arith.constant 8 : index
    %c0_1011 = arith.constant 0 : index
    %1114 = vector.load %arg3[%c0_1009, %1113, %c8_1010, %c0_1011] : memref<1x9x16x9xbf16, #tpu.memory_space<vmem>>, vector<1x1x4x8xbf16>
    %1115 = vector.shape_cast %1114 : vector<1x1x4x8xbf16> to vector<4x8xbf16>
    %c12_1012 = arith.constant 12 : index
    %c0_1013 = arith.constant 0 : index
    %c0_1014 = arith.constant 0 : index
    %1116 = vector.load %arg2[%c12_1012, %c0_1013, %c0_1014] : memref<16x8x4xbf16, #tpu.memory_space<vmem>>, vector<1x8x4xbf16>
    %1117 = vector.shape_cast %1116 : vector<1x8x4xbf16> to vector<8x4xbf16>
    %cst_1015 = arith.constant dense<0.000000e+00> : vector<8x8xf32>
    %1118 = tpu.matmul %1117, %1115, %cst_1015 {dimension_numbers = #tpu.dot_dimension_numbers<[1], [0], [0], [1], [0, 0, 1, 1], [], []>} : vector<8x4xbf16>, vector<4x8xbf16>, vector<8x8xf32> -> vector<8x8xf32>
    %1119 = arith.addf %1111, %1118 : vector<8x8xf32>
    %c1_i32_1016 = arith.constant 1 : i32
    %1120 = arith.addi %1014, %c1_i32_1016 : i32
    %c0_1017 = arith.constant 0 : index
    %1121 = arith.index_cast %1120 : i32 to index
    %c12_1018 = arith.constant 12 : index
    %c0_1019 = arith.constant 0 : index
    %1122 = vector.load %arg3[%c0_1017, %1121, %c12_1018, %c0_1019] : memref<1x9x16x9xbf16, #tpu.memory_space<vmem>>, vector<1x1x4x8xbf16>
    %1123 = vector.shape_cast %1122 : vector<1x1x4x8xbf16> to vector<4x8xbf16>
    %c13_1020 = arith.constant 13 : index
    %c0_1021 = arith.constant 0 : index
    %c0_1022 = arith.constant 0 : index
    %1124 = vector.load %arg2[%c13_1020, %c0_1021, %c0_1022] : memref<16x8x4xbf16, #tpu.memory_space<vmem>>, vector<1x8x4xbf16>
    %1125 = vector.shape_cast %1124 : vector<1x8x4xbf16> to vector<8x4xbf16>
    %cst_1023 = arith.constant dense<0.000000e+00> : vector<8x8xf32>
    %1126 = tpu.matmul %1125, %1123, %cst_1023 {dimension_numbers = #tpu.dot_dimension_numbers<[1], [0], [0], [1], [0, 0, 1, 1], [], []>} : vector<8x4xbf16>, vector<4x8xbf16>, vector<8x8xf32> -> vector<8x8xf32>
    %1127 = arith.addf %1119, %1126 : vector<8x8xf32>
    %c1_i32_1024 = arith.constant 1 : i32
    %1128 = arith.addi %1014, %c1_i32_1024 : i32
    %c0_1025 = arith.constant 0 : index
    %1129 = arith.index_cast %1128 : i32 to index
    %c8_1026 = arith.constant 8 : index
    %c1_1027 = arith.constant 1 : index
    %1130 = vector.load %arg3[%c0_1025, %1129, %c8_1026, %c1_1027] : memref<1x9x16x9xbf16, #tpu.memory_space<vmem>>, vector<1x1x4x8xbf16>
    %1131 = vector.shape_cast %1130 : vector<1x1x4x8xbf16> to vector<4x8xbf16>
    %c14_1028 = arith.constant 14 : index
    %c0_1029 = arith.constant 0 : index
    %c0_1030 = arith.constant 0 : index
    %1132 = vector.load %arg2[%c14_1028, %c0_1029, %c0_1030] : memref<16x8x4xbf16, #tpu.memory_space<vmem>>, vector<1x8x4xbf16>
    %1133 = vector.shape_cast %1132 : vector<1x8x4xbf16> to vector<8x4xbf16>
    %cst_1031 = arith.constant dense<0.000000e+00> : vector<8x8xf32>
    %1134 = tpu.matmul %1133, %1131, %cst_1031 {dimension_numbers = #tpu.dot_dimension_numbers<[1], [0], [0], [1], [0, 0, 1, 1], [], []>} : vector<8x4xbf16>, vector<4x8xbf16>, vector<8x8xf32> -> vector<8x8xf32>
    %1135 = arith.addf %1127, %1134 : vector<8x8xf32>
    %c1_i32_1032 = arith.constant 1 : i32
    %1136 = arith.addi %1014, %c1_i32_1032 : i32
    %c0_1033 = arith.constant 0 : index
    %1137 = arith.index_cast %1136 : i32 to index
    %c12_1034 = arith.constant 12 : index
    %c1_1035 = arith.constant 1 : index
    %1138 = vector.load %arg3[%c0_1033, %1137, %c12_1034, %c1_1035] : memref<1x9x16x9xbf16, #tpu.memory_space<vmem>>, vector<1x1x4x8xbf16>
    %1139 = vector.shape_cast %1138 : vector<1x1x4x8xbf16> to vector<4x8xbf16>
    %c15_1036 = arith.constant 15 : index
    %c0_1037 = arith.constant 0 : index
    %c0_1038 = arith.constant 0 : index
    %1140 = vector.load %arg2[%c15_1036, %c0_1037, %c0_1038] : memref<16x8x4xbf16, #tpu.memory_space<vmem>>, vector<1x8x4xbf16>
    %1141 = vector.shape_cast %1140 : vector<1x8x4xbf16> to vector<8x4xbf16>
    %cst_1039 = arith.constant dense<0.000000e+00> : vector<8x8xf32>
    %1142 = tpu.matmul %1141, %1139, %cst_1039 {dimension_numbers = #tpu.dot_dimension_numbers<[1], [0], [0], [1], [0, 0, 1, 1], [], []>} : vector<8x4xbf16>, vector<4x8xbf16>, vector<8x8xf32> -> vector<8x8xf32>
    %1143 = arith.addf %1135, %1142 : vector<8x8xf32>
    %c8_i32_1040 = arith.constant 8 : i32
    %1144 = arith.cmpi slt, %1014, %c8_i32_1040 : i32
    %1145 = arith.extui %1144 : i1 to i32
    %1146 = arith.sitofp %1145 : i32 to f32
    %cst_1041 = arith.constant dense<0.000000e+00> : vector<8xf32>
    %1147 = vector.multi_reduction <add>, %1143, %cst_1041 [1] : vector<8x8xf32> to vector<8xf32>
    %1148 = vector.shape_cast %1147 : vector<8xf32> to vector<8x1xf32>
    %1149 = vector.broadcast %1146 : f32 to vector<8x1xf32>
    %1150 = arith.mulf %1149, %1148 : vector<8x1xf32>
    %1151 = arith.addf %1007, %1150 : vector<8x1xf32>
    %1152 = arith.mulf %1143, %1143 : vector<8x8xf32>
    %cst_1042 = arith.constant dense<0.000000e+00> : vector<8xf32>
    %1153 = vector.multi_reduction <add>, %1152, %cst_1042 [1] : vector<8x8xf32> to vector<8xf32>
    %1154 = vector.shape_cast %1153 : vector<8xf32> to vector<8x1xf32>
    %1155 = vector.broadcast %1146 : f32 to vector<8x1xf32>
    %1156 = arith.mulf %1155, %1154 : vector<8x1xf32>
    %1157 = arith.addf %1013, %1156 : vector<8x1xf32>
    %1158 = tpu.concatenate %135, %279, %423, %567, %711, %855, %999, %1143 in 1 : vector<8x8xf32>, vector<8x8xf32>, vector<8x8xf32>, vector<8x8xf32>, vector<8x8xf32>, vector<8x8xf32>, vector<8x8xf32>, vector<8x8xf32> -> vector<8x64xf32>
    %1159 = arith.truncf %1158 : vector<8x64xf32> to vector<8x64xbf16>
    %c0_1043 = arith.constant 0 : index
    %c0_1044 = arith.constant 0 : index
    %c0_1045 = arith.constant 0 : index
    %1160 = vector.load %arg4[%c0_1043, %c0_1044, %c0_1045] : memref<1x8x64xbf16, #tpu.memory_space<vmem>>, vector<1x8x64xbf16>
    %1161 = vector.shape_cast %1160 : vector<1x8x64xbf16> to vector<8x64xbf16>
    %1162 = vector.shape_cast %1159 : vector<8x64xbf16> to vector<1x8x64xbf16>
    tpu.vector_store %arg4[%c0_1043, %c0_1044, %c0_1045], %1162 {strides = array<i32>} : memref<1x8x64xbf16, #tpu.memory_space<vmem>>, vector<1x8x64xbf16>,
    %c0_1046 = arith.constant 0 : index
    %c0_1047 = arith.constant 0 : index
    %c0_1048 = arith.constant 0 : index
    %1163 = vector.load %arg5[%c0_1046, %c0_1047, %c0_1048] : memref<1x8x1xf32, #tpu.memory_space<vmem>>, vector<1x8x1xf32>
    %1164 = vector.shape_cast %1151 : vector<8x1xf32> to vector<1x8x1xf32>
    %1165 = arith.addf %1163, %1164 : vector<1x8x1xf32>
    %c0_1049 = arith.constant 0 : index
    %c0_1050 = arith.constant 0 : index
    %c0_1051 = arith.constant 0 : index
    %1166 = vector.load %arg5[%c0_1049, %c0_1050, %c0_1051] : memref<1x8x1xf32, #tpu.memory_space<vmem>>, vector<1x8x1xf32>
    tpu.vector_store %arg5[%c0_1049, %c0_1050, %c0_1051], %1165 {strides = array<i32>} : memref<1x8x1xf32, #tpu.memory_space<vmem>>, vector<1x8x1xf32>,
    %c0_1052 = arith.constant 0 : index
    %c0_1053 = arith.constant 0 : index
    %c0_1054 = arith.constant 0 : index
    %1167 = vector.load %arg6[%c0_1052, %c0_1053, %c0_1054] : memref<1x8x1xf32, #tpu.memory_space<vmem>>, vector<1x8x1xf32>
    %1168 = vector.shape_cast %1157 : vector<8x1xf32> to vector<1x8x1xf32>
    %1169 = arith.addf %1167, %1168 : vector<1x8x1xf32>
    %c0_1055 = arith.constant 0 : index
    %c0_1056 = arith.constant 0 : index
    %c0_1057 = arith.constant 0 : index
    %1170 = vector.load %arg6[%c0_1055, %c0_1056, %c0_1057] : memref<1x8x1xf32, #tpu.memory_space<vmem>>, vector<1x8x1xf32>
    tpu.vector_store %arg6[%c0_1055, %c0_1056, %c0_1057], %1169 {strides = array<i32>} : memref<1x8x1xf32, #tpu.memory_space<vmem>>, vector<1x8x1xf32>,
    return
  }
  func.func @transform_0(%arg0: i32, %arg1: i32) -> (i32, i32, i32) {
    %c0_i32 = arith.constant 0 : i32
    %c0_i32_0 = arith.constant 0 : i32
    %c0_i32_1 = arith.constant 0 : i32
    %c0_i32_2 = arith.constant 0 : i32
    return %c0_i32, %c0_i32_0, %c0_i32_1 : i32, i32, i32
  }
  func.func @transform_1(%arg0: i32, %arg1: i32) -> (i32, i32, i32, i32) {
    %c0_i32 = arith.constant 0 : i32
    %c0_i32_0 = arith.constant 0 : i32
    %c0_i32_1 = arith.constant 0 : i32
    %c0_i32_2 = arith.constant 0 : i32
    return %arg0, %c0_i32, %c0_i32_0, %c0_i32_1 : i32, i32, i32, i32
  }
  func.func @transform_2(%arg0: i32, %arg1: i32) -> (i32, i32, i32) {
    %c0_i32 = arith.constant 0 : i32
    %c0_i32_0 = arith.constant 0 : i32
    %c0_i32_1 = arith.constant 0 : i32
    return %arg0, %c0_i32, %c0_i32_0 : i32, i32, i32
  }
  func.func @transform_3(%arg0: i32, %arg1: i32) -> (i32, i32, i32) {
    %c0_i32 = arith.constant 0 : i32
    %c0_i32_0 = arith.constant 0 : i32
    %c0_i32_1 = arith.constant 0 : i32
    return %arg0, %c0_i32, %c0_i32_0 : i32, i32, i32
  }
  func.func @transform_4(%arg0: i32, %arg1: i32) -> (i32, i32, i32) {
    %c0_i32 = arith.constant 0 : i32
    %c0_i32_0 = arith.constant 0 : i32
    %c0_i32_1 = arith.constant 0 : i32
    return %arg0, %c0_i32, %c0_i32_0 : i32, i32, i32
  }
}

</mosaic_0001>

<llo_original>
// kernel: tpu_custom_call.1
$region0: #{tpu_custom_call.1}
  #allocation0 [shape = 'u32[]', space=smem, size = 0x4, offset = 0x4, fixed_abs, tag = 'smem constant byte address 0x4 - core index']
  #allocation1 [shape = 'u32[144,128]{1,0:T(1,128)}', space=vmem, size = 0x12000, scoped, tag = 'internal scratch']
  %s0 = inlined_call_operand.vmem [shape: bf16[16,8,4], index: 0, kind: input, shape index: {}]
  %s1 = inlined_call_operand.vmem [shape: bf16[2,9,16,9], index: 1, kind: input, shape index: {}]
  %s2 = inlined_call_operand.hbm [shape: bf16[2,8,64], index: 2, kind: output, shape index: {0}]
  %s3 = inlined_call_operand.vmem [shape: f32[2,8,1], index: 3, kind: output, shape index: {1}]
  %s4 = inlined_call_operand.vmem [shape: f32[2,8,1], index: 4, kind: output, shape index: {2}]
  %5 = xla_tuple %s2, %s3, %s4
  %s6 = sld [smem:[#allocation0]]
  $region61: #{tpu_custom_call.1} parent=0
    _
  %s8 = ssub.s32 1, %s6
  %s9 = scalar_select 0, %s8, %s6
  $region1: #{tpu_custom_call.1} parent=0
    #allocation2 [shape = 'u8[4096]{0}', space=vmem, size = 0x1000, scoped, tag = 'output window, operand 0']
    #allocation3 [shape = 's32[2]{0}', space=sflag, size = 0x8, scoped, tag = 'scoped memory for tpu_custom_call.1']
    %10 = vsyncpa [#allocation3], 0
    %s11 = scalar_lea.sflag [#allocation3], 1
    %12 = vsyncpa %s11, 0
    loop: start=0, step=1, limit=4
    $region2: #{tpu_custom_call.1} parent=1 // loop_pre_header
      _
    $region3: #{tpu_custom_call.1} parent=1 // loop_header
      %s14 = sphi 0, %s18
      %p15 = scmp.ge.s32.totalorder %s14, 4
      %s21 = sphi 0, %s33
      %s22 = sphi 0, %s29
      %s23 = sphi 0, %s21
      %s24 = sphi 0, %s22
      %s25 = sphi 0, %s23
      %s26 = sphi 0, %s24
      %s34 = sphi 0, %s34
      %s36 = sphi 0, %s34
      %s37 = sphi 0, %s36
      %s51 = sphi 0, %s37
      %s57 = sphi 0, %s59
      %s60 = sphi 0, %s57
      %s61 = sphi 0, %s60
      %s77 = sphi 0, %s61
      %s83 = sphi 0, %s85
      %s86 = sphi 0, %s83
      %s87 = sphi 0, %s86
      %s103 = sphi 0, %s87
      %s109 = sphi 0, %s111
      %s112 = sphi 0, %s109
      %s113 = sphi 0, %s112
      %s129 = sphi 0, %s113
      %s135 = sphi 0, %s137
      %s138 = sphi 0, %s135
      %s139 = sphi 0, %s138
      %s155 = sphi 0, %s139
    $region4: #{tpu_custom_call.1} parent=1 // loop_header_branch
      %17 = sbr.rel (%p15) target = $region8
    $region5: #{tpu_custom_call.1} parent=1 // loop_body
      %s19 = ssub.s32 %s14, 1
      %s20 = ssub.s32 %s14, 2
      %s27 = sadd.s32 1, %s22
      %p28 = scmp.ge.s32.totalorder %s27, 1
      %s29 = scalar_select %p28, 0, %s27
      %s30 = sadd.s32 1, %s21
      %s31 = scalar_select %p28, %s30, %s21
      %p32 = scmp.ge.s32.totalorder %s31, 2
      %s33 = scalar_select %p32, 0, %s31
      %s35 = sadd.s32 %s34, 1
      %p38 = scmp.eq.s32.totalorder %s14, 1
      %p39 = scmp.ne.s32.totalorder %s34, %s36
      %p40 = scmp.eq.s32.totalorder %s14, 0
      %p41 = por %p39, %p40
      %p42 = scmp.ne.s32.totalorder %s34, %s36
      %p43 = scmp.eq.s32.totalorder %s19, 1
      %p44 = por %p42, %p43
      %p45 = scmp.ne.s32.totalorder %s36, %s37
      %p46 = scmp.eq.s32.totalorder %s19, 0
      %p47 = por %p45, %p46
      %p48 = scmp.ne.s32.totalorder %s36, %s37
      %p49 = scmp.eq.s32.totalorder %s20, 1
      %p50 = por %p48, %p49
      %p52 = scmp.ne.s32.totalorder %s37, %s51
      %p53 = scmp.eq.s32.totalorder %s20, 0
      %p54 = por %p52, %p53
      %s55 = ssub.s32 %s21, %s33
      %p56 = scmp.eq.s32.totalorder %s55, 0
      %s58 = sadd.s32 %s57, 1
      %s59 = scalar_select %p56, %s57, %s58
      %p62 = pneg %p56
      %p63 = scmp.eq.s32.totalorder %s14, 1
      %p64 = por %p62, %p63
      %p65 = scmp.ne.s32.totalorder %s57, %s60
      %p66 = scmp.eq.s32.totalorder %s14, 0
      %p67 = por %p65, %p66
      %p68 = scmp.ne.s32.totalorder %s57, %s60
      %p69 = scmp.eq.s32.totalorder %s19, 1
      %p70 = por %p68, %p69
      %p71 = scmp.ne.s32.totalorder %s60, %s61
      %p72 = scmp.eq.s32.totalorder %s19, 0
      %p73 = por %p71, %p72
      %p74 = scmp.ne.s32.totalorder %s60, %s61
      %p75 = scmp.eq.s32.totalorder %s20, 1
      %p76 = por %p74, %p75
      %p78 = scmp.ne.s32.totalorder %s61, %s77
      %p79 = scmp.eq.s32.totalorder %s20, 0
      %p80 = por %p78, %p79
      %s81 = ssub.s32 %s21, %s33
      %p82 = scmp.eq.s32.totalorder %s81, 0
      %s84 = sadd.s32 %s83, 1
      %s85 = scalar_select %p82, %s83, %s84
      %p88 = pneg %p82
      %p89 = scmp.eq.s32.totalorder %s14, 1
      %p90 = por %p88, %p89
      %p91 = scmp.ne.s32.totalorder %s83, %s86
      %p92 = scmp.eq.s32.totalorder %s14, 0
      %p93 = por %p91, %p92
      %p94 = scmp.ne.s32.totalorder %s83, %s86
      %p95 = scmp.eq.s32.totalorder %s19, 1
      %p96 = por %p94, %p95
      %p97 = scmp.ne.s32.totalorder %s86, %s87
      %p98 = scmp.eq.s32.totalorder %s19, 0
      %p99 = por %p97, %p98
      %p100 = scmp.ne.s32.totalorder %s86, %s87
      %p101 = scmp.eq.s32.totalorder %s20, 1
      %p102 = por %p100, %p101
      %p104 = scmp.ne.s32.totalorder %s87, %s103
      %p105 = scmp.eq.s32.totalorder %s20, 0
      %p106 = por %p104, %p105
      %s107 = ssub.s32 %s21, %s33
      %p108 = scmp.eq.s32.totalorder %s107, 0
      %s110 = sadd.s32 %s109, 1
      %s111 = scalar_select %p108, %s109, %s110
      %p114 = pneg %p108
      %p115 = scmp.eq.s32.totalorder %s14, 1
      %p116 = por %p114, %p115
      %p117 = scmp.ne.s32.totalorder %s109, %s112
      %p118 = scmp.eq.s32.totalorder %s14, 0
      %p119 = por %p117, %p118
      %p120 = scmp.ne.s32.totalorder %s109, %s112
      %p121 = scmp.eq.s32.totalorder %s19, 1
      %p122 = por %p120, %p121
      %p123 = scmp.ne.s32.totalorder %s112, %s113
      %p124 = scmp.eq.s32.totalorder %s19, 0
      %p125 = por %p123, %p124
      %p126 = scmp.ne.s32.totalorder %s112, %s113
      %p127 = scmp.eq.s32.totalorder %s20, 1
      %p128 = por %p126, %p127
      %p130 = scmp.ne.s32.totalorder %s113, %s129
      %p131 = scmp.eq.s32.totalorder %s20, 0
      %p132 = por %p130, %p131
      %s133 = ssub.s32 %s21, %s33
      %p134 = scmp.eq.s32.totalorder %s133, 0
      %s136 = sadd.s32 %s135, 1
      %s137 = scalar_select %p134, %s135, %s136
      %p140 = pneg %p134
      %p141 = scmp.eq.s32.totalorder %s14, 1
      %p142 = por %p140, %p141
      %p143 = scmp.ne.s32.totalorder %s135, %s138
      %p144 = scmp.eq.s32.totalorder %s14, 0
      %p145 = por %p143, %p144
      %p146 = scmp.ne.s32.totalorder %s135, %s138
      %p147 = scmp.eq.s32.totalorder %s19, 1
      %p148 = por %p146, %p147
      %p149 = scmp.ne.s32.totalorder %s138, %s139
      %p150 = scmp.eq.s32.totalorder %s19, 0
      %p151 = por %p149, %p150
      %p152 = scmp.ne.s32.totalorder %s138, %s139
      %p153 = scmp.eq.s32.totalorder %s20, 1
      %p154 = por %p152, %p153
      %p156 = scmp.ne.s32.totalorder %s139, %s155
      %p157 = scmp.eq.s32.totalorder %s20, 0
      %p158 = por %p156, %p157
      %p159 = scmp.le.s32.totalorder 1, %s14
      %p160 = scmp.lt.s32.totalorder %s14, 3
      %p161 = pnand %p159, %p160
      %p162 = pneg %p161
      // Predicated region
      $region9: #{tpu_custom_call.1} parent=5 // pred_check
        _
      $region10: #{tpu_custom_call.1} parent=5 // pred_check_branch
        %164 = sbr.rel (%p161) target = $region12
      $region11: #{tpu_custom_call.1} parent=5 // pred_region
        %s165 = ssub.s32 %s14, 1
        // Predicated region
        $region13: #{tpu_custom_call.1} parent=11 // pred_check
          %p166 = pneg %p47
        $region14: #{tpu_custom_call.1} parent=11 // pred_check_branch
          %168 = sbr.rel (%p166) target = $region16
        $region15: #{tpu_custom_call.1} parent=11 // pred_region
          _
        $region16: #{tpu_custom_call.1} parent=11 // pred_fallthru
          _
      $region12: #{tpu_custom_call.1} parent=5 // pred_fallthru
        _
      %p169 = scmp.lt.s32.totalorder %s14, 2
      // Predicated region
      $region17: #{tpu_custom_call.1} parent=5 // pred_check
        %p170 = pneg %p169
      $region18: #{tpu_custom_call.1} parent=5 // pred_check_branch
        %172 = sbr.rel (%p170) target = $region20
      $region19: #{tpu_custom_call.1} parent=5 // pred_region
        // Predicated region
        $region21: #{tpu_custom_call.1} parent=19 // pred_check
          %p173 = pneg %p67
        $region22: #{tpu_custom_call.1} parent=19 // pred_check_branch
          %175 = sbr.rel (%p173) target = $region24
        $region23: #{tpu_custom_call.1} parent=19 // pred_region
          %p176 = scmp.lt.s32.totalorder %s21, 1
          %s177 = scalar_select %p176, %s21, 1
          %s178 = smul.addr %s177, 18
          %s179 = smul.addr %s178, 4
          %s180 = scalar_lea.vmem %s1, %s179
        $region24: #{tpu_custom_call.1} parent=19 // pred_fallthru
          _
      $region20: #{tpu_custom_call.1} parent=5 // pred_fallthru
        _
      %p181 = scmp.le.s32.totalorder 1, %s14
      %p182 = scmp.lt.s32.totalorder %s14, 3
      %p183 = pnand %p181, %p182
      %p184 = pneg %p183
      // Predicated region
      $region25: #{tpu_custom_call.1} parent=5 // pred_check
        _
      $region26: #{tpu_custom_call.1} parent=5 // pred_check_branch
        %186 = sbr.rel (%p183) target = $region28
      $region27: #{tpu_custom_call.1} parent=5 // pred_region
        %s187 = ssub.s32 %s14, 1
        %p188 = pneg %p47
        %p189 = pneg %p44
        %p190 = scmp.lt.s32.totalorder %s23, 1
        %s191 = scalar_select %p190, %s23, 1
        %s192 = smul.addr %s191, 18
        %s193 = smul.addr %s192, 4
        %s194 = scalar_lea.vmem %s1, %s193
        %p195 = pneg %p73
        %p196 = pneg %p70
        %p197 = pneg %p99
        %p198 = pneg %p96
        %s199 = sand.u32 %s86, 1
        %s200 = scalar_lea.sflag [#allocation3], %s199
        %s201 = sand.u32 %s86, 1
        %s202 = smul.addr %s201, 4
        %s203 = scalar_lea.vmem [#allocation2], %s202
        %p204 = pneg %p125
        %p205 = pneg %p122
        %p206 = scmp.lt.s32.totalorder %s23, 1
        %s207 = scalar_select %p206, %s23, 1
        %s208 = smul.addr %s207, 8
        %s209 = scalar_lea.vmem %s3, %s208
        %p210 = pneg %p151
        %p211 = pneg %p148
        %p212 = scmp.lt.s32.totalorder %s23, 1
        %s213 = scalar_select %p212, %s23, 1
        %s214 = smul.addr %s213, 8
        %s215 = scalar_lea.vmem %s4, %s214
        %p216 = scmp.lt.s32.totalorder %s23, 1
        %s217 = scalar_select %p216, %s23, 1
        %s218 = smul.addr %s217, 18
        %s219 = smul.addr %s218, 4
        %s220 = scalar_lea.vmem %s1, %s219
        %p221 = scmp.lt.s32.totalorder %s23, 1
        %s222 = scalar_select %p221, %s23, 1
        %s223 = smul.addr %s222, 8
        %s224 = scalar_lea.vmem %s3, %s223
        %p225 = scmp.lt.s32.totalorder %s23, 1
        %s226 = scalar_select %p225, %s23, 1
        %s227 = smul.addr %s226, 8
        %s228 = scalar_lea.vmem %s4, %s227
        %p230 = scmp.eq.s32.totalorder %s24, 0
        // Predicated region
        $region29: #{tpu_custom_call.1} parent=27 // pred_check
          %p231 = pneg %p230
        $region30: #{tpu_custom_call.1} parent=27 // pred_check_branch
          %233 = sbr.rel (%p231) target = $region32
        $region31: #{tpu_custom_call.1} parent=27 // pred_region
          %vm234 = vcmask 7168
          %235 = vst.msk [vmem:[%s224] sm:$0xff] %vm234, 0.0
          %236 = vst.msk [vmem:[%s228] sm:$0xff] %vm234, 0.0
        $region32: #{tpu_custom_call.1} parent=27 // pred_fallthru
          _
        %s237 = smul.u32 %s24, 8
        %s238 = smul.u32 %s237, 2
        %s239 = smul.addr %s238, 4
        %s240 = scalar_lea.vmem %s220, %s239
        %v241 = vld [vmem:[%s240] sm:$0x3]
        %v242 = vld [vmem:[%s0] sm:$0xf]
        %v243 = vld [vmem:[%s240] sm:$0xc]
        %s244 = scalar_lea.vmem %s0, 4
        %v245 = vld [vmem:[%s244] sm:$0xf]
        %v247 = vunpack.c.l.b16 %v243
        %v248 = vpack.c.b16 %v247, %v247
        %v249 = vrot.slane %v248, 2
        %vm250 = vcmask 31744
        %v252 = vsel %vm250, %v245, 0
        %vm254 = vcmask 1041408
        %v256 = vsel %vm254, %v249, 0
        %258 = vmatprep.subr.bf16.mxu0 0
        %259 = vmatpush1.bf16.msra.mxu0 %v256
        %260 = vmatprep.subr.bf16.mxu0 0
        %261 = vmatpush1.bf16.msra.mxu0 0
        %262 = vmatprep.subr.bf16.mxu0 0
        %263 = vmatpush1.bf16.msra.mxu0 0
        %264 = vmatprep.subr.bf16.mxu0 0
        %265 = vmatpush1.bf16.msra.mxu0 0
        %266 = vmatprep.subr.bf16.mxu0 0
        %267 = vmatpush1.bf16.msra.mxu0 0
        %268 = vmatprep.subr.bf16.mxu0 0
        %269 = vmatpush1.bf16.msra.mxu0 0
        %270 = vmatprep.subr.bf16.mxu0 0
        %271 = vmatpush1.bf16.msra.mxu0 0
        %272 = vmatprep.subr.bf16.mxu0 0
        %273 = vmatpush1.bf16.msra.mxu0 0
        %274 = vmatprep.subr.bf16.mxu0 0
        %275 = vmatpush1.bf16.msra.mxu0 0
        %276 = vmatprep.subr.bf16.mxu0 0
        %277 = vmatpush1.bf16.msra.mxu0 0
        %278 = vmatprep.subr.bf16.mxu0 0
        %279 = vmatpush1.bf16.msra.mxu0 0
        %280 = vmatprep.subr.bf16.mxu0 0
        %281 = vmatpush1.bf16.msra.mxu0 0
        %282 = vmatprep.subr.bf16.mxu0 0
        %283 = vmatpush1.bf16.msra.mxu0 0
        %284 = vmatprep.subr.bf16.mxu0 0
        %285 = vmatpush1.bf16.msra.mxu0 0
        %286 = vmatprep.subr.bf16.mxu0 0
        %287 = vmatpush1.bf16.msra.mxu0 0
        %288 = vmatprep.subr.bf16.mxu0 0
        %289 = vmatpush1.bf16.msra.mxu0 0
        %290 = vmatprep.mubr.bf16.mxu0 0
        %291 = vmatmul.mubr.bf16.gmra.mrb[0].mxu0 %v252
        %v292 = vpop.f32.mrb[0].mxu0
        %v293 = vadd.f32 0.0, %v292
        %v294 = vpop.f32.mrb[0].mxu0
        %v295 = vpop.f32.mrb[0].mxu0
        %v296 = vpop.f32.mrb[0].mxu0
        %297 = vdwg.mxu0
        %v299 = vsel %vm250, %v242, 0
        %v302 = vsel %vm254, %v241, 0
        %304 = vmatprep.subr.bf16.mxu0 0
        %305 = vmatpush1.bf16.msra.mxu0 %v302
        %306 = vmatprep.subr.bf16.mxu0 0
        %307 = vmatpush1.bf16.msra.mxu0 0
        %308 = vmatprep.subr.bf16.mxu0 0
        %309 = vmatpush1.bf16.msra.mxu0 0
        %310 = vmatprep.subr.bf16.mxu0 0
        %311 = vmatpush1.bf16.msra.mxu0 0
        %312 = vmatprep.subr.bf16.mxu0 0
        %313 = vmatpush1.bf16.msra.mxu0 0
        %314 = vmatprep.subr.bf16.mxu0 0
        %315 = vmatpush1.bf16.msra.mxu0 0
        %316 = vmatprep.subr.bf16.mxu0 0
        %317 = vmatpush1.bf16.msra.mxu0 0
        %318 = vmatprep.subr.bf16.mxu0 0
        %319 = vmatpush1.bf16.msra.mxu0 0
        %320 = vmatprep.subr.bf16.mxu0 0
        %321 = vmatpush1.bf16.msra.mxu0 0
        %322 = vmatprep.subr.bf16.mxu0 0
        %323 = vmatpush1.bf16.msra.mxu0 0
        %324 = vmatprep.subr.bf16.mxu0 0
        %325 = vmatpush1.bf16.msra.mxu0 0
        %326 = vmatprep.subr.bf16.mxu0 0
        %327 = vmatpush1.bf16.msra.mxu0 0
        %328 = vmatprep.subr.bf16.mxu0 0
        %329 = vmatpush1.bf16.msra.mxu0 0
        %330 = vmatprep.subr.bf16.mxu0 0
        %331 = vmatpush1.bf16.msra.mxu0 0
        %332 = vmatprep.subr.bf16.mxu0 0
        %333 = vmatpush1.bf16.msra.mxu0 0
        %334 = vmatprep.subr.bf16.mxu0 0
        %335 = vmatpush1.bf16.msra.mxu0 0
        %336 = vmatprep.mubr.bf16.mxu0 0
        %337 = vmatmul.mubr.bf16.gmra.mrb[0].mxu0 %v299
        %v338 = vpop.f32.mrb[0].mxu0
        %v339 = vadd.f32 %v293, %v338
        %v340 = vpop.f32.mrb[0].mxu0
        %v341 = vpop.f32.mrb[0].mxu0
        %v342 = vpop.f32.mrb[0].mxu0
        %343 = vdwg.mxu0
        %s344 = scalar_lea.vmem %s0, 8
        %v345 = vld [vmem:[%s344] sm:$0xf]
        %v347 = vunpack.c.l.b16 %v241
        %v348 = vpack.c.b16 %v347, %v347
        %349 = vrot.lane.b32.xlu0 %v348, 127
        %v350 = vpop.permute.xlu0 %349
        %v352 = vsel %vm250, %v345, 0
        %v355 = vsel %vm254, %v350, 0
        %357 = vmatprep.subr.bf16.mxu0 0
        %358 = vmatpush1.bf16.msra.mxu0 %v355
        %359 = vmatprep.subr.bf16.mxu0 0
        %360 = vmatpush1.bf16.msra.mxu0 0
        %361 = vmatprep.subr.bf16.mxu0 0
        %362 = vmatpush1.bf16.msra.mxu0 0
        %363 = vmatprep.subr.bf16.mxu0 0
        %364 = vmatpush1.bf16.msra.mxu0 0
        %365 = vmatprep.subr.bf16.mxu0 0
        %366 = vmatpush1.bf16.msra.mxu0 0
        %367 = vmatprep.subr.bf16.mxu0 0
        %368 = vmatpush1.bf16.msra.mxu0 0
        %369 = vmatprep.subr.bf16.mxu0 0
        %370 = vmatpush1.bf16.msra.mxu0 0
        %371 = vmatprep.subr.bf16.mxu0 0
        %372 = vmatpush1.bf16.msra.mxu0 0
        %373 = vmatprep.subr.bf16.mxu0 0
        %374 = vmatpush1.bf16.msra.mxu0 0
        %375 = vmatprep.subr.bf16.mxu0 0
        %376 = vmatpush1.bf16.msra.mxu0 0
        %377 = vmatprep.subr.bf16.mxu0 0
        %378 = vmatpush1.bf16.msra.mxu0 0
        %379 = vmatprep.subr.bf16.mxu0 0
        %380 = vmatpush1.bf16.msra.mxu0 0
        %381 = vmatprep.subr.bf16.mxu0 0
        %382 = vmatpush1.bf16.msra.mxu0 0
        %383 = vmatprep.subr.bf16.mxu0 0
        %384 = vmatpush1.bf16.msra.mxu0 0
        %385 = vmatprep.subr.bf16.mxu0 0
        %386 = vmatpush1.bf16.msra.mxu0 0
        %387 = vmatprep.subr.bf16.mxu0 0
        %388 = vmatpush1.bf16.msra.mxu0 0
        %389 = vmatprep.mubr.bf16.mxu0 0
        %390 = vmatmul.mubr.bf16.gmra.mrb[0].mxu0 %v352
        %v391 = vpop.f32.mrb[0].mxu0
        %v392 = vadd.f32 0.0, %v391
        %v393 = vpop.f32.mrb[0].mxu0
        %v394 = vpop.f32.mrb[0].mxu0
        %v395 = vpop.f32.mrb[0].mxu0
        %396 = vdwg.mxu0
        %v397 = vadd.f32 %v339, %v392
        %s398 = scalar_lea.vmem %s0, 12
        %v399 = vld [vmem:[%s398] sm:$0xf]
        %400 = vrot.lane.b32.xlu0 %v249, 127
        %v401 = vpop.permute.xlu0 %400
        %v403 = vsel %vm250, %v399, 0
        %v406 = vsel %vm254, %v401, 0
        %408 = vmatprep.subr.bf16.mxu0 0
        %409 = vmatpush1.bf16.msra.mxu0 %v406
        %410 = vmatprep.subr.bf16.mxu0 0
        %411 = vmatpush1.bf16.msra.mxu0 0
        %412 = vmatprep.subr.bf16.mxu0 0
        %413 = vmatpush1.bf16.msra.mxu0 0
        %414 = vmatprep.subr.bf16.mxu0 0
        %415 = vmatpush1.bf16.msra.mxu0 0
        %416 = vmatprep.subr.bf16.mxu0 0
        %417 = vmatpush1.bf16.msra.mxu0 0
        %418 = vmatprep.subr.bf16.mxu0 0
        %419 = vmatpush1.bf16.msra.mxu0 0
        %420 = vmatprep.subr.bf16.mxu0 0
        %421 = vmatpush1.bf16.msra.mxu0 0
        %422 = vmatprep.subr.bf16.mxu0 0
        %423 = vmatpush1.bf16.msra.mxu0 0
        %424 = vmatprep.subr.bf16.mxu0 0
        %425 = vmatpush1.bf16.msra.mxu0 0
        %426 = vmatprep.subr.bf16.mxu0 0
        %427 = vmatpush1.bf16.msra.mxu0 0
        %428 = vmatprep.subr.bf16.mxu0 0
        %429 = vmatpush1.bf16.msra.mxu0 0
        %430 = vmatprep.subr.bf16.mxu0 0
        %431 = vmatpush1.bf16.msra.mxu0 0
        %432 = vmatprep.subr.bf16.mxu0 0
        %433 = vmatpush1.bf16.msra.mxu0 0
        %434 = vmatprep.subr.bf16.mxu0 0
        %435 = vmatpush1.bf16.msra.mxu0 0
        %436 = vmatprep.subr.bf16.mxu0 0
        %437 = vmatpush1.bf16.msra.mxu0 0
        %438 = vmatprep.subr.bf16.mxu0 0
        %439 = vmatpush1.bf16.msra.mxu0 0
        %440 = vmatprep.mubr.bf16.mxu0 0
        %441 = vmatmul.mubr.bf16.gmra.mrb[0].mxu0 %v403
        %v442 = vpop.f32.mrb[0].mxu0
        %v443 = vadd.f32 0.0, %v442
        %v444 = vpop.f32.mrb[0].mxu0
        %v445 = vpop.f32.mrb[0].mxu0
        %v446 = vpop.f32.mrb[0].mxu0
        %447 = vdwg.mxu0
        %v448 = vadd.f32 %v397, %v443
        %v449 = vld [vmem:[%s240 + $0x4] sm:$0x3]
        %s450 = scalar_lea.vmem %s0, 16
        %v451 = vld [vmem:[%s450] sm:$0xf]
        %v453 = vsel %vm250, %v451, 0
        %v456 = vsel %vm254, %v449, 0
        %458 = vmatprep.subr.bf16.mxu0 0
        %459 = vmatpush1.bf16.msra.mxu0 %v456
        %460 = vmatprep.subr.bf16.mxu0 0
        %461 = vmatpush1.bf16.msra.mxu0 0
        %462 = vmatprep.subr.bf16.mxu0 0
        %463 = vmatpush1.bf16.msra.mxu0 0
        %464 = vmatprep.subr.bf16.mxu0 0
        %465 = vmatpush1.bf16.msra.mxu0 0
        %466 = vmatprep.subr.bf16.mxu0 0
        %467 = vmatpush1.bf16.msra.mxu0 0
        %468 = vmatprep.subr.bf16.mxu0 0
        %469 = vmatpush1.bf16.msra.mxu0 0
        %470 = vmatprep.subr.bf16.mxu0 0
        %471 = vmatpush1.bf16.msra.mxu0 0
        %472 = vmatprep.subr.bf16.mxu0 0
        %473 = vmatpush1.bf16.msra.mxu0 0
        %474 = vmatprep.subr.bf16.mxu0 0
        %475 = vmatpush1.bf16.msra.mxu0 0
        %476 = vmatprep.subr.bf16.mxu0 0
        %477 = vmatpush1.bf16.msra.mxu0 0
        %478 = vmatprep.subr.bf16.mxu0 0
        %479 = vmatpush1.bf16.msra.mxu0 0
        %480 = vmatprep.subr.bf16.mxu0 0
        %481 = vmatpush1.bf16.msra.mxu0 0
        %482 = vmatprep.subr.bf16.mxu0 0
        %483 = vmatpush1.bf16.msra.mxu0 0
        %484 = vmatprep.subr.bf16.mxu0 0
        %485 = vmatpush1.bf16.msra.mxu0 0
        %486 = vmatprep.subr.bf16.mxu0 0
        %487 = vmatpush1.bf16.msra.mxu0 0
        %488 = vmatprep.subr.bf16.mxu0 0
        %489 = vmatpush1.bf16.msra.mxu0 0
        %490 = vmatprep.mubr.bf16.mxu0 0
        %491 = vmatmul.mubr.bf16.gmra.mrb[0].mxu0 %v453
        %v492 = vpop.f32.mrb[0].mxu0
        %v493 = vadd.f32 0.0, %v492
        %v494 = vpop.f32.mrb[0].mxu0
        %v495 = vpop.f32.mrb[0].mxu0
        %v496 = vpop.f32.mrb[0].mxu0
        %497 = vdwg.mxu0
        %v498 = vadd.f32 %v448, %v493
        %v499 = vld [vmem:[%s240 + $0x4] sm:$0xc]
        %s500 = scalar_lea.vmem %s0, 20
        %v501 = vld [vmem:[%s500] sm:$0xf]
        %v503 = vunpack.c.l.b16 %v499
        %v504 = vpack.c.b16 %v503, %v503
        %v505 = vrot.slane %v504, 2
        %v507 = vsel %vm250, %v501, 0
        %v510 = vsel %vm254, %v505, 0
        %512 = vmatprep.subr.bf16.mxu0 0
        %513 = vmatpush1.bf16.msra.mxu0 %v510
        %514 = vmatprep.subr.bf16.mxu0 0
        %515 = vmatpush1.bf16.msra.mxu0 0
        %516 = vmatprep.subr.bf16.mxu0 0
        %517 = vmatpush1.bf16.msra.mxu0 0
        %518 = vmatprep.subr.bf16.mxu0 0
        %519 = vmatpush1.bf16.msra.mxu0 0
        %520 = vmatprep.subr.bf16.mxu0 0
        %521 = vmatpush1.bf16.msra.mxu0 0
        %522 = vmatprep.subr.bf16.mxu0 0
        %523 = vmatpush1.bf16.msra.mxu0 0
        %524 = vmatprep.subr.bf16.mxu0 0
        %525 = vmatpush1.bf16.msra.mxu0 0
        %526 = vmatprep.subr.bf16.mxu0 0
        %527 = vmatpush1.bf16.msra.mxu0 0
        %528 = vmatprep.subr.bf16.mxu0 0
        %529 = vmatpush1.bf16.msra.mxu0 0
        %530 = vmatprep.subr.bf16.mxu0 0
        %531 = vmatpush1.bf16.msra.mxu0 0
        %532 = vmatprep.subr.bf16.mxu0 0
        %533 = vmatpush1.bf16.msra.mxu0 0
        %534 = vmatprep.subr.bf16.mxu0 0
        %535 = vmatpush1.bf16.msra.mxu0 0
        %536 = vmatprep.subr.bf16.mxu0 0
        %537 = vmatpush1.bf16.msra.mxu0 0
        %538 = vmatprep.subr.bf16.mxu0 0
        %539 = vmatpush1.bf16.msra.mxu0 0
        %540 = vmatprep.subr.bf16.mxu0 0
        %541 = vmatpush1.bf16.msra.mxu0 0
        %542 = vmatprep.subr.bf16.mxu0 0
        %543 = vmatpush1.bf16.msra.mxu0 0
        %544 = vmatprep.mubr.bf16.mxu0 0
        %545 = vmatmul.mubr.bf16.gmra.mrb[0].mxu0 %v507
        %v546 = vpop.f32.mrb[0].mxu0
        %v547 = vadd.f32 0.0, %v546
        %v548 = vpop.f32.mrb[0].mxu0
        %v549 = vpop.f32.mrb[0].mxu0
        %v550 = vpop.f32.mrb[0].mxu0
        %551 = vdwg.mxu0
        %v552 = vadd.f32 %v498, %v547
        %s553 = scalar_lea.vmem %s0, 24
        %v554 = vld [vmem:[%s553] sm:$0xf]
        %v556 = vunpack.c.l.b16 %v449
        %v557 = vpack.c.b16 %v556, %v556
        %558 = vrot.lane.b32.xlu0 %v557, 127
        %v559 = vpop.permute.xlu0 %558
        %v561 = vsel %vm250, %v554, 0
        %v564 = vsel %vm254, %v559, 0
        %566 = vmatprep.subr.bf16.mxu0 0
        %567 = vmatpush1.bf16.msra.mxu0 %v564
        %568 = vmatprep.subr.bf16.mxu0 0
        %569 = vmatpush1.bf16.msra.mxu0 0
        %570 = vmatprep.subr.bf16.mxu0 0
        %571 = vmatpush1.bf16.msra.mxu0 0
        %572 = vmatprep.subr.bf16.mxu0 0
        %573 = vmatpush1.bf16.msra.mxu0 0
        %574 = vmatprep.subr.bf16.mxu0 0
        %575 = vmatpush1.bf16.msra.mxu0 0
        %576 = vmatprep.subr.bf16.mxu0 0
        %577 = vmatpush1.bf16.msra.mxu0 0
        %578 = vmatprep.subr.bf16.mxu0 0
        %579 = vmatpush1.bf16.msra.mxu0 0
        %580 = vmatprep.subr.bf16.mxu0 0
        %581 = vmatpush1.bf16.msra.mxu0 0
        %582 = vmatprep.subr.bf16.mxu0 0
        %583 = vmatpush1.bf16.msra.mxu0 0
        %584 = vmatprep.subr.bf16.mxu0 0
        %585 = vmatpush1.bf16.msra.mxu0 0
        %586 = vmatprep.subr.bf16.mxu0 0
        %587 = vmatpush1.bf16.msra.mxu0 0
        %588 = vmatprep.subr.bf16.mxu0 0
        %589 = vmatpush1.bf16.msra.mxu0 0
        %590 = vmatprep.subr.bf16.mxu0 0
        %591 = vmatpush1.bf16.msra.mxu0 0
        %592 = vmatprep.subr.bf16.mxu0 0
        %593 = vmatpush1.bf16.msra.mxu0 0
        %594 = vmatprep.subr.bf16.mxu0 0
        %595 = vmatpush1.bf16.msra.mxu0 0
        %596 = vmatprep.subr.bf16.mxu0 0
        %597 = vmatpush1.bf16.msra.mxu0 0
        %598 = vmatprep.mubr.bf16.mxu0 0
        %599 = vmatmul.mubr.bf16.gmra.mrb[0].mxu0 %v561
        %v600 = vpop.f32.mrb[0].mxu0
        %v601 = vadd.f32 0.0, %v600
        %v602 = vpop.f32.mrb[0].mxu0
        %v603 = vpop.f32.mrb[0].mxu0
        %v604 = vpop.f32.mrb[0].mxu0
        %605 = vdwg.mxu0
        %v606 = vadd.f32 %v552, %v601
        %s607 = scalar_lea.vmem %s0, 28
        %v608 = vld [vmem:[%s607] sm:$0xf]
        %609 = vrot.lane.b32.xlu0 %v505, 127
        %v610 = vpop.permute.xlu0 %609
        %v612 = vsel %vm250, %v608, 0
        %v615 = vsel %vm254, %v610, 0
        %617 = vmatprep.subr.bf16.mxu0 0
        %618 = vmatpush1.bf16.msra.mxu0 %v615
        %619 = vmatprep.subr.bf16.mxu0 0
        %620 = vmatpush1.bf16.msra.mxu0 0
        %621 = vmatprep.subr.bf16.mxu0 0
        %622 = vmatpush1.bf16.msra.mxu0 0
        %623 = vmatprep.subr.bf16.mxu0 0
        %624 = vmatpush1.bf16.msra.mxu0 0
        %625 = vmatprep.subr.bf16.mxu0 0
        %626 = vmatpush1.bf16.msra.mxu0 0
        %627 = vmatprep.subr.bf16.mxu0 0
        %628 = vmatpush1.bf16.msra.mxu0 0
        %629 = vmatprep.subr.bf16.mxu0 0
        %630 = vmatpush1.bf16.msra.mxu0 0
        %631 = vmatprep.subr.bf16.mxu0 0
        %632 = vmatpush1.bf16.msra.mxu0 0
        %633 = vmatprep.subr.bf16.mxu0 0
        %634 = vmatpush1.bf16.msra.mxu0 0
        %635 = vmatprep.subr.bf16.mxu0 0
        %636 = vmatpush1.bf16.msra.mxu0 0
        %637 = vmatprep.subr.bf16.mxu0 0
        %638 = vmatpush1.bf16.msra.mxu0 0
        %639 = vmatprep.subr.bf16.mxu0 0
        %640 = vmatpush1.bf16.msra.mxu0 0
        %641 = vmatprep.subr.bf16.mxu0 0
        %642 = vmatpush1.bf16.msra.mxu0 0
        %643 = vmatprep.subr.bf16.mxu0 0
        %644 = vmatpush1.bf16.msra.mxu0 0
        %645 = vmatprep.subr.bf16.mxu0 0
        %646 = vmatpush1.bf16.msra.mxu0 0
        %647 = vmatprep.subr.bf16.mxu0 0
        %648 = vmatpush1.bf16.msra.mxu0 0
        %649 = vmatprep.mubr.bf16.mxu0 0
        %650 = vmatmul.mubr.bf16.gmra.mrb[0].mxu0 %v612
        %v651 = vpop.f32.mrb[0].mxu0
        %v652 = vadd.f32 0.0, %v651
        %v653 = vpop.f32.mrb[0].mxu0
        %v654 = vpop.f32.mrb[0].mxu0
        %v655 = vpop.f32.mrb[0].mxu0
        %656 = vdwg.mxu0
        %v657 = vadd.f32 %v606, %v652
        %s658 = sadd.s32 %s237, 1
        %s659 = smul.u32 %s658, 2
        %s660 = smul.addr %s659, 4
        %s661 = scalar_lea.vmem %s220, %s660
        %v662 = vld [vmem:[%s661] sm:$0x3]
        %s663 = scalar_lea.vmem %s0, 32
        %v664 = vld [vmem:[%s663] sm:$0xf]
        %v666 = vsel %vm250, %v664, 0
        %v669 = vsel %vm254, %v662, 0
        %671 = vmatprep.subr.bf16.mxu0 0
        %672 = vmatpush1.bf16.msra.mxu0 %v669
        %673 = vmatprep.subr.bf16.mxu0 0
        %674 = vmatpush1.bf16.msra.mxu0 0
        %675 = vmatprep.subr.bf16.mxu0 0
        %676 = vmatpush1.bf16.msra.mxu0 0
        %677 = vmatprep.subr.bf16.mxu0 0
        %678 = vmatpush1.bf16.msra.mxu0 0
        %679 = vmatprep.subr.bf16.mxu0 0
        %680 = vmatpush1.bf16.msra.mxu0 0
        %681 = vmatprep.subr.bf16.mxu0 0
        %682 = vmatpush1.bf16.msra.mxu0 0
        %683 = vmatprep.subr.bf16.mxu0 0
        %684 = vmatpush1.bf16.msra.mxu0 0
        %685 = vmatprep.subr.bf16.mxu0 0
        %686 = vmatpush1.bf16.msra.mxu0 0
        %687 = vmatprep.subr.bf16.mxu0 0
        %688 = vmatpush1.bf16.msra.mxu0 0
        %689 = vmatprep.subr.bf16.mxu0 0
        %690 = vmatpush1.bf16.msra.mxu0 0
        %691 = vmatprep.subr.bf16.mxu0 0
        %692 = vmatpush1.bf16.msra.mxu0 0
        %693 = vmatprep.subr.bf16.mxu0 0
        %694 = vmatpush1.bf16.msra.mxu0 0
        %695 = vmatprep.subr.bf16.mxu0 0
        %696 = vmatpush1.bf16.msra.mxu0 0
        %697 = vmatprep.subr.bf16.mxu0 0
        %698 = vmatpush1.bf16.msra.mxu0 0
        %699 = vmatprep.subr.bf16.mxu0 0
        %700 = vmatpush1.bf16.msra.mxu0 0
        %701 = vmatprep.subr.bf16.mxu0 0
        %702 = vmatpush1.bf16.msra.mxu0 0
        %703 = vmatprep.mubr.bf16.mxu0 0
        %704 = vmatmul.mubr.bf16.gmra.mrb[0].mxu0 %v666
        %v705 = vpop.f32.mrb[0].mxu0
        %v706 = vadd.f32 0.0, %v705
        %v707 = vpop.f32.mrb[0].mxu0
        %v708 = vpop.f32.mrb[0].mxu0
        %v709 = vpop.f32.mrb[0].mxu0
        %710 = vdwg.mxu0
        %v711 = vadd.f32 %v657, %v706
        %v712 = vld [vmem:[%s661] sm:$0xc]
        %s713 = scalar_lea.vmem %s0, 36
        %v714 = vld [vmem:[%s713] sm:$0xf]
        %v716 = vunpack.c.l.b16 %v712
        %v717 = vpack.c.b16 %v716, %v716
        %v718 = vrot.slane %v717, 2
        %v720 = vsel %vm250, %v714, 0
        %v723 = vsel %vm254, %v718, 0
        %725 = vmatprep.subr.bf16.mxu0 0
        %726 = vmatpush1.bf16.msra.mxu0 %v723
        %727 = vmatprep.subr.bf16.mxu0 0
        %728 = vmatpush1.bf16.msra.mxu0 0
        %729 = vmatprep.subr.bf16.mxu0 0
        %730 = vmatpush1.bf16.msra.mxu0 0
        %731 = vmatprep.subr.bf16.mxu0 0
        %732 = vmatpush1.bf16.msra.mxu0 0
        %733 = vmatprep.subr.bf16.mxu0 0
        %734 = vmatpush1.bf16.msra.mxu0 0
        %735 = vmatprep.subr.bf16.mxu0 0
        %736 = vmatpush1.bf16.msra.mxu0 0
        %737 = vmatprep.subr.bf16.mxu0 0
        %738 = vmatpush1.bf16.msra.mxu0 0
        %739 = vmatprep.subr.bf16.mxu0 0
        %740 = vmatpush1.bf16.msra.mxu0 0
        %741 = vmatprep.subr.bf16.mxu0 0
        %742 = vmatpush1.bf16.msra.mxu0 0
        %743 = vmatprep.subr.bf16.mxu0 0
        %744 = vmatpush1.bf16.msra.mxu0 0
        %745 = vmatprep.subr.bf16.mxu0 0
        %746 = vmatpush1.bf16.msra.mxu0 0
        %747 = vmatprep.subr.bf16.mxu0 0
        %748 = vmatpush1.bf16.msra.mxu0 0
        %749 = vmatprep.subr.bf16.mxu0 0
        %750 = vmatpush1.bf16.msra.mxu0 0
        %751 = vmatprep.subr.bf16.mxu0 0
        %752 = vmatpush1.bf16.msra.mxu0 0
        %753 = vmatprep.subr.bf16.mxu0 0
        %754 = vmatpush1.bf16.msra.mxu0 0
        %755 = vmatprep.subr.bf16.mxu0 0
        %756 = vmatpush1.bf16.msra.mxu0 0
        %757 = vmatprep.mubr.bf16.mxu0 0
        %758 = vmatmul.mubr.bf16.gmra.mrb[0].mxu0 %v720
        %v759 = vpop.f32.mrb[0].mxu0
        %v760 = vadd.f32 0.0, %v759
        %v761 = vpop.f32.mrb[0].mxu0
        %v762 = vpop.f32.mrb[0].mxu0
        %v763 = vpop.f32.mrb[0].mxu0
        %764 = vdwg.mxu0
        %v765 = vadd.f32 %v711, %v760
        %s766 = scalar_lea.vmem %s0, 40
        %v767 = vld [vmem:[%s766] sm:$0xf]
        %v769 = vunpack.c.l.b16 %v662
        %v770 = vpack.c.b16 %v769, %v769
        %771 = vrot.lane.b32.xlu0 %v770, 127
        %v772 = vpop.permute.xlu0 %771
        %v774 = vsel %vm250, %v767, 0
        %v777 = vsel %vm254, %v772, 0
        %779 = vmatprep.subr.bf16.mxu0 0
        %780 = vmatpush1.bf16.msra.mxu0 %v777
        %781 = vmatprep.subr.bf16.mxu0 0
        %782 = vmatpush1.bf16.msra.mxu0 0
        %783 = vmatprep.subr.bf16.mxu0 0
        %784 = vmatpush1.bf16.msra.mxu0 0
        %785 = vmatprep.subr.bf16.mxu0 0
        %786 = vmatpush1.bf16.msra.mxu0 0
        %787 = vmatprep.subr.bf16.mxu0 0
        %788 = vmatpush1.bf16.msra.mxu0 0
        %789 = vmatprep.subr.bf16.mxu0 0
        %790 = vmatpush1.bf16.msra.mxu0 0
        %791 = vmatprep.subr.bf16.mxu0 0
        %792 = vmatpush1.bf16.msra.mxu0 0
        %793 = vmatprep.subr.bf16.mxu0 0
        %794 = vmatpush1.bf16.msra.mxu0 0
        %795 = vmatprep.subr.bf16.mxu0 0
        %796 = vmatpush1.bf16.msra.mxu0 0
        %797 = vmatprep.subr.bf16.mxu0 0
        %798 = vmatpush1.bf16.msra.mxu0 0
        %799 = vmatprep.subr.bf16.mxu0 0
        %800 = vmatpush1.bf16.msra.mxu0 0
        %801 = vmatprep.subr.bf16.mxu0 0
        %802 = vmatpush1.bf16.msra.mxu0 0
        %803 = vmatprep.subr.bf16.mxu0 0
        %804 = vmatpush1.bf16.msra.mxu0 0
        %805 = vmatprep.subr.bf16.mxu0 0
        %806 = vmatpush1.bf16.msra.mxu0 0
        %807 = vmatprep.subr.bf16.mxu0 0
        %808 = vmatpush1.bf16.msra.mxu0 0
        %809 = vmatprep.subr.bf16.mxu0 0
        %810 = vmatpush1.bf16.msra.mxu0 0
        %811 = vmatprep.mubr.bf16.mxu0 0
        %812 = vmatmul.mubr.bf16.gmra.mrb[0].mxu0 %v774
        %v813 = vpop.f32.mrb[0].mxu0
        %v814 = vadd.f32 0.0, %v813
        %v815 = vpop.f32.mrb[0].mxu0
        %v816 = vpop.f32.mrb[0].mxu0
        %v817 = vpop.f32.mrb[0].mxu0
        %818 = vdwg.mxu0
        %v819 = vadd.f32 %v765, %v814
        %s820 = scalar_lea.vmem %s0, 44
        %v821 = vld [vmem:[%s820] sm:$0xf]
        %822 = vrot.lane.b32.xlu0 %v718, 127
        %v823 = vpop.permute.xlu0 %822
        %v825 = vsel %vm250, %v821, 0
        %v828 = vsel %vm254, %v823, 0
        %830 = vmatprep.subr.bf16.mxu0 0
        %831 = vmatpush1.bf16.msra.mxu0 %v828
        %832 = vmatprep.subr.bf16.mxu0 0
        %833 = vmatpush1.bf16.msra.mxu0 0
        %834 = vmatprep.subr.bf16.mxu0 0
        %835 = vmatpush1.bf16.msra.mxu0 0
        %836 = vmatprep.subr.bf16.mxu0 0
        %837 = vmatpush1.bf16.msra.mxu0 0
        %838 = vmatprep.subr.bf16.mxu0 0
        %839 = vmatpush1.bf16.msra.mxu0 0
        %840 = vmatprep.subr.bf16.mxu0 0
        %841 = vmatpush1.bf16.msra.mxu0 0
        %842 = vmatprep.subr.bf16.mxu0 0
        %843 = vmatpush1.bf16.msra.mxu0 0
        %844 = vmatprep.subr.bf16.mxu0 0
        %845 = vmatpush1.bf16.msra.mxu0 0
        %846 = vmatprep.subr.bf16.mxu0 0
        %847 = vmatpush1.bf16.msra.mxu0 0
        %848 = vmatprep.subr.bf16.mxu0 0
        %849 = vmatpush1.bf16.msra.mxu0 0
        %850 = vmatprep.subr.bf16.mxu0 0
        %851 = vmatpush1.bf16.msra.mxu0 0
        %852 = vmatprep.subr.bf16.mxu0 0
        %853 = vmatpush1.bf16.msra.mxu0 0
        %854 = vmatprep.subr.bf16.mxu0 0
        %855 = vmatpush1.bf16.msra.mxu0 0
        %856 = vmatprep.subr.bf16.mxu0 0
        %857 = vmatpush1.bf16.msra.mxu0 0
        %858 = vmatprep.subr.bf16.mxu0 0
        %859 = vmatpush1.bf16.msra.mxu0 0
        %860 = vmatprep.subr.bf16.mxu0 0
        %861 = vmatpush1.bf16.msra.mxu0 0
        %862 = vmatprep.mubr.bf16.mxu0 0
        %863 = vmatmul.mubr.bf16.gmra.mrb[0].mxu0 %v825
        %v864 = vpop.f32.mrb[0].mxu0
        %v865 = vadd.f32 0.0, %v864
        %v866 = vpop.f32.mrb[0].mxu0
        %v867 = vpop.f32.mrb[0].mxu0
        %v868 = vpop.f32.mrb[0].mxu0
        %869 = vdwg.mxu0
        %v870 = vadd.f32 %v819, %v865
        %v871 = vld [vmem:[%s661 + $0x4] sm:$0x3]
        %s872 = scalar_lea.vmem %s0, 48
        %v873 = vld [vmem:[%s872] sm:$0xf]
        %v875 = vsel %vm250, %v873, 0
        %v878 = vsel %vm254, %v871, 0
        %880 = vmatprep.subr.bf16.mxu0 0
        %881 = vmatpush1.bf16.msra.mxu0 %v878
        %882 = vmatprep.subr.bf16.mxu0 0
        %883 = vmatpush1.bf16.msra.mxu0 0
        %884 = vmatprep.subr.bf16.mxu0 0
        %885 = vmatpush1.bf16.msra.mxu0 0
        %886 = vmatprep.subr.bf16.mxu0 0
        %887 = vmatpush1.bf16.msra.mxu0 0
        %888 = vmatprep.subr.bf16.mxu0 0
        %889 = vmatpush1.bf16.msra.mxu0 0
        %890 = vmatprep.subr.bf16.mxu0 0
        %891 = vmatpush1.bf16.msra.mxu0 0
        %892 = vmatprep.subr.bf16.mxu0 0
        %893 = vmatpush1.bf16.msra.mxu0 0
        %894 = vmatprep.subr.bf16.mxu0 0
        %895 = vmatpush1.bf16.msra.mxu0 0
        %896 = vmatprep.subr.bf16.mxu0 0
        %897 = vmatpush1.bf16.msra.mxu0 0
        %898 = vmatprep.subr.bf16.mxu0 0
        %899 = vmatpush1.bf16.msra.mxu0 0
        %900 = vmatprep.subr.bf16.mxu0 0
        %901 = vmatpush1.bf16.msra.mxu0 0
        %902 = vmatprep.subr.bf16.mxu0 0
        %903 = vmatpush1.bf16.msra.mxu0 0
        %904 = vmatprep.subr.bf16.mxu0 0
        %905 = vmatpush1.bf16.msra.mxu0 0
        %906 = vmatprep.subr.bf16.mxu0 0
        %907 = vmatpush1.bf16.msra.mxu0 0
        %908 = vmatprep.subr.bf16.mxu0 0
        %909 = vmatpush1.bf16.msra.mxu0 0
        %910 = vmatprep.subr.bf16.mxu0 0
        %911 = vmatpush1.bf16.msra.mxu0 0
        %912 = vmatprep.mubr.bf16.mxu0 0
        %913 = vmatmul.mubr.bf16.gmra.mrb[0].mxu0 %v875
        %v914 = vpop.f32.mrb[0].mxu0
        %v915 = vadd.f32 0.0, %v914
        %v916 = vpop.f32.mrb[0].mxu0
        %v917 = vpop.f32.mrb[0].mxu0
        %v918 = vpop.f32.mrb[0].mxu0
        %919 = vdwg.mxu0
        %v920 = vadd.f32 %v870, %v915
        %v921 = vld [vmem:[%s661 + $0x4] sm:$0xc]
        %s922 = scalar_lea.vmem %s0, 52
        %v923 = vld [vmem:[%s922] sm:$0xf]
        %v925 = vunpack.c.l.b16 %v921
        %v926 = vpack.c.b16 %v925, %v925
        %v927 = vrot.slane %v926, 2
        %v929 = vsel %vm250, %v923, 0
        %v932 = vsel %vm254, %v927, 0
        %934 = vmatprep.subr.bf16.mxu0 0
        %935 = vmatpush1.bf16.msra.mxu0 %v932
        %936 = vmatprep.subr.bf16.mxu0 0
        %937 = vmatpush1.bf16.msra.mxu0 0
        %938 = vmatprep.subr.bf16.mxu0 0
        %939 = vmatpush1.bf16.msra.mxu0 0
        %940 = vmatprep.subr.bf16.mxu0 0
        %941 = vmatpush1.bf16.msra.mxu0 0
        %942 = vmatprep.subr.bf16.mxu0 0
        %943 = vmatpush1.bf16.msra.mxu0 0
        %944 = vmatprep.subr.bf16.mxu0 0
        %945 = vmatpush1.bf16.msra.mxu0 0
        %946 = vmatprep.subr.bf16.mxu0 0
        %947 = vmatpush1.bf16.msra.mxu0 0
        %948 = vmatprep.subr.bf16.mxu0 0
        %949 = vmatpush1.bf16.msra.mxu0 0
        %950 = vmatprep.subr.bf16.mxu0 0
        %951 = vmatpush1.bf16.msra.mxu0 0
        %952 = vmatprep.subr.bf16.mxu0 0
        %953 = vmatpush1.bf16.msra.mxu0 0
        %954 = vmatprep.subr.bf16.mxu0 0
        %955 = vmatpush1.bf16.msra.mxu0 0
        %956 = vmatprep.subr.bf16.mxu0 0
        %957 = vmatpush1.bf16.msra.mxu0 0
        %958 = vmatprep.subr.bf16.mxu0 0
        %959 = vmatpush1.bf16.msra.mxu0 0
        %960 = vmatprep.subr.bf16.mxu0 0
        %961 = vmatpush1.bf16.msra.mxu0 0
        %962 = vmatprep.subr.bf16.mxu0 0
        %963 = vmatpush1.bf16.msra.mxu0 0
        %964 = vmatprep.subr.bf16.mxu0 0
        %965 = vmatpush1.bf16.msra.mxu0 0
        %966 = vmatprep.mubr.bf16.mxu0 0
        %967 = vmatmul.mubr.bf16.gmra.mrb[0].mxu0 %v929
        %v968 = vpop.f32.mrb[0].mxu0
        %v969 = vadd.f32 0.0, %v968
        %v970 = vpop.f32.mrb[0].mxu0
        %v971 = vpop.f32.mrb[0].mxu0
        %v972 = vpop.f32.mrb[0].mxu0
        %973 = vdwg.mxu0
        %v974 = vadd.f32 %v920, %v969
        %s975 = scalar_lea.vmem %s0, 56
        %v976 = vld [vmem:[%s975] sm:$0xf]
        %v978 = vunpack.c.l.b16 %v871
        %v979 = vpack.c.b16 %v978, %v978
        %980 = vrot.lane.b32.xlu0 %v979, 127
        %v981 = vpop.permute.xlu0 %980
        %v983 = vsel %vm250, %v976, 0
        %v986 = vsel %vm254, %v981, 0
        %988 = vmatprep.subr.bf16.mxu0 0
        %989 = vmatpush1.bf16.msra.mxu0 %v986
        %990 = vmatprep.subr.bf16.mxu0 0
        %991 = vmatpush1.bf16.msra.mxu0 0
        %992 = vmatprep.subr.bf16.mxu0 0
        %993 = vmatpush1.bf16.msra.mxu0 0
        %994 = vmatprep.subr.bf16.mxu0 0
        %995 = vmatpush1.bf16.msra.mxu0 0
        %996 = vmatprep.subr.bf16.mxu0 0
        %997 = vmatpush1.bf16.msra.mxu0 0
        %998 = vmatprep.subr.bf16.mxu0 0
        %999 = vmatpush1.bf16.msra.mxu0 0
        %1000 = vmatprep.subr.bf16.mxu0 0
        %1001 = vmatpush1.bf16.msra.mxu0 0
        %1002 = vmatprep.subr.bf16.mxu0 0
        %1003 = vmatpush1.bf16.msra.mxu0 0
        %1004 = vmatprep.subr.bf16.mxu0 0
        %1005 = vmatpush1.bf16.msra.mxu0 0
        %1006 = vmatprep.subr.bf16.mxu0 0
        %1007 = vmatpush1.bf16.msra.mxu0 0
        %1008 = vmatprep.subr.bf16.mxu0 0
        %1009 = vmatpush1.bf16.msra.mxu0 0
        %1010 = vmatprep.subr.bf16.mxu0 0
        %1011 = vmatpush1.bf16.msra.mxu0 0
        %1012 = vmatprep.subr.bf16.mxu0 0
        %1013 = vmatpush1.bf16.msra.mxu0 0
        %1014 = vmatprep.subr.bf16.mxu0 0
        %1015 = vmatpush1.bf16.msra.mxu0 0
        %1016 = vmatprep.subr.bf16.mxu0 0
        %1017 = vmatpush1.bf16.msra.mxu0 0
        %1018 = vmatprep.subr.bf16.mxu0 0
        %1019 = vmatpush1.bf16.msra.mxu0 0
        %1020 = vmatprep.mubr.bf16.mxu0 0
        %1021 = vmatmul.mubr.bf16.gmra.mrb[0].mxu0 %v983
        %v1022 = vpop.f32.mrb[0].mxu0
        %v1023 = vadd.f32 0.0, %v1022
        %v1024 = vpop.f32.mrb[0].mxu0
        %v1025 = vpop.f32.mrb[0].mxu0
        %v1026 = vpop.f32.mrb[0].mxu0
        %1027 = vdwg.mxu0
        %v1028 = vadd.f32 %v974, %v1023
        %s1029 = scalar_lea.vmem %s0, 60
        %v1030 = vld [vmem:[%s1029] sm:$0xf]
        %1031 = vrot.lane.b32.xlu0 %v927, 127
        %v1032 = vpop.permute.xlu0 %1031
        %v1034 = vsel %vm250, %v1030, 0
        %v1037 = vsel %vm254, %v1032, 0
        %1039 = vmatprep.subr.bf16.mxu0 0
        %1040 = vmatpush1.bf16.msra.mxu0 %v1037
        %1041 = vmatprep.subr.bf16.mxu0 0
        %1042 = vmatpush1.bf16.msra.mxu0 0
        %1043 = vmatprep.subr.bf16.mxu0 0
        %1044 = vmatpush1.bf16.msra.mxu0 0
        %1045 = vmatprep.subr.bf16.mxu0 0
        %1046 = vmatpush1.bf16.msra.mxu0 0
        %1047 = vmatprep.subr.bf16.mxu0 0
        %1048 = vmatpush1.bf16.msra.mxu0 0
        %1049 = vmatprep.subr.bf16.mxu0 0
        %1050 = vmatpush1.bf16.msra.mxu0 0
        %1051 = vmatprep.subr.bf16.mxu0 0
        %1052 = vmatpush1.bf16.msra.mxu0 0
        %1053 = vmatprep.subr.bf16.mxu0 0
        %1054 = vmatpush1.bf16.msra.mxu0 0
        %1055 = vmatprep.subr.bf16.mxu0 0
        %1056 = vmatpush1.bf16.msra.mxu0 0
        %1057 = vmatprep.subr.bf16.mxu0 0
        %1058 = vmatpush1.bf16.msra.mxu0 0
        %1059 = vmatprep.subr.bf16.mxu0 0
        %1060 = vmatpush1.bf16.msra.mxu0 0
        %1061 = vmatprep.subr.bf16.mxu0 0
        %1062 = vmatpush1.bf16.msra.mxu0 0
        %1063 = vmatprep.subr.bf16.mxu0 0
        %1064 = vmatpush1.bf16.msra.mxu0 0
        %1065 = vmatprep.subr.bf16.mxu0 0
        %1066 = vmatpush1.bf16.msra.mxu0 0
        %1067 = vmatprep.subr.bf16.mxu0 0
        %1068 = vmatpush1.bf16.msra.mxu0 0
        %1069 = vmatprep.subr.bf16.mxu0 0
        %1070 = vmatpush1.bf16.msra.mxu0 0
        %1071 = vmatprep.mubr.bf16.mxu0 0
        %1072 = vmatmul.mubr.bf16.gmra.mrb[0].mxu0 %v1034
        %v1073 = vpop.f32.mrb[0].mxu0
        %v1074 = vadd.f32 0.0, %v1073
        %v1075 = vpop.f32.mrb[0].mxu0
        %v1076 = vpop.f32.mrb[0].mxu0
        %v1077 = vpop.f32.mrb[0].mxu0
        %1078 = vdwg.mxu0
        %v1079 = vadd.f32 %v1028, %v1074
        %p1080 = scmp.lt.s32.totalorder %s237, 8
        %s1081 = scalar_select %p1080, 1, 0
        %s1082 = scvt.s32.f32 %s1081
        %vm1083 = vcmask 64512
        %v1084 = vsel %vm1083, %v1079, 0.0
        %1085 = vadd.xlane.f32.xlu0 %v1084
        %v1086 = vpop.xlane.xlu0 %1085
        %v1087 = vstv %s1082
        %v1088 = vmul.f32 %v1087, %v1086
        %v1089 = vadd.f32 %v1088, 0.0
        %v1090 = vmul.f32 %v1079, %v1079
        %v1091 = vsel %vm1083, %v1090, 0.0
        %1092 = vadd.xlane.f32.xlu0 %v1091
        %v1093 = vpop.xlane.xlu0 %1092
        %v1094 = vmul.f32 %v1087, %v1093
        %v1095 = vadd.f32 %v1094, 0.0
        %1096 = vmatprep.subr.bf16.mxu0 0
        %1097 = vmatpush1.bf16.msra.mxu0 %v723
        %1098 = vmatprep.subr.bf16.mxu0 0
        %1099 = vmatpush1.bf16.msra.mxu0 0
        %1100 = vmatprep.subr.bf16.mxu0 0
        %1101 = vmatpush1.bf16.msra.mxu0 0
        %1102 = vmatprep.subr.bf16.mxu0 0
        %1103 = vmatpush1.bf16.msra.mxu0 0
        %1104 = vmatprep.subr.bf16.mxu0 0
        %1105 = vmatpush1.bf16.msra.mxu0 0
        %1106 = vmatprep.subr.bf16.mxu0 0
        %1107 = vmatpush1.bf16.msra.mxu0 0
        %1108 = vmatprep.subr.bf16.mxu0 0
        %1109 = vmatpush1.bf16.msra.mxu0 0
        %1110 = vmatprep.subr.bf16.mxu0 0
        %1111 = vmatpush1.bf16.msra.mxu0 0
        %1112 = vmatprep.subr.bf16.mxu0 0
        %1113 = vmatpush1.bf16.msra.mxu0 0
        %1114 = vmatprep.subr.bf16.mxu0 0
        %1115 = vmatpush1.bf16.msra.mxu0 0
        %1116 = vmatprep.subr.bf16.mxu0 0
        %1117 = vmatpush1.bf16.msra.mxu0 0
        %1118 = vmatprep.subr.bf16.mxu0 0
        %1119 = vmatpush1.bf16.msra.mxu0 0
        %1120 = vmatprep.subr.bf16.mxu0 0
        %1121 = vmatpush1.bf16.msra.mxu0 0
        %1122 = vmatprep.subr.bf16.mxu0 0
        %1123 = vmatpush1.bf16.msra.mxu0 0
        %1124 = vmatprep.subr.bf16.mxu0 0
        %1125 = vmatpush1.bf16.msra.mxu0 0
        %1126 = vmatprep.subr.bf16.mxu0 0
        %1127 = vmatpush1.bf16.msra.mxu0 0
        %1128 = vmatprep.mubr.bf16.mxu0 0
        %1129 = vmatmul.mubr.bf16.gmra.mrb[0].mxu0 %v252
        %v1130 = vpop.f32.mrb[0].mxu0
        %v1131 = vadd.f32 0.0, %v1130
        %v1132 = vpop.f32.mrb[0].mxu0
        %v1133 = vpop.f32.mrb[0].mxu0
        %v1134 = vpop.f32.mrb[0].mxu0
        %1135 = vdwg.mxu0
        %1136 = vmatprep.subr.bf16.mxu0 0
        %1137 = vmatpush1.bf16.msra.mxu0 %v669
        %1138 = vmatprep.subr.bf16.mxu0 0
        %1139 = vmatpush1.bf16.msra.mxu0 0
        %1140 = vmatprep.subr.bf16.mxu0 0
        %1141 = vmatpush1.bf16.msra.mxu0 0
        %1142 = vmatprep.subr.bf16.mxu0 0
        %1143 = vmatpush1.bf16.msra.mxu0 0
        %1144 = vmatprep.subr.bf16.mxu0 0
        %1145 = vmatpush1.bf16.msra.mxu0 0
        %1146 = vmatprep.subr.bf16.mxu0 0
        %1147 = vmatpush1.bf16.msra.mxu0 0
        %1148 = vmatprep.subr.bf16.mxu0 0
        %1149 = vmatpush1.bf16.msra.mxu0 0
        %1150 = vmatprep.subr.bf16.mxu0 0
        %1151 = vmatpush1.bf16.msra.mxu0 0
        %1152 = vmatprep.subr.bf16.mxu0 0
        %1153 = vmatpush1.bf16.msra.mxu0 0
        %1154 = vmatprep.subr.bf16.mxu0 0
        %1155 = vmatpush1.bf16.msra.mxu0 0
        %1156 = vmatprep.subr.bf16.mxu0 0
        %1157 = vmatpush1.bf16.msra.mxu0 0
        %1158 = vmatprep.subr.bf16.mxu0 0
        %1159 = vmatpush1.bf16.msra.mxu0 0
        %1160 = vmatprep.subr.bf16.mxu0 0
        %1161 = vmatpush1.bf16.msra.mxu0 0
        %1162 = vmatprep.subr.bf16.mxu0 0
        %1163 = vmatpush1.bf16.msra.mxu0 0
        %1164 = vmatprep.subr.bf16.mxu0 0
        %1165 = vmatpush1.bf16.msra.mxu0 0
        %1166 = vmatprep.subr.bf16.mxu0 0
        %1167 = vmatpush1.bf16.msra.mxu0 0
        %1168 = vmatprep.mubr.bf16.mxu0 0
        %1169 = vmatmul.mubr.bf16.gmra.mrb[0].mxu0 %v299
        %v1170 = vpop.f32.mrb[0].mxu0
        %v1171 = vadd.f32 %v1131, %v1170
        %v1172 = vpop.f32.mrb[0].mxu0
        %v1173 = vpop.f32.mrb[0].mxu0
        %v1174 = vpop.f32.mrb[0].mxu0
        %1175 = vdwg.mxu0
        %1176 = vmatprep.subr.bf16.mxu0 0
        %1177 = vmatpush1.bf16.msra.mxu0 %v777
        %1178 = vmatprep.subr.bf16.mxu0 0
        %1179 = vmatpush1.bf16.msra.mxu0 0
        %1180 = vmatprep.subr.bf16.mxu0 0
        %1181 = vmatpush1.bf16.msra.mxu0 0
        %1182 = vmatprep.subr.bf16.mxu0 0
        %1183 = vmatpush1.bf16.msra.mxu0 0
        %1184 = vmatprep.subr.bf16.mxu0 0
        %1185 = vmatpush1.bf16.msra.mxu0 0
        %1186 = vmatprep.subr.bf16.mxu0 0
        %1187 = vmatpush1.bf16.msra.mxu0 0
        %1188 = vmatprep.subr.bf16.mxu0 0
        %1189 = vmatpush1.bf16.msra.mxu0 0
        %1190 = vmatprep.subr.bf16.mxu0 0
        %1191 = vmatpush1.bf16.msra.mxu0 0
        %1192 = vmatprep.subr.bf16.mxu0 0
        %1193 = vmatpush1.bf16.msra.mxu0 0
        %1194 = vmatprep.subr.bf16.mxu0 0
        %1195 = vmatpush1.bf16.msra.mxu0 0
        %1196 = vmatprep.subr.bf16.mxu0 0
        %1197 = vmatpush1.bf16.msra.mxu0 0
        %1198 = vmatprep.subr.bf16.mxu0 0
        %1199 = vmatpush1.bf16.msra.mxu0 0
        %1200 = vmatprep.subr.bf16.mxu0 0
        %1201 = vmatpush1.bf16.msra.mxu0 0
        %1202 = vmatprep.subr.bf16.mxu0 0
        %1203 = vmatpush1.bf16.msra.mxu0 0
        %1204 = vmatprep.subr.bf16.mxu0 0
        %1205 = vmatpush1.bf16.msra.mxu0 0
        %1206 = vmatprep.subr.bf16.mxu0 0
        %1207 = vmatpush1.bf16.msra.mxu0 0
        %1208 = vmatprep.mubr.bf16.mxu0 0
        %1209 = vmatmul.mubr.bf16.gmra.mrb[0].mxu0 %v352
        %v1210 = vpop.f32.mrb[0].mxu0
        %v1211 = vadd.f32 0.0, %v1210
        %v1212 = vpop.f32.mrb[0].mxu0
        %v1213 = vpop.f32.mrb[0].mxu0
        %v1214 = vpop.f32.mrb[0].mxu0
        %1215 = vdwg.mxu0
        %v1216 = vadd.f32 %v1171, %v1211
        %1217 = vmatprep.subr.bf16.mxu0 0
        %1218 = vmatpush1.bf16.msra.mxu0 %v828
        %1219 = vmatprep.subr.bf16.mxu0 0
        %1220 = vmatpush1.bf16.msra.mxu0 0
        %1221 = vmatprep.subr.bf16.mxu0 0
        %1222 = vmatpush1.bf16.msra.mxu0 0
        %1223 = vmatprep.subr.bf16.mxu0 0
        %1224 = vmatpush1.bf16.msra.mxu0 0
        %1225 = vmatprep.subr.bf16.mxu0 0
        %1226 = vmatpush1.bf16.msra.mxu0 0
        %1227 = vmatprep.subr.bf16.mxu0 0
        %1228 = vmatpush1.bf16.msra.mxu0 0
        %1229 = vmatprep.subr.bf16.mxu0 0
        %1230 = vmatpush1.bf16.msra.mxu0 0
        %1231 = vmatprep.subr.bf16.mxu0 0
        %1232 = vmatpush1.bf16.msra.mxu0 0
        %1233 = vmatprep.subr.bf16.mxu0 0
        %1234 = vmatpush1.bf16.msra.mxu0 0
        %1235 = vmatprep.subr.bf16.mxu0 0
        %1236 = vmatpush1.bf16.msra.mxu0 0
        %1237 = vmatprep.subr.bf16.mxu0 0
        %1238 = vmatpush1.bf16.msra.mxu0 0
        %1239 = vmatprep.subr.bf16.mxu0 0
        %1240 = vmatpush1.bf16.msra.mxu0 0
        %1241 = vmatprep.subr.bf16.mxu0 0
        %1242 = vmatpush1.bf16.msra.mxu0 0
        %1243 = vmatprep.subr.bf16.mxu0 0
        %1244 = vmatpush1.bf16.msra.mxu0 0
        %1245 = vmatprep.subr.bf16.mxu0 0
        %1246 = vmatpush1.bf16.msra.mxu0 0
        %1247 = vmatprep.subr.bf16.mxu0 0
        %1248 = vmatpush1.bf16.msra.mxu0 0
        %1249 = vmatprep.mubr.bf16.mxu0 0
        %1250 = vmatmul.mubr.bf16.gmra.mrb[0].mxu0 %v403
        %v1251 = vpop.f32.mrb[0].mxu0
        %v1252 = vadd.f32 0.0, %v1251
        %v1253 = vpop.f32.mrb[0].mxu0
        %v1254 = vpop.f32.mrb[0].mxu0
        %v1255 = vpop.f32.mrb[0].mxu0
        %1256 = vdwg.mxu0
        %v1257 = vadd.f32 %v1216, %v1252
        %1258 = vmatprep.subr.bf16.mxu0 0
        %1259 = vmatpush1.bf16.msra.mxu0 %v878
        %1260 = vmatprep.subr.bf16.mxu0 0
        %1261 = vmatpush1.bf16.msra.mxu0 0
        %1262 = vmatprep.subr.bf16.mxu0 0
        %1263 = vmatpush1.bf16.msra.mxu0 0
        %1264 = vmatprep.subr.bf16.mxu0 0
        %1265 = vmatpush1.bf16.msra.mxu0 0
        %1266 = vmatprep.subr.bf16.mxu0 0
        %1267 = vmatpush1.bf16.msra.mxu0 0
        %1268 = vmatprep.subr.bf16.mxu0 0
        %1269 = vmatpush1.bf16.msra.mxu0 0
        %1270 = vmatprep.subr.bf16.mxu0 0
        %1271 = vmatpush1.bf16.msra.mxu0 0
        %1272 = vmatprep.subr.bf16.mxu0 0
        %1273 = vmatpush1.bf16.msra.mxu0 0
        %1274 = vmatprep.subr.bf16.mxu0 0
        %1275 = vmatpush1.bf16.msra.mxu0 0
        %1276 = vmatprep.subr.bf16.mxu0 0
        %1277 = vmatpush1.bf16.msra.mxu0 0
        %1278 = vmatprep.subr.bf16.mxu0 0
        %1279 = vmatpush1.bf16.msra.mxu0 0
        %1280 = vmatprep.subr.bf16.mxu0 0
        %1281 = vmatpush1.bf16.msra.mxu0 0
        %1282 = vmatprep.subr.bf16.mxu0 0
        %1283 = vmatpush1.bf16.msra.mxu0 0
        %1284 = vmatprep.subr.bf16.mxu0 0
        %1285 = vmatpush1.bf16.msra.mxu0 0
        %1286 = vmatprep.subr.bf16.mxu0 0
        %1287 = vmatpush1.bf16.msra.mxu0 0
        %1288 = vmatprep.subr.bf16.mxu0 0
        %1289 = vmatpush1.bf16.msra.mxu0 0
        %1290 = vmatprep.mubr.bf16.mxu0 0
        %1291 = vmatmul.mubr.bf16.gmra.mrb[0].mxu0 %v453
        %v1292 = vpop.f32.mrb[0].mxu0
        %v1293 = vadd.f32 0.0, %v1292
        %v1294 = vpop.f32.mrb[0].mxu0
        %v1295 = vpop.f32.mrb[0].mxu0
        %v1296 = vpop.f32.mrb[0].mxu0
        %1297 = vdwg.mxu0
        %v1298 = vadd.f32 %v1257, %v1293
        %1299 = vmatprep.subr.bf16.mxu0 0
        %1300 = vmatpush1.bf16.msra.mxu0 %v932
        %1301 = vmatprep.subr.bf16.mxu0 0
        %1302 = vmatpush1.bf16.msra.mxu0 0
        %1303 = vmatprep.subr.bf16.mxu0 0
        %1304 = vmatpush1.bf16.msra.mxu0 0
        %1305 = vmatprep.subr.bf16.mxu0 0
        %1306 = vmatpush1.bf16.msra.mxu0 0
        %1307 = vmatprep.subr.bf16.mxu0 0
        %1308 = vmatpush1.bf16.msra.mxu0 0
        %1309 = vmatprep.subr.bf16.mxu0 0
        %1310 = vmatpush1.bf16.msra.mxu0 0
        %1311 = vmatprep.subr.bf16.mxu0 0
        %1312 = vmatpush1.bf16.msra.mxu0 0
        %1313 = vmatprep.subr.bf16.mxu0 0
        %1314 = vmatpush1.bf16.msra.mxu0 0
        %1315 = vmatprep.subr.bf16.mxu0 0
        %1316 = vmatpush1.bf16.msra.mxu0 0
        %1317 = vmatprep.subr.bf16.mxu0 0
        %1318 = vmatpush1.bf16.msra.mxu0 0
        %1319 = vmatprep.subr.bf16.mxu0 0
        %1320 = vmatpush1.bf16.msra.mxu0 0
        %1321 = vmatprep.subr.bf16.mxu0 0
        %1322 = vmatpush1.bf16.msra.mxu0 0
        %1323 = vmatprep.subr.bf16.mxu0 0
        %1324 = vmatpush1.bf16.msra.mxu0 0
        %1325 = vmatprep.subr.bf16.mxu0 0
        %1326 = vmatpush1.bf16.msra.mxu0 0
        %1327 = vmatprep.subr.bf16.mxu0 0
        %1328 = vmatpush1.bf16.msra.mxu0 0
        %1329 = vmatprep.subr.bf16.mxu0 0
        %1330 = vmatpush1.bf16.msra.mxu0 0
        %1331 = vmatprep.mubr.bf16.mxu0 0
        %1332 = vmatmul.mubr.bf16.gmra.mrb[0].mxu0 %v507
        %v1333 = vpop.f32.mrb[0].mxu0
        %v1334 = vadd.f32 0.0, %v1333
        %v1335 = vpop.f32.mrb[0].mxu0
        %v1336 = vpop.f32.mrb[0].mxu0
        %v1337 = vpop.f32.mrb[0].mxu0
        %1338 = vdwg.mxu0
        %v1339 = vadd.f32 %v1298, %v1334
        %1340 = vmatprep.subr.bf16.mxu0 0
        %1341 = vmatpush1.bf16.msra.mxu0 %v986
        %1342 = vmatprep.subr.bf16.mxu0 0
        %1343 = vmatpush1.bf16.msra.mxu0 0
        %1344 = vmatprep.subr.bf16.mxu0 0
        %1345 = vmatpush1.bf16.msra.mxu0 0
        %1346 = vmatprep.subr.bf16.mxu0 0
        %1347 = vmatpush1.bf16.msra.mxu0 0
        %1348 = vmatprep.subr.bf16.mxu0 0
        %1349 = vmatpush1.bf16.msra.mxu0 0
        %1350 = vmatprep.subr.bf16.mxu0 0
        %1351 = vmatpush1.bf16.msra.mxu0 0
        %1352 = vmatprep.subr.bf16.mxu0 0
        %1353 = vmatpush1.bf16.msra.mxu0 0
        %1354 = vmatprep.subr.bf16.mxu0 0
        %1355 = vmatpush1.bf16.msra.mxu0 0
        %1356 = vmatprep.subr.bf16.mxu0 0
        %1357 = vmatpush1.bf16.msra.mxu0 0
        %1358 = vmatprep.subr.bf16.mxu0 0
        %1359 = vmatpush1.bf16.msra.mxu0 0
        %1360 = vmatprep.subr.bf16.mxu0 0
        %1361 = vmatpush1.bf16.msra.mxu0 0
        %1362 = vmatprep.subr.bf16.mxu0 0
        %1363 = vmatpush1.bf16.msra.mxu0 0
        %1364 = vmatprep.subr.bf16.mxu0 0
        %1365 = vmatpush1.bf16.msra.mxu0 0
        %1366 = vmatprep.subr.bf16.mxu0 0
        %1367 = vmatpush1.bf16.msra.mxu0 0
        %1368 = vmatprep.subr.bf16.mxu0 0
        %1369 = vmatpush1.bf16.msra.mxu0 0
        %1370 = vmatprep.subr.bf16.mxu0 0
        %1371 = vmatpush1.bf16.msra.mxu0 0
        %1372 = vmatprep.mubr.bf16.mxu0 0
        %1373 = vmatmul.mubr.bf16.gmra.mrb[0].mxu0 %v561
        %v1374 = vpop.f32.mrb[0].mxu0
        %v1375 = vadd.f32 0.0, %v1374
        %v1376 = vpop.f32.mrb[0].mxu0
        %v1377 = vpop.f32.mrb[0].mxu0
        %v1378 = vpop.f32.mrb[0].mxu0
        %1379 = vdwg.mxu0
        %v1380 = vadd.f32 %v1339, %v1375
        %1381 = vmatprep.subr.bf16.mxu0 0
        %1382 = vmatpush1.bf16.msra.mxu0 %v1037
        %1383 = vmatprep.subr.bf16.mxu0 0
        %1384 = vmatpush1.bf16.msra.mxu0 0
        %1385 = vmatprep.subr.bf16.mxu0 0
        %1386 = vmatpush1.bf16.msra.mxu0 0
        %1387 = vmatprep.subr.bf16.mxu0 0
        %1388 = vmatpush1.bf16.msra.mxu0 0
        %1389 = vmatprep.subr.bf16.mxu0 0
        %1390 = vmatpush1.bf16.msra.mxu0 0
        %1391 = vmatprep.subr.bf16.mxu0 0
        %1392 = vmatpush1.bf16.msra.mxu0 0
        %1393 = vmatprep.subr.bf16.mxu0 0
        %1394 = vmatpush1.bf16.msra.mxu0 0
        %1395 = vmatprep.subr.bf16.mxu0 0
        %1396 = vmatpush1.bf16.msra.mxu0 0
        %1397 = vmatprep.subr.bf16.mxu0 0
        %1398 = vmatpush1.bf16.msra.mxu0 0
        %1399 = vmatprep.subr.bf16.mxu0 0
        %1400 = vmatpush1.bf16.msra.mxu0 0
        %1401 = vmatprep.subr.bf16.mxu0 0
        %1402 = vmatpush1.bf16.msra.mxu0 0
        %1403 = vmatprep.subr.bf16.mxu0 0
        %1404 = vmatpush1.bf16.msra.mxu0 0
        %1405 = vmatprep.subr.bf16.mxu0 0
        %1406 = vmatpush1.bf16.msra.mxu0 0
        %1407 = vmatprep.subr.bf16.mxu0 0
        %1408 = vmatpush1.bf16.msra.mxu0 0
        %1409 = vmatprep.subr.bf16.mxu0 0
        %1410 = vmatpush1.bf16.msra.mxu0 0
        %1411 = vmatprep.subr.bf16.mxu0 0
        %1412 = vmatpush1.bf16.msra.mxu0 0
        %1413 = vmatprep.mubr.bf16.mxu0 0
        %1414 = vmatmul.mubr.bf16.gmra.mrb[0].mxu0 %v612
        %v1415 = vpop.f32.mrb[0].mxu0
        %v1416 = vadd.f32 0.0, %v1415
        %v1417 = vpop.f32.mrb[0].mxu0
        %v1418 = vpop.f32.mrb[0].mxu0
        %v1419 = vpop.f32.mrb[0].mxu0
        %1420 = vdwg.mxu0
        %v1421 = vadd.f32 %v1380, %v1416
        %s1422 = sadd.s32 %s237, 2
        %s1423 = smul.u32 %s1422, 2
        %s1424 = smul.addr %s1423, 4
        %s1425 = scalar_lea.vmem %s220, %s1424
        %v1426 = vld [vmem:[%s1425] sm:$0x3]
        %v1428 = vsel %vm254, %v1426, 0
        %1430 = vmatprep.subr.bf16.mxu0 0
        %1431 = vmatpush1.bf16.msra.mxu0 %v1428
        %1432 = vmatprep.subr.bf16.mxu0 0
        %1433 = vmatpush1.bf16.msra.mxu0 0
        %1434 = vmatprep.subr.bf16.mxu0 0
        %1435 = vmatpush1.bf16.msra.mxu0 0
        %1436 = vmatprep.subr.bf16.mxu0 0
        %1437 = vmatpush1.bf16.msra.mxu0 0
        %1438 = vmatprep.subr.bf16.mxu0 0
        %1439 = vmatpush1.bf16.msra.mxu0 0
        %1440 = vmatprep.subr.bf16.mxu0 0
        %1441 = vmatpush1.bf16.msra.mxu0 0
        %1442 = vmatprep.subr.bf16.mxu0 0
        %1443 = vmatpush1.bf16.msra.mxu0 0
        %1444 = vmatprep.subr.bf16.mxu0 0
        %1445 = vmatpush1.bf16.msra.mxu0 0
        %1446 = vmatprep.subr.bf16.mxu0 0
        %1447 = vmatpush1.bf16.msra.mxu0 0
        %1448 = vmatprep.subr.bf16.mxu0 0
        %1449 = vmatpush1.bf16.msra.mxu0 0
        %1450 = vmatprep.subr.bf16.mxu0 0
        %1451 = vmatpush1.bf16.msra.mxu0 0
        %1452 = vmatprep.subr.bf16.mxu0 0
        %1453 = vmatpush1.bf16.msra.mxu0 0
        %1454 = vmatprep.subr.bf16.mxu0 0
        %1455 = vmatpush1.bf16.msra.mxu0 0
        %1456 = vmatprep.subr.bf16.mxu0 0
        %1457 = vmatpush1.bf16.msra.mxu0 0
        %1458 = vmatprep.subr.bf16.mxu0 0
        %1459 = vmatpush1.bf16.msra.mxu0 0
        %1460 = vmatprep.subr.bf16.mxu0 0
        %1461 = vmatpush1.bf16.msra.mxu0 0
        %1462 = vmatprep.mubr.bf16.mxu0 0
        %1463 = vmatmul.mubr.bf16.gmra.mrb[0].mxu0 %v666
        %v1464 = vpop.f32.mrb[0].mxu0
        %v1465 = vadd.f32 0.0, %v1464
        %v1466 = vpop.f32.mrb[0].mxu0
        %v1467 = vpop.f32.mrb[0].mxu0
        %v1468 = vpop.f32.mrb[0].mxu0
        %1469 = vdwg.mxu0
        %v1470 = vadd.f32 %v1421, %v1465
        %v1471 = vld [vmem:[%s1425] sm:$0xc]
        %v1473 = vunpack.c.l.b16 %v1471
        %v1474 = vpack.c.b16 %v1473, %v1473
        %v1475 = vrot.slane %v1474, 2
        %v1477 = vsel %vm254, %v1475, 0
        %1479 = vmatprep.subr.bf16.mxu0 0
        %1480 = vmatpush1.bf16.msra.mxu0 %v1477
        %1481 = vmatprep.subr.bf16.mxu0 0
        %1482 = vmatpush1.bf16.msra.mxu0 0
        %1483 = vmatprep.subr.bf16.mxu0 0
        %1484 = vmatpush1.bf16.msra.mxu0 0
        %1485 = vmatprep.subr.bf16.mxu0 0
        %1486 = vmatpush1.bf16.msra.mxu0 0
        %1487 = vmatprep.subr.bf16.mxu0 0
        %1488 = vmatpush1.bf16.msra.mxu0 0
        %1489 = vmatprep.subr.bf16.mxu0 0
        %1490 = vmatpush1.bf16.msra.mxu0 0
        %1491 = vmatprep.subr.bf16.mxu0 0
        %1492 = vmatpush1.bf16.msra.mxu0 0
        %1493 = vmatprep.subr.bf16.mxu0 0
        %1494 = vmatpush1.bf16.msra.mxu0 0
        %1495 = vmatprep.subr.bf16.mxu0 0
        %1496 = vmatpush1.bf16.msra.mxu0 0
        %1497 = vmatprep.subr.bf16.mxu0 0
        %1498 = vmatpush1.bf16.msra.mxu0 0
        %1499 = vmatprep.subr.bf16.mxu0 0
        %1500 = vmatpush1.bf16.msra.mxu0 0
        %1501 = vmatprep.subr.bf16.mxu0 0
        %1502 = vmatpush1.bf16.msra.mxu0 0
        %1503 = vmatprep.subr.bf16.mxu0 0
        %1504 = vmatpush1.bf16.msra.mxu0 0
        %1505 = vmatprep.subr.bf16.mxu0 0
        %1506 = vmatpush1.bf16.msra.mxu0 0
        %1507 = vmatprep.subr.bf16.mxu0 0
        %1508 = vmatpush1.bf16.msra.mxu0 0
        %1509 = vmatprep.subr.bf16.mxu0 0
        %1510 = vmatpush1.bf16.msra.mxu0 0
        %1511 = vmatprep.mubr.bf16.mxu0 0
        %1512 = vmatmul.mubr.bf16.gmra.mrb[0].mxu0 %v720
        %v1513 = vpop.f32.mrb[0].mxu0
        %v1514 = vadd.f32 0.0, %v1513
        %v1515 = vpop.f32.mrb[0].mxu0
        %v1516 = vpop.f32.mrb[0].mxu0
        %v1517 = vpop.f32.mrb[0].mxu0
        %1518 = vdwg.mxu0
        %v1519 = vadd.f32 %v1470, %v1514
        %v1521 = vunpack.c.l.b16 %v1426
        %v1522 = vpack.c.b16 %v1521, %v1521
        %1523 = vrot.lane.b32.xlu0 %v1522, 127
        %v1524 = vpop.permute.xlu0 %1523
        %v1526 = vsel %vm254, %v1524, 0
        %1528 = vmatprep.subr.bf16.mxu0 0
        %1529 = vmatpush1.bf16.msra.mxu0 %v1526
        %1530 = vmatprep.subr.bf16.mxu0 0
        %1531 = vmatpush1.bf16.msra.mxu0 0
        %1532 = vmatprep.subr.bf16.mxu0 0
        %1533 = vmatpush1.bf16.msra.mxu0 0
        %1534 = vmatprep.subr.bf16.mxu0 0
        %1535 = vmatpush1.bf16.msra.mxu0 0
        %1536 = vmatprep.subr.bf16.mxu0 0
        %1537 = vmatpush1.bf16.msra.mxu0 0
        %1538 = vmatprep.subr.bf16.mxu0 0
        %1539 = vmatpush1.bf16.msra.mxu0 0
        %1540 = vmatprep.subr.bf16.mxu0 0
        %1541 = vmatpush1.bf16.msra.mxu0 0
        %1542 = vmatprep.subr.bf16.mxu0 0
        %1543 = vmatpush1.bf16.msra.mxu0 0
        %1544 = vmatprep.subr.bf16.mxu0 0
        %1545 = vmatpush1.bf16.msra.mxu0 0
        %1546 = vmatprep.subr.bf16.mxu0 0
        %1547 = vmatpush1.bf16.msra.mxu0 0
        %1548 = vmatprep.subr.bf16.mxu0 0
        %1549 = vmatpush1.bf16.msra.mxu0 0
        %1550 = vmatprep.subr.bf16.mxu0 0
        %1551 = vmatpush1.bf16.msra.mxu0 0
        %1552 = vmatprep.subr.bf16.mxu0 0
        %1553 = vmatpush1.bf16.msra.mxu0 0
        %1554 = vmatprep.subr.bf16.mxu0 0
        %1555 = vmatpush1.bf16.msra.mxu0 0
        %1556 = vmatprep.subr.bf16.mxu0 0
        %1557 = vmatpush1.bf16.msra.mxu0 0
        %1558 = vmatprep.subr.bf16.mxu0 0
        %1559 = vmatpush1.bf16.msra.mxu0 0
        %1560 = vmatprep.mubr.bf16.mxu0 0
        %1561 = vmatmul.mubr.bf16.gmra.mrb[0].mxu0 %v774
        %v1562 = vpop.f32.mrb[0].mxu0
        %v1563 = vadd.f32 0.0, %v1562
        %v1564 = vpop.f32.mrb[0].mxu0
        %v1565 = vpop.f32.mrb[0].mxu0
        %v1566 = vpop.f32.mrb[0].mxu0
        %1567 = vdwg.mxu0
        %v1568 = vadd.f32 %v1519, %v1563
        %1569 = vrot.lane.b32.xlu0 %v1475, 127
        %v1570 = vpop.permute.xlu0 %1569
        %v1572 = vsel %vm254, %v1570, 0
        %1574 = vmatprep.subr.bf16.mxu0 0
        %1575 = vmatpush1.bf16.msra.mxu0 %v1572
        %1576 = vmatprep.subr.bf16.mxu0 0
        %1577 = vmatpush1.bf16.msra.mxu0 0
        %1578 = vmatprep.subr.bf16.mxu0 0
        %1579 = vmatpush1.bf16.msra.mxu0 0
        %1580 = vmatprep.subr.bf16.mxu0 0
        %1581 = vmatpush1.bf16.msra.mxu0 0
        %1582 = vmatprep.subr.bf16.mxu0 0
        %1583 = vmatpush1.bf16.msra.mxu0 0
        %1584 = vmatprep.subr.bf16.mxu0 0
        %1585 = vmatpush1.bf16.msra.mxu0 0
        %1586 = vmatprep.subr.bf16.mxu0 0
        %1587 = vmatpush1.bf16.msra.mxu0 0
        %1588 = vmatprep.subr.bf16.mxu0 0
        %1589 = vmatpush1.bf16.msra.mxu0 0
        %1590 = vmatprep.subr.bf16.mxu0 0
        %1591 = vmatpush1.bf16.msra.mxu0 0
        %1592 = vmatprep.subr.bf16.mxu0 0
        %1593 = vmatpush1.bf16.msra.mxu0 0
        %1594 = vmatprep.subr.bf16.mxu0 0
        %1595 = vmatpush1.bf16.msra.mxu0 0
        %1596 = vmatprep.subr.bf16.mxu0 0
        %1597 = vmatpush1.bf16.msra.mxu0 0
        %1598 = vmatprep.subr.bf16.mxu0 0
        %1599 = vmatpush1.bf16.msra.mxu0 0
        %1600 = vmatprep.subr.bf16.mxu0 0
        %1601 = vmatpush1.bf16.msra.mxu0 0
        %1602 = vmatprep.subr.bf16.mxu0 0
        %1603 = vmatpush1.bf16.msra.mxu0 0
        %1604 = vmatprep.subr.bf16.mxu0 0
        %1605 = vmatpush1.bf16.msra.mxu0 0
        %1606 = vmatprep.mubr.bf16.mxu0 0
        %1607 = vmatmul.mubr.bf16.gmra.mrb[0].mxu0 %v825
        %v1608 = vpop.f32.mrb[0].mxu0
        %v1609 = vadd.f32 0.0, %v1608
        %v1610 = vpop.f32.mrb[0].mxu0
        %v1611 = vpop.f32.mrb[0].mxu0
        %v1612 = vpop.f32.mrb[0].mxu0
        %1613 = vdwg.mxu0
        %v1614 = vadd.f32 %v1568, %v1609
        %v1615 = vld [vmem:[%s1425 + $0x4] sm:$0x3]
        %v1617 = vsel %vm254, %v1615, 0
        %1619 = vmatprep.subr.bf16.mxu0 0
        %1620 = vmatpush1.bf16.msra.mxu0 %v1617
        %1621 = vmatprep.subr.bf16.mxu0 0
        %1622 = vmatpush1.bf16.msra.mxu0 0
        %1623 = vmatprep.subr.bf16.mxu0 0
        %1624 = vmatpush1.bf16.msra.mxu0 0
        %1625 = vmatprep.subr.bf16.mxu0 0
        %1626 = vmatpush1.bf16.msra.mxu0 0
        %1627 = vmatprep.subr.bf16.mxu0 0
        %1628 = vmatpush1.bf16.msra.mxu0 0
        %1629 = vmatprep.subr.bf16.mxu0 0
        %1630 = vmatpush1.bf16.msra.mxu0 0
        %1631 = vmatprep.subr.bf16.mxu0 0
        %1632 = vmatpush1.bf16.msra.mxu0 0
        %1633 = vmatprep.subr.bf16.mxu0 0
        %1634 = vmatpush1.bf16.msra.mxu0 0
        %1635 = vmatprep.subr.bf16.mxu0 0
        %1636 = vmatpush1.bf16.msra.mxu0 0
        %1637 = vmatprep.subr.bf16.mxu0 0
        %1638 = vmatpush1.bf16.msra.mxu0 0
        %1639 = vmatprep.subr.bf16.mxu0 0
        %1640 = vmatpush1.bf16.msra.mxu0 0
        %1641 = vmatprep.subr.bf16.mxu0 0
        %1642 = vmatpush1.bf16.msra.mxu0 0
        %1643 = vmatprep.subr.bf16.mxu0 0
        %1644 = vmatpush1.bf16.msra.mxu0 0
        %1645 = vmatprep.subr.bf16.mxu0 0
        %1646 = vmatpush1.bf16.msra.mxu0 0
        %1647 = vmatprep.subr.bf16.mxu0 0
        %1648 = vmatpush1.bf16.msra.mxu0 0
        %1649 = vmatprep.subr.bf16.mxu0 0
        %1650 = vmatpush1.bf16.msra.mxu0 0
        %1651 = vmatprep.mubr.bf16.mxu0 0
        %1652 = vmatmul.mubr.bf16.gmra.mrb[0].mxu0 %v875
        %v1653 = vpop.f32.mrb[0].mxu0
        %v1654 = vadd.f32 0.0, %v1653
        %v1655 = vpop.f32.mrb[0].mxu0
        %v1656 = vpop.f32.mrb[0].mxu0
        %v1657 = vpop.f32.mrb[0].mxu0
        %1658 = vdwg.mxu0
        %v1659 = vadd.f32 %v1614, %v1654
        %v1660 = vld [vmem:[%s1425 + $0x4] sm:$0xc]
        %v1662 = vunpack.c.l.b16 %v1660
        %v1663 = vpack.c.b16 %v1662, %v1662
        %v1664 = vrot.slane %v1663, 2
        %v1666 = vsel %vm254, %v1664, 0
        %1668 = vmatprep.subr.bf16.mxu0 0
        %1669 = vmatpush1.bf16.msra.mxu0 %v1666
        %1670 = vmatprep.subr.bf16.mxu0 0
        %1671 = vmatpush1.bf16.msra.mxu0 0
        %1672 = vmatprep.subr.bf16.mxu0 0
        %1673 = vmatpush1.bf16.msra.mxu0 0
        %1674 = vmatprep.subr.bf16.mxu0 0
        %1675 = vmatpush1.bf16.msra.mxu0 0
        %1676 = vmatprep.subr.bf16.mxu0 0
        %1677 = vmatpush1.bf16.msra.mxu0 0
        %1678 = vmatprep.subr.bf16.mxu0 0
        %1679 = vmatpush1.bf16.msra.mxu0 0
        %1680 = vmatprep.subr.bf16.mxu0 0
        %1681 = vmatpush1.bf16.msra.mxu0 0
        %1682 = vmatprep.subr.bf16.mxu0 0
        %1683 = vmatpush1.bf16.msra.mxu0 0
        %1684 = vmatprep.subr.bf16.mxu0 0
        %1685 = vmatpush1.bf16.msra.mxu0 0
        %1686 = vmatprep.subr.bf16.mxu0 0
        %1687 = vmatpush1.bf16.msra.mxu0 0
        %1688 = vmatprep.subr.bf16.mxu0 0
        %1689 = vmatpush1.bf16.msra.mxu0 0
        %1690 = vmatprep.subr.bf16.mxu0 0
        %1691 = vmatpush1.bf16.msra.mxu0 0
        %1692 = vmatprep.subr.bf16.mxu0 0
        %1693 = vmatpush1.bf16.msra.mxu0 0
        %1694 = vmatprep.subr.bf16.mxu0 0
        %1695 = vmatpush1.bf16.msra.mxu0 0
        %1696 = vmatprep.subr.bf16.mxu0 0
        %1697 = vmatpush1.bf16.msra.mxu0 0
        %1698 = vmatprep.subr.bf16.mxu0 0
        %1699 = vmatpush1.bf16.msra.mxu0 0
        %1700 = vmatprep.mubr.bf16.mxu0 0
        %1701 = vmatmul.mubr.bf16.gmra.mrb[0].mxu0 %v929
        %v1702 = vpop.f32.mrb[0].mxu0
        %v1703 = vadd.f32 0.0, %v1702
        %v1704 = vpop.f32.mrb[0].mxu0
        %v1705 = vpop.f32.mrb[0].mxu0
        %v1706 = vpop.f32.mrb[0].mxu0
        %1707 = vdwg.mxu0
        %v1708 = vadd.f32 %v1659, %v1703
        %v1710 = vunpack.c.l.b16 %v1615
        %v1711 = vpack.c.b16 %v1710, %v1710
        %1712 = vrot.lane.b32.xlu0 %v1711, 127
        %v1713 = vpop.permute.xlu0 %1712
        %v1715 = vsel %vm254, %v1713, 0
        %1717 = vmatprep.subr.bf16.mxu0 0
        %1718 = vmatpush1.bf16.msra.mxu0 %v1715
        %1719 = vmatprep.subr.bf16.mxu0 0
        %1720 = vmatpush1.bf16.msra.mxu0 0
        %1721 = vmatprep.subr.bf16.mxu0 0
        %1722 = vmatpush1.bf16.msra.mxu0 0
        %1723 = vmatprep.subr.bf16.mxu0 0
        %1724 = vmatpush1.bf16.msra.mxu0 0
        %1725 = vmatprep.subr.bf16.mxu0 0
        %1726 = vmatpush1.bf16.msra.mxu0 0
        %1727 = vmatprep.subr.bf16.mxu0 0
        %1728 = vmatpush1.bf16.msra.mxu0 0
        %1729 = vmatprep.subr.bf16.mxu0 0
        %1730 = vmatpush1.bf16.msra.mxu0 0
        %1731 = vmatprep.subr.bf16.mxu0 0
        %1732 = vmatpush1.bf16.msra.mxu0 0
        %1733 = vmatprep.subr.bf16.mxu0 0
        %1734 = vmatpush1.bf16.msra.mxu0 0
        %1735 = vmatprep.subr.bf16.mxu0 0
        %1736 = vmatpush1.bf16.msra.mxu0 0
        %1737 = vmatprep.subr.bf16.mxu0 0
        %1738 = vmatpush1.bf16.msra.mxu0 0
        %1739 = vmatprep.subr.bf16.mxu0 0
        %1740 = vmatpush1.bf16.msra.mxu0 0
        %1741 = vmatprep.subr.bf16.mxu0 0
        %1742 = vmatpush1.bf16.msra.mxu0 0
        %1743 = vmatprep.subr.bf16.mxu0 0
        %1744 = vmatpush1.bf16.msra.mxu0 0
        %1745 = vmatprep.subr.bf16.mxu0 0
        %1746 = vmatpush1.bf16.msra.mxu0 0
        %1747 = vmatprep.subr.bf16.mxu0 0
        %1748 = vmatpush1.bf16.msra.mxu0 0
        %1749 = vmatprep.mubr.bf16.mxu0 0
        %1750 = vmatmul.mubr.bf16.gmra.mrb[0].mxu0 %v983
        %v1751 = vpop.f32.mrb[0].mxu0
        %v1752 = vadd.f32 0.0, %v1751
        %v1753 = vpop.f32.mrb[0].mxu0
        %v1754 = vpop.f32.mrb[0].mxu0
        %v1755 = vpop.f32.mrb[0].mxu0
        %1756 = vdwg.mxu0
        %v1757 = vadd.f32 %v1708, %v1752
        %1758 = vrot.lane.b32.xlu0 %v1664, 127
        %v1759 = vpop.permute.xlu0 %1758
        %v1761 = vsel %vm254, %v1759, 0
        %1763 = vmatprep.subr.bf16.mxu0 0
        %1764 = vmatpush1.bf16.msra.mxu0 %v1761
        %1765 = vmatprep.subr.bf16.mxu0 0
        %1766 = vmatpush1.bf16.msra.mxu0 0
        %1767 = vmatprep.subr.bf16.mxu0 0
        %1768 = vmatpush1.bf16.msra.mxu0 0
        %1769 = vmatprep.subr.bf16.mxu0 0
        %1770 = vmatpush1.bf16.msra.mxu0 0
        %1771 = vmatprep.subr.bf16.mxu0 0
        %1772 = vmatpush1.bf16.msra.mxu0 0
        %1773 = vmatprep.subr.bf16.mxu0 0
        %1774 = vmatpush1.bf16.msra.mxu0 0
        %1775 = vmatprep.subr.bf16.mxu0 0
        %1776 = vmatpush1.bf16.msra.mxu0 0
        %1777 = vmatprep.subr.bf16.mxu0 0
        %1778 = vmatpush1.bf16.msra.mxu0 0
        %1779 = vmatprep.subr.bf16.mxu0 0
        %1780 = vmatpush1.bf16.msra.mxu0 0
        %1781 = vmatprep.subr.bf16.mxu0 0
        %1782 = vmatpush1.bf16.msra.mxu0 0
        %1783 = vmatprep.subr.bf16.mxu0 0
        %1784 = vmatpush1.bf16.msra.mxu0 0
        %1785 = vmatprep.subr.bf16.mxu0 0
        %1786 = vmatpush1.bf16.msra.mxu0 0
        %1787 = vmatprep.subr.bf16.mxu0 0
        %1788 = vmatpush1.bf16.msra.mxu0 0
        %1789 = vmatprep.subr.bf16.mxu0 0
        %1790 = vmatpush1.bf16.msra.mxu0 0
        %1791 = vmatprep.subr.bf16.mxu0 0
        %1792 = vmatpush1.bf16.msra.mxu0 0
        %1793 = vmatprep.subr.bf16.mxu0 0
        %1794 = vmatpush1.bf16.msra.mxu0 0
        %1795 = vmatprep.mubr.bf16.mxu0 0
        %1796 = vmatmul.mubr.bf16.gmra.mrb[0].mxu0 %v1034
        %v1797 = vpop.f32.mrb[0].mxu0
        %v1798 = vadd.f32 0.0, %v1797
        %v1799 = vpop.f32.mrb[0].mxu0
        %v1800 = vpop.f32.mrb[0].mxu0
        %v1801 = vpop.f32.mrb[0].mxu0
        %1802 = vdwg.mxu0
        %v1803 = vadd.f32 %v1757, %v1798
        %p1804 = scmp.lt.s32.totalorder %s658, 8
        %s1805 = scalar_select %p1804, 1, 0
        %s1806 = scvt.s32.f32 %s1805
        %v1807 = vsel %vm1083, %v1803, 0.0
        %1808 = vadd.xlane.f32.xlu0 %v1807
        %v1809 = vpop.xlane.xlu0 %1808
        %v1810 = vstv %s1806
        %v1811 = vmul.f32 %v1810, %v1809
        %v1812 = vadd.f32 %v1089, %v1811
        %v1813 = vmul.f32 %v1803, %v1803
        %v1814 = vsel %vm1083, %v1813, 0.0
        %1815 = vadd.xlane.f32.xlu0 %v1814
        %v1816 = vpop.xlane.xlu0 %1815
        %v1817 = vmul.f32 %v1810, %v1816
        %v1818 = vadd.f32 %v1095, %v1817
        %1819 = vmatprep.subr.bf16.mxu0 0
        %1820 = vmatpush1.bf16.msra.mxu0 %v1477
        %1821 = vmatprep.subr.bf16.mxu0 0
        %1822 = vmatpush1.bf16.msra.mxu0 0
        %1823 = vmatprep.subr.bf16.mxu0 0
        %1824 = vmatpush1.bf16.msra.mxu0 0
        %1825 = vmatprep.subr.bf16.mxu0 0
        %1826 = vmatpush1.bf16.msra.mxu0 0
        %1827 = vmatprep.subr.bf16.mxu0 0
        %1828 = vmatpush1.bf16.msra.mxu0 0
        %1829 = vmatprep.subr.bf16.mxu0 0
        %1830 = vmatpush1.bf16.msra.mxu0 0
        %1831 = vmatprep.subr.bf16.mxu0 0
        %1832 = vmatpush1.bf16.msra.mxu0 0
        %1833 = vmatprep.subr.bf16.mxu0 0
        %1834 = vmatpush1.bf16.msra.mxu0 0
        %1835 = vmatprep.subr.bf16.mxu0 0
        %1836 = vmatpush1.bf16.msra.mxu0 0
        %1837 = vmatprep.subr.bf16.mxu0 0
        %1838 = vmatpush1.bf16.msra.mxu0 0
        %1839 = vmatprep.subr.bf16.mxu0 0
        %1840 = vmatpush1.bf16.msra.mxu0 0
        %1841 = vmatprep.subr.bf16.mxu0 0
        %1842 = vmatpush1.bf16.msra.mxu0 0
        %1843 = vmatprep.subr.bf16.mxu0 0
        %1844 = vmatpush1.bf16.msra.mxu0 0
        %1845 = vmatprep.subr.bf16.mxu0 0
        %1846 = vmatpush1.bf16.msra.mxu0 0
        %1847 = vmatprep.subr.bf16.mxu0 0
        %1848 = vmatpush1.bf16.msra.mxu0 0
        %1849 = vmatprep.subr.bf16.mxu0 0
        %1850 = vmatpush1.bf16.msra.mxu0 0
        %1851 = vmatprep.mubr.bf16.mxu0 0
        %1852 = vmatmul.mubr.bf16.gmra.mrb[0].mxu0 %v252
        %v1853 = vpop.f32.mrb[0].mxu0
        %v1854 = vadd.f32 0.0, %v1853
        %v1855 = vpop.f32.mrb[0].mxu0
        %v1856 = vpop.f32.mrb[0].mxu0
        %v1857 = vpop.f32.mrb[0].mxu0
        %1858 = vdwg.mxu0
        %1859 = vmatprep.subr.bf16.mxu0 0
        %1860 = vmatpush1.bf16.msra.mxu0 %v1428
        %1861 = vmatprep.subr.bf16.mxu0 0
        %1862 = vmatpush1.bf16.msra.mxu0 0
        %1863 = vmatprep.subr.bf16.mxu0 0
        %1864 = vmatpush1.bf16.msra.mxu0 0
        %1865 = vmatprep.subr.bf16.mxu0 0
        %1866 = vmatpush1.bf16.msra.mxu0 0
        %1867 = vmatprep.subr.bf16.mxu0 0
        %1868 = vmatpush1.bf16.msra.mxu0 0
        %1869 = vmatprep.subr.bf16.mxu0 0
        %1870 = vmatpush1.bf16.msra.mxu0 0
        %1871 = vmatprep.subr.bf16.mxu0 0
        %1872 = vmatpush1.bf16.msra.mxu0 0
        %1873 = vmatprep.subr.bf16.mxu0 0
        %1874 = vmatpush1.bf16.msra.mxu0 0
        %1875 = vmatprep.subr.bf16.mxu0 0
        %1876 = vmatpush1.bf16.msra.mxu0 0
        %1877 = vmatprep.subr.bf16.mxu0 0
        %1878 = vmatpush1.bf16.msra.mxu0 0
        %1879 = vmatprep.subr.bf16.mxu0 0
        %1880 = vmatpush1.bf16.msra.mxu0 0
        %1881 = vmatprep.subr.bf16.mxu0 0
        %1882 = vmatpush1.bf16.msra.mxu0 0
        %1883 = vmatprep.subr.bf16.mxu0 0
        %1884 = vmatpush1.bf16.msra.mxu0 0
        %1885 = vmatprep.subr.bf16.mxu0 0
        %1886 = vmatpush1.bf16.msra.mxu0 0
        %1887 = vmatprep.subr.bf16.mxu0 0
        %1888 = vmatpush1.bf16.msra.mxu0 0
        %1889 = vmatprep.subr.bf16.mxu0 0
        %1890 = vmatpush1.bf16.msra.mxu0 0
        %1891 = vmatprep.mubr.bf16.mxu0 0
        %1892 = vmatmul.mubr.bf16.gmra.mrb[0].mxu0 %v299
        %v1893 = vpop.f32.mrb[0].mxu0
        %v1894 = vadd.f32 %v1854, %v1893
        %v1895 = vpop.f32.mrb[0].mxu0
        %v1896 = vpop.f32.mrb[0].mxu0
        %v1897 = vpop.f32.mrb[0].mxu0
        %1898 = vdwg.mxu0
        %1899 = vmatprep.subr.bf16.mxu0 0
        %1900 = vmatpush1.bf16.msra.mxu0 %v1526
        %1901 = vmatprep.subr.bf16.mxu0 0
        %1902 = vmatpush1.bf16.msra.mxu0 0
        %1903 = vmatprep.subr.bf16.mxu0 0
        %1904 = vmatpush1.bf16.msra.mxu0 0
        %1905 = vmatprep.subr.bf16.mxu0 0
        %1906 = vmatpush1.bf16.msra.mxu0 0
        %1907 = vmatprep.subr.bf16.mxu0 0
        %1908 = vmatpush1.bf16.msra.mxu0 0
        %1909 = vmatprep.subr.bf16.mxu0 0
        %1910 = vmatpush1.bf16.msra.mxu0 0
        %1911 = vmatprep.subr.bf16.mxu0 0
        %1912 = vmatpush1.bf16.msra.mxu0 0
        %1913 = vmatprep.subr.bf16.mxu0 0
        %1914 = vmatpush1.bf16.msra.mxu0 0
        %1915 = vmatprep.subr.bf16.mxu0 0
        %1916 = vmatpush1.bf16.msra.mxu0 0
        %1917 = vmatprep.subr.bf16.mxu0 0
        %1918 = vmatpush1.bf16.msra.mxu0 0
        %1919 = vmatprep.subr.bf16.mxu0 0
        %1920 = vmatpush1.bf16.msra.mxu0 0
        %1921 = vmatprep.subr.bf16.mxu0 0
        %1922 = vmatpush1.bf16.msra.mxu0 0
        %1923 = vmatprep.subr.bf16.mxu0 0
        %1924 = vmatpush1.bf16.msra.mxu0 0
        %1925 = vmatprep.subr.bf16.mxu0 0
        %1926 = vmatpush1.bf16.msra.mxu0 0
        %1927 = vmatprep.subr.bf16.mxu0 0
        %1928 = vmatpush1.bf16.msra.mxu0 0
        %1929 = vmatprep.subr.bf16.mxu0 0
        %1930 = vmatpush1.bf16.msra.mxu0 0
        %1931 = vmatprep.mubr.bf16.mxu0 0
        %1932 = vmatmul.mubr.bf16.gmra.mrb[0].mxu0 %v352
        %v1933 = vpop.f32.mrb[0].mxu0
        %v1934 = vadd.f32 0.0, %v1933
        %v1935 = vpop.f32.mrb[0].mxu0
        %v1936 = vpop.f32.mrb[0].mxu0
        %v1937 = vpop.f32.mrb[0].mxu0
        %1938 = vdwg.mxu0
        %v1939 = vadd.f32 %v1894, %v1934
        %1940 = vmatprep.subr.bf16.mxu0 0
        %1941 = vmatpush1.bf16.msra.mxu0 %v1572
        %1942 = vmatprep.subr.bf16.mxu0 0
        %1943 = vmatpush1.bf16.msra.mxu0 0
        %1944 = vmatprep.subr.bf16.mxu0 0
        %1945 = vmatpush1.bf16.msra.mxu0 0
        %1946 = vmatprep.subr.bf16.mxu0 0
        %1947 = vmatpush1.bf16.msra.mxu0 0
        %1948 = vmatprep.subr.bf16.mxu0 0
        %1949 = vmatpush1.bf16.msra.mxu0 0
        %1950 = vmatprep.subr.bf16.mxu0 0
        %1951 = vmatpush1.bf16.msra.mxu0 0
        %1952 = vmatprep.subr.bf16.mxu0 0
        %1953 = vmatpush1.bf16.msra.mxu0 0
        %1954 = vmatprep.subr.bf16.mxu0 0
        %1955 = vmatpush1.bf16.msra.mxu0 0
        %1956 = vmatprep.subr.bf16.mxu0 0
        %1957 = vmatpush1.bf16.msra.mxu0 0
        %1958 = vmatprep.subr.bf16.mxu0 0
        %1959 = vmatpush1.bf16.msra.mxu0 0
        %1960 = vmatprep.subr.bf16.mxu0 0
        %1961 = vmatpush1.bf16.msra.mxu0 0
        %1962 = vmatprep.subr.bf16.mxu0 0
        %1963 = vmatpush1.bf16.msra.mxu0 0
        %1964 = vmatprep.subr.bf16.mxu0 0
        %1965 = vmatpush1.bf16.msra.mxu0 0
        %1966 = vmatprep.subr.bf16.mxu0 0
        %1967 = vmatpush1.bf16.msra.mxu0 0
        %1968 = vmatprep.subr.bf16.mxu0 0
        %1969 = vmatpush1.bf16.msra.mxu0 0
        %1970 = vmatprep.subr.bf16.mxu0 0
        %1971 = vmatpush1.bf16.msra.mxu0 0
        %1972 = vmatprep.mubr.bf16.mxu0 0
        %1973 = vmatmul.mubr.bf16.gmra.mrb[0].mxu0 %v403
        %v1974 = vpop.f32.mrb[0].mxu0
        %v1975 = vadd.f32 0.0, %v1974
        %v1976 = vpop.f32.mrb[0].mxu0
        %v1977 = vpop.f32.mrb[0].mxu0
        %v1978 = vpop.f32.mrb[0].mxu0
        %1979 = vdwg.mxu0
        %v1980 = vadd.f32 %v1939, %v1975
        %1981 = vmatprep.subr.bf16.mxu0 0
        %1982 = vmatpush1.bf16.msra.mxu0 %v1617
        %1983 = vmatprep.subr.bf16.mxu0 0
        %1984 = vmatpush1.bf16.msra.mxu0 0
        %1985 = vmatprep.subr.bf16.mxu0 0
        %1986 = vmatpush1.bf16.msra.mxu0 0
        %1987 = vmatprep.subr.bf16.mxu0 0
        %1988 = vmatpush1.bf16.msra.mxu0 0
        %1989 = vmatprep.subr.bf16.mxu0 0
        %1990 = vmatpush1.bf16.msra.mxu0 0
        %1991 = vmatprep.subr.bf16.mxu0 0
        %1992 = vmatpush1.bf16.msra.mxu0 0
        %1993 = vmatprep.subr.bf16.mxu0 0
        %1994 = vmatpush1.bf16.msra.mxu0 0
        %1995 = vmatprep.subr.bf16.mxu0 0
        %1996 = vmatpush1.bf16.msra.mxu0 0
        %1997 = vmatprep.subr.bf16.mxu0 0
        %1998 = vmatpush1.bf16.msra.mxu0 0
        %1999 = vmatprep.subr.bf16.mxu0 0
        %2000 = vmatpush1.bf16.msra.mxu0 0
        %2001 = vmatprep.subr.bf16.mxu0 0
        %2002 = vmatpush1.bf16.msra.mxu0 0
        %2003 = vmatprep.subr.bf16.mxu0 0
        %2004 = vmatpush1.bf16.msra.mxu0 0
        %2005 = vmatprep.subr.bf16.mxu0 0
        %2006 = vmatpush1.bf16.msra.mxu0 0
        %2007 = vmatprep.subr.bf16.mxu0 0
        %2008 = vmatpush1.bf16.msra.mxu0 0
        %2009 = vmatprep.subr.bf16.mxu0 0
        %2010 = vmatpush1.bf16.msra.mxu0 0
        %2011 = vmatprep.subr.bf16.mxu0 0
        %2012 = vmatpush1.bf16.msra.mxu0 0
        %2013 = vmatprep.mubr.bf16.mxu0 0
        %2014 = vmatmul.mubr.bf16.gmra.mrb[0].mxu0 %v453
        %v2015 = vpop.f32.mrb[0].mxu0
        %v2016 = vadd.f32 0.0, %v2015
        %v2017 = vpop.f32.mrb[0].mxu0
        %v2018 = vpop.f32.mrb[0].mxu0
        %v2019 = vpop.f32.mrb[0].mxu0
        %2020 = vdwg.mxu0
        %v2021 = vadd.f32 %v1980, %v2016
        %2022 = vmatprep.subr.bf16.mxu0 0
        %2023 = vmatpush1.bf16.msra.mxu0 %v1666
        %2024 = vmatprep.subr.bf16.mxu0 0
        %2025 = vmatpush1.bf16.msra.mxu0 0
        %2026 = vmatprep.subr.bf16.mxu0 0
        %2027 = vmatpush1.bf16.msra.mxu0 0
        %2028 = vmatprep.subr.bf16.mxu0 0
        %2029 = vmatpush1.bf16.msra.mxu0 0
        %2030 = vmatprep.subr.bf16.mxu0 0
        %2031 = vmatpush1.bf16.msra.mxu0 0
        %2032 = vmatprep.subr.bf16.mxu0 0
        %2033 = vmatpush1.bf16.msra.mxu0 0
        %2034 = vmatprep.subr.bf16.mxu0 0
        %2035 = vmatpush1.bf16.msra.mxu0 0
        %2036 = vmatprep.subr.bf16.mxu0 0
        %2037 = vmatpush1.bf16.msra.mxu0 0
        %2038 = vmatprep.subr.bf16.mxu0 0
        %2039 = vmatpush1.bf16.msra.mxu0 0
        %2040 = vmatprep.subr.bf16.mxu0 0
        %2041 = vmatpush1.bf16.msra.mxu0 0
        %2042 = vmatprep.subr.bf16.mxu0 0
        %2043 = vmatpush1.bf16.msra.mxu0 0
        %2044 = vmatprep.subr.bf16.mxu0 0
        %2045 = vmatpush1.bf16.msra.mxu0 0
        %2046 = vmatprep.subr.bf16.mxu0 0
        %2047 = vmatpush1.bf16.msra.mxu0 0
        %2048 = vmatprep.subr.bf16.mxu0 0
        %2049 = vmatpush1.bf16.msra.mxu0 0
        %2050 = vmatprep.subr.bf16.mxu0 0
        %2051 = vmatpush1.bf16.msra.mxu0 0
        %2052 = vmatprep.subr.bf16.mxu0 0
        %2053 = vmatpush1.bf16.msra.mxu0 0
        %2054 = vmatprep.mubr.bf16.mxu0 0
        %2055 = vmatmul.mubr.bf16.gmra.mrb[0].mxu0 %v507
        %v2056 = vpop.f32.mrb[0].mxu0
        %v2057 = vadd.f32 0.0, %v2056
        %v2058 = vpop.f32.mrb[0].mxu0
        %v2059 = vpop.f32.mrb[0].mxu0
        %v2060 = vpop.f32.mrb[0].mxu0
        %2061 = vdwg.mxu0
        %v2062 = vadd.f32 %v2021, %v2057
        %2063 = vmatprep.subr.bf16.mxu0 0
        %2064 = vmatpush1.bf16.msra.mxu0 %v1715
        %2065 = vmatprep.subr.bf16.mxu0 0
        %2066 = vmatpush1.bf16.msra.mxu0 0
        %2067 = vmatprep.subr.bf16.mxu0 0
        %2068 = vmatpush1.bf16.msra.mxu0 0
        %2069 = vmatprep.subr.bf16.mxu0 0
        %2070 = vmatpush1.bf16.msra.mxu0 0
        %2071 = vmatprep.subr.bf16.mxu0 0
        %2072 = vmatpush1.bf16.msra.mxu0 0
        %2073 = vmatprep.subr.bf16.mxu0 0
        %2074 = vmatpush1.bf16.msra.mxu0 0
        %2075 = vmatprep.subr.bf16.mxu0 0
        %2076 = vmatpush1.bf16.msra.mxu0 0
        %2077 = vmatprep.subr.bf16.mxu0 0
        %2078 = vmatpush1.bf16.msra.mxu0 0
        %2079 = vmatprep.subr.bf16.mxu0 0
        %2080 = vmatpush1.bf16.msra.mxu0 0
        %2081 = vmatprep.subr.bf16.mxu0 0
        %2082 = vmatpush1.bf16.msra.mxu0 0
        %2083 = vmatprep.subr.bf16.mxu0 0
        %2084 = vmatpush1.bf16.msra.mxu0 0
        %2085 = vmatprep.subr.bf16.mxu0 0
        %2086 = vmatpush1.bf16.msra.mxu0 0
        %2087 = vmatprep.subr.bf16.mxu0 0
        %2088 = vmatpush1.bf16.msra.mxu0 0
        %2089 = vmatprep.subr.bf16.mxu0 0
        %2090 = vmatpush1.bf16.msra.mxu0 0
        %2091 = vmatprep.subr.bf16.mxu0 0
        %2092 = vmatpush1.bf16.msra.mxu0 0
        %2093 = vmatprep.subr.bf16.mxu0 0
        %2094 = vmatpush1.bf16.msra.mxu0 0
        %2095 = vmatprep.mubr.bf16.mxu0 0
        %2096 = vmatmul.mubr.bf16.gmra.mrb[0].mxu0 %v561
        %v2097 = vpop.f32.mrb[0].mxu0
        %v2098 = vadd.f32 0.0, %v2097
        %v2099 = vpop.f32.mrb[0].mxu0
        %v2100 = vpop.f32.mrb[0].mxu0
        %v2101 = vpop.f32.mrb[0].mxu0
        %2102 = vdwg.mxu0
        %v2103 = vadd.f32 %v2062, %v2098
        %2104 = vmatprep.subr.bf16.mxu0 0
        %2105 = vmatpush1.bf16.msra.mxu0 %v1761
        %2106 = vmatprep.subr.bf16.mxu0 0
        %2107 = vmatpush1.bf16.msra.mxu0 0
        %2108 = vmatprep.subr.bf16.mxu0 0
        %2109 = vmatpush1.bf16.msra.mxu0 0
        %2110 = vmatprep.subr.bf16.mxu0 0
        %2111 = vmatpush1.bf16.msra.mxu0 0
        %2112 = vmatprep.subr.bf16.mxu0 0
        %2113 = vmatpush1.bf16.msra.mxu0 0
        %2114 = vmatprep.subr.bf16.mxu0 0
        %2115 = vmatpush1.bf16.msra.mxu0 0
        %2116 = vmatprep.subr.bf16.mxu0 0
        %2117 = vmatpush1.bf16.msra.mxu0 0
        %2118 = vmatprep.subr.bf16.mxu0 0
        %2119 = vmatpush1.bf16.msra.mxu0 0
        %2120 = vmatprep.subr.bf16.mxu0 0
        %2121 = vmatpush1.bf16.msra.mxu0 0
        %2122 = vmatprep.subr.bf16.mxu0 0
        %2123 = vmatpush1.bf16.msra.mxu0 0
        %2124 = vmatprep.subr.bf16.mxu0 0
        %2125 = vmatpush1.bf16.msra.mxu0 0
        %2126 = vmatprep.subr.bf16.mxu0 0
        %2127 = vmatpush1.bf16.msra.mxu0 0
        %2128 = vmatprep.subr.bf16.mxu0 0
        %2129 = vmatpush1.bf16.msra.mxu0 0
        %2130 = vmatprep.subr.bf16.mxu0 0
        %2131 = vmatpush1.bf16.msra.mxu0 0
        %2132 = vmatprep.subr.bf16.mxu0 0
        %2133 = vmatpush1.bf16.msra.mxu0 0
        %2134 = vmatprep.subr.bf16.mxu0 0
        %2135 = vmatpush1.bf16.msra.mxu0 0
        %2136 = vmatprep.mubr.bf16.mxu0 0
        %2137 = vmatmul.mubr.bf16.gmra.mrb[0].mxu0 %v612
        %v2138 = vpop.f32.mrb[0].mxu0
        %v2139 = vadd.f32 0.0, %v2138
        %v2140 = vpop.f32.mrb[0].mxu0
        %v2141 = vpop.f32.mrb[0].mxu0
        %v2142 = vpop.f32.mrb[0].mxu0
        %2143 = vdwg.mxu0
        %v2144 = vadd.f32 %v2103, %v2139
        %s2145 = sadd.s32 %s237, 3
        %s2146 = smul.u32 %s2145, 2
        %s2147 = smul.addr %s2146, 4
        %s2148 = scalar_lea.vmem %s220, %s2147
        %v2149 = vld [vmem:[%s2148] sm:$0x3]
        %v2151 = vsel %vm254, %v2149, 0
        %2153 = vmatprep.subr.bf16.mxu0 0
        %2154 = vmatpush1.bf16.msra.mxu0 %v2151
        %2155 = vmatprep.subr.bf16.mxu0 0
        %2156 = vmatpush1.bf16.msra.mxu0 0
        %2157 = vmatprep.subr.bf16.mxu0 0
        %2158 = vmatpush1.bf16.msra.mxu0 0
        %2159 = vmatprep.subr.bf16.mxu0 0
        %2160 = vmatpush1.bf16.msra.mxu0 0
        %2161 = vmatprep.subr.bf16.mxu0 0
        %2162 = vmatpush1.bf16.msra.mxu0 0
        %2163 = vmatprep.subr.bf16.mxu0 0
        %2164 = vmatpush1.bf16.msra.mxu0 0
        %2165 = vmatprep.subr.bf16.mxu0 0
        %2166 = vmatpush1.bf16.msra.mxu0 0
        %2167 = vmatprep.subr.bf16.mxu0 0
        %2168 = vmatpush1.bf16.msra.mxu0 0
        %2169 = vmatprep.subr.bf16.mxu0 0
        %2170 = vmatpush1.bf16.msra.mxu0 0
        %2171 = vmatprep.subr.bf16.mxu0 0
        %2172 = vmatpush1.bf16.msra.mxu0 0
        %2173 = vmatprep.subr.bf16.mxu0 0
        %2174 = vmatpush1.bf16.msra.mxu0 0
        %2175 = vmatprep.subr.bf16.mxu0 0
        %2176 = vmatpush1.bf16.msra.mxu0 0
        %2177 = vmatprep.subr.bf16.mxu0 0
        %2178 = vmatpush1.bf16.msra.mxu0 0
        %2179 = vmatprep.subr.bf16.mxu0 0
        %2180 = vmatpush1.bf16.msra.mxu0 0
        %2181 = vmatprep.subr.bf16.mxu0 0
        %2182 = vmatpush1.bf16.msra.mxu0 0
        %2183 = vmatprep.subr.bf16.mxu0 0
        %2184 = vmatpush1.bf16.msra.mxu0 0
        %2185 = vmatprep.mubr.bf16.mxu0 0
        %2186 = vmatmul.mubr.bf16.gmra.mrb[0].mxu0 %v666
        %v2187 = vpop.f32.mrb[0].mxu0
        %v2188 = vadd.f32 0.0, %v2187
        %v2189 = vpop.f32.mrb[0].mxu0
        %v2190 = vpop.f32.mrb[0].mxu0
        %v2191 = vpop.f32.mrb[0].mxu0
        %2192 = vdwg.mxu0
        %v2193 = vadd.f32 %v2144, %v2188
        %v2194 = vld [vmem:[%s2148] sm:$0xc]
        %v2196 = vunpack.c.l.b16 %v2194
        %v2197 = vpack.c.b16 %v2196, %v2196
        %v2198 = vrot.slane %v2197, 2
        %v2200 = vsel %vm254, %v2198, 0
        %2202 = vmatprep.subr.bf16.mxu0 0
        %2203 = vmatpush1.bf16.msra.mxu0 %v2200
        %2204 = vmatprep.subr.bf16.mxu0 0
        %2205 = vmatpush1.bf16.msra.mxu0 0
        %2206 = vmatprep.subr.bf16.mxu0 0
        %2207 = vmatpush1.bf16.msra.mxu0 0
        %2208 = vmatprep.subr.bf16.mxu0 0
        %2209 = vmatpush1.bf16.msra.mxu0 0
        %2210 = vmatprep.subr.bf16.mxu0 0
        %2211 = vmatpush1.bf16.msra.mxu0 0
        %2212 = vmatprep.subr.bf16.mxu0 0
        %2213 = vmatpush1.bf16.msra.mxu0 0
        %2214 = vmatprep.subr.bf16.mxu0 0
        %2215 = vmatpush1.bf16.msra.mxu0 0
        %2216 = vmatprep.subr.bf16.mxu0 0
        %2217 = vmatpush1.bf16.msra.mxu0 0
        %2218 = vmatprep.subr.bf16.mxu0 0
        %2219 = vmatpush1.bf16.msra.mxu0 0
        %2220 = vmatprep.subr.bf16.mxu0 0
        %2221 = vmatpush1.bf16.msra.mxu0 0
        %2222 = vmatprep.subr.bf16.mxu0 0
        %2223 = vmatpush1.bf16.msra.mxu0 0
        %2224 = vmatprep.subr.bf16.mxu0 0
        %2225 = vmatpush1.bf16.msra.mxu0 0
        %2226 = vmatprep.subr.bf16.mxu0 0
        %2227 = vmatpush1.bf16.msra.mxu0 0
        %2228 = vmatprep.subr.bf16.mxu0 0
        %2229 = vmatpush1.bf16.msra.mxu0 0
        %2230 = vmatprep.subr.bf16.mxu0 0
        %2231 = vmatpush1.bf16.msra.mxu0 0
        %2232 = vmatprep.subr.bf16.mxu0 0
        %2233 = vmatpush1.bf16.msra.mxu0 0
        %2234 = vmatprep.mubr.bf16.mxu0 0
        %2235 = vmatmul.mubr.bf16.gmra.mrb[0].mxu0 %v720
        %v2236 = vpop.f32.mrb[0].mxu0
        %v2237 = vadd.f32 0.0, %v2236
        %v2238 = vpop.f32.mrb[0].mxu0
        %v2239 = vpop.f32.mrb[0].mxu0
        %v2240 = vpop.f32.mrb[0].mxu0
        %2241 = vdwg.mxu0
        %v2242 = vadd.f32 %v2193, %v2237
        %v2244 = vunpack.c.l.b16 %v2149
        %v2245 = vpack.c.b16 %v2244, %v2244
        %2246 = vrot.lane.b32.xlu0 %v2245, 127
        %v2247 = vpop.permute.xlu0 %2246
        %v2249 = vsel %vm254, %v2247, 0
        %2251 = vmatprep.subr.bf16.mxu0 0
        %2252 = vmatpush1.bf16.msra.mxu0 %v2249
        %2253 = vmatprep.subr.bf16.mxu0 0
        %2254 = vmatpush1.bf16.msra.mxu0 0
        %2255 = vmatprep.subr.bf16.mxu0 0
        %2256 = vmatpush1.bf16.msra.mxu0 0
        %2257 = vmatprep.subr.bf16.mxu0 0
        %2258 = vmatpush1.bf16.msra.mxu0 0
        %2259 = vmatprep.subr.bf16.mxu0 0
        %2260 = vmatpush1.bf16.msra.mxu0 0
        %2261 = vmatprep.subr.bf16.mxu0 0
        %2262 = vmatpush1.bf16.msra.mxu0 0
        %2263 = vmatprep.subr.bf16.mxu0 0
        %2264 = vmatpush1.bf16.msra.mxu0 0
        %2265 = vmatprep.subr.bf16.mxu0 0
        %2266 = vmatpush1.bf16.msra.mxu0 0
        %2267 = vmatprep.subr.bf16.mxu0 0
        %2268 = vmatpush1.bf16.msra.mxu0 0
        %2269 = vmatprep.subr.bf16.mxu0 0
        %2270 = vmatpush1.bf16.msra.mxu0 0
        %2271 = vmatprep.subr.bf16.mxu0 0
        %2272 = vmatpush1.bf16.msra.mxu0 0
        %2273 = vmatprep.subr.bf16.mxu0 0
        %2274 = vmatpush1.bf16.msra.mxu0 0
        %2275 = vmatprep.subr.bf16.mxu0 0
        %2276 = vmatpush1.bf16.msra.mxu0 0
        %2277 = vmatprep.subr.bf16.mxu0 0
        %2278 = vmatpush1.bf16.msra.mxu0 0
        %2279 = vmatprep.subr.bf16.mxu0 0
        %2280 = vmatpush1.bf16.msra.mxu0 0
        %2281 = vmatprep.subr.bf16.mxu0 0
        %2282 = vmatpush1.bf16.msra.mxu0 0
        %2283 = vmatprep.mubr.bf16.mxu0 0
        %2284 = vmatmul.mubr.bf16.gmra.mrb[0].mxu0 %v774
        %v2285 = vpop.f32.mrb[0].mxu0
        %v2286 = vadd.f32 0.0, %v2285
        %v2287 = vpop.f32.mrb[0].mxu0
        %v2288 = vpop.f32.mrb[0].mxu0
        %v2289 = vpop.f32.mrb[0].mxu0
        %2290 = vdwg.mxu0
        %v2291 = vadd.f32 %v2242, %v2286
        %2292 = vrot.lane.b32.xlu0 %v2198, 127
        %v2293 = vpop.permute.xlu0 %2292
        %v2295 = vsel %vm254, %v2293, 0
        %2297 = vmatprep.subr.bf16.mxu0 0
        %2298 = vmatpush1.bf16.msra.mxu0 %v2295
        %2299 = vmatprep.subr.bf16.mxu0 0
        %2300 = vmatpush1.bf16.msra.mxu0 0
        %2301 = vmatprep.subr.bf16.mxu0 0
        %2302 = vmatpush1.bf16.msra.mxu0 0
        %2303 = vmatprep.subr.bf16.mxu0 0
        %2304 = vmatpush1.bf16.msra.mxu0 0
        %2305 = vmatprep.subr.bf16.mxu0 0
        %2306 = vmatpush1.bf16.msra.mxu0 0
        %2307 = vmatprep.subr.bf16.mxu0 0
        %2308 = vmatpush1.bf16.msra.mxu0 0
        %2309 = vmatprep.subr.bf16.mxu0 0
        %2310 = vmatpush1.bf16.msra.mxu0 0
        %2311 = vmatprep.subr.bf16.mxu0 0
        %2312 = vmatpush1.bf16.msra.mxu0 0
        %2313 = vmatprep.subr.bf16.mxu0 0
        %2314 = vmatpush1.bf16.msra.mxu0 0
        %2315 = vmatprep.subr.bf16.mxu0 0
        %2316 = vmatpush1.bf16.msra.mxu0 0
        %2317 = vmatprep.subr.bf16.mxu0 0
        %2318 = vmatpush1.bf16.msra.mxu0 0
        %2319 = vmatprep.subr.bf16.mxu0 0
        %2320 = vmatpush1.bf16.msra.mxu0 0
        %2321 = vmatprep.subr.bf16.mxu0 0
        %2322 = vmatpush1.bf16.msra.mxu0 0
        %2323 = vmatprep.subr.bf16.mxu0 0
        %2324 = vmatpush1.bf16.msra.mxu0 0
        %2325 = vmatprep.subr.bf16.mxu0 0
        %2326 = vmatpush1.bf16.msra.mxu0 0
        %2327 = vmatprep.subr.bf16.mxu0 0
        %2328 = vmatpush1.bf16.msra.mxu0 0
        %2329 = vmatprep.mubr.bf16.mxu0 0
        %2330 = vmatmul.mubr.bf16.gmra.mrb[0].mxu0 %v825
        %v2331 = vpop.f32.mrb[0].mxu0
        %v2332 = vadd.f32 0.0, %v2331
        %v2333 = vpop.f32.mrb[0].mxu0
        %v2334 = vpop.f32.mrb[0].mxu0
        %v2335 = vpop.f32.mrb[0].mxu0
        %2336 = vdwg.mxu0
        %v2337 = vadd.f32 %v2291, %v2332
        %v2338 = vld [vmem:[%s2148 + $0x4] sm:$0x3]
        %v2340 = vsel %vm254, %v2338, 0
        %2342 = vmatprep.subr.bf16.mxu0 0
        %2343 = vmatpush1.bf16.msra.mxu0 %v2340
        %2344 = vmatprep.subr.bf16.mxu0 0
        %2345 = vmatpush1.bf16.msra.mxu0 0
        %2346 = vmatprep.subr.bf16.mxu0 0
        %2347 = vmatpush1.bf16.msra.mxu0 0
        %2348 = vmatprep.subr.bf16.mxu0 0
        %2349 = vmatpush1.bf16.msra.mxu0 0
        %2350 = vmatprep.subr.bf16.mxu0 0
        %2351 = vmatpush1.bf16.msra.mxu0 0
        %2352 = vmatprep.subr.bf16.mxu0 0
        %2353 = vmatpush1.bf16.msra.mxu0 0
        %2354 = vmatprep.subr.bf16.mxu0 0
        %2355 = vmatpush1.bf16.msra.mxu0 0
        %2356 = vmatprep.subr.bf16.mxu0 0
        %2357 = vmatpush1.bf16.msra.mxu0 0
        %2358 = vmatprep.subr.bf16.mxu0 0
        %2359 = vmatpush1.bf16.msra.mxu0 0
        %2360 = vmatprep.subr.bf16.mxu0 0
        %2361 = vmatpush1.bf16.msra.mxu0 0
        %2362 = vmatprep.subr.bf16.mxu0 0
        %2363 = vmatpush1.bf16.msra.mxu0 0
        %2364 = vmatprep.subr.bf16.mxu0 0
        %2365 = vmatpush1.bf16.msra.mxu0 0
        %2366 = vmatprep.subr.bf16.mxu0 0
        %2367 = vmatpush1.bf16.msra.mxu0 0
        %2368 = vmatprep.subr.bf16.mxu0 0
        %2369 = vmatpush1.bf16.msra.mxu0 0
        %2370 = vmatprep.subr.bf16.mxu0 0
        %2371 = vmatpush1.bf16.msra.mxu0 0
        %2372 = vmatprep.subr.bf16.mxu0 0
        %2373 = vmatpush1.bf16.msra.mxu0 0
        %2374 = vmatprep.mubr.bf16.mxu0 0
        %2375 = vmatmul.mubr.bf16.gmra.mrb[0].mxu0 %v875
        %v2376 = vpop.f32.mrb[0].mxu0
        %v2377 = vadd.f32 0.0, %v2376
        %v2378 = vpop.f32.mrb[0].mxu0
        %v2379 = vpop.f32.mrb[0].mxu0
        %v2380 = vpop.f32.mrb[0].mxu0
        %2381 = vdwg.mxu0
        %v2382 = vadd.f32 %v2337, %v2377
        %v2383 = vld [vmem:[%s2148 + $0x4] sm:$0xc]
        %v2385 = vunpack.c.l.b16 %v2383
        %v2386 = vpack.c.b16 %v2385, %v2385
        %v2387 = vrot.slane %v2386, 2
        %v2389 = vsel %vm254, %v2387, 0
        %2391 = vmatprep.subr.bf16.mxu0 0
        %2392 = vmatpush1.bf16.msra.mxu0 %v2389
        %2393 = vmatprep.subr.bf16.mxu0 0
        %2394 = vmatpush1.bf16.msra.mxu0 0
        %2395 = vmatprep.subr.bf16.mxu0 0
        %2396 = vmatpush1.bf16.msra.mxu0 0
        %2397 = vmatprep.subr.bf16.mxu0 0
        %2398 = vmatpush1.bf16.msra.mxu0 0
        %2399 = vmatprep.subr.bf16.mxu0 0
        %2400 = vmatpush1.bf16.msra.mxu0 0
        %2401 = vmatprep.subr.bf16.mxu0 0
        %2402 = vmatpush1.bf16.msra.mxu0 0
        %2403 = vmatprep.subr.bf16.mxu0 0
        %2404 = vmatpush1.bf16.msra.mxu0 0
        %2405 = vmatprep.subr.bf16.mxu0 0
        %2406 = vmatpush1.bf16.msra.mxu0 0
        %2407 = vmatprep.subr.bf16.mxu0 0
        %2408 = vmatpush1.bf16.msra.mxu0 0
        %2409 = vmatprep.subr.bf16.mxu0 0
        %2410 = vmatpush1.bf16.msra.mxu0 0
        %2411 = vmatprep.subr.bf16.mxu0 0
        %2412 = vmatpush1.bf16.msra.mxu0 0
        %2413 = vmatprep.subr.bf16.mxu0 0
        %2414 = vmatpush1.bf16.msra.mxu0 0
        %2415 = vmatprep.subr.bf16.mxu0 0
        %2416 = vmatpush1.bf16.msra.mxu0 0
        %2417 = vmatprep.subr.bf16.mxu0 0
        %2418 = vmatpush1.bf16.msra.mxu0 0
        %2419 = vmatprep.subr.bf16.mxu0 0
        %2420 = vmatpush1.bf16.msra.mxu0 0
        %2421 = vmatprep.subr.bf16.mxu0 0
        %2422 = vmatpush1.bf16.msra.mxu0 0
        %2423 = vmatprep.mubr.bf16.mxu0 0
        %2424 = vmatmul.mubr.bf16.gmra.mrb[0].mxu0 %v929
        %v2425 = vpop.f32.mrb[0].mxu0
        %v2426 = vadd.f32 0.0, %v2425
        %v2427 = vpop.f32.mrb[0].mxu0
        %v2428 = vpop.f32.mrb[0].mxu0
        %v2429 = vpop.f32.mrb[0].mxu0
        %2430 = vdwg.mxu0
        %v2431 = vadd.f32 %v2382, %v2426
        %v2433 = vunpack.c.l.b16 %v2338
        %v2434 = vpack.c.b16 %v2433, %v2433
        %2435 = vrot.lane.b32.xlu0 %v2434, 127
        %v2436 = vpop.permute.xlu0 %2435
        %v2438 = vsel %vm254, %v2436, 0
        %2440 = vmatprep.subr.bf16.mxu0 0
        %2441 = vmatpush1.bf16.msra.mxu0 %v2438
        %2442 = vmatprep.subr.bf16.mxu0 0
        %2443 = vmatpush1.bf16.msra.mxu0 0
        %2444 = vmatprep.subr.bf16.mxu0 0
        %2445 = vmatpush1.bf16.msra.mxu0 0
        %2446 = vmatprep.subr.bf16.mxu0 0
        %2447 = vmatpush1.bf16.msra.mxu0 0
        %2448 = vmatprep.subr.bf16.mxu0 0
        %2449 = vmatpush1.bf16.msra.mxu0 0
        %2450 = vmatprep.subr.bf16.mxu0 0
        %2451 = vmatpush1.bf16.msra.mxu0 0
        %2452 = vmatprep.subr.bf16.mxu0 0
        %2453 = vmatpush1.bf16.msra.mxu0 0
        %2454 = vmatprep.subr.bf16.mxu0 0
        %2455 = vmatpush1.bf16.msra.mxu0 0
        %2456 = vmatprep.subr.bf16.mxu0 0
        %2457 = vmatpush1.bf16.msra.mxu0 0
        %2458 = vmatprep.subr.bf16.mxu0 0
        %2459 = vmatpush1.bf16.msra.mxu0 0
        %2460 = vmatprep.subr.bf16.mxu0 0
        %2461 = vmatpush1.bf16.msra.mxu0 0
        %2462 = vmatprep.subr.bf16.mxu0 0
        %2463 = vmatpush1.bf16.msra.mxu0 0
        %2464 = vmatprep.subr.bf16.mxu0 0
        %2465 = vmatpush1.bf16.msra.mxu0 0
        %2466 = vmatprep.subr.bf16.mxu0 0
        %2467 = vmatpush1.bf16.msra.mxu0 0
        %2468 = vmatprep.subr.bf16.mxu0 0
        %2469 = vmatpush1.bf16.msra.mxu0 0
        %2470 = vmatprep.subr.bf16.mxu0 0
        %2471 = vmatpush1.bf16.msra.mxu0 0
        %2472 = vmatprep.mubr.bf16.mxu0 0
        %2473 = vmatmul.mubr.bf16.gmra.mrb[0].mxu0 %v983
        %v2474 = vpop.f32.mrb[0].mxu0
        %v2475 = vadd.f32 0.0, %v2474
        %v2476 = vpop.f32.mrb[0].mxu0
        %v2477 = vpop.f32.mrb[0].mxu0
        %v2478 = vpop.f32.mrb[0].mxu0
        %2479 = vdwg.mxu0
        %v2480 = vadd.f32 %v2431, %v2475
        %2481 = vrot.lane.b32.xlu0 %v2387, 127
        %v2482 = vpop.permute.xlu0 %2481
        %v2484 = vsel %vm254, %v2482, 0
        %2486 = vmatprep.subr.bf16.mxu0 0
        %2487 = vmatpush1.bf16.msra.mxu0 %v2484
        %2488 = vmatprep.subr.bf16.mxu0 0
        %2489 = vmatpush1.bf16.msra.mxu0 0
        %2490 = vmatprep.subr.bf16.mxu0 0
        %2491 = vmatpush1.bf16.msra.mxu0 0
        %2492 = vmatprep.subr.bf16.mxu0 0
        %2493 = vmatpush1.bf16.msra.mxu0 0
        %2494 = vmatprep.subr.bf16.mxu0 0
        %2495 = vmatpush1.bf16.msra.mxu0 0
        %2496 = vmatprep.subr.bf16.mxu0 0
        %2497 = vmatpush1.bf16.msra.mxu0 0
        %2498 = vmatprep.subr.bf16.mxu0 0
        %2499 = vmatpush1.bf16.msra.mxu0 0
        %2500 = vmatprep.subr.bf16.mxu0 0
        %2501 = vmatpush1.bf16.msra.mxu0 0
        %2502 = vmatprep.subr.bf16.mxu0 0
        %2503 = vmatpush1.bf16.msra.mxu0 0
        %2504 = vmatprep.subr.bf16.mxu0 0
        %2505 = vmatpush1.bf16.msra.mxu0 0
        %2506 = vmatprep.subr.bf16.mxu0 0
        %2507 = vmatpush1.bf16.msra.mxu0 0
        %2508 = vmatprep.subr.bf16.mxu0 0
        %2509 = vmatpush1.bf16.msra.mxu0 0
        %2510 = vmatprep.subr.bf16.mxu0 0
        %2511 = vmatpush1.bf16.msra.mxu0 0
        %2512 = vmatprep.subr.bf16.mxu0 0
        %2513 = vmatpush1.bf16.msra.mxu0 0
        %2514 = vmatprep.subr.bf16.mxu0 0
        %2515 = vmatpush1.bf16.msra.mxu0 0
        %2516 = vmatprep.subr.bf16.mxu0 0
        %2517 = vmatpush1.bf16.msra.mxu0 0
        %2518 = vmatprep.mubr.bf16.mxu0 0
        %2519 = vmatmul.mubr.bf16.gmra.mrb[0].mxu0 %v1034
        %v2520 = vpop.f32.mrb[0].mxu0
        %v2521 = vadd.f32 0.0, %v2520
        %v2522 = vpop.f32.mrb[0].mxu0
        %v2523 = vpop.f32.mrb[0].mxu0
        %v2524 = vpop.f32.mrb[0].mxu0
        %2525 = vdwg.mxu0
        %v2526 = vadd.f32 %v2480, %v2521
        %p2527 = scmp.lt.s32.totalorder %s1422, 8
        %s2528 = scalar_select %p2527, 1, 0
        %s2529 = scvt.s32.f32 %s2528
        %v2530 = vsel %vm1083, %v2526, 0.0
        %2531 = vadd.xlane.f32.xlu0 %v2530
        %v2532 = vpop.xlane.xlu0 %2531
        %v2533 = vstv %s2529
        %v2534 = vmul.f32 %v2533, %v2532
        %v2535 = vadd.f32 %v1812, %v2534
        %v2536 = vmul.f32 %v2526, %v2526
        %v2537 = vsel %vm1083, %v2536, 0.0
        %2538 = vadd.xlane.f32.xlu0 %v2537
        %v2539 = vpop.xlane.xlu0 %2538
        %v2540 = vmul.f32 %v2533, %v2539
        %v2541 = vadd.f32 %v1818, %v2540
        %2542 = vmatprep.subr.bf16.mxu0 0
        %2543 = vmatpush1.bf16.msra.mxu0 %v2200
        %2544 = vmatprep.subr.bf16.mxu0 0
        %2545 = vmatpush1.bf16.msra.mxu0 0
        %2546 = vmatprep.subr.bf16.mxu0 0
        %2547 = vmatpush1.bf16.msra.mxu0 0
        %2548 = vmatprep.subr.bf16.mxu0 0
        %2549 = vmatpush1.bf16.msra.mxu0 0
        %2550 = vmatprep.subr.bf16.mxu0 0
        %2551 = vmatpush1.bf16.msra.mxu0 0
        %2552 = vmatprep.subr.bf16.mxu0 0
        %2553 = vmatpush1.bf16.msra.mxu0 0
        %2554 = vmatprep.subr.bf16.mxu0 0
        %2555 = vmatpush1.bf16.msra.mxu0 0
        %2556 = vmatprep.subr.bf16.mxu0 0
        %2557 = vmatpush1.bf16.msra.mxu0 0
        %2558 = vmatprep.subr.bf16.mxu0 0
        %2559 = vmatpush1.bf16.msra.mxu0 0
        %2560 = vmatprep.subr.bf16.mxu0 0
        %2561 = vmatpush1.bf16.msra.mxu0 0
        %2562 = vmatprep.subr.bf16.mxu0 0
        %2563 = vmatpush1.bf16.msra.mxu0 0
        %2564 = vmatprep.subr.bf16.mxu0 0
        %2565 = vmatpush1.bf16.msra.mxu0 0
        %2566 = vmatprep.subr.bf16.mxu0 0
        %2567 = vmatpush1.bf16.msra.mxu0 0
        %2568 = vmatprep.subr.bf16.mxu0 0
        %2569 = vmatpush1.bf16.msra.mxu0 0
        %2570 = vmatprep.subr.bf16.mxu0 0
        %2571 = vmatpush1.bf16.msra.mxu0 0
        %2572 = vmatprep.subr.bf16.mxu0 0
        %2573 = vmatpush1.bf16.msra.mxu0 0
        %2574 = vmatprep.mubr.bf16.mxu0 0
        %2575 = vmatmul.mubr.bf16.gmra.mrb[0].mxu0 %v252
        %v2576 = vpop.f32.mrb[0].mxu0
        %v2577 = vadd.f32 0.0, %v2576
        %v2578 = vpop.f32.mrb[0].mxu0
        %v2579 = vpop.f32.mrb[0].mxu0
        %v2580 = vpop.f32.mrb[0].mxu0
        %2581 = vdwg.mxu0
        %2582 = vmatprep.subr.bf16.mxu0 0
        %2583 = vmatpush1.bf16.msra.mxu0 %v2151
        %2584 = vmatprep.subr.bf16.mxu0 0
        %2585 = vmatpush1.bf16.msra.mxu0 0
        %2586 = vmatprep.subr.bf16.mxu0 0
        %2587 = vmatpush1.bf16.msra.mxu0 0
        %2588 = vmatprep.subr.bf16.mxu0 0
        %2589 = vmatpush1.bf16.msra.mxu0 0
        %2590 = vmatprep.subr.bf16.mxu0 0
        %2591 = vmatpush1.bf16.msra.mxu0 0
        %2592 = vmatprep.subr.bf16.mxu0 0
        %2593 = vmatpush1.bf16.msra.mxu0 0
        %2594 = vmatprep.subr.bf16.mxu0 0
        %2595 = vmatpush1.bf16.msra.mxu0 0
        %2596 = vmatprep.subr.bf16.mxu0 0
        %2597 = vmatpush1.bf16.msra.mxu0 0
        %2598 = vmatprep.subr.bf16.mxu0 0
        %2599 = vmatpush1.bf16.msra.mxu0 0
        %2600 = vmatprep.subr.bf16.mxu0 0
        %2601 = vmatpush1.bf16.msra.mxu0 0
        %2602 = vmatprep.subr.bf16.mxu0 0
        %2603 = vmatpush1.bf16.msra.mxu0 0
        %2604 = vmatprep.subr.bf16.mxu0 0
        %2605 = vmatpush1.bf16.msra.mxu0 0
        %2606 = vmatprep.subr.bf16.mxu0 0
        %2607 = vmatpush1.bf16.msra.mxu0 0
        %2608 = vmatprep.subr.bf16.mxu0 0
        %2609 = vmatpush1.bf16.msra.mxu0 0
        %2610 = vmatprep.subr.bf16.mxu0 0
        %2611 = vmatpush1.bf16.msra.mxu0 0
        %2612 = vmatprep.subr.bf16.mxu0 0
        %2613 = vmatpush1.bf16.msra.mxu0 0
        %2614 = vmatprep.mubr.bf16.mxu0 0
        %2615 = vmatmul.mubr.bf16.gmra.mrb[0].mxu0 %v299
        %v2616 = vpop.f32.mrb[0].mxu0
        %v2617 = vadd.f32 %v2577, %v2616
        %v2618 = vpop.f32.mrb[0].mxu0
        %v2619 = vpop.f32.mrb[0].mxu0
        %v2620 = vpop.f32.mrb[0].mxu0
        %2621 = vdwg.mxu0
        %2622 = vmatprep.subr.bf16.mxu0 0
        %2623 = vmatpush1.bf16.msra.mxu0 %v2249
        %2624 = vmatprep.subr.bf16.mxu0 0
        %2625 = vmatpush1.bf16.msra.mxu0 0
        %2626 = vmatprep.subr.bf16.mxu0 0
        %2627 = vmatpush1.bf16.msra.mxu0 0
        %2628 = vmatprep.subr.bf16.mxu0 0
        %2629 = vmatpush1.bf16.msra.mxu0 0
        %2630 = vmatprep.subr.bf16.mxu0 0
        %2631 = vmatpush1.bf16.msra.mxu0 0
        %2632 = vmatprep.subr.bf16.mxu0 0
        %2633 = vmatpush1.bf16.msra.mxu0 0
        %2634 = vmatprep.subr.bf16.mxu0 0
        %2635 = vmatpush1.bf16.msra.mxu0 0
        %2636 = vmatprep.subr.bf16.mxu0 0
        %2637 = vmatpush1.bf16.msra.mxu0 0
        %2638 = vmatprep.subr.bf16.mxu0 0
        %2639 = vmatpush1.bf16.msra.mxu0 0
        %2640 = vmatprep.subr.bf16.mxu0 0
        %2641 = vmatpush1.bf16.msra.mxu0 0
        %2642 = vmatprep.subr.bf16.mxu0 0
        %2643 = vmatpush1.bf16.msra.mxu0 0
        %2644 = vmatprep.subr.bf16.mxu0 0
        %2645 = vmatpush1.bf16.msra.mxu0 0
        %2646 = vmatprep.subr.bf16.mxu0 0
        %2647 = vmatpush1.bf16.msra.mxu0 0
        %2648 = vmatprep.subr.bf16.mxu0 0
        %2649 = vmatpush1.bf16.msra.mxu0 0
        %2650 = vmatprep.subr.bf16.mxu0 0
        %2651 = vmatpush1.bf16.msra.mxu0 0
        %2652 = vmatprep.subr.bf16.mxu0 0
        %2653 = vmatpush1.bf16.msra.mxu0 0
        %2654 = vmatprep.mubr.bf16.mxu0 0
        %2655 = vmatmul.mubr.bf16.gmra.mrb[0].mxu0 %v352
        %v2656 = vpop.f32.mrb[0].mxu0
        %v2657 = vadd.f32 0.0, %v2656
        %v2658 = vpop.f32.mrb[0].mxu0
        %v2659 = vpop.f32.mrb[0].mxu0
        %v2660 = vpop.f32.mrb[0].mxu0
        %2661 = vdwg.mxu0
        %v2662 = vadd.f32 %v2617, %v2657
        %2663 = vmatprep.subr.bf16.mxu0 0
        %2664 = vmatpush1.bf16.msra.mxu0 %v2295
        %2665 = vmatprep.subr.bf16.mxu0 0
        %2666 = vmatpush1.bf16.msra.mxu0 0
        %2667 = vmatprep.subr.bf16.mxu0 0
        %2668 = vmatpush1.bf16.msra.mxu0 0
        %2669 = vmatprep.subr.bf16.mxu0 0
        %2670 = vmatpush1.bf16.msra.mxu0 0
        %2671 = vmatprep.subr.bf16.mxu0 0
        %2672 = vmatpush1.bf16.msra.mxu0 0
        %2673 = vmatprep.subr.bf16.mxu0 0
        %2674 = vmatpush1.bf16.msra.mxu0 0
        %2675 = vmatprep.subr.bf16.mxu0 0
        %2676 = vmatpush1.bf16.msra.mxu0 0
        %2677 = vmatprep.subr.bf16.mxu0 0
        %2678 = vmatpush1.bf16.msra.mxu0 0
        %2679 = vmatprep.subr.bf16.mxu0 0
        %2680 = vmatpush1.bf16.msra.mxu0 0
        %2681 = vmatprep.subr.bf16.mxu0 0
        %2682 = vmatpush1.bf16.msra.mxu0 0
        %2683 = vmatprep.subr.bf16.mxu0 0
        %2684 = vmatpush1.bf16.msra.mxu0 0
        %2685 = vmatprep.subr.bf16.mxu0 0
        %2686 = vmatpush1.bf16.msra.mxu0 0
        %2687 = vmatprep.subr.bf16.mxu0 0
        %2688 = vmatpush1.bf16.msra.mxu0 0
        %2689 = vmatprep.subr.bf16.mxu0 0
        %2690 = vmatpush1.bf16.msra.mxu0 0
        %2691 = vmatprep.subr.bf16.mxu0 0
        %2692 = vmatpush1.bf16.msra.mxu0 0
        %2693 = vmatprep.subr.bf16.mxu0 0
        %2694 = vmatpush1.bf16.msra.mxu0 0
        %2695 = vmatprep.mubr.bf16.mxu0 0
        %2696 = vmatmul.mubr.bf16.gmra.mrb[0].mxu0 %v403
        %v2697 = vpop.f32.mrb[0].mxu0
        %v2698 = vadd.f32 0.0, %v2697
        %v2699 = vpop.f32.mrb[0].mxu0
        %v2700 = vpop.f32.mrb[0].mxu0
        %v2701 = vpop.f32.mrb[0].mxu0
        %2702 = vdwg.mxu0
        %v2703 = vadd.f32 %v2662, %v2698
        %2704 = vmatprep.subr.bf16.mxu0 0
        %2705 = vmatpush1.bf16.msra.mxu0 %v2340
        %2706 = vmatprep.subr.bf16.mxu0 0
        %2707 = vmatpush1.bf16.msra.mxu0 0
        %2708 = vmatprep.subr.bf16.mxu0 0
        %2709 = vmatpush1.bf16.msra.mxu0 0
        %2710 = vmatprep.subr.bf16.mxu0 0
        %2711 = vmatpush1.bf16.msra.mxu0 0
        %2712 = vmatprep.subr.bf16.mxu0 0
        %2713 = vmatpush1.bf16.msra.mxu0 0
        %2714 = vmatprep.subr.bf16.mxu0 0
        %2715 = vmatpush1.bf16.msra.mxu0 0
        %2716 = vmatprep.subr.bf16.mxu0 0
        %2717 = vmatpush1.bf16.msra.mxu0 0
        %2718 = vmatprep.subr.bf16.mxu0 0
        %2719 = vmatpush1.bf16.msra.mxu0 0
        %2720 = vmatprep.subr.bf16.mxu0 0
        %2721 = vmatpush1.bf16.msra.mxu0 0
        %2722 = vmatprep.subr.bf16.mxu0 0
        %2723 = vmatpush1.bf16.msra.mxu0 0
        %2724 = vmatprep.subr.bf16.mxu0 0
        %2725 = vmatpush1.bf16.msra.mxu0 0
        %2726 = vmatprep.subr.bf16.mxu0 0
        %2727 = vmatpush1.bf16.msra.mxu0 0
        %2728 = vmatprep.subr.bf16.mxu0 0
        %2729 = vmatpush1.bf16.msra.mxu0 0
        %2730 = vmatprep.subr.bf16.mxu0 0
        %2731 = vmatpush1.bf16.msra.mxu0 0
        %2732 = vmatprep.subr.bf16.mxu0 0
        %2733 = vmatpush1.bf16.msra.mxu0 0
        %2734 = vmatprep.subr.bf16.mxu0 0
        %2735 = vmatpush1.bf16.msra.mxu0 0
        %2736 = vmatprep.mubr.bf16.mxu0 0
        %2737 = vmatmul.mubr.bf16.gmra.mrb[0].mxu0 %v453
        %v2738 = vpop.f32.mrb[0].mxu0
        %v2739 = vadd.f32 0.0, %v2738
        %v2740 = vpop.f32.mrb[0].mxu0
        %v2741 = vpop.f32.mrb[0].mxu0
        %v2742 = vpop.f32.mrb[0].mxu0
        %2743 = vdwg.mxu0
        %v2744 = vadd.f32 %v2703, %v2739
        %2745 = vmatprep.subr.bf16.mxu0 0
        %2746 = vmatpush1.bf16.msra.mxu0 %v2389
        %2747 = vmatprep.subr.bf16.mxu0 0
        %2748 = vmatpush1.bf16.msra.mxu0 0
        %2749 = vmatprep.subr.bf16.mxu0 0
        %2750 = vmatpush1.bf16.msra.mxu0 0
        %2751 = vmatprep.subr.bf16.mxu0 0
        %2752 = vmatpush1.bf16.msra.mxu0 0
        %2753 = vmatprep.subr.bf16.mxu0 0
        %2754 = vmatpush1.bf16.msra.mxu0 0
        %2755 = vmatprep.subr.bf16.mxu0 0
        %2756 = vmatpush1.bf16.msra.mxu0 0
        %2757 = vmatprep.subr.bf16.mxu0 0
        %2758 = vmatpush1.bf16.msra.mxu0 0
        %2759 = vmatprep.subr.bf16.mxu0 0
        %2760 = vmatpush1.bf16.msra.mxu0 0
        %2761 = vmatprep.subr.bf16.mxu0 0
        %2762 = vmatpush1.bf16.msra.mxu0 0
        %2763 = vmatprep.subr.bf16.mxu0 0
        %2764 = vmatpush1.bf16.msra.mxu0 0
        %2765 = vmatprep.subr.bf16.mxu0 0
        %2766 = vmatpush1.bf16.msra.mxu0 0
        %2767 = vmatprep.subr.bf16.mxu0 0
        %2768 = vmatpush1.bf16.msra.mxu0 0
        %2769 = vmatprep.subr.bf16.mxu0 0
        %2770 = vmatpush1.bf16.msra.mxu0 0
        %2771 = vmatprep.subr.bf16.mxu0 0
        %2772 = vmatpush1.bf16.msra.mxu0 0
        %2773 = vmatprep.subr.bf16.mxu0 0
        %2774 = vmatpush1.bf16.msra.mxu0 0
        %2775 = vmatprep.subr.bf16.mxu0 0
        %2776 = vmatpush1.bf16.msra.mxu0 0
        %2777 = vmatprep.mubr.bf16.mxu0 0
        %2778 = vmatmul.mubr.bf16.gmra.mrb[0].mxu0 %v507
        %v2779 = vpop.f32.mrb[0].mxu0
        %v2780 = vadd.f32 0.0, %v2779
        %v2781 = vpop.f32.mrb[0].mxu0
        %v2782 = vpop.f32.mrb[0].mxu0
        %v2783 = vpop.f32.mrb[0].mxu0
        %2784 = vdwg.mxu0
        %v2785 = vadd.f32 %v2744, %v2780
        %2786 = vmatprep.subr.bf16.mxu0 0
        %2787 = vmatpush1.bf16.msra.mxu0 %v2438
        %2788 = vmatprep.subr.bf16.mxu0 0
        %2789 = vmatpush1.bf16.msra.mxu0 0
        %2790 = vmatprep.subr.bf16.mxu0 0
        %2791 = vmatpush1.bf16.msra.mxu0 0
        %2792 = vmatprep.subr.bf16.mxu0 0
        %2793 = vmatpush1.bf16.msra.mxu0 0
        %2794 = vmatprep.subr.bf16.mxu0 0
        %2795 = vmatpush1.bf16.msra.mxu0 0
        %2796 = vmatprep.subr.bf16.mxu0 0
        %2797 = vmatpush1.bf16.msra.mxu0 0
        %2798 = vmatprep.subr.bf16.mxu0 0
        %2799 = vmatpush1.bf16.msra.mxu0 0
        %2800 = vmatprep.subr.bf16.mxu0 0
        %2801 = vmatpush1.bf16.msra.mxu0 0
        %2802 = vmatprep.subr.bf16.mxu0 0
        %2803 = vmatpush1.bf16.msra.mxu0 0
        %2804 = vmatprep.subr.bf16.mxu0 0
        %2805 = vmatpush1.bf16.msra.mxu0 0
        %2806 = vmatprep.subr.bf16.mxu0 0
        %2807 = vmatpush1.bf16.msra.mxu0 0
        %2808 = vmatprep.subr.bf16.mxu0 0
        %2809 = vmatpush1.bf16.msra.mxu0 0
        %2810 = vmatprep.subr.bf16.mxu0 0
        %2811 = vmatpush1.bf16.msra.mxu0 0
        %2812 = vmatprep.subr.bf16.mxu0 0
        %2813 = vmatpush1.bf16.msra.mxu0 0
        %2814 = vmatprep.subr.bf16.mxu0 0
        %2815 = vmatpush1.bf16.msra.mxu0 0
        %2816 = vmatprep.subr.bf16.mxu0 0
        %2817 = vmatpush1.bf16.msra.mxu0 0
        %2818 = vmatprep.mubr.bf16.mxu0 0
        %2819 = vmatmul.mubr.bf16.gmra.mrb[0].mxu0 %v561
        %v2820 = vpop.f32.mrb[0].mxu0
        %v2821 = vadd.f32 0.0, %v2820
        %v2822 = vpop.f32.mrb[0].mxu0
        %v2823 = vpop.f32.mrb[0].mxu0
        %v2824 = vpop.f32.mrb[0].mxu0
        %2825 = vdwg.mxu0
        %v2826 = vadd.f32 %v2785, %v2821
        %2827 = vmatprep.subr.bf16.mxu0 0
        %2828 = vmatpush1.bf16.msra.mxu0 %v2484
        %2829 = vmatprep.subr.bf16.mxu0 0
        %2830 = vmatpush1.bf16.msra.mxu0 0
        %2831 = vmatprep.subr.bf16.mxu0 0
        %2832 = vmatpush1.bf16.msra.mxu0 0
        %2833 = vmatprep.subr.bf16.mxu0 0
        %2834 = vmatpush1.bf16.msra.mxu0 0
        %2835 = vmatprep.subr.bf16.mxu0 0
        %2836 = vmatpush1.bf16.msra.mxu0 0
        %2837 = vmatprep.subr.bf16.mxu0 0
        %2838 = vmatpush1.bf16.msra.mxu0 0
        %2839 = vmatprep.subr.bf16.mxu0 0
        %2840 = vmatpush1.bf16.msra.mxu0 0
        %2841 = vmatprep.subr.bf16.mxu0 0
        %2842 = vmatpush1.bf16.msra.mxu0 0
        %2843 = vmatprep.subr.bf16.mxu0 0
        %2844 = vmatpush1.bf16.msra.mxu0 0
        %2845 = vmatprep.subr.bf16.mxu0 0
        %2846 = vmatpush1.bf16.msra.mxu0 0
        %2847 = vmatprep.subr.bf16.mxu0 0
        %2848 = vmatpush1.bf16.msra.mxu0 0
        %2849 = vmatprep.subr.bf16.mxu0 0
        %2850 = vmatpush1.bf16.msra.mxu0 0
        %2851 = vmatprep.subr.bf16.mxu0 0
        %2852 = vmatpush1.bf16.msra.mxu0 0
        %2853 = vmatprep.subr.bf16.mxu0 0
        %2854 = vmatpush1.bf16.msra.mxu0 0
        %2855 = vmatprep.subr.bf16.mxu0 0
        %2856 = vmatpush1.bf16.msra.mxu0 0
        %2857 = vmatprep.subr.bf16.mxu0 0
        %2858 = vmatpush1.bf16.msra.mxu0 0
        %2859 = vmatprep.mubr.bf16.mxu0 0
        %2860 = vmatmul.mubr.bf16.gmra.mrb[0].mxu0 %v612
        %v2861 = vpop.f32.mrb[0].mxu0
        %v2862 = vadd.f32 0.0, %v2861
        %v2863 = vpop.f32.mrb[0].mxu0
        %v2864 = vpop.f32.mrb[0].mxu0
        %v2865 = vpop.f32.mrb[0].mxu0
        %2866 = vdwg.mxu0
        %v2867 = vadd.f32 %v2826, %v2862
        %s2868 = sadd.s32 %s237, 4
        %s2869 = smul.u32 %s2868, 2
        %s2870 = smul.addr %s2869, 4
        %s2871 = scalar_lea.vmem %s220, %s2870
        %v2872 = vld [vmem:[%s2871] sm:$0x3]
        %v2874 = vsel %vm254, %v2872, 0
        %2876 = vmatprep.subr.bf16.mxu0 0
        %2877 = vmatpush1.bf16.msra.mxu0 %v2874
        %2878 = vmatprep.subr.bf16.mxu0 0
        %2879 = vmatpush1.bf16.msra.mxu0 0
        %2880 = vmatprep.subr.bf16.mxu0 0
        %2881 = vmatpush1.bf16.msra.mxu0 0
        %2882 = vmatprep.subr.bf16.mxu0 0
        %2883 = vmatpush1.bf16.msra.mxu0 0
        %2884 = vmatprep.subr.bf16.mxu0 0
        %2885 = vmatpush1.bf16.msra.mxu0 0
        %2886 = vmatprep.subr.bf16.mxu0 0
        %2887 = vmatpush1.bf16.msra.mxu0 0
        %2888 = vmatprep.subr.bf16.mxu0 0
        %2889 = vmatpush1.bf16.msra.mxu0 0
        %2890 = vmatprep.subr.bf16.mxu0 0
        %2891 = vmatpush1.bf16.msra.mxu0 0
        %2892 = vmatprep.subr.bf16.mxu0 0
        %2893 = vmatpush1.bf16.msra.mxu0 0
        %2894 = vmatprep.subr.bf16.mxu0 0
        %2895 = vmatpush1.bf16.msra.mxu0 0
        %2896 = vmatprep.subr.bf16.mxu0 0
        %2897 = vmatpush1.bf16.msra.mxu0 0
        %2898 = vmatprep.subr.bf16.mxu0 0
        %2899 = vmatpush1.bf16.msra.mxu0 0
        %2900 = vmatprep.subr.bf16.mxu0 0
        %2901 = vmatpush1.bf16.msra.mxu0 0
        %2902 = vmatprep.subr.bf16.mxu0 0
        %2903 = vmatpush1.bf16.msra.mxu0 0
        %2904 = vmatprep.subr.bf16.mxu0 0
        %2905 = vmatpush1.bf16.msra.mxu0 0
        %2906 = vmatprep.subr.bf16.mxu0 0
        %2907 = vmatpush1.bf16.msra.mxu0 0
        %2908 = vmatprep.mubr.bf16.mxu0 0
        %2909 = vmatmul.mubr.bf16.gmra.mrb[0].mxu0 %v666
        %v2910 = vpop.f32.mrb[0].mxu0
        %v2911 = vadd.f32 0.0, %v2910
        %v2912 = vpop.f32.mrb[0].mxu0
        %v2913 = vpop.f32.mrb[0].mxu0
        %v2914 = vpop.f32.mrb[0].mxu0
        %2915 = vdwg.mxu0
        %v2916 = vadd.f32 %v2867, %v2911
        %v2917 = vld [vmem:[%s2871] sm:$0xc]
        %v2919 = vunpack.c.l.b16 %v2917
        %v2920 = vpack.c.b16 %v2919, %v2919
        %v2921 = vrot.slane %v2920, 2
        %v2923 = vsel %vm254, %v2921, 0
        %2925 = vmatprep.subr.bf16.mxu0 0
        %2926 = vmatpush1.bf16.msra.mxu0 %v2923
        %2927 = vmatprep.subr.bf16.mxu0 0
        %2928 = vmatpush1.bf16.msra.mxu0 0
        %2929 = vmatprep.subr.bf16.mxu0 0
        %2930 = vmatpush1.bf16.msra.mxu0 0
        %2931 = vmatprep.subr.bf16.mxu0 0
        %2932 = vmatpush1.bf16.msra.mxu0 0
        %2933 = vmatprep.subr.bf16.mxu0 0
        %2934 = vmatpush1.bf16.msra.mxu0 0
        %2935 = vmatprep.subr.bf16.mxu0 0
        %2936 = vmatpush1.bf16.msra.mxu0 0
        %2937 = vmatprep.subr.bf16.mxu0 0
        %2938 = vmatpush1.bf16.msra.mxu0 0
        %2939 = vmatprep.subr.bf16.mxu0 0
        %2940 = vmatpush1.bf16.msra.mxu0 0
        %2941 = vmatprep.subr.bf16.mxu0 0
        %2942 = vmatpush1.bf16.msra.mxu0 0
        %2943 = vmatprep.subr.bf16.mxu0 0
        %2944 = vmatpush1.bf16.msra.mxu0 0
        %2945 = vmatprep.subr.bf16.mxu0 0
        %2946 = vmatpush1.bf16.msra.mxu0 0
        %2947 = vmatprep.subr.bf16.mxu0 0
        %2948 = vmatpush1.bf16.msra.mxu0 0
        %2949 = vmatprep.subr.bf16.mxu0 0
        %2950 = vmatpush1.bf16.msra.mxu0 0
        %2951 = vmatprep.subr.bf16.mxu0 0
        %2952 = vmatpush1.bf16.msra.mxu0 0
        %2953 = vmatprep.subr.bf16.mxu0 0
        %2954 = vmatpush1.bf16.msra.mxu0 0
        %2955 = vmatprep.subr.bf16.mxu0 0
        %2956 = vmatpush1.bf16.msra.mxu0 0
        %2957 = vmatprep.mubr.bf16.mxu0 0
        %2958 = vmatmul.mubr.bf16.gmra.mrb[0].mxu0 %v720
        %v2959 = vpop.f32.mrb[0].mxu0
        %v2960 = vadd.f32 0.0, %v2959
        %v2961 = vpop.f32.mrb[0].mxu0
        %v2962 = vpop.f32.mrb[0].mxu0
        %v2963 = vpop.f32.mrb[0].mxu0
        %2964 = vdwg.mxu0
        %v2965 = vadd.f32 %v2916, %v2960
        %v2967 = vunpack.c.l.b16 %v2872
        %v2968 = vpack.c.b16 %v2967, %v2967
        %2969 = vrot.lane.b32.xlu0 %v2968, 127
        %v2970 = vpop.permute.xlu0 %2969
        %v2972 = vsel %vm254, %v2970, 0
        %2974 = vmatprep.subr.bf16.mxu0 0
        %2975 = vmatpush1.bf16.msra.mxu0 %v2972
        %2976 = vmatprep.subr.bf16.mxu0 0
        %2977 = vmatpush1.bf16.msra.mxu0 0
        %2978 = vmatprep.subr.bf16.mxu0 0
        %2979 = vmatpush1.bf16.msra.mxu0 0
        %2980 = vmatprep.subr.bf16.mxu0 0
        %2981 = vmatpush1.bf16.msra.mxu0 0
        %2982 = vmatprep.subr.bf16.mxu0 0
        %2983 = vmatpush1.bf16.msra.mxu0 0
        %2984 = vmatprep.subr.bf16.mxu0 0
        %2985 = vmatpush1.bf16.msra.mxu0 0
        %2986 = vmatprep.subr.bf16.mxu0 0
        %2987 = vmatpush1.bf16.msra.mxu0 0
        %2988 = vmatprep.subr.bf16.mxu0 0
        %2989 = vmatpush1.bf16.msra.mxu0 0
        %2990 = vmatprep.subr.bf16.mxu0 0
        %2991 = vmatpush1.bf16.msra.mxu0 0
        %2992 = vmatprep.subr.bf16.mxu0 0
        %2993 = vmatpush1.bf16.msra.mxu0 0
        %2994 = vmatprep.subr.bf16.mxu0 0
        %2995 = vmatpush1.bf16.msra.mxu0 0
        %2996 = vmatprep.subr.bf16.mxu0 0
        %2997 = vmatpush1.bf16.msra.mxu0 0
        %2998 = vmatprep.subr.bf16.mxu0 0
        %2999 = vmatpush1.bf16.msra.mxu0 0
        %3000 = vmatprep.subr.bf16.mxu0 0
        %3001 = vmatpush1.bf16.msra.mxu0 0
        %3002 = vmatprep.subr.bf16.mxu0 0
        %3003 = vmatpush1.bf16.msra.mxu0 0
        %3004 = vmatprep.subr.bf16.mxu0 0
        %3005 = vmatpush1.bf16.msra.mxu0 0
        %3006 = vmatprep.mubr.bf16.mxu0 0
        %3007 = vmatmul.mubr.bf16.gmra.mrb[0].mxu0 %v774
        %v3008 = vpop.f32.mrb[0].mxu0
        %v3009 = vadd.f32 0.0, %v3008
        %v3010 = vpop.f32.mrb[0].mxu0
        %v3011 = vpop.f32.mrb[0].mxu0
        %v3012 = vpop.f32.mrb[0].mxu0
        %3013 = vdwg.mxu0
        %v3014 = vadd.f32 %v2965, %v3009
        %3015 = vrot.lane.b32.xlu0 %v2921, 127
        %v3016 = vpop.permute.xlu0 %3015
        %v3018 = vsel %vm254, %v3016, 0
        %3020 = vmatprep.subr.bf16.mxu0 0
        %3021 = vmatpush1.bf16.msra.mxu0 %v3018
        %3022 = vmatprep.subr.bf16.mxu0 0
        %3023 = vmatpush1.bf16.msra.mxu0 0
        %3024 = vmatprep.subr.bf16.mxu0 0
        %3025 = vmatpush1.bf16.msra.mxu0 0
        %3026 = vmatprep.subr.bf16.mxu0 0
        %3027 = vmatpush1.bf16.msra.mxu0 0
        %3028 = vmatprep.subr.bf16.mxu0 0
        %3029 = vmatpush1.bf16.msra.mxu0 0
        %3030 = vmatprep.subr.bf16.mxu0 0
        %3031 = vmatpush1.bf16.msra.mxu0 0
        %3032 = vmatprep.subr.bf16.mxu0 0
        %3033 = vmatpush1.bf16.msra.mxu0 0
        %3034 = vmatprep.subr.bf16.mxu0 0
        %3035 = vmatpush1.bf16.msra.mxu0 0
        %3036 = vmatprep.subr.bf16.mxu0 0
        %3037 = vmatpush1.bf16.msra.mxu0 0
        %3038 = vmatprep.subr.bf16.mxu0 0
        %3039 = vmatpush1.bf16.msra.mxu0 0
        %3040 = vmatprep.subr.bf16.mxu0 0
        %3041 = vmatpush1.bf16.msra.mxu0 0
        %3042 = vmatprep.subr.bf16.mxu0 0
        %3043 = vmatpush1.bf16.msra.mxu0 0
        %3044 = vmatprep.subr.bf16.mxu0 0
        %3045 = vmatpush1.bf16.msra.mxu0 0
        %3046 = vmatprep.subr.bf16.mxu0 0
        %3047 = vmatpush1.bf16.msra.mxu0 0
        %3048 = vmatprep.subr.bf16.mxu0 0
        %3049 = vmatpush1.bf16.msra.mxu0 0
        %3050 = vmatprep.subr.bf16.mxu0 0
        %3051 = vmatpush1.bf16.msra.mxu0 0
        %3052 = vmatprep.mubr.bf16.mxu0 0
        %3053 = vmatmul.mubr.bf16.gmra.mrb[0].mxu0 %v825
        %v3054 = vpop.f32.mrb[0].mxu0
        %v3055 = vadd.f32 0.0, %v3054
        %v3056 = vpop.f32.mrb[0].mxu0
        %v3057 = vpop.f32.mrb[0].mxu0
        %v3058 = vpop.f32.mrb[0].mxu0
        %3059 = vdwg.mxu0
        %v3060 = vadd.f32 %v3014, %v3055
        %v3061 = vld [vmem:[%s2871 + $0x4] sm:$0x3]
        %v3063 = vsel %vm254, %v3061, 0
        %3065 = vmatprep.subr.bf16.mxu0 0
        %3066 = vmatpush1.bf16.msra.mxu0 %v3063
        %3067 = vmatprep.subr.bf16.mxu0 0
        %3068 = vmatpush1.bf16.msra.mxu0 0
        %3069 = vmatprep.subr.bf16.mxu0 0
        %3070 = vmatpush1.bf16.msra.mxu0 0
        %3071 = vmatprep.subr.bf16.mxu0 0
        %3072 = vmatpush1.bf16.msra.mxu0 0
        %3073 = vmatprep.subr.bf16.mxu0 0
        %3074 = vmatpush1.bf16.msra.mxu0 0
        %3075 = vmatprep.subr.bf16.mxu0 0
        %3076 = vmatpush1.bf16.msra.mxu0 0
        %3077 = vmatprep.subr.bf16.mxu0 0
        %3078 = vmatpush1.bf16.msra.mxu0 0
        %3079 = vmatprep.subr.bf16.mxu0 0
        %3080 = vmatpush1.bf16.msra.mxu0 0
        %3081 = vmatprep.subr.bf16.mxu0 0
        %3082 = vmatpush1.bf16.msra.mxu0 0
        %3083 = vmatprep.subr.bf16.mxu0 0
        %3084 = vmatpush1.bf16.msra.mxu0 0
        %3085 = vmatprep.subr.bf16.mxu0 0
        %3086 = vmatpush1.bf16.msra.mxu0 0
        %3087 = vmatprep.subr.bf16.mxu0 0
        %3088 = vmatpush1.bf16.msra.mxu0 0
        %3089 = vmatprep.subr.bf16.mxu0 0
        %3090 = vmatpush1.bf16.msra.mxu0 0
        %3091 = vmatprep.subr.bf16.mxu0 0
        %3092 = vmatpush1.bf16.msra.mxu0 0
        %3093 = vmatprep.subr.bf16.mxu0 0
        %3094 = vmatpush1.bf16.msra.mxu0 0
        %3095 = vmatprep.subr.bf16.mxu0 0
        %3096 = vmatpush1.bf16.msra.mxu0 0
        %3097 = vmatprep.mubr.bf16.mxu0 0
        %3098 = vmatmul.mubr.bf16.gmra.mrb[0].mxu0 %v875
        %v3099 = vpop.f32.mrb[0].mxu0
        %v3100 = vadd.f32 0.0, %v3099
        %v3101 = vpop.f32.mrb[0].mxu0
        %v3102 = vpop.f32.mrb[0].mxu0
        %v3103 = vpop.f32.mrb[0].mxu0
        %3104 = vdwg.mxu0
        %v3105 = vadd.f32 %v3060, %v3100
        %v3106 = vld [vmem:[%s2871 + $0x4] sm:$0xc]
        %v3108 = vunpack.c.l.b16 %v3106
        %v3109 = vpack.c.b16 %v3108, %v3108
        %v3110 = vrot.slane %v3109, 2
        %v3112 = vsel %vm254, %v3110, 0
        %3114 = vmatprep.subr.bf16.mxu0 0
        %3115 = vmatpush1.bf16.msra.mxu0 %v3112
        %3116 = vmatprep.subr.bf16.mxu0 0
        %3117 = vmatpush1.bf16.msra.mxu0 0
        %3118 = vmatprep.subr.bf16.mxu0 0
        %3119 = vmatpush1.bf16.msra.mxu0 0
        %3120 = vmatprep.subr.bf16.mxu0 0
        %3121 = vmatpush1.bf16.msra.mxu0 0
        %3122 = vmatprep.subr.bf16.mxu0 0
        %3123 = vmatpush1.bf16.msra.mxu0 0
        %3124 = vmatprep.subr.bf16.mxu0 0
        %3125 = vmatpush1.bf16.msra.mxu0 0
        %3126 = vmatprep.subr.bf16.mxu0 0
        %3127 = vmatpush1.bf16.msra.mxu0 0
        %3128 = vmatprep.subr.bf16.mxu0 0
        %3129 = vmatpush1.bf16.msra.mxu0 0
        %3130 = vmatprep.subr.bf16.mxu0 0
        %3131 = vmatpush1.bf16.msra.mxu0 0
        %3132 = vmatprep.subr.bf16.mxu0 0
        %3133 = vmatpush1.bf16.msra.mxu0 0
        %3134 = vmatprep.subr.bf16.mxu0 0
        %3135 = vmatpush1.bf16.msra.mxu0 0
        %3136 = vmatprep.subr.bf16.mxu0 0
        %3137 = vmatpush1.bf16.msra.mxu0 0
        %3138 = vmatprep.subr.bf16.mxu0 0
        %3139 = vmatpush1.bf16.msra.mxu0 0
        %3140 = vmatprep.subr.bf16.mxu0 0
        %3141 = vmatpush1.bf16.msra.mxu0 0
        %3142 = vmatprep.subr.bf16.mxu0 0
        %3143 = vmatpush1.bf16.msra.mxu0 0
        %3144 = vmatprep.subr.bf16.mxu0 0
        %3145 = vmatpush1.bf16.msra.mxu0 0
        %3146 = vmatprep.mubr.bf16.mxu0 0
        %3147 = vmatmul.mubr.bf16.gmra.mrb[0].mxu0 %v929
        %v3148 = vpop.f32.mrb[0].mxu0
        %v3149 = vadd.f32 0.0, %v3148
        %v3150 = vpop.f32.mrb[0].mxu0
        %v3151 = vpop.f32.mrb[0].mxu0
        %v3152 = vpop.f32.mrb[0].mxu0
        %3153 = vdwg.mxu0
        %v3154 = vadd.f32 %v3105, %v3149
        %v3156 = vunpack.c.l.b16 %v3061
        %v3157 = vpack.c.b16 %v3156, %v3156
        %3158 = vrot.lane.b32.xlu0 %v3157, 127
        %v3159 = vpop.permute.xlu0 %3158
        %v3161 = vsel %vm254, %v3159, 0
        %3163 = vmatprep.subr.bf16.mxu0 0
        %3164 = vmatpush1.bf16.msra.mxu0 %v3161
        %3165 = vmatprep.subr.bf16.mxu0 0
        %3166 = vmatpush1.bf16.msra.mxu0 0
        %3167 = vmatprep.subr.bf16.mxu0 0
        %3168 = vmatpush1.bf16.msra.mxu0 0
        %3169 = vmatprep.subr.bf16.mxu0 0
        %3170 = vmatpush1.bf16.msra.mxu0 0
        %3171 = vmatprep.subr.bf16.mxu0 0
        %3172 = vmatpush1.bf16.msra.mxu0 0
        %3173 = vmatprep.subr.bf16.mxu0 0
        %3174 = vmatpush1.bf16.msra.mxu0 0
        %3175 = vmatprep.subr.bf16.mxu0 0
        %3176 = vmatpush1.bf16.msra.mxu0 0
        %3177 = vmatprep.subr.bf16.mxu0 0
        %3178 = vmatpush1.bf16.msra.mxu0 0
        %3179 = vmatprep.subr.bf16.mxu0 0
        %3180 = vmatpush1.bf16.msra.mxu0 0
        %3181 = vmatprep.subr.bf16.mxu0 0
        %3182 = vmatpush1.bf16.msra.mxu0 0
        %3183 = vmatprep.subr.bf16.mxu0 0
        %3184 = vmatpush1.bf16.msra.mxu0 0
        %3185 = vmatprep.subr.bf16.mxu0 0
        %3186 = vmatpush1.bf16.msra.mxu0 0
        %3187 = vmatprep.subr.bf16.mxu0 0
        %3188 = vmatpush1.bf16.msra.mxu0 0
        %3189 = vmatprep.subr.bf16.mxu0 0
        %3190 = vmatpush1.bf16.msra.mxu0 0
        %3191 = vmatprep.subr.bf16.mxu0 0
        %3192 = vmatpush1.bf16.msra.mxu0 0
        %3193 = vmatprep.subr.bf16.mxu0 0
        %3194 = vmatpush1.bf16.msra.mxu0 0
        %3195 = vmatprep.mubr.bf16.mxu0 0
        %3196 = vmatmul.mubr.bf16.gmra.mrb[0].mxu0 %v983
        %v3197 = vpop.f32.mrb[0].mxu0
        %v3198 = vadd.f32 0.0, %v3197
        %v3199 = vpop.f32.mrb[0].mxu0
        %v3200 = vpop.f32.mrb[0].mxu0
        %v3201 = vpop.f32.mrb[0].mxu0
        %3202 = vdwg.mxu0
        %v3203 = vadd.f32 %v3154, %v3198
        %3204 = vrot.lane.b32.xlu0 %v3110, 127
        %v3205 = vpop.permute.xlu0 %3204
        %v3207 = vsel %vm254, %v3205, 0
        %3209 = vmatprep.subr.bf16.mxu0 0
        %3210 = vmatpush1.bf16.msra.mxu0 %v3207
        %3211 = vmatprep.subr.bf16.mxu0 0
        %3212 = vmatpush1.bf16.msra.mxu0 0
        %3213 = vmatprep.subr.bf16.mxu0 0
        %3214 = vmatpush1.bf16.msra.mxu0 0
        %3215 = vmatprep.subr.bf16.mxu0 0
        %3216 = vmatpush1.bf16.msra.mxu0 0
        %3217 = vmatprep.subr.bf16.mxu0 0
        %3218 = vmatpush1.bf16.msra.mxu0 0
        %3219 = vmatprep.subr.bf16.mxu0 0
        %3220 = vmatpush1.bf16.msra.mxu0 0
        %3221 = vmatprep.subr.bf16.mxu0 0
        %3222 = vmatpush1.bf16.msra.mxu0 0
        %3223 = vmatprep.subr.bf16.mxu0 0
        %3224 = vmatpush1.bf16.msra.mxu0 0
        %3225 = vmatprep.subr.bf16.mxu0 0
        %3226 = vmatpush1.bf16.msra.mxu0 0
        %3227 = vmatprep.subr.bf16.mxu0 0
        %3228 = vmatpush1.bf16.msra.mxu0 0
        %3229 = vmatprep.subr.bf16.mxu0 0
        %3230 = vmatpush1.bf16.msra.mxu0 0
        %3231 = vmatprep.subr.bf16.mxu0 0
        %3232 = vmatpush1.bf16.msra.mxu0 0
        %3233 = vmatprep.subr.bf16.mxu0 0
        %3234 = vmatpush1.bf16.msra.mxu0 0
        %3235 = vmatprep.subr.bf16.mxu0 0
        %3236 = vmatpush1.bf16.msra.mxu0 0
        %3237 = vmatprep.subr.bf16.mxu0 0
        %3238 = vmatpush1.bf16.msra.mxu0 0
        %3239 = vmatprep.subr.bf16.mxu0 0
        %3240 = vmatpush1.bf16.msra.mxu0 0
        %3241 = vmatprep.mubr.bf16.mxu0 0
        %3242 = vmatmul.mubr.bf16.gmra.mrb[0].mxu0 %v1034
        %v3243 = vpop.f32.mrb[0].mxu0
        %v3244 = vadd.f32 0.0, %v3243
        %v3245 = vpop.f32.mrb[0].mxu0
        %v3246 = vpop.f32.mrb[0].mxu0
        %v3247 = vpop.f32.mrb[0].mxu0
        %3248 = vdwg.mxu0
        %v3249 = vadd.f32 %v3203, %v3244
        %p3250 = scmp.lt.s32.totalorder %s2145, 8
        %s3251 = scalar_select %p3250, 1, 0
        %s3252 = scvt.s32.f32 %s3251
        %v3253 = vsel %vm1083, %v3249, 0.0
        %3254 = vadd.xlane.f32.xlu0 %v3253
        %v3255 = vpop.xlane.xlu0 %3254
        %v3256 = vstv %s3252
        %v3257 = vmul.f32 %v3256, %v3255
        %v3258 = vadd.f32 %v2535, %v3257
        %v3259 = vmul.f32 %v3249, %v3249
        %v3260 = vsel %vm1083, %v3259, 0.0
        %3261 = vadd.xlane.f32.xlu0 %v3260
        %v3262 = vpop.xlane.xlu0 %3261
        %v3263 = vmul.f32 %v3256, %v3262
        %v3264 = vadd.f32 %v2541, %v3263
        %3265 = vmatprep.subr.bf16.mxu0 0
        %3266 = vmatpush1.bf16.msra.mxu0 %v2923
        %3267 = vmatprep.subr.bf16.mxu0 0
        %3268 = vmatpush1.bf16.msra.mxu0 0
        %3269 = vmatprep.subr.bf16.mxu0 0
        %3270 = vmatpush1.bf16.msra.mxu0 0
        %3271 = vmatprep.subr.bf16.mxu0 0
        %3272 = vmatpush1.bf16.msra.mxu0 0
        %3273 = vmatprep.subr.bf16.mxu0 0
        %3274 = vmatpush1.bf16.msra.mxu0 0
        %3275 = vmatprep.subr.bf16.mxu0 0
        %3276 = vmatpush1.bf16.msra.mxu0 0
        %3277 = vmatprep.subr.bf16.mxu0 0
        %3278 = vmatpush1.bf16.msra.mxu0 0
        %3279 = vmatprep.subr.bf16.mxu0 0
        %3280 = vmatpush1.bf16.msra.mxu0 0
        %3281 = vmatprep.subr.bf16.mxu0 0
        %3282 = vmatpush1.bf16.msra.mxu0 0
        %3283 = vmatprep.subr.bf16.mxu0 0
        %3284 = vmatpush1.bf16.msra.mxu0 0
        %3285 = vmatprep.subr.bf16.mxu0 0
        %3286 = vmatpush1.bf16.msra.mxu0 0
        %3287 = vmatprep.subr.bf16.mxu0 0
        %3288 = vmatpush1.bf16.msra.mxu0 0
        %3289 = vmatprep.subr.bf16.mxu0 0
        %3290 = vmatpush1.bf16.msra.mxu0 0
        %3291 = vmatprep.subr.bf16.mxu0 0
        %3292 = vmatpush1.bf16.msra.mxu0 0
        %3293 = vmatprep.subr.bf16.mxu0 0
        %3294 = vmatpush1.bf16.msra.mxu0 0
        %3295 = vmatprep.subr.bf16.mxu0 0
        %3296 = vmatpush1.bf16.msra.mxu0 0
        %3297 = vmatprep.mubr.bf16.mxu0 0
        %3298 = vmatmul.mubr.bf16.gmra.mrb[0].mxu0 %v252
        %v3299 = vpop.f32.mrb[0].mxu0
        %v3300 = vadd.f32 0.0, %v3299
        %v3301 = vpop.f32.mrb[0].mxu0
        %v3302 = vpop.f32.mrb[0].mxu0
        %v3303 = vpop.f32.mrb[0].mxu0
        %3304 = vdwg.mxu0
        %3305 = vmatprep.subr.bf16.mxu0 0
        %3306 = vmatpush1.bf16.msra.mxu0 %v2874
        %3307 = vmatprep.subr.bf16.mxu0 0
        %3308 = vmatpush1.bf16.msra.mxu0 0
        %3309 = vmatprep.subr.bf16.mxu0 0
        %3310 = vmatpush1.bf16.msra.mxu0 0
        %3311 = vmatprep.subr.bf16.mxu0 0
        %3312 = vmatpush1.bf16.msra.mxu0 0
        %3313 = vmatprep.subr.bf16.mxu0 0
        %3314 = vmatpush1.bf16.msra.mxu0 0
        %3315 = vmatprep.subr.bf16.mxu0 0
        %3316 = vmatpush1.bf16.msra.mxu0 0
        %3317 = vmatprep.subr.bf16.mxu0 0
        %3318 = vmatpush1.bf16.msra.mxu0 0
        %3319 = vmatprep.subr.bf16.mxu0 0
        %3320 = vmatpush1.bf16.msra.mxu0 0
        %3321 = vmatprep.subr.bf16.mxu0 0
        %3322 = vmatpush1.bf16.msra.mxu0 0
        %3323 = vmatprep.subr.bf16.mxu0 0
        %3324 = vmatpush1.bf16.msra.mxu0 0
        %3325 = vmatprep.subr.bf16.mxu0 0
        %3326 = vmatpush1.bf16.msra.mxu0 0
        %3327 = vmatprep.subr.bf16.mxu0 0
        %3328 = vmatpush1.bf16.msra.mxu0 0
        %3329 = vmatprep.subr.bf16.mxu0 0
        %3330 = vmatpush1.bf16.msra.mxu0 0
        %3331 = vmatprep.subr.bf16.mxu0 0
        %3332 = vmatpush1.bf16.msra.mxu0 0
        %3333 = vmatprep.subr.bf16.mxu0 0
        %3334 = vmatpush1.bf16.msra.mxu0 0
        %3335 = vmatprep.subr.bf16.mxu0 0
        %3336 = vmatpush1.bf16.msra.mxu0 0
        %3337 = vmatprep.mubr.bf16.mxu0 0
        %3338 = vmatmul.mubr.bf16.gmra.mrb[0].mxu0 %v299
        %v3339 = vpop.f32.mrb[0].mxu0
        %v3340 = vadd.f32 %v3300, %v3339
        %v3341 = vpop.f32.mrb[0].mxu0
        %v3342 = vpop.f32.mrb[0].mxu0
        %v3343 = vpop.f32.mrb[0].mxu0
        %3344 = vdwg.mxu0
        %3345 = vmatprep.subr.bf16.mxu0 0
        %3346 = vmatpush1.bf16.msra.mxu0 %v2972
        %3347 = vmatprep.subr.bf16.mxu0 0
        %3348 = vmatpush1.bf16.msra.mxu0 0
        %3349 = vmatprep.subr.bf16.mxu0 0
        %3350 = vmatpush1.bf16.msra.mxu0 0
        %3351 = vmatprep.subr.bf16.mxu0 0
        %3352 = vmatpush1.bf16.msra.mxu0 0
        %3353 = vmatprep.subr.bf16.mxu0 0
        %3354 = vmatpush1.bf16.msra.mxu0 0
        %3355 = vmatprep.subr.bf16.mxu0 0
        %3356 = vmatpush1.bf16.msra.mxu0 0
        %3357 = vmatprep.subr.bf16.mxu0 0
        %3358 = vmatpush1.bf16.msra.mxu0 0
        %3359 = vmatprep.subr.bf16.mxu0 0
        %3360 = vmatpush1.bf16.msra.mxu0 0
        %3361 = vmatprep.subr.bf16.mxu0 0
        %3362 = vmatpush1.bf16.msra.mxu0 0
        %3363 = vmatprep.subr.bf16.mxu0 0
        %3364 = vmatpush1.bf16.msra.mxu0 0
        %3365 = vmatprep.subr.bf16.mxu0 0
        %3366 = vmatpush1.bf16.msra.mxu0 0
        %3367 = vmatprep.subr.bf16.mxu0 0
        %3368 = vmatpush1.bf16.msra.mxu0 0
        %3369 = vmatprep.subr.bf16.mxu0 0
        %3370 = vmatpush1.bf16.msra.mxu0 0
        %3371 = vmatprep.subr.bf16.mxu0 0
        %3372 = vmatpush1.bf16.msra.mxu0 0
        %3373 = vmatprep.subr.bf16.mxu0 0
        %3374 = vmatpush1.bf16.msra.mxu0 0
        %3375 = vmatprep.subr.bf16.mxu0 0
        %3376 = vmatpush1.bf16.msra.mxu0 0
        %3377 = vmatprep.mubr.bf16.mxu0 0
        %3378 = vmatmul.mubr.bf16.gmra.mrb[0].mxu0 %v352
        %v3379 = vpop.f32.mrb[0].mxu0
        %v3380 = vadd.f32 0.0, %v3379
        %v3381 = vpop.f32.mrb[0].mxu0
        %v3382 = vpop.f32.mrb[0].mxu0
        %v3383 = vpop.f32.mrb[0].mxu0
        %3384 = vdwg.mxu0
        %v3385 = vadd.f32 %v3340, %v3380
        %3386 = vmatprep.subr.bf16.mxu0 0
        %3387 = vmatpush1.bf16.msra.mxu0 %v3018
        %3388 = vmatprep.subr.bf16.mxu0 0
        %3389 = vmatpush1.bf16.msra.mxu0 0
        %3390 = vmatprep.subr.bf16.mxu0 0
        %3391 = vmatpush1.bf16.msra.mxu0 0
        %3392 = vmatprep.subr.bf16.mxu0 0
        %3393 = vmatpush1.bf16.msra.mxu0 0
        %3394 = vmatprep.subr.bf16.mxu0 0
        %3395 = vmatpush1.bf16.msra.mxu0 0
        %3396 = vmatprep.subr.bf16.mxu0 0
        %3397 = vmatpush1.bf16.msra.mxu0 0
        %3398 = vmatprep.subr.bf16.mxu0 0
        %3399 = vmatpush1.bf16.msra.mxu0 0
        %3400 = vmatprep.subr.bf16.mxu0 0
        %3401 = vmatpush1.bf16.msra.mxu0 0
        %3402 = vmatprep.subr.bf16.mxu0 0
        %3403 = vmatpush1.bf16.msra.mxu0 0
        %3404 = vmatprep.subr.bf16.mxu0 0
        %3405 = vmatpush1.bf16.msra.mxu0 0
        %3406 = vmatprep.subr.bf16.mxu0 0
        %3407 = vmatpush1.bf16.msra.mxu0 0
        %3408 = vmatprep.subr.bf16.mxu0 0
        %3409 = vmatpush1.bf16.msra.mxu0 0
        %3410 = vmatprep.subr.bf16.mxu0 0
        %3411 = vmatpush1.bf16.msra.mxu0 0
        %3412 = vmatprep.subr.bf16.mxu0 0
        %3413 = vmatpush1.bf16.msra.mxu0 0
        %3414 = vmatprep.subr.bf16.mxu0 0
        %3415 = vmatpush1.bf16.msra.mxu0 0
        %3416 = vmatprep.subr.bf16.mxu0 0
        %3417 = vmatpush1.bf16.msra.mxu0 0
        %3418 = vmatprep.mubr.bf16.mxu0 0
        %3419 = vmatmul.mubr.bf16.gmra.mrb[0].mxu0 %v403
        %v3420 = vpop.f32.mrb[0].mxu0
        %v3421 = vadd.f32 0.0, %v3420
        %v3422 = vpop.f32.mrb[0].mxu0
        %v3423 = vpop.f32.mrb[0].mxu0
        %v3424 = vpop.f32.mrb[0].mxu0
        %3425 = vdwg.mxu0
        %v3426 = vadd.f32 %v3385, %v3421
        %3427 = vmatprep.subr.bf16.mxu0 0
        %3428 = vmatpush1.bf16.msra.mxu0 %v3063
        %3429 = vmatprep.subr.bf16.mxu0 0
        %3430 = vmatpush1.bf16.msra.mxu0 0
        %3431 = vmatprep.subr.bf16.mxu0 0
        %3432 = vmatpush1.bf16.msra.mxu0 0
        %3433 = vmatprep.subr.bf16.mxu0 0
        %3434 = vmatpush1.bf16.msra.mxu0 0
        %3435 = vmatprep.subr.bf16.mxu0 0
        %3436 = vmatpush1.bf16.msra.mxu0 0
        %3437 = vmatprep.subr.bf16.mxu0 0
        %3438 = vmatpush1.bf16.msra.mxu0 0
        %3439 = vmatprep.subr.bf16.mxu0 0
        %3440 = vmatpush1.bf16.msra.mxu0 0
        %3441 = vmatprep.subr.bf16.mxu0 0
        %3442 = vmatpush1.bf16.msra.mxu0 0
        %3443 = vmatprep.subr.bf16.mxu0 0
        %3444 = vmatpush1.bf16.msra.mxu0 0
        %3445 = vmatprep.subr.bf16.mxu0 0
        %3446 = vmatpush1.bf16.msra.mxu0 0
        %3447 = vmatprep.subr.bf16.mxu0 0
        %3448 = vmatpush1.bf16.msra.mxu0 0
        %3449 = vmatprep.subr.bf16.mxu0 0
        %3450 = vmatpush1.bf16.msra.mxu0 0
        %3451 = vmatprep.subr.bf16.mxu0 0
        %3452 = vmatpush1.bf16.msra.mxu0 0
        %3453 = vmatprep.subr.bf16.mxu0 0
        %3454 = vmatpush1.bf16.msra.mxu0 0
        %3455 = vmatprep.subr.bf16.mxu0 0
        %3456 = vmatpush1.bf16.msra.mxu0 0
        %3457 = vmatprep.subr.bf16.mxu0 0
        %3458 = vmatpush1.bf16.msra.mxu0 0
        %3459 = vmatprep.mubr.bf16.mxu0 0
        %3460 = vmatmul.mubr.bf16.gmra.mrb[0].mxu0 %v453
        %v3461 = vpop.f32.mrb[0].mxu0
        %v3462 = vadd.f32 0.0, %v3461
        %v3463 = vpop.f32.mrb[0].mxu0
        %v3464 = vpop.f32.mrb[0].mxu0
        %v3465 = vpop.f32.mrb[0].mxu0
        %3466 = vdwg.mxu0
        %v3467 = vadd.f32 %v3426, %v3462
        %3468 = vmatprep.subr.bf16.mxu0 0
        %3469 = vmatpush1.bf16.msra.mxu0 %v3112
        %3470 = vmatprep.subr.bf16.mxu0 0
        %3471 = vmatpush1.bf16.msra.mxu0 0
        %3472 = vmatprep.subr.bf16.mxu0 0
        %3473 = vmatpush1.bf16.msra.mxu0 0
        %3474 = vmatprep.subr.bf16.mxu0 0
        %3475 = vmatpush1.bf16.msra.mxu0 0
        %3476 = vmatprep.subr.bf16.mxu0 0
        %3477 = vmatpush1.bf16.msra.mxu0 0
        %3478 = vmatprep.subr.bf16.mxu0 0
        %3479 = vmatpush1.bf16.msra.mxu0 0
        %3480 = vmatprep.subr.bf16.mxu0 0
        %3481 = vmatpush1.bf16.msra.mxu0 0
        %3482 = vmatprep.subr.bf16.mxu0 0
        %3483 = vmatpush1.bf16.msra.mxu0 0
        %3484 = vmatprep.subr.bf16.mxu0 0
        %3485 = vmatpush1.bf16.msra.mxu0 0
        %3486 = vmatprep.subr.bf16.mxu0 0
        %3487 = vmatpush1.bf16.msra.mxu0 0
        %3488 = vmatprep.subr.bf16.mxu0 0
        %3489 = vmatpush1.bf16.msra.mxu0 0
        %3490 = vmatprep.subr.bf16.mxu0 0
        %3491 = vmatpush1.bf16.msra.mxu0 0
        %3492 = vmatprep.subr.bf16.mxu0 0
        %3493 = vmatpush1.bf16.msra.mxu0 0
        %3494 = vmatprep.subr.bf16.mxu0 0
        %3495 = vmatpush1.bf16.msra.mxu0 0
        %3496 = vmatprep.subr.bf16.mxu0 0
        %3497 = vmatpush1.bf16.msra.mxu0 0
        %3498 = vmatprep.subr.bf16.mxu0 0
        %3499 = vmatpush1.bf16.msra.mxu0 0
        %3500 = vmatprep.mubr.bf16.mxu0 0
        %3501 = vmatmul.mubr.bf16.gmra.mrb[0].mxu0 %v507
        %v3502 = vpop.f32.mrb[0].mxu0
        %v3503 = vadd.f32 0.0, %v3502
        %v3504 = vpop.f32.mrb[0].mxu0
        %v3505 = vpop.f32.mrb[0].mxu0
        %v3506 = vpop.f32.mrb[0].mxu0
        %3507 = vdwg.mxu0
        %v3508 = vadd.f32 %v3467, %v3503
        %3509 = vmatprep.subr.bf16.mxu0 0
        %3510 = vmatpush1.bf16.msra.mxu0 %v3161
        %3511 = vmatprep.subr.bf16.mxu0 0
        %3512 = vmatpush1.bf16.msra.mxu0 0
        %3513 = vmatprep.subr.bf16.mxu0 0
        %3514 = vmatpush1.bf16.msra.mxu0 0
        %3515 = vmatprep.subr.bf16.mxu0 0
        %3516 = vmatpush1.bf16.msra.mxu0 0
        %3517 = vmatprep.subr.bf16.mxu0 0
        %3518 = vmatpush1.bf16.msra.mxu0 0
        %3519 = vmatprep.subr.bf16.mxu0 0
        %3520 = vmatpush1.bf16.msra.mxu0 0
        %3521 = vmatprep.subr.bf16.mxu0 0
        %3522 = vmatpush1.bf16.msra.mxu0 0
        %3523 = vmatprep.subr.bf16.mxu0 0
        %3524 = vmatpush1.bf16.msra.mxu0 0
        %3525 = vmatprep.subr.bf16.mxu0 0
        %3526 = vmatpush1.bf16.msra.mxu0 0
        %3527 = vmatprep.subr.bf16.mxu0 0
        %3528 = vmatpush1.bf16.msra.mxu0 0
        %3529 = vmatprep.subr.bf16.mxu0 0
        %3530 = vmatpush1.bf16.msra.mxu0 0
        %3531 = vmatprep.subr.bf16.mxu0 0
        %3532 = vmatpush1.bf16.msra.mxu0 0
        %3533 = vmatprep.subr.bf16.mxu0 0
        %3534 = vmatpush1.bf16.msra.mxu0 0
        %3535 = vmatprep.subr.bf16.mxu0 0
        %3536 = vmatpush1.bf16.msra.mxu0 0
        %3537 = vmatprep.subr.bf16.mxu0 0
        %3538 = vmatpush1.bf16.msra.mxu0 0
        %3539 = vmatprep.subr.bf16.mxu0 0
        %3540 = vmatpush1.bf16.msra.mxu0 0
        %3541 = vmatprep.mubr.bf16.mxu0 0
        %3542 = vmatmul.mubr.bf16.gmra.mrb[0].mxu0 %v561
        %v3543 = vpop.f32.mrb[0].mxu0
        %v3544 = vadd.f32 0.0, %v3543
        %v3545 = vpop.f32.mrb[0].mxu0
        %v3546 = vpop.f32.mrb[0].mxu0
        %v3547 = vpop.f32.mrb[0].mxu0
        %3548 = vdwg.mxu0
        %v3549 = vadd.f32 %v3508, %v3544
        %3550 = vmatprep.subr.bf16.mxu0 0
        %3551 = vmatpush1.bf16.msra.mxu0 %v3207
        %3552 = vmatprep.subr.bf16.mxu0 0
        %3553 = vmatpush1.bf16.msra.mxu0 0
        %3554 = vmatprep.subr.bf16.mxu0 0
        %3555 = vmatpush1.bf16.msra.mxu0 0
        %3556 = vmatprep.subr.bf16.mxu0 0
        %3557 = vmatpush1.bf16.msra.mxu0 0
        %3558 = vmatprep.subr.bf16.mxu0 0
        %3559 = vmatpush1.bf16.msra.mxu0 0
        %3560 = vmatprep.subr.bf16.mxu0 0
        %3561 = vmatpush1.bf16.msra.mxu0 0
        %3562 = vmatprep.subr.bf16.mxu0 0
        %3563 = vmatpush1.bf16.msra.mxu0 0
        %3564 = vmatprep.subr.bf16.mxu0 0
        %3565 = vmatpush1.bf16.msra.mxu0 0
        %3566 = vmatprep.subr.bf16.mxu0 0
        %3567 = vmatpush1.bf16.msra.mxu0 0
        %3568 = vmatprep.subr.bf16.mxu0 0
        %3569 = vmatpush1.bf16.msra.mxu0 0
        %3570 = vmatprep.subr.bf16.mxu0 0
        %3571 = vmatpush1.bf16.msra.mxu0 0
        %3572 = vmatprep.subr.bf16.mxu0 0
        %3573 = vmatpush1.bf16.msra.mxu0 0
        %3574 = vmatprep.subr.bf16.mxu0 0
        %3575 = vmatpush1.bf16.msra.mxu0 0
        %3576 = vmatprep.subr.bf16.mxu0 0
        %3577 = vmatpush1.bf16.msra.mxu0 0
        %3578 = vmatprep.subr.bf16.mxu0 0
        %3579 = vmatpush1.bf16.msra.mxu0 0
        %3580 = vmatprep.subr.bf16.mxu0 0
        %3581 = vmatpush1.bf16.msra.mxu0 0
        %3582 = vmatprep.mubr.bf16.mxu0 0
        %3583 = vmatmul.mubr.bf16.gmra.mrb[0].mxu0 %v612
        %v3584 = vpop.f32.mrb[0].mxu0
        %v3585 = vadd.f32 0.0, %v3584
        %v3586 = vpop.f32.mrb[0].mxu0
        %v3587 = vpop.f32.mrb[0].mxu0
        %v3588 = vpop.f32.mrb[0].mxu0
        %3589 = vdwg.mxu0
        %v3590 = vadd.f32 %v3549, %v3585
        %s3591 = sadd.s32 %s237, 5
        %s3592 = smul.u32 %s3591, 2
        %s3593 = smul.addr %s3592, 4
        %s3594 = scalar_lea.vmem %s220, %s3593
        %v3595 = vld [vmem:[%s3594] sm:$0x3]
        %v3597 = vsel %vm254, %v3595, 0
        %3599 = vmatprep.subr.bf16.mxu0 0
        %3600 = vmatpush1.bf16.msra.mxu0 %v3597
        %3601 = vmatprep.subr.bf16.mxu0 0
        %3602 = vmatpush1.bf16.msra.mxu0 0
        %3603 = vmatprep.subr.bf16.mxu0 0
        %3604 = vmatpush1.bf16.msra.mxu0 0
        %3605 = vmatprep.subr.bf16.mxu0 0
        %3606 = vmatpush1.bf16.msra.mxu0 0
        %3607 = vmatprep.subr.bf16.mxu0 0
        %3608 = vmatpush1.bf16.msra.mxu0 0
        %3609 = vmatprep.subr.bf16.mxu0 0
        %3610 = vmatpush1.bf16.msra.mxu0 0
        %3611 = vmatprep.subr.bf16.mxu0 0
        %3612 = vmatpush1.bf16.msra.mxu0 0
        %3613 = vmatprep.subr.bf16.mxu0 0
        %3614 = vmatpush1.bf16.msra.mxu0 0
        %3615 = vmatprep.subr.bf16.mxu0 0
        %3616 = vmatpush1.bf16.msra.mxu0 0
        %3617 = vmatprep.subr.bf16.mxu0 0
        %3618 = vmatpush1.bf16.msra.mxu0 0
        %3619 = vmatprep.subr.bf16.mxu0 0
        %3620 = vmatpush1.bf16.msra.mxu0 0
        %3621 = vmatprep.subr.bf16.mxu0 0
        %3622 = vmatpush1.bf16.msra.mxu0 0
        %3623 = vmatprep.subr.bf16.mxu0 0
        %3624 = vmatpush1.bf16.msra.mxu0 0
        %3625 = vmatprep.subr.bf16.mxu0 0
        %3626 = vmatpush1.bf16.msra.mxu0 0
        %3627 = vmatprep.subr.bf16.mxu0 0
        %3628 = vmatpush1.bf16.msra.mxu0 0
        %3629 = vmatprep.subr.bf16.mxu0 0
        %3630 = vmatpush1.bf16.msra.mxu0 0
        %3631 = vmatprep.mubr.bf16.mxu0 0
        %3632 = vmatmul.mubr.bf16.gmra.mrb[0].mxu0 %v666
        %v3633 = vpop.f32.mrb[0].mxu0
        %v3634 = vadd.f32 0.0, %v3633
        %v3635 = vpop.f32.mrb[0].mxu0
        %v3636 = vpop.f32.mrb[0].mxu0
        %v3637 = vpop.f32.mrb[0].mxu0
        %3638 = vdwg.mxu0
        %v3639 = vadd.f32 %v3590, %v3634
        %v3640 = vld [vmem:[%s3594] sm:$0xc]
        %v3642 = vunpack.c.l.b16 %v3640
        %v3643 = vpack.c.b16 %v3642, %v3642
        %v3644 = vrot.slane %v3643, 2
        %v3646 = vsel %vm254, %v3644, 0
        %3648 = vmatprep.subr.bf16.mxu0 0
        %3649 = vmatpush1.bf16.msra.mxu0 %v3646
        %3650 = vmatprep.subr.bf16.mxu0 0
        %3651 = vmatpush1.bf16.msra.mxu0 0
        %3652 = vmatprep.subr.bf16.mxu0 0
        %3653 = vmatpush1.bf16.msra.mxu0 0
        %3654 = vmatprep.subr.bf16.mxu0 0
        %3655 = vmatpush1.bf16.msra.mxu0 0
        %3656 = vmatprep.subr.bf16.mxu0 0
        %3657 = vmatpush1.bf16.msra.mxu0 0
        %3658 = vmatprep.subr.bf16.mxu0 0
        %3659 = vmatpush1.bf16.msra.mxu0 0
        %3660 = vmatprep.subr.bf16.mxu0 0
        %3661 = vmatpush1.bf16.msra.mxu0 0
        %3662 = vmatprep.subr.bf16.mxu0 0
        %3663 = vmatpush1.bf16.msra.mxu0 0
        %3664 = vmatprep.subr.bf16.mxu0 0
        %3665 = vmatpush1.bf16.msra.mxu0 0
        %3666 = vmatprep.subr.bf16.mxu0 0
        %3667 = vmatpush1.bf16.msra.mxu0 0
        %3668 = vmatprep.subr.bf16.mxu0 0
        %3669 = vmatpush1.bf16.msra.mxu0 0
        %3670 = vmatprep.subr.bf16.mxu0 0
        %3671 = vmatpush1.bf16.msra.mxu0 0
        %3672 = vmatprep.subr.bf16.mxu0 0
        %3673 = vmatpush1.bf16.msra.mxu0 0
        %3674 = vmatprep.subr.bf16.mxu0 0
        %3675 = vmatpush1.bf16.msra.mxu0 0
        %3676 = vmatprep.subr.bf16.mxu0 0
        %3677 = vmatpush1.bf16.msra.mxu0 0
        %3678 = vmatprep.subr.bf16.mxu0 0
        %3679 = vmatpush1.bf16.msra.mxu0 0
        %3680 = vmatprep.mubr.bf16.mxu0 0
        %3681 = vmatmul.mubr.bf16.gmra.mrb[0].mxu0 %v720
        %v3682 = vpop.f32.mrb[0].mxu0
        %v3683 = vadd.f32 0.0, %v3682
        %v3684 = vpop.f32.mrb[0].mxu0
        %v3685 = vpop.f32.mrb[0].mxu0
        %v3686 = vpop.f32.mrb[0].mxu0
        %3687 = vdwg.mxu0
        %v3688 = vadd.f32 %v3639, %v3683
        %v3690 = vunpack.c.l.b16 %v3595
        %v3691 = vpack.c.b16 %v3690, %v3690
        %3692 = vrot.lane.b32.xlu0 %v3691, 127
        %v3693 = vpop.permute.xlu0 %3692
        %v3695 = vsel %vm254, %v3693, 0
        %3697 = vmatprep.subr.bf16.mxu0 0
        %3698 = vmatpush1.bf16.msra.mxu0 %v3695
        %3699 = vmatprep.subr.bf16.mxu0 0
        %3700 = vmatpush1.bf16.msra.mxu0 0
        %3701 = vmatprep.subr.bf16.mxu0 0
        %3702 = vmatpush1.bf16.msra.mxu0 0
        %3703 = vmatprep.subr.bf16.mxu0 0
        %3704 = vmatpush1.bf16.msra.mxu0 0
        %3705 = vmatprep.subr.bf16.mxu0 0
        %3706 = vmatpush1.bf16.msra.mxu0 0
        %3707 = vmatprep.subr.bf16.mxu0 0
        %3708 = vmatpush1.bf16.msra.mxu0 0
        %3709 = vmatprep.subr.bf16.mxu0 0
        %3710 = vmatpush1.bf16.msra.mxu0 0
        %3711 = vmatprep.subr.bf16.mxu0 0
        %3712 = vmatpush1.bf16.msra.mxu0 0
        %3713 = vmatprep.subr.bf16.mxu0 0
        %3714 = vmatpush1.bf16.msra.mxu0 0
        %3715 = vmatprep.subr.bf16.mxu0 0
        %3716 = vmatpush1.bf16.msra.mxu0 0
        %3717 = vmatprep.subr.bf16.mxu0 0
        %3718 = vmatpush1.bf16.msra.mxu0 0
        %3719 = vmatprep.subr.bf16.mxu0 0
        %3720 = vmatpush1.bf16.msra.mxu0 0
        %3721 = vmatprep.subr.bf16.mxu0 0
        %3722 = vmatpush1.bf16.msra.mxu0 0
        %3723 = vmatprep.subr.bf16.mxu0 0
        %3724 = vmatpush1.bf16.msra.mxu0 0
        %3725 = vmatprep.subr.bf16.mxu0 0
        %3726 = vmatpush1.bf16.msra.mxu0 0
        %3727 = vmatprep.subr.bf16.mxu0 0
        %3728 = vmatpush1.bf16.msra.mxu0 0
        %3729 = vmatprep.mubr.bf16.mxu0 0
        %3730 = vmatmul.mubr.bf16.gmra.mrb[0].mxu0 %v774
        %v3731 = vpop.f32.mrb[0].mxu0
        %v3732 = vadd.f32 0.0, %v3731
        %v3733 = vpop.f32.mrb[0].mxu0
        %v3734 = vpop.f32.mrb[0].mxu0
        %v3735 = vpop.f32.mrb[0].mxu0
        %3736 = vdwg.mxu0
        %v3737 = vadd.f32 %v3688, %v3732
        %3738 = vrot.lane.b32.xlu0 %v3644, 127
        %v3739 = vpop.permute.xlu0 %3738
        %v3741 = vsel %vm254, %v3739, 0
        %3743 = vmatprep.subr.bf16.mxu0 0
        %3744 = vmatpush1.bf16.msra.mxu0 %v3741
        %3745 = vmatprep.subr.bf16.mxu0 0
        %3746 = vmatpush1.bf16.msra.mxu0 0
        %3747 = vmatprep.subr.bf16.mxu0 0
        %3748 = vmatpush1.bf16.msra.mxu0 0
        %3749 = vmatprep.subr.bf16.mxu0 0
        %3750 = vmatpush1.bf16.msra.mxu0 0
        %3751 = vmatprep.subr.bf16.mxu0 0
        %3752 = vmatpush1.bf16.msra.mxu0 0
        %3753 = vmatprep.subr.bf16.mxu0 0
        %3754 = vmatpush1.bf16.msra.mxu0 0
        %3755 = vmatprep.subr.bf16.mxu0 0
        %3756 = vmatpush1.bf16.msra.mxu0 0
        %3757 = vmatprep.subr.bf16.mxu0 0
        %3758 = vmatpush1.bf16.msra.mxu0 0
        %3759 = vmatprep.subr.bf16.mxu0 0
        %3760 = vmatpush1.bf16.msra.mxu0 0
        %3761 = vmatprep.subr.bf16.mxu0 0
        %3762 = vmatpush1.bf16.msra.mxu0 0
        %3763 = vmatprep.subr.bf16.mxu0 0
        %3764 = vmatpush1.bf16.msra.mxu0 0
        %3765 = vmatprep.subr.bf16.mxu0 0
        %3766 = vmatpush1.bf16.msra.mxu0 0
        %3767 = vmatprep.subr.bf16.mxu0 0
        %3768 = vmatpush1.bf16.msra.mxu0 0
        %3769 = vmatprep.subr.bf16.mxu0 0
        %3770 = vmatpush1.bf16.msra.mxu0 0
        %3771 = vmatprep.subr.bf16.mxu0 0
        %3772 = vmatpush1.bf16.msra.mxu0 0
        %3773 = vmatprep.subr.bf16.mxu0 0
        %3774 = vmatpush1.bf16.msra.mxu0 0
        %3775 = vmatprep.mubr.bf16.mxu0 0
        %3776 = vmatmul.mubr.bf16.gmra.mrb[0].mxu0 %v825
        %v3777 = vpop.f32.mrb[0].mxu0
        %v3778 = vadd.f32 0.0, %v3777
        %v3779 = vpop.f32.mrb[0].mxu0
        %v3780 = vpop.f32.mrb[0].mxu0
        %v3781 = vpop.f32.mrb[0].mxu0
        %3782 = vdwg.mxu0
        %v3783 = vadd.f32 %v3737, %v3778
        %v3784 = vld [vmem:[%s3594 + $0x4] sm:$0x3]
        %v3786 = vsel %vm254, %v3784, 0
        %3788 = vmatprep.subr.bf16.mxu0 0
        %3789 = vmatpush1.bf16.msra.mxu0 %v3786
        %3790 = vmatprep.subr.bf16.mxu0 0
        %3791 = vmatpush1.bf16.msra.mxu0 0
        %3792 = vmatprep.subr.bf16.mxu0 0
        %3793 = vmatpush1.bf16.msra.mxu0 0
        %3794 = vmatprep.subr.bf16.mxu0 0
        %3795 = vmatpush1.bf16.msra.mxu0 0
        %3796 = vmatprep.subr.bf16.mxu0 0
        %3797 = vmatpush1.bf16.msra.mxu0 0
        %3798 = vmatprep.subr.bf16.mxu0 0
        %3799 = vmatpush1.bf16.msra.mxu0 0
        %3800 = vmatprep.subr.bf16.mxu0 0
        %3801 = vmatpush1.bf16.msra.mxu0 0
        %3802 = vmatprep.subr.bf16.mxu0 0
        %3803 = vmatpush1.bf16.msra.mxu0 0
        %3804 = vmatprep.subr.bf16.mxu0 0
        %3805 = vmatpush1.bf16.msra.mxu0 0
        %3806 = vmatprep.subr.bf16.mxu0 0
        %3807 = vmatpush1.bf16.msra.mxu0 0
        %3808 = vmatprep.subr.bf16.mxu0 0
        %3809 = vmatpush1.bf16.msra.mxu0 0
        %3810 = vmatprep.subr.bf16.mxu0 0
        %3811 = vmatpush1.bf16.msra.mxu0 0
        %3812 = vmatprep.subr.bf16.mxu0 0
        %3813 = vmatpush1.bf16.msra.mxu0 0
        %3814 = vmatprep.subr.bf16.mxu0 0
        %3815 = vmatpush1.bf16.msra.mxu0 0
        %3816 = vmatprep.subr.bf16.mxu0 0
        %3817 = vmatpush1.bf16.msra.mxu0 0
        %3818 = vmatprep.subr.bf16.mxu0 0
        %3819 = vmatpush1.bf16.msra.mxu0 0
        %3820 = vmatprep.mubr.bf16.mxu0 0
        %3821 = vmatmul.mubr.bf16.gmra.mrb[0].mxu0 %v875
        %v3822 = vpop.f32.mrb[0].mxu0
        %v3823 = vadd.f32 0.0, %v3822
        %v3824 = vpop.f32.mrb[0].mxu0
        %v3825 = vpop.f32.mrb[0].mxu0
        %v3826 = vpop.f32.mrb[0].mxu0
        %3827 = vdwg.mxu0
        %v3828 = vadd.f32 %v3783, %v3823
        %v3829 = vld [vmem:[%s3594 + $0x4] sm:$0xc]
        %v3831 = vunpack.c.l.b16 %v3829
        %v3832 = vpack.c.b16 %v3831, %v3831
        %v3833 = vrot.slane %v3832, 2
        %v3835 = vsel %vm254, %v3833, 0
        %3837 = vmatprep.subr.bf16.mxu0 0
        %3838 = vmatpush1.bf16.msra.mxu0 %v3835
        %3839 = vmatprep.subr.bf16.mxu0 0
        %3840 = vmatpush1.bf16.msra.mxu0 0
        %3841 = vmatprep.subr.bf16.mxu0 0
        %3842 = vmatpush1.bf16.msra.mxu0 0
        %3843 = vmatprep.subr.bf16.mxu0 0
        %3844 = vmatpush1.bf16.msra.mxu0 0
        %3845 = vmatprep.subr.bf16.mxu0 0
        %3846 = vmatpush1.bf16.msra.mxu0 0
        %3847 = vmatprep.subr.bf16.mxu0 0
        %3848 = vmatpush1.bf16.msra.mxu0 0
        %3849 = vmatprep.subr.bf16.mxu0 0
        %3850 = vmatpush1.bf16.msra.mxu0 0
        %3851 = vmatprep.subr.bf16.mxu0 0
        %3852 = vmatpush1.bf16.msra.mxu0 0
        %3853 = vmatprep.subr.bf16.mxu0 0
        %3854 = vmatpush1.bf16.msra.mxu0 0
        %3855 = vmatprep.subr.bf16.mxu0 0
        %3856 = vmatpush1.bf16.msra.mxu0 0
        %3857 = vmatprep.subr.bf16.mxu0 0
        %3858 = vmatpush1.bf16.msra.mxu0 0
        %3859 = vmatprep.subr.bf16.mxu0 0
        %3860 = vmatpush1.bf16.msra.mxu0 0
        %3861 = vmatprep.subr.bf16.mxu0 0
        %3862 = vmatpush1.bf16.msra.mxu0 0
        %3863 = vmatprep.subr.bf16.mxu0 0
        %3864 = vmatpush1.bf16.msra.mxu0 0
        %3865 = vmatprep.subr.bf16.mxu0 0
        %3866 = vmatpush1.bf16.msra.mxu0 0
        %3867 = vmatprep.subr.bf16.mxu0 0
        %3868 = vmatpush1.bf16.msra.mxu0 0
        %3869 = vmatprep.mubr.bf16.mxu0 0
        %3870 = vmatmul.mubr.bf16.gmra.mrb[0].mxu0 %v929
        %v3871 = vpop.f32.mrb[0].mxu0
        %v3872 = vadd.f32 0.0, %v3871
        %v3873 = vpop.f32.mrb[0].mxu0
        %v3874 = vpop.f32.mrb[0].mxu0
        %v3875 = vpop.f32.mrb[0].mxu0
        %3876 = vdwg.mxu0
        %v3877 = vadd.f32 %v3828, %v3872
        %v3879 = vunpack.c.l.b16 %v3784
        %v3880 = vpack.c.b16 %v3879, %v3879
        %3881 = vrot.lane.b32.xlu0 %v3880, 127
        %v3882 = vpop.permute.xlu0 %3881
        %v3884 = vsel %vm254, %v3882, 0
        %3886 = vmatprep.subr.bf16.mxu0 0
        %3887 = vmatpush1.bf16.msra.mxu0 %v3884
        %3888 = vmatprep.subr.bf16.mxu0 0
        %3889 = vmatpush1.bf16.msra.mxu0 0
        %3890 = vmatprep.subr.bf16.mxu0 0
        %3891 = vmatpush1.bf16.msra.mxu0 0
        %3892 = vmatprep.subr.bf16.mxu0 0
        %3893 = vmatpush1.bf16.msra.mxu0 0
        %3894 = vmatprep.subr.bf16.mxu0 0
        %3895 = vmatpush1.bf16.msra.mxu0 0
        %3896 = vmatprep.subr.bf16.mxu0 0
        %3897 = vmatpush1.bf16.msra.mxu0 0
        %3898 = vmatprep.subr.bf16.mxu0 0
        %3899 = vmatpush1.bf16.msra.mxu0 0
        %3900 = vmatprep.subr.bf16.mxu0 0
        %3901 = vmatpush1.bf16.msra.mxu0 0
        %3902 = vmatprep.subr.bf16.mxu0 0
        %3903 = vmatpush1.bf16.msra.mxu0 0
        %3904 = vmatprep.subr.bf16.mxu0 0
        %3905 = vmatpush1.bf16.msra.mxu0 0
        %3906 = vmatprep.subr.bf16.mxu0 0
        %3907 = vmatpush1.bf16.msra.mxu0 0
        %3908 = vmatprep.subr.bf16.mxu0 0
        %3909 = vmatpush1.bf16.msra.mxu0 0
        %3910 = vmatprep.subr.bf16.mxu0 0
        %3911 = vmatpush1.bf16.msra.mxu0 0
        %3912 = vmatprep.subr.bf16.mxu0 0
        %3913 = vmatpush1.bf16.msra.mxu0 0
        %3914 = vmatprep.subr.bf16.mxu0 0
        %3915 = vmatpush1.bf16.msra.mxu0 0
        %3916 = vmatprep.subr.bf16.mxu0 0
        %3917 = vmatpush1.bf16.msra.mxu0 0
        %3918 = vmatprep.mubr.bf16.mxu0 0
        %3919 = vmatmul.mubr.bf16.gmra.mrb[0].mxu0 %v983
        %v3920 = vpop.f32.mrb[0].mxu0
        %v3921 = vadd.f32 0.0, %v3920
        %v3922 = vpop.f32.mrb[0].mxu0
        %v3923 = vpop.f32.mrb[0].mxu0
        %v3924 = vpop.f32.mrb[0].mxu0
        %3925 = vdwg.mxu0
        %v3926 = vadd.f32 %v3877, %v3921
        %3927 = vrot.lane.b32.xlu0 %v3833, 127
        %v3928 = vpop.permute.xlu0 %3927
        %v3930 = vsel %vm254, %v3928, 0
        %3932 = vmatprep.subr.bf16.mxu0 0
        %3933 = vmatpush1.bf16.msra.mxu0 %v3930
        %3934 = vmatprep.subr.bf16.mxu0 0
        %3935 = vmatpush1.bf16.msra.mxu0 0
        %3936 = vmatprep.subr.bf16.mxu0 0
        %3937 = vmatpush1.bf16.msra.mxu0 0
        %3938 = vmatprep.subr.bf16.mxu0 0
        %3939 = vmatpush1.bf16.msra.mxu0 0
        %3940 = vmatprep.subr.bf16.mxu0 0
        %3941 = vmatpush1.bf16.msra.mxu0 0
        %3942 = vmatprep.subr.bf16.mxu0 0
        %3943 = vmatpush1.bf16.msra.mxu0 0
        %3944 = vmatprep.subr.bf16.mxu0 0
        %3945 = vmatpush1.bf16.msra.mxu0 0
        %3946 = vmatprep.subr.bf16.mxu0 0
        %3947 = vmatpush1.bf16.msra.mxu0 0
        %3948 = vmatprep.subr.bf16.mxu0 0
        %3949 = vmatpush1.bf16.msra.mxu0 0
        %3950 = vmatprep.subr.bf16.mxu0 0
        %3951 = vmatpush1.bf16.msra.mxu0 0
        %3952 = vmatprep.subr.bf16.mxu0 0
        %3953 = vmatpush1.bf16.msra.mxu0 0
        %3954 = vmatprep.subr.bf16.mxu0 0
        %3955 = vmatpush1.bf16.msra.mxu0 0
        %3956 = vmatprep.subr.bf16.mxu0 0
        %3957 = vmatpush1.bf16.msra.mxu0 0
        %3958 = vmatprep.subr.bf16.mxu0 0
        %3959 = vmatpush1.bf16.msra.mxu0 0
        %3960 = vmatprep.subr.bf16.mxu0 0
        %3961 = vmatpush1.bf16.msra.mxu0 0
        %3962 = vmatprep.subr.bf16.mxu0 0
        %3963 = vmatpush1.bf16.msra.mxu0 0
        %3964 = vmatprep.mubr.bf16.mxu0 0
        %3965 = vmatmul.mubr.bf16.gmra.mrb[0].mxu0 %v1034
        %v3966 = vpop.f32.mrb[0].mxu0
        %v3967 = vadd.f32 0.0, %v3966
        %v3968 = vpop.f32.mrb[0].mxu0
        %v3969 = vpop.f32.mrb[0].mxu0
        %v3970 = vpop.f32.mrb[0].mxu0
        %3971 = vdwg.mxu0
        %v3972 = vadd.f32 %v3926, %v3967
        %p3973 = scmp.lt.s32.totalorder %s2868, 8
        %s3974 = scalar_select %p3973, 1, 0
        %s3975 = scvt.s32.f32 %s3974
        %v3976 = vsel %vm1083, %v3972, 0.0
        %3977 = vadd.xlane.f32.xlu0 %v3976
        %v3978 = vpop.xlane.xlu0 %3977
        %v3979 = vstv %s3975
        %v3980 = vmul.f32 %v3979, %v3978
        %v3981 = vadd.f32 %v3258, %v3980
        %v3982 = vmul.f32 %v3972, %v3972
        %v3983 = vsel %vm1083, %v3982, 0.0
        %3984 = vadd.xlane.f32.xlu0 %v3983
        %v3985 = vpop.xlane.xlu0 %3984
        %v3986 = vmul.f32 %v3979, %v3985
        %v3987 = vadd.f32 %v3264, %v3986
        %3988 = vmatprep.subr.bf16.mxu0 0
        %3989 = vmatpush1.bf16.msra.mxu0 %v3646
        %3990 = vmatprep.subr.bf16.mxu0 0
        %3991 = vmatpush1.bf16.msra.mxu0 0
        %3992 = vmatprep.subr.bf16.mxu0 0
        %3993 = vmatpush1.bf16.msra.mxu0 0
        %3994 = vmatprep.subr.bf16.mxu0 0
        %3995 = vmatpush1.bf16.msra.mxu0 0
        %3996 = vmatprep.subr.bf16.mxu0 0
        %3997 = vmatpush1.bf16.msra.mxu0 0
        %3998 = vmatprep.subr.bf16.mxu0 0
        %3999 = vmatpush1.bf16.msra.mxu0 0
        %4000 = vmatprep.subr.bf16.mxu0 0
        %4001 = vmatpush1.bf16.msra.mxu0 0
        %4002 = vmatprep.subr.bf16.mxu0 0
        %4003 = vmatpush1.bf16.msra.mxu0 0
        %4004 = vmatprep.subr.bf16.mxu0 0
        %4005 = vmatpush1.bf16.msra.mxu0 0
        %4006 = vmatprep.subr.bf16.mxu0 0
        %4007 = vmatpush1.bf16.msra.mxu0 0
        %4008 = vmatprep.subr.bf16.mxu0 0
        %4009 = vmatpush1.bf16.msra.mxu0 0
        %4010 = vmatprep.subr.bf16.mxu0 0
        %4011 = vmatpush1.bf16.msra.mxu0 0
        %4012 = vmatprep.subr.bf16.mxu0 0
        %4013 = vmatpush1.bf16.msra.mxu0 0
        %4014 = vmatprep.subr.bf16.mxu0 0
        %4015 = vmatpush1.bf16.msra.mxu0 0
        %4016 = vmatprep.subr.bf16.mxu0 0
        %4017 = vmatpush1.bf16.msra.mxu0 0
        %4018 = vmatprep.subr.bf16.mxu0 0
        %4019 = vmatpush1.bf16.msra.mxu0 0
        %4020 = vmatprep.mubr.bf16.mxu0 0
        %4021 = vmatmul.mubr.bf16.gmra.mrb[0].mxu0 %v252
        %v4022 = vpop.f32.mrb[0].mxu0
        %v4023 = vadd.f32 0.0, %v4022
        %v4024 = vpop.f32.mrb[0].mxu0
        %v4025 = vpop.f32.mrb[0].mxu0
        %v4026 = vpop.f32.mrb[0].mxu0
        %4027 = vdwg.mxu0
        %4028 = vmatprep.subr.bf16.mxu0 0
        %4029 = vmatpush1.bf16.msra.mxu0 %v3597
        %4030 = vmatprep.subr.bf16.mxu0 0
        %4031 = vmatpush1.bf16.msra.mxu0 0
        %4032 = vmatprep.subr.bf16.mxu0 0
        %4033 = vmatpush1.bf16.msra.mxu0 0
        %4034 = vmatprep.subr.bf16.mxu0 0
        %4035 = vmatpush1.bf16.msra.mxu0 0
        %4036 = vmatprep.subr.bf16.mxu0 0
        %4037 = vmatpush1.bf16.msra.mxu0 0
        %4038 = vmatprep.subr.bf16.mxu0 0
        %4039 = vmatpush1.bf16.msra.mxu0 0
        %4040 = vmatprep.subr.bf16.mxu0 0
        %4041 = vmatpush1.bf16.msra.mxu0 0
        %4042 = vmatprep.subr.bf16.mxu0 0
        %4043 = vmatpush1.bf16.msra.mxu0 0
        %4044 = vmatprep.subr.bf16.mxu0 0
        %4045 = vmatpush1.bf16.msra.mxu0 0
        %4046 = vmatprep.subr.bf16.mxu0 0
        %4047 = vmatpush1.bf16.msra.mxu0 0
        %4048 = vmatprep.subr.bf16.mxu0 0
        %4049 = vmatpush1.bf16.msra.mxu0 0
        %4050 = vmatprep.subr.bf16.mxu0 0
        %4051 = vmatpush1.bf16.msra.mxu0 0
        %4052 = vmatprep.subr.bf16.mxu0 0
        %4053 = vmatpush1.bf16.msra.mxu0 0
        %4054 = vmatprep.subr.bf16.mxu0 0
        %4055 = vmatpush1.bf16.msra.mxu0 0
        %4056 = vmatprep.subr.bf16.mxu0 0
        %4057 = vmatpush1.bf16.msra.mxu0 0
        %4058 = vmatprep.subr.bf16.mxu0 0
        %4059 = vmatpush1.bf16.msra.mxu0 0
        %4060 = vmatprep.mubr.bf16.mxu0 0
        %4061 = vmatmul.mubr.bf16.gmra.mrb[0].mxu0 %v299
        %v4062 = vpop.f32.mrb[0].mxu0
        %v4063 = vadd.f32 %v4023, %v4062
        %v4064 = vpop.f32.mrb[0].mxu0
        %v4065 = vpop.f32.mrb[0].mxu0
        %v4066 = vpop.f32.mrb[0].mxu0
        %4067 = vdwg.mxu0
        %4068 = vmatprep.subr.bf16.mxu0 0
        %4069 = vmatpush1.bf16.msra.mxu0 %v3695
        %4070 = vmatprep.subr.bf16.mxu0 0
        %4071 = vmatpush1.bf16.msra.mxu0 0
        %4072 = vmatprep.subr.bf16.mxu0 0
        %4073 = vmatpush1.bf16.msra.mxu0 0
        %4074 = vmatprep.subr.bf16.mxu0 0
        %4075 = vmatpush1.bf16.msra.mxu0 0
        %4076 = vmatprep.subr.bf16.mxu0 0
        %4077 = vmatpush1.bf16.msra.mxu0 0
        %4078 = vmatprep.subr.bf16.mxu0 0
        %4079 = vmatpush1.bf16.msra.mxu0 0
        %4080 = vmatprep.subr.bf16.mxu0 0
        %4081 = vmatpush1.bf16.msra.mxu0 0
        %4082 = vmatprep.subr.bf16.mxu0 0
        %4083 = vmatpush1.bf16.msra.mxu0 0
        %4084 = vmatprep.subr.bf16.mxu0 0
        %4085 = vmatpush1.bf16.msra.mxu0 0
        %4086 = vmatprep.subr.bf16.mxu0 0
        %4087 = vmatpush1.bf16.msra.mxu0 0
        %4088 = vmatprep.subr.bf16.mxu0 0
        %4089 = vmatpush1.bf16.msra.mxu0 0
        %4090 = vmatprep.subr.bf16.mxu0 0
        %4091 = vmatpush1.bf16.msra.mxu0 0
        %4092 = vmatprep.subr.bf16.mxu0 0
        %4093 = vmatpush1.bf16.msra.mxu0 0
        %4094 = vmatprep.subr.bf16.mxu0 0
        %4095 = vmatpush1.bf16.msra.mxu0 0
        %4096 = vmatprep.subr.bf16.mxu0 0
        %4097 = vmatpush1.bf16.msra.mxu0 0
        %4098 = vmatprep.subr.bf16.mxu0 0
        %4099 = vmatpush1.bf16.msra.mxu0 0
        %4100 = vmatprep.mubr.bf16.mxu0 0
        %4101 = vmatmul.mubr.bf16.gmra.mrb[0].mxu0 %v352
        %v4102 = vpop.f32.mrb[0].mxu0
        %v4103 = vadd.f32 0.0, %v4102
        %v4104 = vpop.f32.mrb[0].mxu0
        %v4105 = vpop.f32.mrb[0].mxu0
        %v4106 = vpop.f32.mrb[0].mxu0
        %4107 = vdwg.mxu0
        %v4108 = vadd.f32 %v4063, %v4103
        %4109 = vmatprep.subr.bf16.mxu0 0
        %4110 = vmatpush1.bf16.msra.mxu0 %v3741
        %4111 = vmatprep.subr.bf16.mxu0 0
        %4112 = vmatpush1.bf16.msra.mxu0 0
        %4113 = vmatprep.subr.bf16.mxu0 0
        %4114 = vmatpush1.bf16.msra.mxu0 0
        %4115 = vmatprep.subr.bf16.mxu0 0
        %4116 = vmatpush1.bf16.msra.mxu0 0
        %4117 = vmatprep.subr.bf16.mxu0 0
        %4118 = vmatpush1.bf16.msra.mxu0 0
        %4119 = vmatprep.subr.bf16.mxu0 0
        %4120 = vmatpush1.bf16.msra.mxu0 0
        %4121 = vmatprep.subr.bf16.mxu0 0
        %4122 = vmatpush1.bf16.msra.mxu0 0
        %4123 = vmatprep.subr.bf16.mxu0 0
        %4124 = vmatpush1.bf16.msra.mxu0 0
        %4125 = vmatprep.subr.bf16.mxu0 0
        %4126 = vmatpush1.bf16.msra.mxu0 0
        %4127 = vmatprep.subr.bf16.mxu0 0
        %4128 = vmatpush1.bf16.msra.mxu0 0
        %4129 = vmatprep.subr.bf16.mxu0 0
        %4130 = vmatpush1.bf16.msra.mxu0 0
        %4131 = vmatprep.subr.bf16.mxu0 0
        %4132 = vmatpush1.bf16.msra.mxu0 0
        %4133 = vmatprep.subr.bf16.mxu0 0
        %4134 = vmatpush1.bf16.msra.mxu0 0
        %4135 = vmatprep.subr.bf16.mxu0 0
        %4136 = vmatpush1.bf16.msra.mxu0 0
        %4137 = vmatprep.subr.bf16.mxu0 0
        %4138 = vmatpush1.bf16.msra.mxu0 0
        %4139 = vmatprep.subr.bf16.mxu0 0
        %4140 = vmatpush1.bf16.msra.mxu0 0
        %4141 = vmatprep.mubr.bf16.mxu0 0
        %4142 = vmatmul.mubr.bf16.gmra.mrb[0].mxu0 %v403
        %v4143 = vpop.f32.mrb[0].mxu0
        %v4144 = vadd.f32 0.0, %v4143
        %v4145 = vpop.f32.mrb[0].mxu0
        %v4146 = vpop.f32.mrb[0].mxu0
        %v4147 = vpop.f32.mrb[0].mxu0
        %4148 = vdwg.mxu0
        %v4149 = vadd.f32 %v4108, %v4144
        %4150 = vmatprep.subr.bf16.mxu0 0
        %4151 = vmatpush1.bf16.msra.mxu0 %v3786
        %4152 = vmatprep.subr.bf16.mxu0 0
        %4153 = vmatpush1.bf16.msra.mxu0 0
        %4154 = vmatprep.subr.bf16.mxu0 0
        %4155 = vmatpush1.bf16.msra.mxu0 0
        %4156 = vmatprep.subr.bf16.mxu0 0
        %4157 = vmatpush1.bf16.msra.mxu0 0
        %4158 = vmatprep.subr.bf16.mxu0 0
        %4159 = vmatpush1.bf16.msra.mxu0 0
        %4160 = vmatprep.subr.bf16.mxu0 0
        %4161 = vmatpush1.bf16.msra.mxu0 0
        %4162 = vmatprep.subr.bf16.mxu0 0
        %4163 = vmatpush1.bf16.msra.mxu0 0
        %4164 = vmatprep.subr.bf16.mxu0 0
        %4165 = vmatpush1.bf16.msra.mxu0 0
        %4166 = vmatprep.subr.bf16.mxu0 0
        %4167 = vmatpush1.bf16.msra.mxu0 0
        %4168 = vmatprep.subr.bf16.mxu0 0
        %4169 = vmatpush1.bf16.msra.mxu0 0
        %4170 = vmatprep.subr.bf16.mxu0 0
        %4171 = vmatpush1.bf16.msra.mxu0 0
        %4172 = vmatprep.subr.bf16.mxu0 0
        %4173 = vmatpush1.bf16.msra.mxu0 0
        %4174 = vmatprep.subr.bf16.mxu0 0
        %4175 = vmatpush1.bf16.msra.mxu0 0
        %4176 = vmatprep.subr.bf16.mxu0 0
        %4177 = vmatpush1.bf16.msra.mxu0 0
        %4178 = vmatprep.subr.bf16.mxu0 0
        %4179 = vmatpush1.bf16.msra.mxu0 0
        %4180 = vmatprep.subr.bf16.mxu0 0
        %4181 = vmatpush1.bf16.msra.mxu0 0
        %4182 = vmatprep.mubr.bf16.mxu0 0
        %4183 = vmatmul.mubr.bf16.gmra.mrb[0].mxu0 %v453
        %v4184 = vpop.f32.mrb[0].mxu0
        %v4185 = vadd.f32 0.0, %v4184
        %v4186 = vpop.f32.mrb[0].mxu0
        %v4187 = vpop.f32.mrb[0].mxu0
        %v4188 = vpop.f32.mrb[0].mxu0
        %4189 = vdwg.mxu0
        %v4190 = vadd.f32 %v4149, %v4185
        %4191 = vmatprep.subr.bf16.mxu0 0
        %4192 = vmatpush1.bf16.msra.mxu0 %v3835
        %4193 = vmatprep.subr.bf16.mxu0 0
        %4194 = vmatpush1.bf16.msra.mxu0 0
        %4195 = vmatprep.subr.bf16.mxu0 0
        %4196 = vmatpush1.bf16.msra.mxu0 0
        %4197 = vmatprep.subr.bf16.mxu0 0
        %4198 = vmatpush1.bf16.msra.mxu0 0
        %4199 = vmatprep.subr.bf16.mxu0 0
        %4200 = vmatpush1.bf16.msra.mxu0 0
        %4201 = vmatprep.subr.bf16.mxu0 0
        %4202 = vmatpush1.bf16.msra.mxu0 0
        %4203 = vmatprep.subr.bf16.mxu0 0
        %4204 = vmatpush1.bf16.msra.mxu0 0
        %4205 = vmatprep.subr.bf16.mxu0 0
        %4206 = vmatpush1.bf16.msra.mxu0 0
        %4207 = vmatprep.subr.bf16.mxu0 0
        %4208 = vmatpush1.bf16.msra.mxu0 0
        %4209 = vmatprep.subr.bf16.mxu0 0
        %4210 = vmatpush1.bf16.msra.mxu0 0
        %4211 = vmatprep.subr.bf16.mxu0 0
        %4212 = vmatpush1.bf16.msra.mxu0 0
        %4213 = vmatprep.subr.bf16.mxu0 0
        %4214 = vmatpush1.bf16.msra.mxu0 0
        %4215 = vmatprep.subr.bf16.mxu0 0
        %4216 = vmatpush1.bf16.msra.mxu0 0
        %4217 = vmatprep.subr.bf16.mxu0 0
        %4218 = vmatpush1.bf16.msra.mxu0 0
        %4219 = vmatprep.subr.bf16.mxu0 0
        %4220 = vmatpush1.bf16.msra.mxu0 0
        %4221 = vmatprep.subr.bf16.mxu0 0
        %4222 = vmatpush1.bf16.msra.mxu0 0
        %4223 = vmatprep.mubr.bf16.mxu0 0
        %4224 = vmatmul.mubr.bf16.gmra.mrb[0].mxu0 %v507
        %v4225 = vpop.f32.mrb[0].mxu0
        %v4226 = vadd.f32 0.0, %v4225
        %v4227 = vpop.f32.mrb[0].mxu0
        %v4228 = vpop.f32.mrb[0].mxu0
        %v4229 = vpop.f32.mrb[0].mxu0
        %4230 = vdwg.mxu0
        %v4231 = vadd.f32 %v4190, %v4226
        %4232 = vmatprep.subr.bf16.mxu0 0
        %4233 = vmatpush1.bf16.msra.mxu0 %v3884
        %4234 = vmatprep.subr.bf16.mxu0 0
        %4235 = vmatpush1.bf16.msra.mxu0 0
        %4236 = vmatprep.subr.bf16.mxu0 0
        %4237 = vmatpush1.bf16.msra.mxu0 0
        %4238 = vmatprep.subr.bf16.mxu0 0
        %4239 = vmatpush1.bf16.msra.mxu0 0
        %4240 = vmatprep.subr.bf16.mxu0 0
        %4241 = vmatpush1.bf16.msra.mxu0 0
        %4242 = vmatprep.subr.bf16.mxu0 0
        %4243 = vmatpush1.bf16.msra.mxu0 0
        %4244 = vmatprep.subr.bf16.mxu0 0
        %4245 = vmatpush1.bf16.msra.mxu0 0
        %4246 = vmatprep.subr.bf16.mxu0 0
        %4247 = vmatpush1.bf16.msra.mxu0 0
        %4248 = vmatprep.subr.bf16.mxu0 0
        %4249 = vmatpush1.bf16.msra.mxu0 0
        %4250 = vmatprep.subr.bf16.mxu0 0
        %4251 = vmatpush1.bf16.msra.mxu0 0
        %4252 = vmatprep.subr.bf16.mxu0 0
        %4253 = vmatpush1.bf16.msra.mxu0 0
        %4254 = vmatprep.subr.bf16.mxu0 0
        %4255 = vmatpush1.bf16.msra.mxu0 0
        %4256 = vmatprep.subr.bf16.mxu0 0
        %4257 = vmatpush1.bf16.msra.mxu0 0
        %4258 = vmatprep.subr.bf16.mxu0 0
        %4259 = vmatpush1.bf16.msra.mxu0 0
        %4260 = vmatprep.subr.bf16.mxu0 0
        %4261 = vmatpush1.bf16.msra.mxu0 0
        %4262 = vmatprep.subr.bf16.mxu0 0
        %4263 = vmatpush1.bf16.msra.mxu0 0
        %4264 = vmatprep.mubr.bf16.mxu0 0
        %4265 = vmatmul.mubr.bf16.gmra.mrb[0].mxu0 %v561
        %v4266 = vpop.f32.mrb[0].mxu0
        %v4267 = vadd.f32 0.0, %v4266
        %v4268 = vpop.f32.mrb[0].mxu0
        %v4269 = vpop.f32.mrb[0].mxu0
        %v4270 = vpop.f32.mrb[0].mxu0
        %4271 = vdwg.mxu0
        %v4272 = vadd.f32 %v4231, %v4267
        %4273 = vmatprep.subr.bf16.mxu0 0
        %4274 = vmatpush1.bf16.msra.mxu0 %v3930
        %4275 = vmatprep.subr.bf16.mxu0 0
        %4276 = vmatpush1.bf16.msra.mxu0 0
        %4277 = vmatprep.subr.bf16.mxu0 0
        %4278 = vmatpush1.bf16.msra.mxu0 0
        %4279 = vmatprep.subr.bf16.mxu0 0
        %4280 = vmatpush1.bf16.msra.mxu0 0
        %4281 = vmatprep.subr.bf16.mxu0 0
        %4282 = vmatpush1.bf16.msra.mxu0 0
        %4283 = vmatprep.subr.bf16.mxu0 0
        %4284 = vmatpush1.bf16.msra.mxu0 0
        %4285 = vmatprep.subr.bf16.mxu0 0
        %4286 = vmatpush1.bf16.msra.mxu0 0
        %4287 = vmatprep.subr.bf16.mxu0 0
        %4288 = vmatpush1.bf16.msra.mxu0 0
        %4289 = vmatprep.subr.bf16.mxu0 0
        %4290 = vmatpush1.bf16.msra.mxu0 0
        %4291 = vmatprep.subr.bf16.mxu0 0
        %4292 = vmatpush1.bf16.msra.mxu0 0
        %4293 = vmatprep.subr.bf16.mxu0 0
        %4294 = vmatpush1.bf16.msra.mxu0 0
        %4295 = vmatprep.subr.bf16.mxu0 0
        %4296 = vmatpush1.bf16.msra.mxu0 0
        %4297 = vmatprep.subr.bf16.mxu0 0
        %4298 = vmatpush1.bf16.msra.mxu0 0
        %4299 = vmatprep.subr.bf16.mxu0 0
        %4300 = vmatpush1.bf16.msra.mxu0 0
        %4301 = vmatprep.subr.bf16.mxu0 0
        %4302 = vmatpush1.bf16.msra.mxu0 0
        %4303 = vmatprep.subr.bf16.mxu0 0
        %4304 = vmatpush1.bf16.msra.mxu0 0
        %4305 = vmatprep.mubr.bf16.mxu0 0
        %4306 = vmatmul.mubr.bf16.gmra.mrb[0].mxu0 %v612
        %v4307 = vpop.f32.mrb[0].mxu0
        %v4308 = vadd.f32 0.0, %v4307
        %v4309 = vpop.f32.mrb[0].mxu0
        %v4310 = vpop.f32.mrb[0].mxu0
        %v4311 = vpop.f32.mrb[0].mxu0
        %4312 = vdwg.mxu0
        %v4313 = vadd.f32 %v4272, %v4308
        %s4314 = sadd.s32 %s237, 6
        %s4315 = smul.u32 %s4314, 2
        %s4316 = smul.addr %s4315, 4
        %s4317 = scalar_lea.vmem %s220, %s4316
        %v4318 = vld [vmem:[%s4317] sm:$0x3]
        %v4320 = vsel %vm254, %v4318, 0
        %4322 = vmatprep.subr.bf16.mxu0 0
        %4323 = vmatpush1.bf16.msra.mxu0 %v4320
        %4324 = vmatprep.subr.bf16.mxu0 0
        %4325 = vmatpush1.bf16.msra.mxu0 0
        %4326 = vmatprep.subr.bf16.mxu0 0
        %4327 = vmatpush1.bf16.msra.mxu0 0
        %4328 = vmatprep.subr.bf16.mxu0 0
        %4329 = vmatpush1.bf16.msra.mxu0 0
        %4330 = vmatprep.subr.bf16.mxu0 0
        %4331 = vmatpush1.bf16.msra.mxu0 0
        %4332 = vmatprep.subr.bf16.mxu0 0
        %4333 = vmatpush1.bf16.msra.mxu0 0
        %4334 = vmatprep.subr.bf16.mxu0 0
        %4335 = vmatpush1.bf16.msra.mxu0 0
        %4336 = vmatprep.subr.bf16.mxu0 0
        %4337 = vmatpush1.bf16.msra.mxu0 0
        %4338 = vmatprep.subr.bf16.mxu0 0
        %4339 = vmatpush1.bf16.msra.mxu0 0
        %4340 = vmatprep.subr.bf16.mxu0 0
        %4341 = vmatpush1.bf16.msra.mxu0 0
        %4342 = vmatprep.subr.bf16.mxu0 0
        %4343 = vmatpush1.bf16.msra.mxu0 0
        %4344 = vmatprep.subr.bf16.mxu0 0
        %4345 = vmatpush1.bf16.msra.mxu0 0
        %4346 = vmatprep.subr.bf16.mxu0 0
        %4347 = vmatpush1.bf16.msra.mxu0 0
        %4348 = vmatprep.subr.bf16.mxu0 0
        %4349 = vmatpush1.bf16.msra.mxu0 0
        %4350 = vmatprep.subr.bf16.mxu0 0
        %4351 = vmatpush1.bf16.msra.mxu0 0
        %4352 = vmatprep.subr.bf16.mxu0 0
        %4353 = vmatpush1.bf16.msra.mxu0 0
        %4354 = vmatprep.mubr.bf16.mxu0 0
        %4355 = vmatmul.mubr.bf16.gmra.mrb[0].mxu0 %v666
        %v4356 = vpop.f32.mrb[0].mxu0
        %v4357 = vadd.f32 0.0, %v4356
        %v4358 = vpop.f32.mrb[0].mxu0
        %v4359 = vpop.f32.mrb[0].mxu0
        %v4360 = vpop.f32.mrb[0].mxu0
        %4361 = vdwg.mxu0
        %v4362 = vadd.f32 %v4313, %v4357
        %v4363 = vld [vmem:[%s4317] sm:$0xc]
        %v4365 = vunpack.c.l.b16 %v4363
        %v4366 = vpack.c.b16 %v4365, %v4365
        %v4367 = vrot.slane %v4366, 2
        %v4369 = vsel %vm254, %v4367, 0
        %4371 = vmatprep.subr.bf16.mxu0 0
        %4372 = vmatpush1.bf16.msra.mxu0 %v4369
        %4373 = vmatprep.subr.bf16.mxu0 0
        %4374 = vmatpush1.bf16.msra.mxu0 0
        %4375 = vmatprep.subr.bf16.mxu0 0
        %4376 = vmatpush1.bf16.msra.mxu0 0
        %4377 = vmatprep.subr.bf16.mxu0 0
        %4378 = vmatpush1.bf16.msra.mxu0 0
        %4379 = vmatprep.subr.bf16.mxu0 0
        %4380 = vmatpush1.bf16.msra.mxu0 0
        %4381 = vmatprep.subr.bf16.mxu0 0
        %4382 = vmatpush1.bf16.msra.mxu0 0
        %4383 = vmatprep.subr.bf16.mxu0 0
        %4384 = vmatpush1.bf16.msra.mxu0 0
        %4385 = vmatprep.subr.bf16.mxu0 0
        %4386 = vmatpush1.bf16.msra.mxu0 0
        %4387 = vmatprep.subr.bf16.mxu0 0
        %4388 = vmatpush1.bf16.msra.mxu0 0
        %4389 = vmatprep.subr.bf16.mxu0 0
        %4390 = vmatpush1.bf16.msra.mxu0 0
        %4391 = vmatprep.subr.bf16.mxu0 0
        %4392 = vmatpush1.bf16.msra.mxu0 0
        %4393 = vmatprep.subr.bf16.mxu0 0
        %4394 = vmatpush1.bf16.msra.mxu0 0
        %4395 = vmatprep.subr.bf16.mxu0 0
        %4396 = vmatpush1.bf16.msra.mxu0 0
        %4397 = vmatprep.subr.bf16.mxu0 0
        %4398 = vmatpush1.bf16.msra.mxu0 0
        %4399 = vmatprep.subr.bf16.mxu0 0
        %4400 = vmatpush1.bf16.msra.mxu0 0
        %4401 = vmatprep.subr.bf16.mxu0 0
        %4402 = vmatpush1.bf16.msra.mxu0 0
        %4403 = vmatprep.mubr.bf16.mxu0 0
        %4404 = vmatmul.mubr.bf16.gmra.mrb[0].mxu0 %v720
        %v4405 = vpop.f32.mrb[0].mxu0
        %v4406 = vadd.f32 0.0, %v4405
        %v4407 = vpop.f32.mrb[0].mxu0
        %v4408 = vpop.f32.mrb[0].mxu0
        %v4409 = vpop.f32.mrb[0].mxu0
        %4410 = vdwg.mxu0
        %v4411 = vadd.f32 %v4362, %v4406
        %v4413 = vunpack.c.l.b16 %v4318
        %v4414 = vpack.c.b16 %v4413, %v4413
        %4415 = vrot.lane.b32.xlu0 %v4414, 127
        %v4416 = vpop.permute.xlu0 %4415
        %v4418 = vsel %vm254, %v4416, 0
        %4420 = vmatprep.subr.bf16.mxu0 0
        %4421 = vmatpush1.bf16.msra.mxu0 %v4418
        %4422 = vmatprep.subr.bf16.mxu0 0
        %4423 = vmatpush1.bf16.msra.mxu0 0
        %4424 = vmatprep.subr.bf16.mxu0 0
        %4425 = vmatpush1.bf16.msra.mxu0 0
        %4426 = vmatprep.subr.bf16.mxu0 0
        %4427 = vmatpush1.bf16.msra.mxu0 0
        %4428 = vmatprep.subr.bf16.mxu0 0
        %4429 = vmatpush1.bf16.msra.mxu0 0
        %4430 = vmatprep.subr.bf16.mxu0 0
        %4431 = vmatpush1.bf16.msra.mxu0 0
        %4432 = vmatprep.subr.bf16.mxu0 0
        %4433 = vmatpush1.bf16.msra.mxu0 0
        %4434 = vmatprep.subr.bf16.mxu0 0
        %4435 = vmatpush1.bf16.msra.mxu0 0
        %4436 = vmatprep.subr.bf16.mxu0 0
        %4437 = vmatpush1.bf16.msra.mxu0 0
        %4438 = vmatprep.subr.bf16.mxu0 0
        %4439 = vmatpush1.bf16.msra.mxu0 0
        %4440 = vmatprep.subr.bf16.mxu0 0
        %4441 = vmatpush1.bf16.msra.mxu0 0
        %4442 = vmatprep.subr.bf16.mxu0 0
        %4443 = vmatpush1.bf16.msra.mxu0 0
        %4444 = vmatprep.subr.bf16.mxu0 0
        %4445 = vmatpush1.bf16.msra.mxu0 0
        %4446 = vmatprep.subr.bf16.mxu0 0
        %4447 = vmatpush1.bf16.msra.mxu0 0
        %4448 = vmatprep.subr.bf16.mxu0 0
        %4449 = vmatpush1.bf16.msra.mxu0 0
        %4450 = vmatprep.subr.bf16.mxu0 0
        %4451 = vmatpush1.bf16.msra.mxu0 0
        %4452 = vmatprep.mubr.bf16.mxu0 0
        %4453 = vmatmul.mubr.bf16.gmra.mrb[0].mxu0 %v774
        %v4454 = vpop.f32.mrb[0].mxu0
        %v4455 = vadd.f32 0.0, %v4454
        %v4456 = vpop.f32.mrb[0].mxu0
        %v4457 = vpop.f32.mrb[0].mxu0
        %v4458 = vpop.f32.mrb[0].mxu0
        %4459 = vdwg.mxu0
        %v4460 = vadd.f32 %v4411, %v4455
        %4461 = vrot.lane.b32.xlu0 %v4367, 127
        %v4462 = vpop.permute.xlu0 %4461
        %v4464 = vsel %vm254, %v4462, 0
        %4466 = vmatprep.subr.bf16.mxu0 0
        %4467 = vmatpush1.bf16.msra.mxu0 %v4464
        %4468 = vmatprep.subr.bf16.mxu0 0
        %4469 = vmatpush1.bf16.msra.mxu0 0
        %4470 = vmatprep.subr.bf16.mxu0 0
        %4471 = vmatpush1.bf16.msra.mxu0 0
        %4472 = vmatprep.subr.bf16.mxu0 0
        %4473 = vmatpush1.bf16.msra.mxu0 0
        %4474 = vmatprep.subr.bf16.mxu0 0
        %4475 = vmatpush1.bf16.msra.mxu0 0
        %4476 = vmatprep.subr.bf16.mxu0 0
        %4477 = vmatpush1.bf16.msra.mxu0 0
        %4478 = vmatprep.subr.bf16.mxu0 0
        %4479 = vmatpush1.bf16.msra.mxu0 0
        %4480 = vmatprep.subr.bf16.mxu0 0
        %4481 = vmatpush1.bf16.msra.mxu0 0
        %4482 = vmatprep.subr.bf16.mxu0 0
        %4483 = vmatpush1.bf16.msra.mxu0 0
        %4484 = vmatprep.subr.bf16.mxu0 0
        %4485 = vmatpush1.bf16.msra.mxu0 0
        %4486 = vmatprep.subr.bf16.mxu0 0
        %4487 = vmatpush1.bf16.msra.mxu0 0
        %4488 = vmatprep.subr.bf16.mxu0 0
        %4489 = vmatpush1.bf16.msra.mxu0 0
        %4490 = vmatprep.subr.bf16.mxu0 0
        %4491 = vmatpush1.bf16.msra.mxu0 0
        %4492 = vmatprep.subr.bf16.mxu0 0
        %4493 = vmatpush1.bf16.msra.mxu0 0
        %4494 = vmatprep.subr.bf16.mxu0 0
        %4495 = vmatpush1.bf16.msra.mxu0 0
        %4496 = vmatprep.subr.bf16.mxu0 0
        %4497 = vmatpush1.bf16.msra.mxu0 0
        %4498 = vmatprep.mubr.bf16.mxu0 0
        %4499 = vmatmul.mubr.bf16.gmra.mrb[0].mxu0 %v825
        %v4500 = vpop.f32.mrb[0].mxu0
        %v4501 = vadd.f32 0.0, %v4500
        %v4502 = vpop.f32.mrb[0].mxu0
        %v4503 = vpop.f32.mrb[0].mxu0
        %v4504 = vpop.f32.mrb[0].mxu0
        %4505 = vdwg.mxu0
        %v4506 = vadd.f32 %v4460, %v4501
        %v4507 = vld [vmem:[%s4317 + $0x4] sm:$0x3]
        %v4509 = vsel %vm254, %v4507, 0
        %4511 = vmatprep.subr.bf16.mxu0 0
        %4512 = vmatpush1.bf16.msra.mxu0 %v4509
        %4513 = vmatprep.subr.bf16.mxu0 0
        %4514 = vmatpush1.bf16.msra.mxu0 0
        %4515 = vmatprep.subr.bf16.mxu0 0
        %4516 = vmatpush1.bf16.msra.mxu0 0
        %4517 = vmatprep.subr.bf16.mxu0 0
        %4518 = vmatpush1.bf16.msra.mxu0 0
        %4519 = vmatprep.subr.bf16.mxu0 0
        %4520 = vmatpush1.bf16.msra.mxu0 0
        %4521 = vmatprep.subr.bf16.mxu0 0
        %4522 = vmatpush1.bf16.msra.mxu0 0
        %4523 = vmatprep.subr.bf16.mxu0 0
        %4524 = vmatpush1.bf16.msra.mxu0 0
        %4525 = vmatprep.subr.bf16.mxu0 0
        %4526 = vmatpush1.bf16.msra.mxu0 0
        %4527 = vmatprep.subr.bf16.mxu0 0
        %4528 = vmatpush1.bf16.msra.mxu0 0
        %4529 = vmatprep.subr.bf16.mxu0 0
        %4530 = vmatpush1.bf16.msra.mxu0 0
        %4531 = vmatprep.subr.bf16.mxu0 0
        %4532 = vmatpush1.bf16.msra.mxu0 0
        %4533 = vmatprep.subr.bf16.mxu0 0
        %4534 = vmatpush1.bf16.msra.mxu0 0
        %4535 = vmatprep.subr.bf16.mxu0 0
        %4536 = vmatpush1.bf16.msra.mxu0 0
        %4537 = vmatprep.subr.bf16.mxu0 0
        %4538 = vmatpush1.bf16.msra.mxu0 0
        %4539 = vmatprep.subr.bf16.mxu0 0
        %4540 = vmatpush1.bf16.msra.mxu0 0
        %4541 = vmatprep.subr.bf16.mxu0 0
        %4542 = vmatpush1.bf16.msra.mxu0 0
        %4543 = vmatprep.mubr.bf16.mxu0 0
        %4544 = vmatmul.mubr.bf16.gmra.mrb[0].mxu0 %v875
        %v4545 = vpop.f32.mrb[0].mxu0
        %v4546 = vadd.f32 0.0, %v4545
        %v4547 = vpop.f32.mrb[0].mxu0
        %v4548 = vpop.f32.mrb[0].mxu0
        %v4549 = vpop.f32.mrb[0].mxu0
        %4550 = vdwg.mxu0
        %v4551 = vadd.f32 %v4506, %v4546
        %v4552 = vld [vmem:[%s4317 + $0x4] sm:$0xc]
        %v4554 = vunpack.c.l.b16 %v4552
        %v4555 = vpack.c.b16 %v4554, %v4554
        %v4556 = vrot.slane %v4555, 2
        %v4558 = vsel %vm254, %v4556, 0
        %4560 = vmatprep.subr.bf16.mxu0 0
        %4561 = vmatpush1.bf16.msra.mxu0 %v4558
        %4562 = vmatprep.subr.bf16.mxu0 0
        %4563 = vmatpush1.bf16.msra.mxu0 0
        %4564 = vmatprep.subr.bf16.mxu0 0
        %4565 = vmatpush1.bf16.msra.mxu0 0
        %4566 = vmatprep.subr.bf16.mxu0 0
        %4567 = vmatpush1.bf16.msra.mxu0 0
        %4568 = vmatprep.subr.bf16.mxu0 0
        %4569 = vmatpush1.bf16.msra.mxu0 0
        %4570 = vmatprep.subr.bf16.mxu0 0
        %4571 = vmatpush1.bf16.msra.mxu0 0
        %4572 = vmatprep.subr.bf16.mxu0 0
        %4573 = vmatpush1.bf16.msra.mxu0 0
        %4574 = vmatprep.subr.bf16.mxu0 0
        %4575 = vmatpush1.bf16.msra.mxu0 0
        %4576 = vmatprep.subr.bf16.mxu0 0
        %4577 = vmatpush1.bf16.msra.mxu0 0
        %4578 = vmatprep.subr.bf16.mxu0 0
        %4579 = vmatpush1.bf16.msra.mxu0 0
        %4580 = vmatprep.subr.bf16.mxu0 0
        %4581 = vmatpush1.bf16.msra.mxu0 0
        %4582 = vmatprep.subr.bf16.mxu0 0
        %4583 = vmatpush1.bf16.msra.mxu0 0
        %4584 = vmatprep.subr.bf16.mxu0 0
        %4585 = vmatpush1.bf16.msra.mxu0 0
        %4586 = vmatprep.subr.bf16.mxu0 0
        %4587 = vmatpush1.bf16.msra.mxu0 0
        %4588 = vmatprep.subr.bf16.mxu0 0
        %4589 = vmatpush1.bf16.msra.mxu0 0
        %4590 = vmatprep.subr.bf16.mxu0 0
        %4591 = vmatpush1.bf16.msra.mxu0 0
        %4592 = vmatprep.mubr.bf16.mxu0 0
        %4593 = vmatmul.mubr.bf16.gmra.mrb[0].mxu0 %v929
        %v4594 = vpop.f32.mrb[0].mxu0
        %v4595 = vadd.f32 0.0, %v4594
        %v4596 = vpop.f32.mrb[0].mxu0
        %v4597 = vpop.f32.mrb[0].mxu0
        %v4598 = vpop.f32.mrb[0].mxu0
        %4599 = vdwg.mxu0
        %v4600 = vadd.f32 %v4551, %v4595
        %v4602 = vunpack.c.l.b16 %v4507
        %v4603 = vpack.c.b16 %v4602, %v4602
        %4604 = vrot.lane.b32.xlu0 %v4603, 127
        %v4605 = vpop.permute.xlu0 %4604
        %v4607 = vsel %vm254, %v4605, 0
        %4609 = vmatprep.subr.bf16.mxu0 0
        %4610 = vmatpush1.bf16.msra.mxu0 %v4607
        %4611 = vmatprep.subr.bf16.mxu0 0
        %4612 = vmatpush1.bf16.msra.mxu0 0
        %4613 = vmatprep.subr.bf16.mxu0 0
        %4614 = vmatpush1.bf16.msra.mxu0 0
        %4615 = vmatprep.subr.bf16.mxu0 0
        %4616 = vmatpush1.bf16.msra.mxu0 0
        %4617 = vmatprep.subr.bf16.mxu0 0
        %4618 = vmatpush1.bf16.msra.mxu0 0
        %4619 = vmatprep.subr.bf16.mxu0 0
        %4620 = vmatpush1.bf16.msra.mxu0 0
        %4621 = vmatprep.subr.bf16.mxu0 0
        %4622 = vmatpush1.bf16.msra.mxu0 0
        %4623 = vmatprep.subr.bf16.mxu0 0
        %4624 = vmatpush1.bf16.msra.mxu0 0
        %4625 = vmatprep.subr.bf16.mxu0 0
        %4626 = vmatpush1.bf16.msra.mxu0 0
        %4627 = vmatprep.subr.bf16.mxu0 0
        %4628 = vmatpush1.bf16.msra.mxu0 0
        %4629 = vmatprep.subr.bf16.mxu0 0
        %4630 = vmatpush1.bf16.msra.mxu0 0
        %4631 = vmatprep.subr.bf16.mxu0 0
        %4632 = vmatpush1.bf16.msra.mxu0 0
        %4633 = vmatprep.subr.bf16.mxu0 0
        %4634 = vmatpush1.bf16.msra.mxu0 0
        %4635 = vmatprep.subr.bf16.mxu0 0
        %4636 = vmatpush1.bf16.msra.mxu0 0
        %4637 = vmatprep.subr.bf16.mxu0 0
        %4638 = vmatpush1.bf16.msra.mxu0 0
        %4639 = vmatprep.subr.bf16.mxu0 0
        %4640 = vmatpush1.bf16.msra.mxu0 0
        %4641 = vmatprep.mubr.bf16.mxu0 0
        %4642 = vmatmul.mubr.bf16.gmra.mrb[0].mxu0 %v983
        %v4643 = vpop.f32.mrb[0].mxu0
        %v4644 = vadd.f32 0.0, %v4643
        %v4645 = vpop.f32.mrb[0].mxu0
        %v4646 = vpop.f32.mrb[0].mxu0
        %v4647 = vpop.f32.mrb[0].mxu0
        %4648 = vdwg.mxu0
        %v4649 = vadd.f32 %v4600, %v4644
        %4650 = vrot.lane.b32.xlu0 %v4556, 127
        %v4651 = vpop.permute.xlu0 %4650
        %v4653 = vsel %vm254, %v4651, 0
        %4655 = vmatprep.subr.bf16.mxu0 0
        %4656 = vmatpush1.bf16.msra.mxu0 %v4653
        %4657 = vmatprep.subr.bf16.mxu0 0
        %4658 = vmatpush1.bf16.msra.mxu0 0
        %4659 = vmatprep.subr.bf16.mxu0 0
        %4660 = vmatpush1.bf16.msra.mxu0 0
        %4661 = vmatprep.subr.bf16.mxu0 0
        %4662 = vmatpush1.bf16.msra.mxu0 0
        %4663 = vmatprep.subr.bf16.mxu0 0
        %4664 = vmatpush1.bf16.msra.mxu0 0
        %4665 = vmatprep.subr.bf16.mxu0 0
        %4666 = vmatpush1.bf16.msra.mxu0 0
        %4667 = vmatprep.subr.bf16.mxu0 0
        %4668 = vmatpush1.bf16.msra.mxu0 0
        %4669 = vmatprep.subr.bf16.mxu0 0
        %4670 = vmatpush1.bf16.msra.mxu0 0
        %4671 = vmatprep.subr.bf16.mxu0 0
        %4672 = vmatpush1.bf16.msra.mxu0 0
        %4673 = vmatprep.subr.bf16.mxu0 0
        %4674 = vmatpush1.bf16.msra.mxu0 0
        %4675 = vmatprep.subr.bf16.mxu0 0
        %4676 = vmatpush1.bf16.msra.mxu0 0
        %4677 = vmatprep.subr.bf16.mxu0 0
        %4678 = vmatpush1.bf16.msra.mxu0 0
        %4679 = vmatprep.subr.bf16.mxu0 0
        %4680 = vmatpush1.bf16.msra.mxu0 0
        %4681 = vmatprep.subr.bf16.mxu0 0
        %4682 = vmatpush1.bf16.msra.mxu0 0
        %4683 = vmatprep.subr.bf16.mxu0 0
        %4684 = vmatpush1.bf16.msra.mxu0 0
        %4685 = vmatprep.subr.bf16.mxu0 0
        %4686 = vmatpush1.bf16.msra.mxu0 0
        %4687 = vmatprep.mubr.bf16.mxu0 0
        %4688 = vmatmul.mubr.bf16.gmra.mrb[0].mxu0 %v1034
        %v4689 = vpop.f32.mrb[0].mxu0
        %v4690 = vadd.f32 0.0, %v4689
        %v4691 = vpop.f32.mrb[0].mxu0
        %v4692 = vpop.f32.mrb[0].mxu0
        %v4693 = vpop.f32.mrb[0].mxu0
        %4694 = vdwg.mxu0
        %v4695 = vadd.f32 %v4649, %v4690
        %p4696 = scmp.lt.s32.totalorder %s3591, 8
        %s4697 = scalar_select %p4696, 1, 0
        %s4698 = scvt.s32.f32 %s4697
        %v4699 = vsel %vm1083, %v4695, 0.0
        %4700 = vadd.xlane.f32.xlu0 %v4699
        %v4701 = vpop.xlane.xlu0 %4700
        %v4702 = vstv %s4698
        %v4703 = vmul.f32 %v4702, %v4701
        %v4704 = vadd.f32 %v3981, %v4703
        %v4705 = vmul.f32 %v4695, %v4695
        %v4706 = vsel %vm1083, %v4705, 0.0
        %4707 = vadd.xlane.f32.xlu0 %v4706
        %v4708 = vpop.xlane.xlu0 %4707
        %v4709 = vmul.f32 %v4702, %v4708
        %v4710 = vadd.f32 %v3987, %v4709
        %4711 = vmatprep.subr.bf16.mxu0 0
        %4712 = vmatpush1.bf16.msra.mxu0 %v4369
        %4713 = vmatprep.subr.bf16.mxu0 0
        %4714 = vmatpush1.bf16.msra.mxu0 0
        %4715 = vmatprep.subr.bf16.mxu0 0
        %4716 = vmatpush1.bf16.msra.mxu0 0
        %4717 = vmatprep.subr.bf16.mxu0 0
        %4718 = vmatpush1.bf16.msra.mxu0 0
        %4719 = vmatprep.subr.bf16.mxu0 0
        %4720 = vmatpush1.bf16.msra.mxu0 0
        %4721 = vmatprep.subr.bf16.mxu0 0
        %4722 = vmatpush1.bf16.msra.mxu0 0
        %4723 = vmatprep.subr.bf16.mxu0 0
        %4724 = vmatpush1.bf16.msra.mxu0 0
        %4725 = vmatprep.subr.bf16.mxu0 0
        %4726 = vmatpush1.bf16.msra.mxu0 0
        %4727 = vmatprep.subr.bf16.mxu0 0
        %4728 = vmatpush1.bf16.msra.mxu0 0
        %4729 = vmatprep.subr.bf16.mxu0 0
        %4730 = vmatpush1.bf16.msra.mxu0 0
        %4731 = vmatprep.subr.bf16.mxu0 0
        %4732 = vmatpush1.bf16.msra.mxu0 0
        %4733 = vmatprep.subr.bf16.mxu0 0
        %4734 = vmatpush1.bf16.msra.mxu0 0
        %4735 = vmatprep.subr.bf16.mxu0 0
        %4736 = vmatpush1.bf16.msra.mxu0 0
        %4737 = vmatprep.subr.bf16.mxu0 0
        %4738 = vmatpush1.bf16.msra.mxu0 0
        %4739 = vmatprep.subr.bf16.mxu0 0
        %4740 = vmatpush1.bf16.msra.mxu0 0
        %4741 = vmatprep.subr.bf16.mxu0 0
        %4742 = vmatpush1.bf16.msra.mxu0 0
        %4743 = vmatprep.mubr.bf16.mxu0 0
        %4744 = vmatmul.mubr.bf16.gmra.mrb[0].mxu0 %v252
        %v4745 = vpop.f32.mrb[0].mxu0
        %v4746 = vadd.f32 0.0, %v4745
        %v4747 = vpop.f32.mrb[0].mxu0
        %v4748 = vpop.f32.mrb[0].mxu0
        %v4749 = vpop.f32.mrb[0].mxu0
        %4750 = vdwg.mxu0
        %4751 = vmatprep.subr.bf16.mxu0 0
        %4752 = vmatpush1.bf16.msra.mxu0 %v4320
        %4753 = vmatprep.subr.bf16.mxu0 0
        %4754 = vmatpush1.bf16.msra.mxu0 0
        %4755 = vmatprep.subr.bf16.mxu0 0
        %4756 = vmatpush1.bf16.msra.mxu0 0
        %4757 = vmatprep.subr.bf16.mxu0 0
        %4758 = vmatpush1.bf16.msra.mxu0 0
        %4759 = vmatprep.subr.bf16.mxu0 0
        %4760 = vmatpush1.bf16.msra.mxu0 0
        %4761 = vmatprep.subr.bf16.mxu0 0
        %4762 = vmatpush1.bf16.msra.mxu0 0
        %4763 = vmatprep.subr.bf16.mxu0 0
        %4764 = vmatpush1.bf16.msra.mxu0 0
        %4765 = vmatprep.subr.bf16.mxu0 0
        %4766 = vmatpush1.bf16.msra.mxu0 0
        %4767 = vmatprep.subr.bf16.mxu0 0
        %4768 = vmatpush1.bf16.msra.mxu0 0
        %4769 = vmatprep.subr.bf16.mxu0 0
        %4770 = vmatpush1.bf16.msra.mxu0 0
        %4771 = vmatprep.subr.bf16.mxu0 0
        %4772 = vmatpush1.bf16.msra.mxu0 0
        %4773 = vmatprep.subr.bf16.mxu0 0
        %4774 = vmatpush1.bf16.msra.mxu0 0
        %4775 = vmatprep.subr.bf16.mxu0 0
        %4776 = vmatpush1.bf16.msra.mxu0 0
        %4777 = vmatprep.subr.bf16.mxu0 0
        %4778 = vmatpush1.bf16.msra.mxu0 0
        %4779 = vmatprep.subr.bf16.mxu0 0
        %4780 = vmatpush1.bf16.msra.mxu0 0
        %4781 = vmatprep.subr.bf16.mxu0 0
        %4782 = vmatpush1.bf16.msra.mxu0 0
        %4783 = vmatprep.mubr.bf16.mxu0 0
        %4784 = vmatmul.mubr.bf16.gmra.mrb[0].mxu0 %v299
        %v4785 = vpop.f32.mrb[0].mxu0
        %v4786 = vadd.f32 %v4746, %v4785
        %v4787 = vpop.f32.mrb[0].mxu0
        %v4788 = vpop.f32.mrb[0].mxu0
        %v4789 = vpop.f32.mrb[0].mxu0
        %4790 = vdwg.mxu0
        %4791 = vmatprep.subr.bf16.mxu0 0
        %4792 = vmatpush1.bf16.msra.mxu0 %v4418
        %4793 = vmatprep.subr.bf16.mxu0 0
        %4794 = vmatpush1.bf16.msra.mxu0 0
        %4795 = vmatprep.subr.bf16.mxu0 0
        %4796 = vmatpush1.bf16.msra.mxu0 0
        %4797 = vmatprep.subr.bf16.mxu0 0
        %4798 = vmatpush1.bf16.msra.mxu0 0
        %4799 = vmatprep.subr.bf16.mxu0 0
        %4800 = vmatpush1.bf16.msra.mxu0 0
        %4801 = vmatprep.subr.bf16.mxu0 0
        %4802 = vmatpush1.bf16.msra.mxu0 0
        %4803 = vmatprep.subr.bf16.mxu0 0
        %4804 = vmatpush1.bf16.msra.mxu0 0
        %4805 = vmatprep.subr.bf16.mxu0 0
        %4806 = vmatpush1.bf16.msra.mxu0 0
        %4807 = vmatprep.subr.bf16.mxu0 0
        %4808 = vmatpush1.bf16.msra.mxu0 0
        %4809 = vmatprep.subr.bf16.mxu0 0
        %4810 = vmatpush1.bf16.msra.mxu0 0
        %4811 = vmatprep.subr.bf16.mxu0 0
        %4812 = vmatpush1.bf16.msra.mxu0 0
        %4813 = vmatprep.subr.bf16.mxu0 0
        %4814 = vmatpush1.bf16.msra.mxu0 0
        %4815 = vmatprep.subr.bf16.mxu0 0
        %4816 = vmatpush1.bf16.msra.mxu0 0
        %4817 = vmatprep.subr.bf16.mxu0 0
        %4818 = vmatpush1.bf16.msra.mxu0 0
        %4819 = vmatprep.subr.bf16.mxu0 0
        %4820 = vmatpush1.bf16.msra.mxu0 0
        %4821 = vmatprep.subr.bf16.mxu0 0
        %4822 = vmatpush1.bf16.msra.mxu0 0
        %4823 = vmatprep.mubr.bf16.mxu0 0
        %4824 = vmatmul.mubr.bf16.gmra.mrb[0].mxu0 %v352
        %v4825 = vpop.f32.mrb[0].mxu0
        %v4826 = vadd.f32 0.0, %v4825
        %v4827 = vpop.f32.mrb[0].mxu0
        %v4828 = vpop.f32.mrb[0].mxu0
        %v4829 = vpop.f32.mrb[0].mxu0
        %4830 = vdwg.mxu0
        %v4831 = vadd.f32 %v4786, %v4826
        %4832 = vmatprep.subr.bf16.mxu0 0
        %4833 = vmatpush1.bf16.msra.mxu0 %v4464
        %4834 = vmatprep.subr.bf16.mxu0 0
        %4835 = vmatpush1.bf16.msra.mxu0 0
        %4836 = vmatprep.subr.bf16.mxu0 0
        %4837 = vmatpush1.bf16.msra.mxu0 0
        %4838 = vmatprep.subr.bf16.mxu0 0
        %4839 = vmatpush1.bf16.msra.mxu0 0
        %4840 = vmatprep.subr.bf16.mxu0 0
        %4841 = vmatpush1.bf16.msra.mxu0 0
        %4842 = vmatprep.subr.bf16.mxu0 0
        %4843 = vmatpush1.bf16.msra.mxu0 0
        %4844 = vmatprep.subr.bf16.mxu0 0
        %4845 = vmatpush1.bf16.msra.mxu0 0
        %4846 = vmatprep.subr.bf16.mxu0 0
        %4847 = vmatpush1.bf16.msra.mxu0 0
        %4848 = vmatprep.subr.bf16.mxu0 0
        %4849 = vmatpush1.bf16.msra.mxu0 0
        %4850 = vmatprep.subr.bf16.mxu0 0
        %4851 = vmatpush1.bf16.msra.mxu0 0
        %4852 = vmatprep.subr.bf16.mxu0 0
        %4853 = vmatpush1.bf16.msra.mxu0 0
        %4854 = vmatprep.subr.bf16.mxu0 0
        %4855 = vmatpush1.bf16.msra.mxu0 0
        %4856 = vmatprep.subr.bf16.mxu0 0
        %4857 = vmatpush1.bf16.msra.mxu0 0
        %4858 = vmatprep.subr.bf16.mxu0 0
        %4859 = vmatpush1.bf16.msra.mxu0 0
        %4860 = vmatprep.subr.bf16.mxu0 0
        %4861 = vmatpush1.bf16.msra.mxu0 0
        %4862 = vmatprep.subr.bf16.mxu0 0
        %4863 = vmatpush1.bf16.msra.mxu0 0
        %4864 = vmatprep.mubr.bf16.mxu0 0
        %4865 = vmatmul.mubr.bf16.gmra.mrb[0].mxu0 %v403
        %v4866 = vpop.f32.mrb[0].mxu0
        %v4867 = vadd.f32 0.0, %v4866
        %v4868 = vpop.f32.mrb[0].mxu0
        %v4869 = vpop.f32.mrb[0].mxu0
        %v4870 = vpop.f32.mrb[0].mxu0
        %4871 = vdwg.mxu0
        %v4872 = vadd.f32 %v4831, %v4867
        %4873 = vmatprep.subr.bf16.mxu0 0
        %4874 = vmatpush1.bf16.msra.mxu0 %v4509
        %4875 = vmatprep.subr.bf16.mxu0 0
        %4876 = vmatpush1.bf16.msra.mxu0 0
        %4877 = vmatprep.subr.bf16.mxu0 0
        %4878 = vmatpush1.bf16.msra.mxu0 0
        %4879 = vmatprep.subr.bf16.mxu0 0
        %4880 = vmatpush1.bf16.msra.mxu0 0
        %4881 = vmatprep.subr.bf16.mxu0 0
        %4882 = vmatpush1.bf16.msra.mxu0 0
        %4883 = vmatprep.subr.bf16.mxu0 0
        %4884 = vmatpush1.bf16.msra.mxu0 0
        %4885 = vmatprep.subr.bf16.mxu0 0
        %4886 = vmatpush1.bf16.msra.mxu0 0
        %4887 = vmatprep.subr.bf16.mxu0 0
        %4888 = vmatpush1.bf16.msra.mxu0 0
        %4889 = vmatprep.subr.bf16.mxu0 0
        %4890 = vmatpush1.bf16.msra.mxu0 0
        %4891 = vmatprep.subr.bf16.mxu0 0
        %4892 = vmatpush1.bf16.msra.mxu0 0
        %4893 = vmatprep.subr.bf16.mxu0 0
        %4894 = vmatpush1.bf16.msra.mxu0 0
        %4895 = vmatprep.subr.bf16.mxu0 0
        %4896 = vmatpush1.bf16.msra.mxu0 0
        %4897 = vmatprep.subr.bf16.mxu0 0
        %4898 = vmatpush1.bf16.msra.mxu0 0
        %4899 = vmatprep.subr.bf16.mxu0 0
        %4900 = vmatpush1.bf16.msra.mxu0 0
        %4901 = vmatprep.subr.bf16.mxu0 0
        %4902 = vmatpush1.bf16.msra.mxu0 0
        %4903 = vmatprep.subr.bf16.mxu0 0
        %4904 = vmatpush1.bf16.msra.mxu0 0
        %4905 = vmatprep.mubr.bf16.mxu0 0
        %4906 = vmatmul.mubr.bf16.gmra.mrb[0].mxu0 %v453
        %v4907 = vpop.f32.mrb[0].mxu0
        %v4908 = vadd.f32 0.0, %v4907
        %v4909 = vpop.f32.mrb[0].mxu0
        %v4910 = vpop.f32.mrb[0].mxu0
        %v4911 = vpop.f32.mrb[0].mxu0
        %4912 = vdwg.mxu0
        %v4913 = vadd.f32 %v4872, %v4908
        %4914 = vmatprep.subr.bf16.mxu0 0
        %4915 = vmatpush1.bf16.msra.mxu0 %v4558
        %4916 = vmatprep.subr.bf16.mxu0 0
        %4917 = vmatpush1.bf16.msra.mxu0 0
        %4918 = vmatprep.subr.bf16.mxu0 0
        %4919 = vmatpush1.bf16.msra.mxu0 0
        %4920 = vmatprep.subr.bf16.mxu0 0
        %4921 = vmatpush1.bf16.msra.mxu0 0
        %4922 = vmatprep.subr.bf16.mxu0 0
        %4923 = vmatpush1.bf16.msra.mxu0 0
        %4924 = vmatprep.subr.bf16.mxu0 0
        %4925 = vmatpush1.bf16.msra.mxu0 0
        %4926 = vmatprep.subr.bf16.mxu0 0
        %4927 = vmatpush1.bf16.msra.mxu0 0
        %4928 = vmatprep.subr.bf16.mxu0 0
        %4929 = vmatpush1.bf16.msra.mxu0 0
        %4930 = vmatprep.subr.bf16.mxu0 0
        %4931 = vmatpush1.bf16.msra.mxu0 0
        %4932 = vmatprep.subr.bf16.mxu0 0
        %4933 = vmatpush1.bf16.msra.mxu0 0
        %4934 = vmatprep.subr.bf16.mxu0 0
        %4935 = vmatpush1.bf16.msra.mxu0 0
        %4936 = vmatprep.subr.bf16.mxu0 0
        %4937 = vmatpush1.bf16.msra.mxu0 0
        %4938 = vmatprep.subr.bf16.mxu0 0
        %4939 = vmatpush1.bf16.msra.mxu0 0
        %4940 = vmatprep.subr.bf16.mxu0 0
        %4941 = vmatpush1.bf16.msra.mxu0 0
        %4942 = vmatprep.subr.bf16.mxu0 0
        %4943 = vmatpush1.bf16.msra.mxu0 0
        %4944 = vmatprep.subr.bf16.mxu0 0
        %4945 = vmatpush1.bf16.msra.mxu0 0
        %4946 = vmatprep.mubr.bf16.mxu0 0
        %4947 = vmatmul.mubr.bf16.gmra.mrb[0].mxu0 %v507
        %v4948 = vpop.f32.mrb[0].mxu0
        %v4949 = vadd.f32 0.0, %v4948
        %v4950 = vpop.f32.mrb[0].mxu0
        %v4951 = vpop.f32.mrb[0].mxu0
        %v4952 = vpop.f32.mrb[0].mxu0
        %4953 = vdwg.mxu0
        %v4954 = vadd.f32 %v4913, %v4949
        %4955 = vmatprep.subr.bf16.mxu0 0
        %4956 = vmatpush1.bf16.msra.mxu0 %v4607
        %4957 = vmatprep.subr.bf16.mxu0 0
        %4958 = vmatpush1.bf16.msra.mxu0 0
        %4959 = vmatprep.subr.bf16.mxu0 0
        %4960 = vmatpush1.bf16.msra.mxu0 0
        %4961 = vmatprep.subr.bf16.mxu0 0
        %4962 = vmatpush1.bf16.msra.mxu0 0
        %4963 = vmatprep.subr.bf16.mxu0 0
        %4964 = vmatpush1.bf16.msra.mxu0 0
        %4965 = vmatprep.subr.bf16.mxu0 0
        %4966 = vmatpush1.bf16.msra.mxu0 0
        %4967 = vmatprep.subr.bf16.mxu0 0
        %4968 = vmatpush1.bf16.msra.mxu0 0
        %4969 = vmatprep.subr.bf16.mxu0 0
        %4970 = vmatpush1.bf16.msra.mxu0 0
        %4971 = vmatprep.subr.bf16.mxu0 0
        %4972 = vmatpush1.bf16.msra.mxu0 0
        %4973 = vmatprep.subr.bf16.mxu0 0
        %4974 = vmatpush1.bf16.msra.mxu0 0
        %4975 = vmatprep.subr.bf16.mxu0 0
        %4976 = vmatpush1.bf16.msra.mxu0 0
        %4977 = vmatprep.subr.bf16.mxu0 0
        %4978 = vmatpush1.bf16.msra.mxu0 0
        %4979 = vmatprep.subr.bf16.mxu0 0
        %4980 = vmatpush1.bf16.msra.mxu0 0
        %4981 = vmatprep.subr.bf16.mxu0 0
        %4982 = vmatpush1.bf16.msra.mxu0 0
        %4983 = vmatprep.subr.bf16.mxu0 0
        %4984 = vmatpush1.bf16.msra.mxu0 0
        %4985 = vmatprep.subr.bf16.mxu0 0
        %4986 = vmatpush1.bf16.msra.mxu0 0
        %4987 = vmatprep.mubr.bf16.mxu0 0
        %4988 = vmatmul.mubr.bf16.gmra.mrb[0].mxu0 %v561
        %v4989 = vpop.f32.mrb[0].mxu0
        %v4990 = vadd.f32 0.0, %v4989
        %v4991 = vpop.f32.mrb[0].mxu0
        %v4992 = vpop.f32.mrb[0].mxu0
        %v4993 = vpop.f32.mrb[0].mxu0
        %4994 = vdwg.mxu0
        %v4995 = vadd.f32 %v4954, %v4990
        %4996 = vmatprep.subr.bf16.mxu0 0
        %4997 = vmatpush1.bf16.msra.mxu0 %v4653
        %4998 = vmatprep.subr.bf16.mxu0 0
        %4999 = vmatpush1.bf16.msra.mxu0 0
        %5000 = vmatprep.subr.bf16.mxu0 0
        %5001 = vmatpush1.bf16.msra.mxu0 0
        %5002 = vmatprep.subr.bf16.mxu0 0
        %5003 = vmatpush1.bf16.msra.mxu0 0
        %5004 = vmatprep.subr.bf16.mxu0 0
        %5005 = vmatpush1.bf16.msra.mxu0 0
        %5006 = vmatprep.subr.bf16.mxu0 0
        %5007 = vmatpush1.bf16.msra.mxu0 0
        %5008 = vmatprep.subr.bf16.mxu0 0
        %5009 = vmatpush1.bf16.msra.mxu0 0
        %5010 = vmatprep.subr.bf16.mxu0 0
        %5011 = vmatpush1.bf16.msra.mxu0 0
        %5012 = vmatprep.subr.bf16.mxu0 0
        %5013 = vmatpush1.bf16.msra.mxu0 0
        %5014 = vmatprep.subr.bf16.mxu0 0
        %5015 = vmatpush1.bf16.msra.mxu0 0
        %5016 = vmatprep.subr.bf16.mxu0 0
        %5017 = vmatpush1.bf16.msra.mxu0 0
        %5018 = vmatprep.subr.bf16.mxu0 0
        %5019 = vmatpush1.bf16.msra.mxu0 0
        %5020 = vmatprep.subr.bf16.mxu0 0
        %5021 = vmatpush1.bf16.msra.mxu0 0
        %5022 = vmatprep.subr.bf16.mxu0 0
        %5023 = vmatpush1.bf16.msra.mxu0 0
        %5024 = vmatprep.subr.bf16.mxu0 0
        %5025 = vmatpush1.bf16.msra.mxu0 0
        %5026 = vmatprep.subr.bf16.mxu0 0
        %5027 = vmatpush1.bf16.msra.mxu0 0
        %5028 = vmatprep.mubr.bf16.mxu0 0
        %5029 = vmatmul.mubr.bf16.gmra.mrb[0].mxu0 %v612
        %v5030 = vpop.f32.mrb[0].mxu0
        %v5031 = vadd.f32 0.0, %v5030
        %v5032 = vpop.f32.mrb[0].mxu0
        %v5033 = vpop.f32.mrb[0].mxu0
        %v5034 = vpop.f32.mrb[0].mxu0
        %5035 = vdwg.mxu0
        %v5036 = vadd.f32 %v4995, %v5031
        %s5037 = sadd.s32 %s237, 7
        %s5038 = smul.u32 %s5037, 2
        %s5039 = smul.addr %s5038, 4
        %s5040 = scalar_lea.vmem %s220, %s5039
        %v5041 = vld [vmem:[%s5040] sm:$0x3]
        %v5043 = vsel %vm254, %v5041, 0
        %5045 = vmatprep.subr.bf16.mxu0 0
        %5046 = vmatpush1.bf16.msra.mxu0 %v5043
        %5047 = vmatprep.subr.bf16.mxu0 0
        %5048 = vmatpush1.bf16.msra.mxu0 0
        %5049 = vmatprep.subr.bf16.mxu0 0
        %5050 = vmatpush1.bf16.msra.mxu0 0
        %5051 = vmatprep.subr.bf16.mxu0 0
        %5052 = vmatpush1.bf16.msra.mxu0 0
        %5053 = vmatprep.subr.bf16.mxu0 0
        %5054 = vmatpush1.bf16.msra.mxu0 0
        %5055 = vmatprep.subr.bf16.mxu0 0
        %5056 = vmatpush1.bf16.msra.mxu0 0
        %5057 = vmatprep.subr.bf16.mxu0 0
        %5058 = vmatpush1.bf16.msra.mxu0 0
        %5059 = vmatprep.subr.bf16.mxu0 0
        %5060 = vmatpush1.bf16.msra.mxu0 0
        %5061 = vmatprep.subr.bf16.mxu0 0
        %5062 = vmatpush1.bf16.msra.mxu0 0
        %5063 = vmatprep.subr.bf16.mxu0 0
        %5064 = vmatpush1.bf16.msra.mxu0 0
        %5065 = vmatprep.subr.bf16.mxu0 0
        %5066 = vmatpush1.bf16.msra.mxu0 0
        %5067 = vmatprep.subr.bf16.mxu0 0
        %5068 = vmatpush1.bf16.msra.mxu0 0
        %5069 = vmatprep.subr.bf16.mxu0 0
        %5070 = vmatpush1.bf16.msra.mxu0 0
        %5071 = vmatprep.subr.bf16.mxu0 0
        %5072 = vmatpush1.bf16.msra.mxu0 0
        %5073 = vmatprep.subr.bf16.mxu0 0
        %5074 = vmatpush1.bf16.msra.mxu0 0
        %5075 = vmatprep.subr.bf16.mxu0 0
        %5076 = vmatpush1.bf16.msra.mxu0 0
        %5077 = vmatprep.mubr.bf16.mxu0 0
        %5078 = vmatmul.mubr.bf16.gmra.mrb[0].mxu0 %v666
        %v5079 = vpop.f32.mrb[0].mxu0
        %v5080 = vadd.f32 0.0, %v5079
        %v5081 = vpop.f32.mrb[0].mxu0
        %v5082 = vpop.f32.mrb[0].mxu0
        %v5083 = vpop.f32.mrb[0].mxu0
        %5084 = vdwg.mxu0
        %v5085 = vadd.f32 %v5036, %v5080
        %v5086 = vld [vmem:[%s5040] sm:$0xc]
        %v5088 = vunpack.c.l.b16 %v5086
        %v5089 = vpack.c.b16 %v5088, %v5088
        %v5090 = vrot.slane %v5089, 2
        %v5092 = vsel %vm254, %v5090, 0
        %5094 = vmatprep.subr.bf16.mxu0 0
        %5095 = vmatpush1.bf16.msra.mxu0 %v5092
        %5096 = vmatprep.subr.bf16.mxu0 0
        %5097 = vmatpush1.bf16.msra.mxu0 0
        %5098 = vmatprep.subr.bf16.mxu0 0
        %5099 = vmatpush1.bf16.msra.mxu0 0
        %5100 = vmatprep.subr.bf16.mxu0 0
        %5101 = vmatpush1.bf16.msra.mxu0 0
        %5102 = vmatprep.subr.bf16.mxu0 0
        %5103 = vmatpush1.bf16.msra.mxu0 0
        %5104 = vmatprep.subr.bf16.mxu0 0
        %5105 = vmatpush1.bf16.msra.mxu0 0
        %5106 = vmatprep.subr.bf16.mxu0 0
        %5107 = vmatpush1.bf16.msra.mxu0 0
        %5108 = vmatprep.subr.bf16.mxu0 0
        %5109 = vmatpush1.bf16.msra.mxu0 0
        %5110 = vmatprep.subr.bf16.mxu0 0
        %5111 = vmatpush1.bf16.msra.mxu0 0
        %5112 = vmatprep.subr.bf16.mxu0 0
        %5113 = vmatpush1.bf16.msra.mxu0 0
        %5114 = vmatprep.subr.bf16.mxu0 0
        %5115 = vmatpush1.bf16.msra.mxu0 0
        %5116 = vmatprep.subr.bf16.mxu0 0
        %5117 = vmatpush1.bf16.msra.mxu0 0
        %5118 = vmatprep.subr.bf16.mxu0 0
        %5119 = vmatpush1.bf16.msra.mxu0 0
        %5120 = vmatprep.subr.bf16.mxu0 0
        %5121 = vmatpush1.bf16.msra.mxu0 0
        %5122 = vmatprep.subr.bf16.mxu0 0
        %5123 = vmatpush1.bf16.msra.mxu0 0
        %5124 = vmatprep.subr.bf16.mxu0 0
        %5125 = vmatpush1.bf16.msra.mxu0 0
        %5126 = vmatprep.mubr.bf16.mxu0 0
        %5127 = vmatmul.mubr.bf16.gmra.mrb[0].mxu0 %v720
        %v5128 = vpop.f32.mrb[0].mxu0
        %v5129 = vadd.f32 0.0, %v5128
        %v5130 = vpop.f32.mrb[0].mxu0
        %v5131 = vpop.f32.mrb[0].mxu0
        %v5132 = vpop.f32.mrb[0].mxu0
        %5133 = vdwg.mxu0
        %v5134 = vadd.f32 %v5085, %v5129
        %v5136 = vunpack.c.l.b16 %v5041
        %v5137 = vpack.c.b16 %v5136, %v5136
        %5138 = vrot.lane.b32.xlu0 %v5137, 127
        %v5139 = vpop.permute.xlu0 %5138
        %v5141 = vsel %vm254, %v5139, 0
        %5143 = vmatprep.subr.bf16.mxu0 0
        %5144 = vmatpush1.bf16.msra.mxu0 %v5141
        %5145 = vmatprep.subr.bf16.mxu0 0
        %5146 = vmatpush1.bf16.msra.mxu0 0
        %5147 = vmatprep.subr.bf16.mxu0 0
        %5148 = vmatpush1.bf16.msra.mxu0 0
        %5149 = vmatprep.subr.bf16.mxu0 0
        %5150 = vmatpush1.bf16.msra.mxu0 0
        %5151 = vmatprep.subr.bf16.mxu0 0
        %5152 = vmatpush1.bf16.msra.mxu0 0
        %5153 = vmatprep.subr.bf16.mxu0 0
        %5154 = vmatpush1.bf16.msra.mxu0 0
        %5155 = vmatprep.subr.bf16.mxu0 0
        %5156 = vmatpush1.bf16.msra.mxu0 0
        %5157 = vmatprep.subr.bf16.mxu0 0
        %5158 = vmatpush1.bf16.msra.mxu0 0
        %5159 = vmatprep.subr.bf16.mxu0 0
        %5160 = vmatpush1.bf16.msra.mxu0 0
        %5161 = vmatprep.subr.bf16.mxu0 0
        %5162 = vmatpush1.bf16.msra.mxu0 0
        %5163 = vmatprep.subr.bf16.mxu0 0
        %5164 = vmatpush1.bf16.msra.mxu0 0
        %5165 = vmatprep.subr.bf16.mxu0 0
        %5166 = vmatpush1.bf16.msra.mxu0 0
        %5167 = vmatprep.subr.bf16.mxu0 0
        %5168 = vmatpush1.bf16.msra.mxu0 0
        %5169 = vmatprep.subr.bf16.mxu0 0
        %5170 = vmatpush1.bf16.msra.mxu0 0
        %5171 = vmatprep.subr.bf16.mxu0 0
        %5172 = vmatpush1.bf16.msra.mxu0 0
        %5173 = vmatprep.subr.bf16.mxu0 0
        %5174 = vmatpush1.bf16.msra.mxu0 0
        %5175 = vmatprep.mubr.bf16.mxu0 0
        %5176 = vmatmul.mubr.bf16.gmra.mrb[0].mxu0 %v774
        %v5177 = vpop.f32.mrb[0].mxu0
        %v5178 = vadd.f32 0.0, %v5177
        %v5179 = vpop.f32.mrb[0].mxu0
        %v5180 = vpop.f32.mrb[0].mxu0
        %v5181 = vpop.f32.mrb[0].mxu0
        %5182 = vdwg.mxu0
        %v5183 = vadd.f32 %v5134, %v5178
        %5184 = vrot.lane.b32.xlu0 %v5090, 127
        %v5185 = vpop.permute.xlu0 %5184
        %v5187 = vsel %vm254, %v5185, 0
        %5189 = vmatprep.subr.bf16.mxu0 0
        %5190 = vmatpush1.bf16.msra.mxu0 %v5187
        %5191 = vmatprep.subr.bf16.mxu0 0
        %5192 = vmatpush1.bf16.msra.mxu0 0
        %5193 = vmatprep.subr.bf16.mxu0 0
        %5194 = vmatpush1.bf16.msra.mxu0 0
        %5195 = vmatprep.subr.bf16.mxu0 0
        %5196 = vmatpush1.bf16.msra.mxu0 0
        %5197 = vmatprep.subr.bf16.mxu0 0
        %5198 = vmatpush1.bf16.msra.mxu0 0
        %5199 = vmatprep.subr.bf16.mxu0 0
        %5200 = vmatpush1.bf16.msra.mxu0 0
        %5201 = vmatprep.subr.bf16.mxu0 0
        %5202 = vmatpush1.bf16.msra.mxu0 0
        %5203 = vmatprep.subr.bf16.mxu0 0
        %5204 = vmatpush1.bf16.msra.mxu0 0
        %5205 = vmatprep.subr.bf16.mxu0 0
        %5206 = vmatpush1.bf16.msra.mxu0 0
        %5207 = vmatprep.subr.bf16.mxu0 0
        %5208 = vmatpush1.bf16.msra.mxu0 0
        %5209 = vmatprep.subr.bf16.mxu0 0
        %5210 = vmatpush1.bf16.msra.mxu0 0
        %5211 = vmatprep.subr.bf16.mxu0 0
        %5212 = vmatpush1.bf16.msra.mxu0 0
        %5213 = vmatprep.subr.bf16.mxu0 0
        %5214 = vmatpush1.bf16.msra.mxu0 0
        %5215 = vmatprep.subr.bf16.mxu0 0
        %5216 = vmatpush1.bf16.msra.mxu0 0
        %5217 = vmatprep.subr.bf16.mxu0 0
        %5218 = vmatpush1.bf16.msra.mxu0 0
        %5219 = vmatprep.subr.bf16.mxu0 0
        %5220 = vmatpush1.bf16.msra.mxu0 0
        %5221 = vmatprep.mubr.bf16.mxu0 0
        %5222 = vmatmul.mubr.bf16.gmra.mrb[0].mxu0 %v825
        %v5223 = vpop.f32.mrb[0].mxu0
        %v5224 = vadd.f32 0.0, %v5223
        %v5225 = vpop.f32.mrb[0].mxu0
        %v5226 = vpop.f32.mrb[0].mxu0
        %v5227 = vpop.f32.mrb[0].mxu0
        %5228 = vdwg.mxu0
        %v5229 = vadd.f32 %v5183, %v5224
        %v5230 = vld [vmem:[%s5040 + $0x4] sm:$0x3]
        %v5232 = vsel %vm254, %v5230, 0
        %5234 = vmatprep.subr.bf16.mxu0 0
        %5235 = vmatpush1.bf16.msra.mxu0 %v5232
        %5236 = vmatprep.subr.bf16.mxu0 0
        %5237 = vmatpush1.bf16.msra.mxu0 0
        %5238 = vmatprep.subr.bf16.mxu0 0
        %5239 = vmatpush1.bf16.msra.mxu0 0
        %5240 = vmatprep.subr.bf16.mxu0 0
        %5241 = vmatpush1.bf16.msra.mxu0 0
        %5242 = vmatprep.subr.bf16.mxu0 0
        %5243 = vmatpush1.bf16.msra.mxu0 0
        %5244 = vmatprep.subr.bf16.mxu0 0
        %5245 = vmatpush1.bf16.msra.mxu0 0
        %5246 = vmatprep.subr.bf16.mxu0 0
        %5247 = vmatpush1.bf16.msra.mxu0 0
        %5248 = vmatprep.subr.bf16.mxu0 0
        %5249 = vmatpush1.bf16.msra.mxu0 0
        %5250 = vmatprep.subr.bf16.mxu0 0
        %5251 = vmatpush1.bf16.msra.mxu0 0
        %5252 = vmatprep.subr.bf16.mxu0 0
        %5253 = vmatpush1.bf16.msra.mxu0 0
        %5254 = vmatprep.subr.bf16.mxu0 0
        %5255 = vmatpush1.bf16.msra.mxu0 0
        %5256 = vmatprep.subr.bf16.mxu0 0
        %5257 = vmatpush1.bf16.msra.mxu0 0
        %5258 = vmatprep.subr.bf16.mxu0 0
        %5259 = vmatpush1.bf16.msra.mxu0 0
        %5260 = vmatprep.subr.bf16.mxu0 0
        %5261 = vmatpush1.bf16.msra.mxu0 0
        %5262 = vmatprep.subr.bf16.mxu0 0
        %5263 = vmatpush1.bf16.msra.mxu0 0
        %5264 = vmatprep.subr.bf16.mxu0 0
        %5265 = vmatpush1.bf16.msra.mxu0 0
        %5266 = vmatprep.mubr.bf16.mxu0 0
        %5267 = vmatmul.mubr.bf16.gmra.mrb[0].mxu0 %v875
        %v5268 = vpop.f32.mrb[0].mxu0
        %v5269 = vadd.f32 0.0, %v5268
        %v5270 = vpop.f32.mrb[0].mxu0
        %v5271 = vpop.f32.mrb[0].mxu0
        %v5272 = vpop.f32.mrb[0].mxu0
        %5273 = vdwg.mxu0
        %v5274 = vadd.f32 %v5229, %v5269
        %v5275 = vld [vmem:[%s5040 + $0x4] sm:$0xc]
        %v5277 = vunpack.c.l.b16 %v5275
        %v5278 = vpack.c.b16 %v5277, %v5277
        %v5279 = vrot.slane %v5278, 2
        %v5281 = vsel %vm254, %v5279, 0
        %5283 = vmatprep.subr.bf16.mxu0 0
        %5284 = vmatpush1.bf16.msra.mxu0 %v5281
        %5285 = vmatprep.subr.bf16.mxu0 0
        %5286 = vmatpush1.bf16.msra.mxu0 0
        %5287 = vmatprep.subr.bf16.mxu0 0
        %5288 = vmatpush1.bf16.msra.mxu0 0
        %5289 = vmatprep.subr.bf16.mxu0 0
        %5290 = vmatpush1.bf16.msra.mxu0 0
        %5291 = vmatprep.subr.bf16.mxu0 0
        %5292 = vmatpush1.bf16.msra.mxu0 0
        %5293 = vmatprep.subr.bf16.mxu0 0
        %5294 = vmatpush1.bf16.msra.mxu0 0
        %5295 = vmatprep.subr.bf16.mxu0 0
        %5296 = vmatpush1.bf16.msra.mxu0 0
        %5297 = vmatprep.subr.bf16.mxu0 0
        %5298 = vmatpush1.bf16.msra.mxu0 0
        %5299 = vmatprep.subr.bf16.mxu0 0
        %5300 = vmatpush1.bf16.msra.mxu0 0
        %5301 = vmatprep.subr.bf16.mxu0 0
        %5302 = vmatpush1.bf16.msra.mxu0 0
        %5303 = vmatprep.subr.bf16.mxu0 0
        %5304 = vmatpush1.bf16.msra.mxu0 0
        %5305 = vmatprep.subr.bf16.mxu0 0
        %5306 = vmatpush1.bf16.msra.mxu0 0
        %5307 = vmatprep.subr.bf16.mxu0 0
        %5308 = vmatpush1.bf16.msra.mxu0 0
        %5309 = vmatprep.subr.bf16.mxu0 0
        %5310 = vmatpush1.bf16.msra.mxu0 0
        %5311 = vmatprep.subr.bf16.mxu0 0
        %5312 = vmatpush1.bf16.msra.mxu0 0
        %5313 = vmatprep.subr.bf16.mxu0 0
        %5314 = vmatpush1.bf16.msra.mxu0 0
        %5315 = vmatprep.mubr.bf16.mxu0 0
        %5316 = vmatmul.mubr.bf16.gmra.mrb[0].mxu0 %v929
        %v5317 = vpop.f32.mrb[0].mxu0
        %v5318 = vadd.f32 0.0, %v5317
        %v5319 = vpop.f32.mrb[0].mxu0
        %v5320 = vpop.f32.mrb[0].mxu0
        %v5321 = vpop.f32.mrb[0].mxu0
        %5322 = vdwg.mxu0
        %v5323 = vadd.f32 %v5274, %v5318
        %v5325 = vunpack.c.l.b16 %v5230
        %v5326 = vpack.c.b16 %v5325, %v5325
        %5327 = vrot.lane.b32.xlu0 %v5326, 127
        %v5328 = vpop.permute.xlu0 %5327
        %v5330 = vsel %vm254, %v5328, 0
        %5332 = vmatprep.subr.bf16.mxu0 0
        %5333 = vmatpush1.bf16.msra.mxu0 %v5330
        %5334 = vmatprep.subr.bf16.mxu0 0
        %5335 = vmatpush1.bf16.msra.mxu0 0
        %5336 = vmatprep.subr.bf16.mxu0 0
        %5337 = vmatpush1.bf16.msra.mxu0 0
        %5338 = vmatprep.subr.bf16.mxu0 0
        %5339 = vmatpush1.bf16.msra.mxu0 0
        %5340 = vmatprep.subr.bf16.mxu0 0
        %5341 = vmatpush1.bf16.msra.mxu0 0
        %5342 = vmatprep.subr.bf16.mxu0 0
        %5343 = vmatpush1.bf16.msra.mxu0 0
        %5344 = vmatprep.subr.bf16.mxu0 0
        %5345 = vmatpush1.bf16.msra.mxu0 0
        %5346 = vmatprep.subr.bf16.mxu0 0
        %5347 = vmatpush1.bf16.msra.mxu0 0
        %5348 = vmatprep.subr.bf16.mxu0 0
        %5349 = vmatpush1.bf16.msra.mxu0 0
        %5350 = vmatprep.subr.bf16.mxu0 0
        %5351 = vmatpush1.bf16.msra.mxu0 0
        %5352 = vmatprep.subr.bf16.mxu0 0
        %5353 = vmatpush1.bf16.msra.mxu0 0
        %5354 = vmatprep.subr.bf16.mxu0 0
        %5355 = vmatpush1.bf16.msra.mxu0 0
        %5356 = vmatprep.subr.bf16.mxu0 0
        %5357 = vmatpush1.bf16.msra.mxu0 0
        %5358 = vmatprep.subr.bf16.mxu0 0
        %5359 = vmatpush1.bf16.msra.mxu0 0
        %5360 = vmatprep.subr.bf16.mxu0 0
        %5361 = vmatpush1.bf16.msra.mxu0 0
        %5362 = vmatprep.subr.bf16.mxu0 0
        %5363 = vmatpush1.bf16.msra.mxu0 0
        %5364 = vmatprep.mubr.bf16.mxu0 0
        %5365 = vmatmul.mubr.bf16.gmra.mrb[0].mxu0 %v983
        %v5366 = vpop.f32.mrb[0].mxu0
        %v5367 = vadd.f32 0.0, %v5366
        %v5368 = vpop.f32.mrb[0].mxu0
        %v5369 = vpop.f32.mrb[0].mxu0
        %v5370 = vpop.f32.mrb[0].mxu0
        %5371 = vdwg.mxu0
        %v5372 = vadd.f32 %v5323, %v5367
        %5373 = vrot.lane.b32.xlu0 %v5279, 127
        %v5374 = vpop.permute.xlu0 %5373
        %v5376 = vsel %vm254, %v5374, 0
        %5378 = vmatprep.subr.bf16.mxu0 0
        %5379 = vmatpush1.bf16.msra.mxu0 %v5376
        %5380 = vmatprep.subr.bf16.mxu0 0
        %5381 = vmatpush1.bf16.msra.mxu0 0
        %5382 = vmatprep.subr.bf16.mxu0 0
        %5383 = vmatpush1.bf16.msra.mxu0 0
        %5384 = vmatprep.subr.bf16.mxu0 0
        %5385 = vmatpush1.bf16.msra.mxu0 0
        %5386 = vmatprep.subr.bf16.mxu0 0
        %5387 = vmatpush1.bf16.msra.mxu0 0
        %5388 = vmatprep.subr.bf16.mxu0 0
        %5389 = vmatpush1.bf16.msra.mxu0 0
        %5390 = vmatprep.subr.bf16.mxu0 0
        %5391 = vmatpush1.bf16.msra.mxu0 0
        %5392 = vmatprep.subr.bf16.mxu0 0
        %5393 = vmatpush1.bf16.msra.mxu0 0
        %5394 = vmatprep.subr.bf16.mxu0 0
        %5395 = vmatpush1.bf16.msra.mxu0 0
        %5396 = vmatprep.subr.bf16.mxu0 0
        %5397 = vmatpush1.bf16.msra.mxu0 0
        %5398 = vmatprep.subr.bf16.mxu0 0
        %5399 = vmatpush1.bf16.msra.mxu0 0
        %5400 = vmatprep.subr.bf16.mxu0 0
        %5401 = vmatpush1.bf16.msra.mxu0 0
        %5402 = vmatprep.subr.bf16.mxu0 0
        %5403 = vmatpush1.bf16.msra.mxu0 0
        %5404 = vmatprep.subr.bf16.mxu0 0
        %5405 = vmatpush1.bf16.msra.mxu0 0
        %5406 = vmatprep.subr.bf16.mxu0 0
        %5407 = vmatpush1.bf16.msra.mxu0 0
        %5408 = vmatprep.subr.bf16.mxu0 0
        %5409 = vmatpush1.bf16.msra.mxu0 0
        %5410 = vmatprep.mubr.bf16.mxu0 0
        %5411 = vmatmul.mubr.bf16.gmra.mrb[0].mxu0 %v1034
        %v5412 = vpop.f32.mrb[0].mxu0
        %v5413 = vadd.f32 0.0, %v5412
        %v5414 = vpop.f32.mrb[0].mxu0
        %v5415 = vpop.f32.mrb[0].mxu0
        %v5416 = vpop.f32.mrb[0].mxu0
        %5417 = vdwg.mxu0
        %v5418 = vadd.f32 %v5372, %v5413
        %p5419 = scmp.lt.s32.totalorder %s4314, 8
        %s5420 = scalar_select %p5419, 1, 0
        %s5421 = scvt.s32.f32 %s5420
        %v5422 = vsel %vm1083, %v5418, 0.0
        %5423 = vadd.xlane.f32.xlu0 %v5422
        %v5424 = vpop.xlane.xlu0 %5423
        %v5425 = vstv %s5421
        %v5426 = vmul.f32 %v5425, %v5424
        %v5427 = vadd.f32 %v4704, %v5426
        %v5428 = vmul.f32 %v5418, %v5418
        %v5429 = vsel %vm1083, %v5428, 0.0
        %5430 = vadd.xlane.f32.xlu0 %v5429
        %v5431 = vpop.xlane.xlu0 %5430
        %v5432 = vmul.f32 %v5425, %v5431
        %v5433 = vadd.f32 %v4710, %v5432
        %5434 = vmatprep.subr.bf16.mxu0 0
        %5435 = vmatpush1.bf16.msra.mxu0 %v5092
        %5436 = vmatprep.subr.bf16.mxu0 0
        %5437 = vmatpush1.bf16.msra.mxu0 0
        %5438 = vmatprep.subr.bf16.mxu0 0
        %5439 = vmatpush1.bf16.msra.mxu0 0
        %5440 = vmatprep.subr.bf16.mxu0 0
        %5441 = vmatpush1.bf16.msra.mxu0 0
        %5442 = vmatprep.subr.bf16.mxu0 0
        %5443 = vmatpush1.bf16.msra.mxu0 0
        %5444 = vmatprep.subr.bf16.mxu0 0
        %5445 = vmatpush1.bf16.msra.mxu0 0
        %5446 = vmatprep.subr.bf16.mxu0 0
        %5447 = vmatpush1.bf16.msra.mxu0 0
        %5448 = vmatprep.subr.bf16.mxu0 0
        %5449 = vmatpush1.bf16.msra.mxu0 0
        %5450 = vmatprep.subr.bf16.mxu0 0
        %5451 = vmatpush1.bf16.msra.mxu0 0
        %5452 = vmatprep.subr.bf16.mxu0 0
        %5453 = vmatpush1.bf16.msra.mxu0 0
        %5454 = vmatprep.subr.bf16.mxu0 0
        %5455 = vmatpush1.bf16.msra.mxu0 0
        %5456 = vmatprep.subr.bf16.mxu0 0
        %5457 = vmatpush1.bf16.msra.mxu0 0
        %5458 = vmatprep.subr.bf16.mxu0 0
        %5459 = vmatpush1.bf16.msra.mxu0 0
        %5460 = vmatprep.subr.bf16.mxu0 0
        %5461 = vmatpush1.bf16.msra.mxu0 0
        %5462 = vmatprep.subr.bf16.mxu0 0
        %5463 = vmatpush1.bf16.msra.mxu0 0
        %5464 = vmatprep.subr.bf16.mxu0 0
        %5465 = vmatpush1.bf16.msra.mxu0 0
        %5466 = vmatprep.mubr.bf16.mxu0 0
        %5467 = vmatmul.mubr.bf16.gmra.mrb[0].mxu0 %v252
        %v5468 = vpop.f32.mrb[0].mxu0
        %v5469 = vadd.f32 0.0, %v5468
        %v5470 = vpop.f32.mrb[0].mxu0
        %v5471 = vpop.f32.mrb[0].mxu0
        %v5472 = vpop.f32.mrb[0].mxu0
        %5473 = vdwg.mxu0
        %5474 = vmatprep.subr.bf16.mxu0 0
        %5475 = vmatpush1.bf16.msra.mxu0 %v5043
        %5476 = vmatprep.subr.bf16.mxu0 0
        %5477 = vmatpush1.bf16.msra.mxu0 0
        %5478 = vmatprep.subr.bf16.mxu0 0
        %5479 = vmatpush1.bf16.msra.mxu0 0
        %5480 = vmatprep.subr.bf16.mxu0 0
        %5481 = vmatpush1.bf16.msra.mxu0 0
        %5482 = vmatprep.subr.bf16.mxu0 0
        %5483 = vmatpush1.bf16.msra.mxu0 0
        %5484 = vmatprep.subr.bf16.mxu0 0
        %5485 = vmatpush1.bf16.msra.mxu0 0
        %5486 = vmatprep.subr.bf16.mxu0 0
        %5487 = vmatpush1.bf16.msra.mxu0 0
        %5488 = vmatprep.subr.bf16.mxu0 0
        %5489 = vmatpush1.bf16.msra.mxu0 0
        %5490 = vmatprep.subr.bf16.mxu0 0
        %5491 = vmatpush1.bf16.msra.mxu0 0
        %5492 = vmatprep.subr.bf16.mxu0 0
        %5493 = vmatpush1.bf16.msra.mxu0 0
        %5494 = vmatprep.subr.bf16.mxu0 0
        %5495 = vmatpush1.bf16.msra.mxu0 0
        %5496 = vmatprep.subr.bf16.mxu0 0
        %5497 = vmatpush1.bf16.msra.mxu0 0
        %5498 = vmatprep.subr.bf16.mxu0 0
        %5499 = vmatpush1.bf16.msra.mxu0 0
        %5500 = vmatprep.subr.bf16.mxu0 0
        %5501 = vmatpush1.bf16.msra.mxu0 0
        %5502 = vmatprep.subr.bf16.mxu0 0
        %5503 = vmatpush1.bf16.msra.mxu0 0
        %5504 = vmatprep.subr.bf16.mxu0 0
        %5505 = vmatpush1.bf16.msra.mxu0 0
        %5506 = vmatprep.mubr.bf16.mxu0 0
        %5507 = vmatmul.mubr.bf16.gmra.mrb[0].mxu0 %v299
        %v5508 = vpop.f32.mrb[0].mxu0
        %v5509 = vadd.f32 %v5469, %v5508
        %v5510 = vpop.f32.mrb[0].mxu0
        %v5511 = vpop.f32.mrb[0].mxu0
        %v5512 = vpop.f32.mrb[0].mxu0
        %5513 = vdwg.mxu0
        %5514 = vmatprep.subr.bf16.mxu0 0
        %5515 = vmatpush1.bf16.msra.mxu0 %v5141
        %5516 = vmatprep.subr.bf16.mxu0 0
        %5517 = vmatpush1.bf16.msra.mxu0 0
        %5518 = vmatprep.subr.bf16.mxu0 0
        %5519 = vmatpush1.bf16.msra.mxu0 0
        %5520 = vmatprep.subr.bf16.mxu0 0
        %5521 = vmatpush1.bf16.msra.mxu0 0
        %5522 = vmatprep.subr.bf16.mxu0 0
        %5523 = vmatpush1.bf16.msra.mxu0 0
        %5524 = vmatprep.subr.bf16.mxu0 0
        %5525 = vmatpush1.bf16.msra.mxu0 0
        %5526 = vmatprep.subr.bf16.mxu0 0
        %5527 = vmatpush1.bf16.msra.mxu0 0
        %5528 = vmatprep.subr.bf16.mxu0 0
        %5529 = vmatpush1.bf16.msra.mxu0 0
        %5530 = vmatprep.subr.bf16.mxu0 0
        %5531 = vmatpush1.bf16.msra.mxu0 0
        %5532 = vmatprep.subr.bf16.mxu0 0
        %5533 = vmatpush1.bf16.msra.mxu0 0
        %5534 = vmatprep.subr.bf16.mxu0 0
        %5535 = vmatpush1.bf16.msra.mxu0 0
        %5536 = vmatprep.subr.bf16.mxu0 0
        %5537 = vmatpush1.bf16.msra.mxu0 0
        %5538 = vmatprep.subr.bf16.mxu0 0
        %5539 = vmatpush1.bf16.msra.mxu0 0
        %5540 = vmatprep.subr.bf16.mxu0 0
        %5541 = vmatpush1.bf16.msra.mxu0 0
        %5542 = vmatprep.subr.bf16.mxu0 0
        %5543 = vmatpush1.bf16.msra.mxu0 0
        %5544 = vmatprep.subr.bf16.mxu0 0
        %5545 = vmatpush1.bf16.msra.mxu0 0
        %5546 = vmatprep.mubr.bf16.mxu0 0
        %5547 = vmatmul.mubr.bf16.gmra.mrb[0].mxu0 %v352
        %v5548 = vpop.f32.mrb[0].mxu0
        %v5549 = vadd.f32 0.0, %v5548
        %v5550 = vpop.f32.mrb[0].mxu0
        %v5551 = vpop.f32.mrb[0].mxu0
        %v5552 = vpop.f32.mrb[0].mxu0
        %5553 = vdwg.mxu0
        %v5554 = vadd.f32 %v5509, %v5549
        %5555 = vmatprep.subr.bf16.mxu0 0
        %5556 = vmatpush1.bf16.msra.mxu0 %v5187
        %5557 = vmatprep.subr.bf16.mxu0 0
        %5558 = vmatpush1.bf16.msra.mxu0 0
        %5559 = vmatprep.subr.bf16.mxu0 0
        %5560 = vmatpush1.bf16.msra.mxu0 0
        %5561 = vmatprep.subr.bf16.mxu0 0
        %5562 = vmatpush1.bf16.msra.mxu0 0
        %5563 = vmatprep.subr.bf16.mxu0 0
        %5564 = vmatpush1.bf16.msra.mxu0 0
        %5565 = vmatprep.subr.bf16.mxu0 0
        %5566 = vmatpush1.bf16.msra.mxu0 0
        %5567 = vmatprep.subr.bf16.mxu0 0
        %5568 = vmatpush1.bf16.msra.mxu0 0
        %5569 = vmatprep.subr.bf16.mxu0 0
        %5570 = vmatpush1.bf16.msra.mxu0 0
        %5571 = vmatprep.subr.bf16.mxu0 0
        %5572 = vmatpush1.bf16.msra.mxu0 0
        %5573 = vmatprep.subr.bf16.mxu0 0
        %5574 = vmatpush1.bf16.msra.mxu0 0
        %5575 = vmatprep.subr.bf16.mxu0 0
        %5576 = vmatpush1.bf16.msra.mxu0 0
        %5577 = vmatprep.subr.bf16.mxu0 0
        %5578 = vmatpush1.bf16.msra.mxu0 0
        %5579 = vmatprep.subr.bf16.mxu0 0
        %5580 = vmatpush1.bf16.msra.mxu0 0
        %5581 = vmatprep.subr.bf16.mxu0 0
        %5582 = vmatpush1.bf16.msra.mxu0 0
        %5583 = vmatprep.subr.bf16.mxu0 0
        %5584 = vmatpush1.bf16.msra.mxu0 0
        %5585 = vmatprep.subr.bf16.mxu0 0
        %5586 = vmatpush1.bf16.msra.mxu0 0
        %5587 = vmatprep.mubr.bf16.mxu0 0
        %5588 = vmatmul.mubr.bf16.gmra.mrb[0].mxu0 %v403
        %v5589 = vpop.f32.mrb[0].mxu0
        %v5590 = vadd.f32 0.0, %v5589
        %v5591 = vpop.f32.mrb[0].mxu0
        %v5592 = vpop.f32.mrb[0].mxu0
        %v5593 = vpop.f32.mrb[0].mxu0
        %5594 = vdwg.mxu0
        %v5595 = vadd.f32 %v5554, %v5590
        %5596 = vmatprep.subr.bf16.mxu0 0
        %5597 = vmatpush1.bf16.msra.mxu0 %v5232
        %5598 = vmatprep.subr.bf16.mxu0 0
        %5599 = vmatpush1.bf16.msra.mxu0 0
        %5600 = vmatprep.subr.bf16.mxu0 0
        %5601 = vmatpush1.bf16.msra.mxu0 0
        %5602 = vmatprep.subr.bf16.mxu0 0
        %5603 = vmatpush1.bf16.msra.mxu0 0
        %5604 = vmatprep.subr.bf16.mxu0 0
        %5605 = vmatpush1.bf16.msra.mxu0 0
        %5606 = vmatprep.subr.bf16.mxu0 0
        %5607 = vmatpush1.bf16.msra.mxu0 0
        %5608 = vmatprep.subr.bf16.mxu0 0
        %5609 = vmatpush1.bf16.msra.mxu0 0
        %5610 = vmatprep.subr.bf16.mxu0 0
        %5611 = vmatpush1.bf16.msra.mxu0 0
        %5612 = vmatprep.subr.bf16.mxu0 0
        %5613 = vmatpush1.bf16.msra.mxu0 0
        %5614 = vmatprep.subr.bf16.mxu0 0
        %5615 = vmatpush1.bf16.msra.mxu0 0
        %5616 = vmatprep.subr.bf16.mxu0 0
        %5617 = vmatpush1.bf16.msra.mxu0 0
        %5618 = vmatprep.subr.bf16.mxu0 0
        %5619 = vmatpush1.bf16.msra.mxu0 0
        %5620 = vmatprep.subr.bf16.mxu0 0
        %5621 = vmatpush1.bf16.msra.mxu0 0
        %5622 = vmatprep.subr.bf16.mxu0 0
        %5623 = vmatpush1.bf16.msra.mxu0 0
        %5624 = vmatprep.subr.bf16.mxu0 0
        %5625 = vmatpush1.bf16.msra.mxu0 0
        %5626 = vmatprep.subr.bf16.mxu0 0
        %5627 = vmatpush1.bf16.msra.mxu0 0
        %5628 = vmatprep.mubr.bf16.mxu0 0
        %5629 = vmatmul.mubr.bf16.gmra.mrb[0].mxu0 %v453
        %v5630 = vpop.f32.mrb[0].mxu0
        %v5631 = vadd.f32 0.0, %v5630
        %v5632 = vpop.f32.mrb[0].mxu0
        %v5633 = vpop.f32.mrb[0].mxu0
        %v5634 = vpop.f32.mrb[0].mxu0
        %5635 = vdwg.mxu0
        %v5636 = vadd.f32 %v5595, %v5631
        %5637 = vmatprep.subr.bf16.mxu0 0
        %5638 = vmatpush1.bf16.msra.mxu0 %v5281
        %5639 = vmatprep.subr.bf16.mxu0 0
        %5640 = vmatpush1.bf16.msra.mxu0 0
        %5641 = vmatprep.subr.bf16.mxu0 0
        %5642 = vmatpush1.bf16.msra.mxu0 0
        %5643 = vmatprep.subr.bf16.mxu0 0
        %5644 = vmatpush1.bf16.msra.mxu0 0
        %5645 = vmatprep.subr.bf16.mxu0 0
        %5646 = vmatpush1.bf16.msra.mxu0 0
        %5647 = vmatprep.subr.bf16.mxu0 0
        %5648 = vmatpush1.bf16.msra.mxu0 0
        %5649 = vmatprep.subr.bf16.mxu0 0
        %5650 = vmatpush1.bf16.msra.mxu0 0
        %5651 = vmatprep.subr.bf16.mxu0 0
        %5652 = vmatpush1.bf16.msra.mxu0 0
        %5653 = vmatprep.subr.bf16.mxu0 0
        %5654 = vmatpush1.bf16.msra.mxu0 0
        %5655 = vmatprep.subr.bf16.mxu0 0
        %5656 = vmatpush1.bf16.msra.mxu0 0
        %5657 = vmatprep.subr.bf16.mxu0 0
        %5658 = vmatpush1.bf16.msra.mxu0 0
        %5659 = vmatprep.subr.bf16.mxu0 0
        %5660 = vmatpush1.bf16.msra.mxu0 0
        %5661 = vmatprep.subr.bf16.mxu0 0
        %5662 = vmatpush1.bf16.msra.mxu0 0
        %5663 = vmatprep.subr.bf16.mxu0 0
        %5664 = vmatpush1.bf16.msra.mxu0 0
        %5665 = vmatprep.subr.bf16.mxu0 0
        %5666 = vmatpush1.bf16.msra.mxu0 0
        %5667 = vmatprep.subr.bf16.mxu0 0
        %5668 = vmatpush1.bf16.msra.mxu0 0
        %5669 = vmatprep.mubr.bf16.mxu0 0
        %5670 = vmatmul.mubr.bf16.gmra.mrb[0].mxu0 %v507
        %v5671 = vpop.f32.mrb[0].mxu0
        %v5672 = vadd.f32 0.0, %v5671
        %v5673 = vpop.f32.mrb[0].mxu0
        %v5674 = vpop.f32.mrb[0].mxu0
        %v5675 = vpop.f32.mrb[0].mxu0
        %5676 = vdwg.mxu0
        %v5677 = vadd.f32 %v5636, %v5672
        %5678 = vmatprep.subr.bf16.mxu0 0
        %5679 = vmatpush1.bf16.msra.mxu0 %v5330
        %5680 = vmatprep.subr.bf16.mxu0 0
        %5681 = vmatpush1.bf16.msra.mxu0 0
        %5682 = vmatprep.subr.bf16.mxu0 0
        %5683 = vmatpush1.bf16.msra.mxu0 0
        %5684 = vmatprep.subr.bf16.mxu0 0
        %5685 = vmatpush1.bf16.msra.mxu0 0
        %5686 = vmatprep.subr.bf16.mxu0 0
        %5687 = vmatpush1.bf16.msra.mxu0 0
        %5688 = vmatprep.subr.bf16.mxu0 0
        %5689 = vmatpush1.bf16.msra.mxu0 0
        %5690 = vmatprep.subr.bf16.mxu0 0
        %5691 = vmatpush1.bf16.msra.mxu0 0
        %5692 = vmatprep.subr.bf16.mxu0 0
        %5693 = vmatpush1.bf16.msra.mxu0 0
        %5694 = vmatprep.subr.bf16.mxu0 0
        %5695 = vmatpush1.bf16.msra.mxu0 0
        %5696 = vmatprep.subr.bf16.mxu0 0
        %5697 = vmatpush1.bf16.msra.mxu0 0
        %5698 = vmatprep.subr.bf16.mxu0 0
        %5699 = vmatpush1.bf16.msra.mxu0 0
        %5700 = vmatprep.subr.bf16.mxu0 0
        %5701 = vmatpush1.bf16.msra.mxu0 0
        %5702 = vmatprep.subr.bf16.mxu0 0
        %5703 = vmatpush1.bf16.msra.mxu0 0
        %5704 = vmatprep.subr.bf16.mxu0 0
        %5705 = vmatpush1.bf16.msra.mxu0 0
        %5706 = vmatprep.subr.bf16.mxu0 0
        %5707 = vmatpush1.bf16.msra.mxu0 0
        %5708 = vmatprep.subr.bf16.mxu0 0
        %5709 = vmatpush1.bf16.msra.mxu0 0
        %5710 = vmatprep.mubr.bf16.mxu0 0
        %5711 = vmatmul.mubr.bf16.gmra.mrb[0].mxu0 %v561
        %v5712 = vpop.f32.mrb[0].mxu0
        %v5713 = vadd.f32 0.0, %v5712
        %v5714 = vpop.f32.mrb[0].mxu0
        %v5715 = vpop.f32.mrb[0].mxu0
        %v5716 = vpop.f32.mrb[0].mxu0
        %5717 = vdwg.mxu0
        %v5718 = vadd.f32 %v5677, %v5713
        %5719 = vmatprep.subr.bf16.mxu0 0
        %5720 = vmatpush1.bf16.msra.mxu0 %v5376
        %5721 = vmatprep.subr.bf16.mxu0 0
        %5722 = vmatpush1.bf16.msra.mxu0 0
        %5723 = vmatprep.subr.bf16.mxu0 0
        %5724 = vmatpush1.bf16.msra.mxu0 0
        %5725 = vmatprep.subr.bf16.mxu0 0
        %5726 = vmatpush1.bf16.msra.mxu0 0
        %5727 = vmatprep.subr.bf16.mxu0 0
        %5728 = vmatpush1.bf16.msra.mxu0 0
        %5729 = vmatprep.subr.bf16.mxu0 0
        %5730 = vmatpush1.bf16.msra.mxu0 0
        %5731 = vmatprep.subr.bf16.mxu0 0
        %5732 = vmatpush1.bf16.msra.mxu0 0
        %5733 = vmatprep.subr.bf16.mxu0 0
        %5734 = vmatpush1.bf16.msra.mxu0 0
        %5735 = vmatprep.subr.bf16.mxu0 0
        %5736 = vmatpush1.bf16.msra.mxu0 0
        %5737 = vmatprep.subr.bf16.mxu0 0
        %5738 = vmatpush1.bf16.msra.mxu0 0
        %5739 = vmatprep.subr.bf16.mxu0 0
        %5740 = vmatpush1.bf16.msra.mxu0 0
        %5741 = vmatprep.subr.bf16.mxu0 0
        %5742 = vmatpush1.bf16.msra.mxu0 0
        %5743 = vmatprep.subr.bf16.mxu0 0
        %5744 = vmatpush1.bf16.msra.mxu0 0
        %5745 = vmatprep.subr.bf16.mxu0 0
        %5746 = vmatpush1.bf16.msra.mxu0 0
        %5747 = vmatprep.subr.bf16.mxu0 0
        %5748 = vmatpush1.bf16.msra.mxu0 0
        %5749 = vmatprep.subr.bf16.mxu0 0
        %5750 = vmatpush1.bf16.msra.mxu0 0
        %5751 = vmatprep.mubr.bf16.mxu0 0
        %5752 = vmatmul.mubr.bf16.gmra.mrb[0].mxu0 %v612
        %v5753 = vpop.f32.mrb[0].mxu0
        %v5754 = vadd.f32 0.0, %v5753
        %v5755 = vpop.f32.mrb[0].mxu0
        %v5756 = vpop.f32.mrb[0].mxu0
        %v5757 = vpop.f32.mrb[0].mxu0
        %5758 = vdwg.mxu0
        %v5759 = vadd.f32 %v5718, %v5754
        %s5760 = sadd.s32 %s237, 8
        %s5761 = smul.u32 %s5760, 2
        %s5762 = smul.addr %s5761, 4
        %s5763 = scalar_lea.vmem %s220, %s5762
        %v5764 = vld [vmem:[%s5763] sm:$0x3]
        %v5766 = vsel %vm254, %v5764, 0
        %5768 = vmatprep.subr.bf16.mxu0 0
        %5769 = vmatpush1.bf16.msra.mxu0 %v5766
        %5770 = vmatprep.subr.bf16.mxu0 0
        %5771 = vmatpush1.bf16.msra.mxu0 0
        %5772 = vmatprep.subr.bf16.mxu0 0
        %5773 = vmatpush1.bf16.msra.mxu0 0
        %5774 = vmatprep.subr.bf16.mxu0 0
        %5775 = vmatpush1.bf16.msra.mxu0 0
        %5776 = vmatprep.subr.bf16.mxu0 0
        %5777 = vmatpush1.bf16.msra.mxu0 0
        %5778 = vmatprep.subr.bf16.mxu0 0
        %5779 = vmatpush1.bf16.msra.mxu0 0
        %5780 = vmatprep.subr.bf16.mxu0 0
        %5781 = vmatpush1.bf16.msra.mxu0 0
        %5782 = vmatprep.subr.bf16.mxu0 0
        %5783 = vmatpush1.bf16.msra.mxu0 0
        %5784 = vmatprep.subr.bf16.mxu0 0
        %5785 = vmatpush1.bf16.msra.mxu0 0
        %5786 = vmatprep.subr.bf16.mxu0 0
        %5787 = vmatpush1.bf16.msra.mxu0 0
        %5788 = vmatprep.subr.bf16.mxu0 0
        %5789 = vmatpush1.bf16.msra.mxu0 0
        %5790 = vmatprep.subr.bf16.mxu0 0
        %5791 = vmatpush1.bf16.msra.mxu0 0
        %5792 = vmatprep.subr.bf16.mxu0 0
        %5793 = vmatpush1.bf16.msra.mxu0 0
        %5794 = vmatprep.subr.bf16.mxu0 0
        %5795 = vmatpush1.bf16.msra.mxu0 0
        %5796 = vmatprep.subr.bf16.mxu0 0
        %5797 = vmatpush1.bf16.msra.mxu0 0
        %5798 = vmatprep.subr.bf16.mxu0 0
        %5799 = vmatpush1.bf16.msra.mxu0 0
        %5800 = vmatprep.mubr.bf16.mxu0 0
        %5801 = vmatmul.mubr.bf16.gmra.mrb[0].mxu0 %v666
        %v5802 = vpop.f32.mrb[0].mxu0
        %v5803 = vadd.f32 0.0, %v5802
        %v5804 = vpop.f32.mrb[0].mxu0
        %v5805 = vpop.f32.mrb[0].mxu0
        %v5806 = vpop.f32.mrb[0].mxu0
        %5807 = vdwg.mxu0
        %v5808 = vadd.f32 %v5759, %v5803
        %v5809 = vld [vmem:[%s5763] sm:$0xc]
        %v5811 = vunpack.c.l.b16 %v5809
        %v5812 = vpack.c.b16 %v5811, %v5811
        %v5813 = vrot.slane %v5812, 2
        %v5815 = vsel %vm254, %v5813, 0
        %5817 = vmatprep.subr.bf16.mxu0 0
        %5818 = vmatpush1.bf16.msra.mxu0 %v5815
        %5819 = vmatprep.subr.bf16.mxu0 0
        %5820 = vmatpush1.bf16.msra.mxu0 0
        %5821 = vmatprep.subr.bf16.mxu0 0
        %5822 = vmatpush1.bf16.msra.mxu0 0
        %5823 = vmatprep.subr.bf16.mxu0 0
        %5824 = vmatpush1.bf16.msra.mxu0 0
        %5825 = vmatprep.subr.bf16.mxu0 0
        %5826 = vmatpush1.bf16.msra.mxu0 0
        %5827 = vmatprep.subr.bf16.mxu0 0
        %5828 = vmatpush1.bf16.msra.mxu0 0
        %5829 = vmatprep.subr.bf16.mxu0 0
        %5830 = vmatpush1.bf16.msra.mxu0 0
        %5831 = vmatprep.subr.bf16.mxu0 0
        %5832 = vmatpush1.bf16.msra.mxu0 0
        %5833 = vmatprep.subr.bf16.mxu0 0
        %5834 = vmatpush1.bf16.msra.mxu0 0
        %5835 = vmatprep.subr.bf16.mxu0 0
        %5836 = vmatpush1.bf16.msra.mxu0 0
        %5837 = vmatprep.subr.bf16.mxu0 0
        %5838 = vmatpush1.bf16.msra.mxu0 0
        %5839 = vmatprep.subr.bf16.mxu0 0
        %5840 = vmatpush1.bf16.msra.mxu0 0
        %5841 = vmatprep.subr.bf16.mxu0 0
        %5842 = vmatpush1.bf16.msra.mxu0 0
        %5843 = vmatprep.subr.bf16.mxu0 0
        %5844 = vmatpush1.bf16.msra.mxu0 0
        %5845 = vmatprep.subr.bf16.mxu0 0
        %5846 = vmatpush1.bf16.msra.mxu0 0
        %5847 = vmatprep.subr.bf16.mxu0 0
        %5848 = vmatpush1.bf16.msra.mxu0 0
        %5849 = vmatprep.mubr.bf16.mxu0 0
        %5850 = vmatmul.mubr.bf16.gmra.mrb[0].mxu0 %v720
        %v5851 = vpop.f32.mrb[0].mxu0
        %v5852 = vadd.f32 0.0, %v5851
        %v5853 = vpop.f32.mrb[0].mxu0
        %v5854 = vpop.f32.mrb[0].mxu0
        %v5855 = vpop.f32.mrb[0].mxu0
        %5856 = vdwg.mxu0
        %v5857 = vadd.f32 %v5808, %v5852
        %v5859 = vunpack.c.l.b16 %v5764
        %v5860 = vpack.c.b16 %v5859, %v5859
        %5861 = vrot.lane.b32.xlu0 %v5860, 127
        %v5862 = vpop.permute.xlu0 %5861
        %v5864 = vsel %vm254, %v5862, 0
        %5866 = vmatprep.subr.bf16.mxu0 0
        %5867 = vmatpush1.bf16.msra.mxu0 %v5864
        %5868 = vmatprep.subr.bf16.mxu0 0
        %5869 = vmatpush1.bf16.msra.mxu0 0
        %5870 = vmatprep.subr.bf16.mxu0 0
        %5871 = vmatpush1.bf16.msra.mxu0 0
        %5872 = vmatprep.subr.bf16.mxu0 0
        %5873 = vmatpush1.bf16.msra.mxu0 0
        %5874 = vmatprep.subr.bf16.mxu0 0
        %5875 = vmatpush1.bf16.msra.mxu0 0
        %5876 = vmatprep.subr.bf16.mxu0 0
        %5877 = vmatpush1.bf16.msra.mxu0 0
        %5878 = vmatprep.subr.bf16.mxu0 0
        %5879 = vmatpush1.bf16.msra.mxu0 0
        %5880 = vmatprep.subr.bf16.mxu0 0
        %5881 = vmatpush1.bf16.msra.mxu0 0
        %5882 = vmatprep.subr.bf16.mxu0 0
        %5883 = vmatpush1.bf16.msra.mxu0 0
        %5884 = vmatprep.subr.bf16.mxu0 0
        %5885 = vmatpush1.bf16.msra.mxu0 0
        %5886 = vmatprep.subr.bf16.mxu0 0
        %5887 = vmatpush1.bf16.msra.mxu0 0
        %5888 = vmatprep.subr.bf16.mxu0 0
        %5889 = vmatpush1.bf16.msra.mxu0 0
        %5890 = vmatprep.subr.bf16.mxu0 0
        %5891 = vmatpush1.bf16.msra.mxu0 0
        %5892 = vmatprep.subr.bf16.mxu0 0
        %5893 = vmatpush1.bf16.msra.mxu0 0
        %5894 = vmatprep.subr.bf16.mxu0 0
        %5895 = vmatpush1.bf16.msra.mxu0 0
        %5896 = vmatprep.subr.bf16.mxu0 0
        %5897 = vmatpush1.bf16.msra.mxu0 0
        %5898 = vmatprep.mubr.bf16.mxu0 0
        %5899 = vmatmul.mubr.bf16.gmra.mrb[0].mxu0 %v774
        %v5900 = vpop.f32.mrb[0].mxu0
        %v5901 = vadd.f32 0.0, %v5900
        %v5902 = vpop.f32.mrb[0].mxu0
        %v5903 = vpop.f32.mrb[0].mxu0
        %v5904 = vpop.f32.mrb[0].mxu0
        %5905 = vdwg.mxu0
        %v5906 = vadd.f32 %v5857, %v5901
        %5907 = vrot.lane.b32.xlu0 %v5813, 127
        %v5908 = vpop.permute.xlu0 %5907
        %v5910 = vsel %vm254, %v5908, 0
        %5912 = vmatprep.subr.bf16.mxu0 0
        %5913 = vmatpush1.bf16.msra.mxu0 %v5910
        %5914 = vmatprep.subr.bf16.mxu0 0
        %5915 = vmatpush1.bf16.msra.mxu0 0
        %5916 = vmatprep.subr.bf16.mxu0 0
        %5917 = vmatpush1.bf16.msra.mxu0 0
        %5918 = vmatprep.subr.bf16.mxu0 0
        %5919 = vmatpush1.bf16.msra.mxu0 0
        %5920 = vmatprep.subr.bf16.mxu0 0
        %5921 = vmatpush1.bf16.msra.mxu0 0
        %5922 = vmatprep.subr.bf16.mxu0 0
        %5923 = vmatpush1.bf16.msra.mxu0 0
        %5924 = vmatprep.subr.bf16.mxu0 0
        %5925 = vmatpush1.bf16.msra.mxu0 0
        %5926 = vmatprep.subr.bf16.mxu0 0
        %5927 = vmatpush1.bf16.msra.mxu0 0
        %5928 = vmatprep.subr.bf16.mxu0 0
        %5929 = vmatpush1.bf16.msra.mxu0 0
        %5930 = vmatprep.subr.bf16.mxu0 0
        %5931 = vmatpush1.bf16.msra.mxu0 0
        %5932 = vmatprep.subr.bf16.mxu0 0
        %5933 = vmatpush1.bf16.msra.mxu0 0
        %5934 = vmatprep.subr.bf16.mxu0 0
        %5935 = vmatpush1.bf16.msra.mxu0 0
        %5936 = vmatprep.subr.bf16.mxu0 0
        %5937 = vmatpush1.bf16.msra.mxu0 0
        %5938 = vmatprep.subr.bf16.mxu0 0
        %5939 = vmatpush1.bf16.msra.mxu0 0
        %5940 = vmatprep.subr.bf16.mxu0 0
        %5941 = vmatpush1.bf16.msra.mxu0 0
        %5942 = vmatprep.subr.bf16.mxu0 0
        %5943 = vmatpush1.bf16.msra.mxu0 0
        %5944 = vmatprep.mubr.bf16.mxu0 0
        %5945 = vmatmul.mubr.bf16.gmra.mrb[0].mxu0 %v825
        %v5946 = vpop.f32.mrb[0].mxu0
        %v5947 = vadd.f32 0.0, %v5946
        %v5948 = vpop.f32.mrb[0].mxu0
        %v5949 = vpop.f32.mrb[0].mxu0
        %v5950 = vpop.f32.mrb[0].mxu0
        %5951 = vdwg.mxu0
        %v5952 = vadd.f32 %v5906, %v5947
        %v5953 = vld [vmem:[%s5763 + $0x4] sm:$0x3]
        %v5955 = vsel %vm254, %v5953, 0
        %5957 = vmatprep.subr.bf16.mxu0 0
        %5958 = vmatpush1.bf16.msra.mxu0 %v5955
        %5959 = vmatprep.subr.bf16.mxu0 0
        %5960 = vmatpush1.bf16.msra.mxu0 0
        %5961 = vmatprep.subr.bf16.mxu0 0
        %5962 = vmatpush1.bf16.msra.mxu0 0
        %5963 = vmatprep.subr.bf16.mxu0 0
        %5964 = vmatpush1.bf16.msra.mxu0 0
        %5965 = vmatprep.subr.bf16.mxu0 0
        %5966 = vmatpush1.bf16.msra.mxu0 0
        %5967 = vmatprep.subr.bf16.mxu0 0
        %5968 = vmatpush1.bf16.msra.mxu0 0
        %5969 = vmatprep.subr.bf16.mxu0 0
        %5970 = vmatpush1.bf16.msra.mxu0 0
        %5971 = vmatprep.subr.bf16.mxu0 0
        %5972 = vmatpush1.bf16.msra.mxu0 0
        %5973 = vmatprep.subr.bf16.mxu0 0
        %5974 = vmatpush1.bf16.msra.mxu0 0
        %5975 = vmatprep.subr.bf16.mxu0 0
        %5976 = vmatpush1.bf16.msra.mxu0 0
        %5977 = vmatprep.subr.bf16.mxu0 0
        %5978 = vmatpush1.bf16.msra.mxu0 0
        %5979 = vmatprep.subr.bf16.mxu0 0
        %5980 = vmatpush1.bf16.msra.mxu0 0
        %5981 = vmatprep.subr.bf16.mxu0 0
        %5982 = vmatpush1.bf16.msra.mxu0 0
        %5983 = vmatprep.subr.bf16.mxu0 0
        %5984 = vmatpush1.bf16.msra.mxu0 0
        %5985 = vmatprep.subr.bf16.mxu0 0
        %5986 = vmatpush1.bf16.msra.mxu0 0
        %5987 = vmatprep.subr.bf16.mxu0 0
        %5988 = vmatpush1.bf16.msra.mxu0 0
        %5989 = vmatprep.mubr.bf16.mxu0 0
        %5990 = vmatmul.mubr.bf16.gmra.mrb[0].mxu0 %v875
        %v5991 = vpop.f32.mrb[0].mxu0
        %v5992 = vadd.f32 0.0, %v5991
        %v5993 = vpop.f32.mrb[0].mxu0
        %v5994 = vpop.f32.mrb[0].mxu0
        %v5995 = vpop.f32.mrb[0].mxu0
        %5996 = vdwg.mxu0
        %v5997 = vadd.f32 %v5952, %v5992
        %v5998 = vld [vmem:[%s5763 + $0x4] sm:$0xc]
        %v6000 = vunpack.c.l.b16 %v5998
        %v6001 = vpack.c.b16 %v6000, %v6000
        %v6002 = vrot.slane %v6001, 2
        %v6004 = vsel %vm254, %v6002, 0
        %6006 = vmatprep.subr.bf16.mxu0 0
        %6007 = vmatpush1.bf16.msra.mxu0 %v6004
        %6008 = vmatprep.subr.bf16.mxu0 0
        %6009 = vmatpush1.bf16.msra.mxu0 0
        %6010 = vmatprep.subr.bf16.mxu0 0
        %6011 = vmatpush1.bf16.msra.mxu0 0
        %6012 = vmatprep.subr.bf16.mxu0 0
        %6013 = vmatpush1.bf16.msra.mxu0 0
        %6014 = vmatprep.subr.bf16.mxu0 0
        %6015 = vmatpush1.bf16.msra.mxu0 0
        %6016 = vmatprep.subr.bf16.mxu0 0
        %6017 = vmatpush1.bf16.msra.mxu0 0
        %6018 = vmatprep.subr.bf16.mxu0 0
        %6019 = vmatpush1.bf16.msra.mxu0 0
        %6020 = vmatprep.subr.bf16.mxu0 0
        %6021 = vmatpush1.bf16.msra.mxu0 0
        %6022 = vmatprep.subr.bf16.mxu0 0
        %6023 = vmatpush1.bf16.msra.mxu0 0
        %6024 = vmatprep.subr.bf16.mxu0 0
        %6025 = vmatpush1.bf16.msra.mxu0 0
        %6026 = vmatprep.subr.bf16.mxu0 0
        %6027 = vmatpush1.bf16.msra.mxu0 0
        %6028 = vmatprep.subr.bf16.mxu0 0
        %6029 = vmatpush1.bf16.msra.mxu0 0
        %6030 = vmatprep.subr.bf16.mxu0 0
        %6031 = vmatpush1.bf16.msra.mxu0 0
        %6032 = vmatprep.subr.bf16.mxu0 0
        %6033 = vmatpush1.bf16.msra.mxu0 0
        %6034 = vmatprep.subr.bf16.mxu0 0
        %6035 = vmatpush1.bf16.msra.mxu0 0
        %6036 = vmatprep.subr.bf16.mxu0 0
        %6037 = vmatpush1.bf16.msra.mxu0 0
        %6038 = vmatprep.mubr.bf16.mxu0 0
        %6039 = vmatmul.mubr.bf16.gmra.mrb[0].mxu0 %v929
        %v6040 = vpop.f32.mrb[0].mxu0
        %v6041 = vadd.f32 0.0, %v6040
        %v6042 = vpop.f32.mrb[0].mxu0
        %v6043 = vpop.f32.mrb[0].mxu0
        %v6044 = vpop.f32.mrb[0].mxu0
        %6045 = vdwg.mxu0
        %v6046 = vadd.f32 %v5997, %v6041
        %v6048 = vunpack.c.l.b16 %v5953
        %v6049 = vpack.c.b16 %v6048, %v6048
        %6050 = vrot.lane.b32.xlu0 %v6049, 127
        %v6051 = vpop.permute.xlu0 %6050
        %v6053 = vsel %vm254, %v6051, 0
        %6055 = vmatprep.subr.bf16.mxu0 0
        %6056 = vmatpush1.bf16.msra.mxu0 %v6053
        %6057 = vmatprep.subr.bf16.mxu0 0
        %6058 = vmatpush1.bf16.msra.mxu0 0
        %6059 = vmatprep.subr.bf16.mxu0 0
        %6060 = vmatpush1.bf16.msra.mxu0 0
        %6061 = vmatprep.subr.bf16.mxu0 0
        %6062 = vmatpush1.bf16.msra.mxu0 0
        %6063 = vmatprep.subr.bf16.mxu0 0
        %6064 = vmatpush1.bf16.msra.mxu0 0
        %6065 = vmatprep.subr.bf16.mxu0 0
        %6066 = vmatpush1.bf16.msra.mxu0 0
        %6067 = vmatprep.subr.bf16.mxu0 0
        %6068 = vmatpush1.bf16.msra.mxu0 0
        %6069 = vmatprep.subr.bf16.mxu0 0
        %6070 = vmatpush1.bf16.msra.mxu0 0
        %6071 = vmatprep.subr.bf16.mxu0 0
        %6072 = vmatpush1.bf16.msra.mxu0 0
        %6073 = vmatprep.subr.bf16.mxu0 0
        %6074 = vmatpush1.bf16.msra.mxu0 0
        %6075 = vmatprep.subr.bf16.mxu0 0
        %6076 = vmatpush1.bf16.msra.mxu0 0
        %6077 = vmatprep.subr.bf16.mxu0 0
        %6078 = vmatpush1.bf16.msra.mxu0 0
        %6079 = vmatprep.subr.bf16.mxu0 0
        %6080 = vmatpush1.bf16.msra.mxu0 0
        %6081 = vmatprep.subr.bf16.mxu0 0
        %6082 = vmatpush1.bf16.msra.mxu0 0
        %6083 = vmatprep.subr.bf16.mxu0 0
        %6084 = vmatpush1.bf16.msra.mxu0 0
        %6085 = vmatprep.subr.bf16.mxu0 0
        %6086 = vmatpush1.bf16.msra.mxu0 0
        %6087 = vmatprep.mubr.bf16.mxu0 0
        %6088 = vmatmul.mubr.bf16.gmra.mrb[0].mxu0 %v983
        %v6089 = vpop.f32.mrb[0].mxu0
        %v6090 = vadd.f32 0.0, %v6089
        %v6091 = vpop.f32.mrb[0].mxu0
        %v6092 = vpop.f32.mrb[0].mxu0
        %v6093 = vpop.f32.mrb[0].mxu0
        %6094 = vdwg.mxu0
        %v6095 = vadd.f32 %v6046, %v6090
        %6096 = vrot.lane.b32.xlu0 %v6002, 127
        %v6097 = vpop.permute.xlu0 %6096
        %v6099 = vsel %vm254, %v6097, 0
        %6101 = vmatprep.subr.bf16.mxu0 0
        %6102 = vmatpush1.bf16.msra.mxu0 %v6099
        %6103 = vmatprep.subr.bf16.mxu0 0
        %6104 = vmatpush1.bf16.msra.mxu0 0
        %6105 = vmatprep.subr.bf16.mxu0 0
        %6106 = vmatpush1.bf16.msra.mxu0 0
        %6107 = vmatprep.subr.bf16.mxu0 0
        %6108 = vmatpush1.bf16.msra.mxu0 0
        %6109 = vmatprep.subr.bf16.mxu0 0
        %6110 = vmatpush1.bf16.msra.mxu0 0
        %6111 = vmatprep.subr.bf16.mxu0 0
        %6112 = vmatpush1.bf16.msra.mxu0 0
        %6113 = vmatprep.subr.bf16.mxu0 0
        %6114 = vmatpush1.bf16.msra.mxu0 0
        %6115 = vmatprep.subr.bf16.mxu0 0
        %6116 = vmatpush1.bf16.msra.mxu0 0
        %6117 = vmatprep.subr.bf16.mxu0 0
        %6118 = vmatpush1.bf16.msra.mxu0 0
        %6119 = vmatprep.subr.bf16.mxu0 0
        %6120 = vmatpush1.bf16.msra.mxu0 0
        %6121 = vmatprep.subr.bf16.mxu0 0
        %6122 = vmatpush1.bf16.msra.mxu0 0
        %6123 = vmatprep.subr.bf16.mxu0 0
        %6124 = vmatpush1.bf16.msra.mxu0 0
        %6125 = vmatprep.subr.bf16.mxu0 0
        %6126 = vmatpush1.bf16.msra.mxu0 0
        %6127 = vmatprep.subr.bf16.mxu0 0
        %6128 = vmatpush1.bf16.msra.mxu0 0
        %6129 = vmatprep.subr.bf16.mxu0 0
        %6130 = vmatpush1.bf16.msra.mxu0 0
        %6131 = vmatprep.subr.bf16.mxu0 0
        %6132 = vmatpush1.bf16.msra.mxu0 0
        %6133 = vmatprep.mubr.bf16.mxu0 0
        %6134 = vmatmul.mubr.bf16.gmra.mrb[0].mxu0 %v1034
        %v6135 = vpop.f32.mrb[0].mxu0
        %v6136 = vadd.f32 0.0, %v6135
        %v6137 = vpop.f32.mrb[0].mxu0
        %v6138 = vpop.f32.mrb[0].mxu0
        %v6139 = vpop.f32.mrb[0].mxu0
        %6140 = vdwg.mxu0
        %v6141 = vadd.f32 %v6095, %v6136
        %p6142 = scmp.lt.s32.totalorder %s5037, 8
        %s6143 = scalar_select %p6142, 1, 0
        %s6144 = scvt.s32.f32 %s6143
        %v6145 = vsel %vm1083, %v6141, 0.0
        %6146 = vadd.xlane.f32.xlu0 %v6145
        %v6147 = vpop.xlane.xlu0 %6146
        %v6148 = vstv %s6144
        %v6149 = vmul.f32 %v6148, %v6147
        %v6150 = vadd.f32 %v5427, %v6149
        %v6151 = vmul.f32 %v6141, %v6141
        %v6152 = vsel %vm1083, %v6151, 0.0
        %6153 = vadd.xlane.f32.xlu0 %v6152
        %v6154 = vpop.xlane.xlu0 %6153
        %v6155 = vmul.f32 %v6148, %v6154
        %v6156 = vadd.f32 %v5433, %v6155
        %6158 = vrot.lane.b32.xlu0 %v1803, 8
        %v6159 = vpop.permute.xlu0 %6158
        %6162 = vrot.lane.b32.xlu0 %v2526, 16
        %v6163 = vpop.permute.xlu0 %6162
        %6166 = vrot.lane.b32.xlu0 %v3249, 24
        %v6167 = vpop.permute.xlu0 %6166
        %6170 = vrot.lane.b32.xlu0 %v3972, 32
        %v6171 = vpop.permute.xlu0 %6170
        %6174 = vrot.lane.b32.xlu0 %v4695, 40
        %v6175 = vpop.permute.xlu0 %6174
        %6178 = vrot.lane.b32.xlu0 %v5418, 48
        %v6179 = vpop.permute.xlu0 %6178
        %6182 = vrot.lane.b32.xlu0 %v6141, 56
        %v6183 = vpop.permute.xlu0 %6182
        %v6185 = vsel %vm1083, %v1079, %v6159
        %vm6186 = vcmask 130048
        %v6187 = vsel %vm6186, %v6185, %v6163
        %vm6188 = vcmask 195584
        %v6189 = vsel %vm6188, %v6187, %v6167
        %vm6190 = vcmask 261120
        %v6191 = vsel %vm6190, %v6189, %v6171
        %vm6192 = vcmask 326656
        %v6193 = vsel %vm6192, %v6191, %v6175
        %vm6194 = vcmask 392192
        %v6195 = vsel %vm6194, %v6193, %v6179
        %vm6196 = vcmask 457728
        %v6197 = vsel %vm6196, %v6195, %v6183
        %v6198 = vpack.c.bf16 %v6197, %v6197
        %vm6199 = vcmask 519168
        %6200 = vst.msk [vmem:[%s203] sm:$0xf] %vm6199, %v6198
        %v6201 = vld [vmem:[%s224] sm:$0xff]
        %v6202 = vadd.f32 %v6201, %v6150
        %vm6203 = vcmask 7168
        %6204 = vst.msk [vmem:[%s224] sm:$0xff] %vm6203, %v6202
        %v6205 = vld [vmem:[%s228] sm:$0xff]
        %v6206 = vadd.f32 %v6205, %v6156
        %6207 = vst.msk [vmem:[%s228] sm:$0xff] %vm6203, %v6206
        %s6208 = sand.u32 %s86, 1
        %s6209 = scalar_lea.sflag [#allocation3], %s6208
        %s6210 = sand.u32 %s86, 1
        %s6211 = smul.addr %s6210, 4
        %s6212 = scalar_lea.vmem [#allocation2], %s6211
        %p6213 = scmp.lt.s32.totalorder %s23, 1
        %s6214 = scalar_select %p6213, %s23, 1
        %s6215 = smul.addr %s6214, 8
        %s6216 = scalar_lea.vmem %s3, %s6215
        %p6217 = scmp.lt.s32.totalorder %s23, 1
        %s6218 = scalar_select %p6217, %s23, 1
        %s6219 = smul.addr %s6218, 8
        %s6220 = scalar_lea.vmem %s4, %s6219
        // Predicated region
        $region33: #{tpu_custom_call.1} parent=27 // pred_check
          %p6221 = pneg %p96
        $region34: #{tpu_custom_call.1} parent=27 // pred_check_branch
          %6223 = sbr.rel (%p6221) target = $region36
        $region35: #{tpu_custom_call.1} parent=27 // pred_region
          %s6225 = ssub.s32 64, 64
          %6226 = vsyncadd %s6209, %s6225
          %s6227 = smul.addr %s23, 64
          %s6228 = scalar_lea.hbm %s2, %s6227
          %s6230 = sshll.u32 %s6212, 4
          %s6231 = int_to_ptr.vmem [resolvable:$true] %s6230
          %6233 = dma.vmem_to_hbm [thread:$0]  %s6231, 64, %s6228, %s6209
        $region36: #{tpu_custom_call.1} parent=27 // pred_fallthru
          _
        // Predicated region
        $region37: #{tpu_custom_call.1} parent=27 // pred_check
          %p6234 = pneg %p122
        $region38: #{tpu_custom_call.1} parent=27 // pred_check_branch
          %6236 = sbr.rel (%p6234) target = $region40
        $region39: #{tpu_custom_call.1} parent=27 // pred_region
          _
        $region40: #{tpu_custom_call.1} parent=27 // pred_fallthru
          _
        // Predicated region
        $region41: #{tpu_custom_call.1} parent=27 // pred_check
          %p6237 = pneg %p148
        $region42: #{tpu_custom_call.1} parent=27 // pred_check_branch
          %6239 = sbr.rel (%p6237) target = $region44
        $region43: #{tpu_custom_call.1} parent=27 // pred_region
          _
        $region44: #{tpu_custom_call.1} parent=27 // pred_fallthru
          _
      $region28: #{tpu_custom_call.1} parent=5 // pred_fallthru
        _
      %p6240 = scmp.le.s32.totalorder 2, %s14
      // Predicated region
      $region45: #{tpu_custom_call.1} parent=5 // pred_check
        %p6241 = pneg %p6240
      $region46: #{tpu_custom_call.1} parent=5 // pred_check_branch
        %6243 = sbr.rel (%p6241) target = $region48
      $region47: #{tpu_custom_call.1} parent=5 // pred_region
        %s6244 = ssub.s32 %s14, 2
        // Predicated region
        $region49: #{tpu_custom_call.1} parent=47 // pred_check
          %p6245 = pneg %p102
        $region50: #{tpu_custom_call.1} parent=47 // pred_check_branch
          %6247 = sbr.rel (%p6245) target = $region52
        $region51: #{tpu_custom_call.1} parent=47 // pred_region
          %s6248 = sand.u32 %s87, 1
          %s6249 = scalar_lea.sflag [#allocation3], %s6248
          %s6250 = sand.u32 %s87, 1
          %s6251 = smul.addr %s6250, 4
          %s6252 = scalar_lea.vmem [#allocation2], %s6251
          %6253 = dma.done %s6249, 64
        $region52: #{tpu_custom_call.1} parent=47 // pred_fallthru
          _
        // Predicated region
        $region53: #{tpu_custom_call.1} parent=47 // pred_check
          %p6254 = pneg %p128
        $region54: #{tpu_custom_call.1} parent=47 // pred_check_branch
          %6256 = sbr.rel (%p6254) target = $region56
        $region55: #{tpu_custom_call.1} parent=47 // pred_region
          %p6257 = scmp.lt.s32.totalorder %s25, 1
          %s6258 = scalar_select %p6257, %s25, 1
          %s6259 = smul.addr %s6258, 8
          %s6260 = scalar_lea.vmem %s3, %s6259
        $region56: #{tpu_custom_call.1} parent=47 // pred_fallthru
          _
        // Predicated region
        $region57: #{tpu_custom_call.1} parent=47 // pred_check
          %p6261 = pneg %p154
        $region58: #{tpu_custom_call.1} parent=47 // pred_check_branch
          %6263 = sbr.rel (%p6261) target = $region60
        $region59: #{tpu_custom_call.1} parent=47 // pred_region
          %p6264 = scmp.lt.s32.totalorder %s25, 1
          %s6265 = scalar_select %p6264, %s25, 1
          %s6266 = smul.addr %s6265, 8
          %s6267 = scalar_lea.vmem %s4, %s6266
        $region60: #{tpu_custom_call.1} parent=47 // pred_fallthru
          _
      $region48: #{tpu_custom_call.1} parent=5 // pred_fallthru
        _
    $region6: #{tpu_custom_call.1} parent=1 // loop_footer
      %s18 = sadd.s32 1, %s14
    $region7: #{tpu_custom_call.1} parent=1 // loop_footer_branch
      %13 = sbr.rel target = $region3
    $region8: #{tpu_custom_call.1} parent=1 // loop_exit
      _
    %6268 = vsyncpa [#allocation3], 1
    %s6269 = scalar_lea.sflag [#allocation3], 1
    %6270 = vsyncpa %s6269, 1

</llo_original>
